<compile_context>
chip_gen: v6e
topology: v6e:2x2x1
jax: 0.10.0
libtpu: 0.0.40
codegen_flags: <defaults>
</compile_context>

<pallas_src>
import functools
import math

import jax
import jax.numpy as jnp
from jax import lax
from jax.experimental import pallas as pl
from jax.experimental.pallas import tpu as pltpu

EPS = 1e-5  # InstanceNorm2d default eps (affine=False, no running stats)


def _round_up(v, m):
    return (v + m - 1) // m * m


# --------------------------------------------------------------------------
# Pallas kernel: folded-tap conv (one MXU dot per output group) + optional
# InstanceNorm + activation + optional fused residual skip-add.
# One batch element per grid step; flattened spatial axis on lanes.
# --------------------------------------------------------------------------
def _conv_kernel(*refs, groups, C_pad, W_pitch, Wo, L_body, n_valid,
                 norm, act, has_bias, has_skip, block_weight):
    idx = 0
    x_ref = refs[idx]; idx += 1      # (1, C_x, L_in)   bf16 flat padded slab(s)
    w_ref = refs[idx]; idx += 1      # (C_out, K_total) f32 folded weights
    b_ref = None
    s_ref = None
    if has_bias:
        b_ref = refs[idx]; idx += 1  # (C_out, 1) f32
    if has_skip:
        s_ref = refs[idx]; idx += 1  # (1, C_out, L_out) bf16 residual skip
    o_ref = refs[idx]                # (1, G*C_out, L_out)

    G = len(groups)
    L_out = o_ref.shape[2]
    C_out = o_ref.shape[1] // G

    # f32 slab assembly: C_pad is a multiple of 8, so all sublane-dim
    # concatenations are tile-aligned; epilogue math stays f32 (v5e-safe).
    x = x_ref[0].astype(jnp.float32)
    w = w_ref[...]

    ys = []
    k0 = 0
    for taps in groups:
        # Flat-shift trick: output flat position q reads input flat q + off
        # from the channel block starting at cs (phase slabs are stacked
        # along the channel axis for stride-2 convs).
        pieces = [x[cs:cs + C_pad, off:off + L_out] for (cs, off) in taps]
        slab = pieces[0] if len(pieces) == 1 else jnp.concatenate(pieces, axis=0)
        kg = len(taps) * C_pad
        y = jnp.dot(w[:, k0:k0 + kg], slab, preferred_element_type=jnp.float32)
        k0 += kg
        if has_bias:
            y = y + b_ref[...]                       # lane-broadcast bias
        ys.append(y)

    if norm:
        # InstanceNorm stats over the valid output positions of all groups
        # (garbage wrap-around columns and the 128-pad tail are excluded).
        need_mask = (Wo < W_pitch) or (L_body < L_out)
        m = None
        if need_mask:
            pos = lax.broadcasted_iota(jnp.int32, (1, L_out), 1)
            valid = ((pos % W_pitch) < Wo) & (pos < L_body)
            m = valid.astype(jnp.float32)
        inv_n = 1.0 / float(n_valid)
        s1 = jnp.zeros((C_out, 1), jnp.float32)
        s2 = jnp.zeros((C_out, 1), jnp.float32)
        for y in ys:
            ym = y * m if need_mask else y
            s1 = s1 + jnp.sum(ym, axis=1, keepdims=True)
            s2 = s2 + jnp.sum(ym * y, axis=1, keepdims=True)
        mean = s1 * inv_n
        var = jnp.maximum(s2 * inv_n - mean * mean, 0.0)
        scale = lax.rsqrt(var + EPS)
        ys = [(y - mean) * scale for y in ys]

    if act == "relu":
        ys = [jnp.maximum(y, 0.0) for y in ys]
    elif act == "tanh":
        ys = [jnp.tanh(y) for y in ys]

    if has_skip:
        skip = s_ref[0].astype(jnp.float32)
        ys = [skip + block_weight * y for y in ys]

    out = ys[0] if G == 1 else jnp.concatenate(ys, axis=0)
    o_ref[0] = out.astype(o_ref.dtype)


# --------------------------------------------------------------------------
# pallas_call wrapper (grid over batch, lane-dense flat layout)
# --------------------------------------------------------------------------
def _run_conv(xf, w_fold, groups, *, C_pad, W_pitch, Wo, Ho, norm, act,
              bias=None, skip=None, block_weight=1.0, out_dtype=jnp.bfloat16):
    N, C_x, L_in = xf.shape
    C_out, K_total = w_fold.shape
    G = len(groups)
    L_body = Ho * W_pitch
    L_out = _round_up(L_body, 128)
    max_off = max(off for g in groups for (_cs, off) in g)
    assert L_in >= L_out + max_off
    n_valid = G * Ho * Wo
    has_bias = bias is not None
    has_skip = skip is not None
    assert not (has_skip and G != 1)

    in_specs = [
        pl.BlockSpec((1, C_x, L_in), lambda n: (n, 0, 0)),
        pl.BlockSpec((C_out, K_total), lambda n: (0, 0)),
    ]
    args = [xf, w_fold.astype(jnp.float32)]
    if has_bias:
        in_specs.append(pl.BlockSpec((C_out, 1), lambda n: (0, 0)))
        args.append(bias.reshape(C_out, 1).astype(jnp.float32))
    if has_skip:
        in_specs.append(pl.BlockSpec((1, C_out, L_out), lambda n: (n, 0, 0)))
        args.append(skip)

    kernel = functools.partial(
        _conv_kernel, groups=groups, C_pad=C_pad, W_pitch=W_pitch, Wo=Wo,
        L_body=L_body, n_valid=n_valid, norm=norm, act=act,
        has_bias=has_bias, has_skip=has_skip, block_weight=block_weight)

    return pl.pallas_call(
        kernel,
        out_shape=jax.ShapeDtypeStruct((N, G * C_out, L_out), out_dtype),
        grid=(N,),
        in_specs=in_specs,
        out_specs=pl.BlockSpec((1, G * C_out, L_out), lambda n: (n, 0, 0)),
        compiler_params=pltpu.CompilerParams(
            dimension_semantics=("parallel",)),
    )(*args)


# --------------------------------------------------------------------------
# Layout helpers
# --------------------------------------------------------------------------
def _pad_channels(x, c_pad):
    c = x.shape[1]
    if c_pad > c:
        x = jnp.pad(x, ((0, 0), (0, c_pad - c), (0, 0), (0, 0)))
    return x


def _flatten_slab(x4, l_min):
    """(N, C, Hp, Wp) -> (N, C, max(l_min, Hp*Wp)) bf16 flat, zero tail."""
    n, c, hp, wp = x4.shape
    xf = x4.reshape(n, c, hp * wp)
    if l_min > hp * wp:
        xf = jnp.pad(xf, ((0, 0), (0, 0), (0, l_min - hp * wp)))
    return xf.astype(jnp.bfloat16)


# --------------------------------------------------------------------------
# Layer wrappers
# --------------------------------------------------------------------------
def conv2d_s1(x, w, b=None, *, pad, pad_mode="constant", norm=True,
              act="relu", skip=None, block_weight=1.0,
              out_dtype=jnp.bfloat16):
    """Stride-1 Conv2d (+ optional InstanceNorm2d + activation + fused skip)."""
    N, C_in, H, W = x.shape
    C_out, _, KH, KW = w.shape
    C_pad = _round_up(max(C_in, 8), 8)

    xp = x
    if pad > 0:
        mode = "reflect" if pad_mode == "reflect" else "constant"
        xp = jnp.pad(x, ((0, 0), (0, 0), (pad, pad), (pad, pad)), mode=mode)
    Hp, Wp = H + 2 * pad, W + 2 * pad
    Ho, Wo = Hp - KH + 1, Wp - KW + 1

    L_body = Ho * Wp
    L_out = _round_up(L_body, 128)
    L_in = L_out + (KH - 1) * Wp + (KW - 1)
    xf = _flatten_slab(_pad_channels(xp, C_pad), L_in)

    taps = tuple((0, di * Wp + dj) for di in range(KH) for dj in range(KW))

    wt = jnp.transpose(w, (2, 3, 0, 1)).reshape(KH * KW, C_out, C_in)
    if C_pad > C_in:
        wt = jnp.pad(wt, ((0, 0), (0, 0), (0, C_pad - C_in)))
    w_fold = jnp.transpose(wt, (1, 0, 2)).reshape(C_out, KH * KW * C_pad)

    skip_f = None
    if skip is not None:
        sp = jnp.pad(skip.astype(jnp.bfloat16),
                     ((0, 0), (0, 0), (0, 0), (0, Wp - Wo)))
        sp = sp.reshape(N, C_out, L_body)
        skip_f = jnp.pad(sp, ((0, 0), (0, 0), (0, L_out - L_body)))

    yf = _run_conv(xf, w_fold, (taps,), C_pad=C_pad, W_pitch=Wp, Wo=Wo, Ho=Ho,
                   norm=norm, act=act, bias=b, skip=skip_f,
                   block_weight=block_weight, out_dtype=out_dtype)
    return yf[:, :, :L_body].reshape(N, C_out, Ho, Wp)[:, :, :, :Wo]


def conv2d_s2(x, w, *, norm=True, act="relu", out_dtype=jnp.bfloat16):
    """3x3 / stride-2 / zero-pad-1 Conv2d (+ IN + act) via input-phase
    decomposition: only surviving output positions are computed."""
    N, C_in, H, W = x.shape
    assert H % 2 == 0 and W % 2 == 0
    C_out = w.shape[0]
    C_pad = _round_up(max(C_in, 8), 8)

    xp = _pad_channels(jnp.pad(x, ((0, 0), (0, 0), (1, 1), (1, 1))), C_pad)
    Hs, Ws = H // 2, W // 2
    Wp = Ws + 1                                # phase-slab row pitch
    L_body = Hs * Wp
    L_out = _round_up(L_body, 128)
    L_in = L_out + Wp + 1

    phases = [_flatten_slab(xp[:, :, a::2, b::2], L_in)
              for a in range(2) for b in range(2)]
    xf = jnp.concatenate(phases, axis=1)       # (N, 4*C_pad, L_in)

    taps = tuple((((ki % 2) * 2 + (kj % 2)) * C_pad,
                  (ki // 2) * Wp + (kj // 2))
                 for ki in range(3) for kj in range(3))

    wt = jnp.transpose(w, (2, 3, 0, 1)).reshape(9, C_out, C_in)
    if C_pad > C_in:
        wt = jnp.pad(wt, ((0, 0), (0, 0), (0, C_pad - C_in)))
    w_fold = jnp.transpose(wt, (1, 0, 2)).reshape(C_out, 9 * C_pad)

    yf = _run_conv(xf, w_fold, (taps,), C_pad=C_pad, W_pitch=Wp, Wo=Ws, Ho=Hs,
                   norm=norm, act=act, out_dtype=out_dtype)
    return yf[:, :, :L_body].reshape(N, C_out, Hs, Wp)[:, :, :, :Ws]


def conv_transpose2d(x, w, *, norm=True, act="relu", out_dtype=jnp.bfloat16):
    """3x3 / stride-2 / pad-1 / output_pad-1 ConvTranspose2d (+ IN + act) via
    sub-pixel (output-phase) decomposition - no zero-dilation waste."""
    N, C_in, H, W = x.shape
    C_inw, C_out, KH, KW = w.shape
    assert (C_inw, KH, KW) == (C_in, 3, 3)
    C_pad = _round_up(max(C_in, 8), 8)

    # Extend bottom/right with zeros for the (r+1, c+1) reads of the last row.
    xe = _pad_channels(jnp.pad(x, ((0, 0), (0, 0), (0, 1), (0, 1))), C_pad)
    Wp = W + 1
    L_body = H * Wp
    L_out = _round_up(L_body, 128)
    L_in = L_out + Wp + 1
    xf = _flatten_slab(xe, L_in)

    # Output phase (p, q) lives at (2r+p, 2c+q); taps derived from R = 2i+k-1.
    groups = (
        ((0, 0),),                                   # (0,0)
        ((0, 0), (0, 1)),                            # (0,1)
        ((0, 0), (0, Wp)),                           # (1,0)
        ((0, 0), (0, 1), (0, Wp), (0, Wp + 1)),      # (1,1)
    )
    tapw = (
        ((1, 1),),
        ((1, 2), (1, 0)),
        ((2, 1), (0, 1)),
        ((2, 2), (2, 0), (0, 2), (0, 0)),
    )
    cols = []
    for g in tapw:
        for (ki, kj) in g:
            m = jnp.transpose(w[:, :, ki, kj])       # (C_out, C_in)
            if C_pad > C_in:
                m = jnp.pad(m, ((0, 0), (0, C_pad - C_in)))
            cols.append(m)
    w_fold = jnp.concatenate(cols, axis=1)

    yf = _run_conv(xf, w_fold, groups, C_pad=C_pad, W_pitch=Wp, Wo=W, Ho=H,
                   norm=norm, act=act, out_dtype=out_dtype)

    y = yf[:, :, :L_body].reshape(N, 2, 2, C_out, H, Wp)[:, :, :, :, :, :W]
    y = jnp.transpose(y, (0, 3, 4, 1, 5, 2)).reshape(N, C_out, 2 * H, 2 * W)
    return y


def residual_block(x, w1, w2, block_weight=1.0):
    """x + block_weight * (pad1-conv3-IN-ReLU-pad1-conv3-IN)(x).
    Biases omitted: conv bias followed by non-affine IN cancels exactly."""
    h = conv2d_s1(x, w1, None, pad=1, pad_mode="reflect", norm=True, act="relu")
    return conv2d_s1(h, w2, None, pad=1, pad_mode="reflect", norm=True,
                     act="none", skip=x, block_weight=block_weight)


# --------------------------------------------------------------------------
# Parameter construction (deterministic, PyTorch-default-style init bounds)
# --------------------------------------------------------------------------
def _init_conv(key, c_out, c_in, kh, kw):
    kw_, kb_ = jax.random.split(key)
    bound = 1.0 / math.sqrt(c_in * kh * kw)
    w = jax.random.uniform(kw_, (c_out, c_in, kh, kw), jnp.float32, -bound, bound)
    b = jax.random.uniform(kb_, (c_out,), jnp.float32, -bound, bound)
    return w, b


def _init_convT(key, c_in, c_out, kh, kw):
    kw_, kb_ = jax.random.split(key)
    bound = 1.0 / math.sqrt(c_out * kh * kw)
    w = jax.random.uniform(kw_, (c_in, c_out, kh, kw), jnp.float32, -bound, bound)
    b = jax.random.uniform(kb_, (c_out,), jnp.float32, -bound, bound)
    return w, b


def init_generator_params(key, opt):
    mx = opt["max_ch_G"]
    n_ch = opt["n_gf"]
    keys = iter(jax.random.split(key, 64))
    params = {"down": [], "trans": [], "up": []}

    params["down"].append(_init_conv(next(keys), n_ch, opt["input_ch"], 7, 7))
    for _ in range(opt["n_downsample"] - 1):
        params["down"].append(
            _init_conv(next(keys), min(2 * n_ch, mx), min(n_ch, mx), 3, 3))
        n_ch *= 2
    params["down"].append(
        _init_conv(next(keys), min(2 * n_ch, mx), min(n_ch, mx), 3, 3))
    bottleneck_ch = min(2 * n_ch, mx)

    for _ in range(opt["n_blocks"]):
        params["trans"].append(
            (_init_conv(next(keys), bottleneck_ch, bottleneck_ch, 3, 3),
             _init_conv(next(keys), bottleneck_ch, bottleneck_ch, 3, 3)))

    for _ in range(opt["n_downsample"]):
        params["up"].append(
            _init_convT(next(keys), min(2 * n_ch, mx), min(n_ch, mx), 3, 3))
        n_ch //= 2
    params["up"].append(_init_conv(next(keys), opt["output_ch"], 2 * n_ch, 7, 7))
    return params


def generator_apply(params, x, opt):
    # down: refl-pad3 + conv7 + IN + ReLU  (bias dropped: cancelled by IN)
    w, b = params["down"][0]
    h = conv2d_s1(x, w, None, pad=3, pad_mode="reflect", norm=True, act="relu")
    # strided downs (trans_module='RB' -> else branch: conv + IN + ReLU)
    for (w, b) in params["down"][1:]:
        h = conv2d_s2(h, w, norm=True, act="relu")
    # translator: residual blocks
    for ((w1, b1), (w2, b2)) in params["trans"]:
        h = residual_block(h, w1, w2, block_weight=opt["block_weight"])
    # up: transposed convs + IN + ReLU (bias dropped: cancelled by IN)
    for (w, b) in params["up"][:-1]:
        h = conv_transpose2d(h, w, norm=True, act="relu")
    # final: refl-pad3 + conv7 + Tanh (no norm -> bias kept, f32 output)
    w, b = params["up"][-1]
    return conv2d_s1(h, w, b, pad=3, pad_mode="reflect", norm=False,
                     act="tanh", out_dtype=jnp.float32)


# --------------------------------------------------------------------------
if __name__ == "__main__":
    opt = dict(input_ch=4, output_ch=3, n_gf=8, max_ch_G=32, n_downsample=2,
               trans_module="RB", n_blocks=2, block_weight=1.0)

    key = jax.random.PRNGKey(0)
    k_params, k_x = jax.random.split(key)
    params = init_generator_params(k_params, opt)

    x = jax.random.normal(k_x, (2, opt["input_ch"], 16, 16), jnp.float32)

    fwd = jax.jit(lambda inp: generator_apply(params, inp, opt))
    y = jax.block_until_ready(fwd(x))

    assert y.shape == (2, opt["output_ch"], 16, 16), y.shape
    assert bool(jnp.all(jnp.isfinite(y)))
    assert bool(jnp.all(jnp.abs(y) <= 1.0 + 1e-6))  # tanh output range
    print("KERNEL_OK")
</pallas_src>

<mosaic_0001>
module attributes {stable_mosaic.version = 11 : i64} {
  func.func @_conv_kernel(%arg0: i32, %arg1: memref<1x8x522xbf16, #tpu.memory_space<vmem>>, %arg2: memref<8x392xf32, #tpu.memory_space<vmem>>, %arg3: memref<1x8x384xbf16, #tpu.memory_space<vmem>>) attributes {dimension_semantics = [#tpu.dimension_semantics<parallel>], iteration_bounds = array<i64: 2>, scalar_prefetch = 0 : i64, scratch_operands = 0 : i64, tpu.core_type = #tpu.core_type<tc>, window_params = [{transform_indices = @transform_0, window_bounds = array<i64: 1, 8, 522>}, {pipeline_mode = #tpu.pipeline_mode<synchronous>, transform_indices = @transform_1, window_bounds = array<i64: 8, 392>}, {transform_indices = @transform_2, window_bounds = array<i64: 1, 8, 384>}]} {
    %c0 = arith.constant 0 : index
    %c0_0 = arith.constant 0 : index
    %c0_1 = arith.constant 0 : index
    %0 = vector.load %arg1[%c0, %c0_0, %c0_1] : memref<1x8x522xbf16, #tpu.memory_space<vmem>>, vector<1x8x522xbf16>
    %1 = vector.shape_cast %0 : vector<1x8x522xbf16> to vector<8x522xbf16>
    %2 = arith.extf %1 : vector<8x522xbf16> to vector<8x522xf32>
    %c0_2 = arith.constant 0 : index
    %c0_3 = arith.constant 0 : index
    %3 = vector.load %arg2[%c0_2, %c0_3] : memref<8x392xf32, #tpu.memory_space<vmem>>, vector<8x392xf32>
    %4 = vector.extract_strided_slice %2 {offsets = [0, 0], sizes = [8, 384], strides = [1, 1]} : vector<8x522xf32> to vector<8x384xf32>
    %5 = vector.extract_strided_slice %2 {offsets = [0, 1], sizes = [8, 384], strides = [1, 1]} : vector<8x522xf32> to vector<8x384xf32>
    %6 = vector.extract_strided_slice %2 {offsets = [0, 2], sizes = [8, 384], strides = [1, 1]} : vector<8x522xf32> to vector<8x384xf32>
    %7 = vector.extract_strided_slice %2 {offsets = [0, 3], sizes = [8, 384], strides = [1, 1]} : vector<8x522xf32> to vector<8x384xf32>
    %8 = vector.extract_strided_slice %2 {offsets = [0, 4], sizes = [8, 384], strides = [1, 1]} : vector<8x522xf32> to vector<8x384xf32>
    %9 = vector.extract_strided_slice %2 {offsets = [0, 5], sizes = [8, 384], strides = [1, 1]} : vector<8x522xf32> to vector<8x384xf32>
    %10 = vector.extract_strided_slice %2 {offsets = [0, 6], sizes = [8, 384], strides = [1, 1]} : vector<8x522xf32> to vector<8x384xf32>
    %11 = vector.extract_strided_slice %2 {offsets = [0, 22], sizes = [8, 384], strides = [1, 1]} : vector<8x522xf32> to vector<8x384xf32>
    %12 = vector.extract_strided_slice %2 {offsets = [0, 23], sizes = [8, 384], strides = [1, 1]} : vector<8x522xf32> to vector<8x384xf32>
    %13 = vector.extract_strided_slice %2 {offsets = [0, 24], sizes = [8, 384], strides = [1, 1]} : vector<8x522xf32> to vector<8x384xf32>
    %14 = vector.extract_strided_slice %2 {offsets = [0, 25], sizes = [8, 384], strides = [1, 1]} : vector<8x522xf32> to vector<8x384xf32>
    %15 = vector.extract_strided_slice %2 {offsets = [0, 26], sizes = [8, 384], strides = [1, 1]} : vector<8x522xf32> to vector<8x384xf32>
    %16 = vector.extract_strided_slice %2 {offsets = [0, 27], sizes = [8, 384], strides = [1, 1]} : vector<8x522xf32> to vector<8x384xf32>
    %17 = vector.extract_strided_slice %2 {offsets = [0, 28], sizes = [8, 384], strides = [1, 1]} : vector<8x522xf32> to vector<8x384xf32>
    %18 = vector.extract_strided_slice %2 {offsets = [0, 44], sizes = [8, 384], strides = [1, 1]} : vector<8x522xf32> to vector<8x384xf32>
    %19 = vector.extract_strided_slice %2 {offsets = [0, 45], sizes = [8, 384], strides = [1, 1]} : vector<8x522xf32> to vector<8x384xf32>
    %20 = vector.extract_strided_slice %2 {offsets = [0, 46], sizes = [8, 384], strides = [1, 1]} : vector<8x522xf32> to vector<8x384xf32>
    %21 = vector.extract_strided_slice %2 {offsets = [0, 47], sizes = [8, 384], strides = [1, 1]} : vector<8x522xf32> to vector<8x384xf32>
    %22 = vector.extract_strided_slice %2 {offsets = [0, 48], sizes = [8, 384], strides = [1, 1]} : vector<8x522xf32> to vector<8x384xf32>
    %23 = vector.extract_strided_slice %2 {offsets = [0, 49], sizes = [8, 384], strides = [1, 1]} : vector<8x522xf32> to vector<8x384xf32>
    %24 = vector.extract_strided_slice %2 {offsets = [0, 50], sizes = [8, 384], strides = [1, 1]} : vector<8x522xf32> to vector<8x384xf32>
    %25 = vector.extract_strided_slice %2 {offsets = [0, 66], sizes = [8, 384], strides = [1, 1]} : vector<8x522xf32> to vector<8x384xf32>
    %26 = vector.extract_strided_slice %2 {offsets = [0, 67], sizes = [8, 384], strides = [1, 1]} : vector<8x522xf32> to vector<8x384xf32>
    %27 = vector.extract_strided_slice %2 {offsets = [0, 68], sizes = [8, 384], strides = [1, 1]} : vector<8x522xf32> to vector<8x384xf32>
    %28 = vector.extract_strided_slice %2 {offsets = [0, 69], sizes = [8, 384], strides = [1, 1]} : vector<8x522xf32> to vector<8x384xf32>
    %29 = vector.extract_strided_slice %2 {offsets = [0, 70], sizes = [8, 384], strides = [1, 1]} : vector<8x522xf32> to vector<8x384xf32>
    %30 = vector.extract_strided_slice %2 {offsets = [0, 71], sizes = [8, 384], strides = [1, 1]} : vector<8x522xf32> to vector<8x384xf32>
    %31 = vector.extract_strided_slice %2 {offsets = [0, 72], sizes = [8, 384], strides = [1, 1]} : vector<8x522xf32> to vector<8x384xf32>
    %32 = vector.extract_strided_slice %2 {offsets = [0, 88], sizes = [8, 384], strides = [1, 1]} : vector<8x522xf32> to vector<8x384xf32>
    %33 = vector.extract_strided_slice %2 {offsets = [0, 89], sizes = [8, 384], strides = [1, 1]} : vector<8x522xf32> to vector<8x384xf32>
    %34 = vector.extract_strided_slice %2 {offsets = [0, 90], sizes = [8, 384], strides = [1, 1]} : vector<8x522xf32> to vector<8x384xf32>
    %35 = vector.extract_strided_slice %2 {offsets = [0, 91], sizes = [8, 384], strides = [1, 1]} : vector<8x522xf32> to vector<8x384xf32>
    %36 = vector.extract_strided_slice %2 {offsets = [0, 92], sizes = [8, 384], strides = [1, 1]} : vector<8x522xf32> to vector<8x384xf32>
    %37 = vector.extract_strided_slice %2 {offsets = [0, 93], sizes = [8, 384], strides = [1, 1]} : vector<8x522xf32> to vector<8x384xf32>
    %38 = vector.extract_strided_slice %2 {offsets = [0, 94], sizes = [8, 384], strides = [1, 1]} : vector<8x522xf32> to vector<8x384xf32>
    %39 = vector.extract_strided_slice %2 {offsets = [0, 110], sizes = [8, 384], strides = [1, 1]} : vector<8x522xf32> to vector<8x384xf32>
    %40 = vector.extract_strided_slice %2 {offsets = [0, 111], sizes = [8, 384], strides = [1, 1]} : vector<8x522xf32> to vector<8x384xf32>
    %41 = vector.extract_strided_slice %2 {offsets = [0, 112], sizes = [8, 384], strides = [1, 1]} : vector<8x522xf32> to vector<8x384xf32>
    %42 = vector.extract_strided_slice %2 {offsets = [0, 113], sizes = [8, 384], strides = [1, 1]} : vector<8x522xf32> to vector<8x384xf32>
    %43 = vector.extract_strided_slice %2 {offsets = [0, 114], sizes = [8, 384], strides = [1, 1]} : vector<8x522xf32> to vector<8x384xf32>
    %44 = vector.extract_strided_slice %2 {offsets = [0, 115], sizes = [8, 384], strides = [1, 1]} : vector<8x522xf32> to vector<8x384xf32>
    %45 = vector.extract_strided_slice %2 {offsets = [0, 116], sizes = [8, 384], strides = [1, 1]} : vector<8x522xf32> to vector<8x384xf32>
    %46 = vector.extract_strided_slice %2 {offsets = [0, 132], sizes = [8, 384], strides = [1, 1]} : vector<8x522xf32> to vector<8x384xf32>
    %47 = vector.extract_strided_slice %2 {offsets = [0, 133], sizes = [8, 384], strides = [1, 1]} : vector<8x522xf32> to vector<8x384xf32>
    %48 = vector.extract_strided_slice %2 {offsets = [0, 134], sizes = [8, 384], strides = [1, 1]} : vector<8x522xf32> to vector<8x384xf32>
    %49 = vector.extract_strided_slice %2 {offsets = [0, 135], sizes = [8, 384], strides = [1, 1]} : vector<8x522xf32> to vector<8x384xf32>
    %50 = vector.extract_strided_slice %2 {offsets = [0, 136], sizes = [8, 384], strides = [1, 1]} : vector<8x522xf32> to vector<8x384xf32>
    %51 = vector.extract_strided_slice %2 {offsets = [0, 137], sizes = [8, 384], strides = [1, 1]} : vector<8x522xf32> to vector<8x384xf32>
    %52 = vector.extract_strided_slice %2 {offsets = [0, 138], sizes = [8, 384], strides = [1, 1]} : vector<8x522xf32> to vector<8x384xf32>
    %53 = tpu.concatenate %4, %5, %6, %7, %8, %9, %10, %11, %12, %13, %14, %15, %16, %17, %18, %19 in 0 : vector<8x384xf32>, vector<8x384xf32>, vector<8x384xf32>, vector<8x384xf32>, vector<8x384xf32>, vector<8x384xf32>, vector<8x384xf32>, vector<8x384xf32>, vector<8x384xf32>, vector<8x384xf32>, vector<8x384xf32>, vector<8x384xf32>, vector<8x384xf32>, vector<8x384xf32>, vector<8x384xf32>, vector<8x384xf32> -> vector<128x384xf32>
    %54 = tpu.concatenate %20, %21, %22, %23, %24, %25, %26, %27, %28, %29, %30, %31, %32, %33, %34, %35 in 0 : vector<8x384xf32>, vector<8x384xf32>, vector<8x384xf32>, vector<8x384xf32>, vector<8x384xf32>, vector<8x384xf32>, vector<8x384xf32>, vector<8x384xf32>, vector<8x384xf32>, vector<8x384xf32>, vector<8x384xf32>, vector<8x384xf32>, vector<8x384xf32>, vector<8x384xf32>, vector<8x384xf32>, vector<8x384xf32> -> vector<128x384xf32>
    %55 = tpu.concatenate %36, %37, %38, %39, %40, %41, %42, %43, %44, %45, %46, %47, %48, %49, %50, %51 in 0 : vector<8x384xf32>, vector<8x384xf32>, vector<8x384xf32>, vector<8x384xf32>, vector<8x384xf32>, vector<8x384xf32>, vector<8x384xf32>, vector<8x384xf32>, vector<8x384xf32>, vector<8x384xf32>, vector<8x384xf32>, vector<8x384xf32>, vector<8x384xf32>, vector<8x384xf32>, vector<8x384xf32>, vector<8x384xf32> -> vector<128x384xf32>
    %56 = tpu.concatenate %53, %54, %55, %52 in 0 : vector<128x384xf32>, vector<128x384xf32>, vector<128x384xf32>, vector<8x384xf32> -> vector<392x384xf32>
    %cst = arith.constant dense<0.000000e+00> : vector<8x384xf32>
    %57 = tpu.matmul %3, %56, %cst {dimension_numbers = #tpu.dot_dimension_numbers<[1], [0], [0], [1], [0, 0, 1, 1], [], []>} : vector<8x392xf32>, vector<392x384xf32>, vector<8x384xf32> -> vector<8x384xf32>
    %58 = tpu.iota {dimensions = array<i32: 1>} : vector<1x384xi32>
    %c22_i32 = arith.constant 22 : i32
    %c0_i32 = arith.constant 0 : i32
    %59 = arith.cmpi eq, %c22_i32, %c0_i32 : i32
    %c1_i32 = arith.constant 1 : i32
    %60 = arith.select %59, %c1_i32, %c22_i32 : i32
    %61 = vector.broadcast %60 : i32 to vector<1x384xi32>
    %62 = arith.remsi %58, %61 : vector<1x384xi32>
    %c0_i32_4 = arith.constant 0 : i32
    %63 = vector.broadcast %c0_i32_4 : i32 to vector<1x384xi32>
    %64 = arith.cmpi ne, %62, %63 : vector<1x384xi32>
    %c0_i32_5 = arith.constant 0 : i32
    %65 = vector.broadcast %c0_i32_5 : i32 to vector<1x384xi32>
    %66 = arith.cmpi slt, %62, %65 : vector<1x384xi32>
    %c0_i32_6 = arith.constant 0 : i32
    %67 = arith.cmpi slt, %60, %c0_i32_6 : i32
    %68 = vector.broadcast %67 : i1 to vector<1x384xi1>
    %69 = vector.broadcast %68 : vector<1x384xi1> to vector<1x384xi1>
    %70 = arith.xori %66, %69 : vector<1x384xi1>
    %71 = arith.andi %70, %64 : vector<1x384xi1>
    %72 = vector.broadcast %60 : i32 to vector<1x384xi32>
    %73 = arith.addi %62, %72 : vector<1x384xi32>
    %74 = arith.select %71, %73, %62 : vector<1x384xi1>, vector<1x384xi32>
    %c16_i32 = arith.constant 16 : i32
    %75 = vector.broadcast %c16_i32 : i32 to vector<1x384xi32>
    %76 = arith.cmpi slt, %74, %75 : vector<1x384xi32>
    %c352_i32 = arith.constant 352 : i32
    %77 = vector.broadcast %c352_i32 : i32 to vector<1x384xi32>
    %78 = arith.cmpi slt, %58, %77 : vector<1x384xi32>
    %79 = arith.andi %76, %78 : vector<1x384xi1>
    %80 = arith.extui %79 : vector<1x384xi1> to vector<1x384xi32>
    %81 = arith.sitofp %80 : vector<1x384xi32> to vector<1x384xf32>
    %cst_7 = arith.constant 0.000000e+00 : f32
    %82 = vector.broadcast %cst_7 : f32 to vector<8x1xf32>
    %cst_8 = arith.constant 0.000000e+00 : f32
    %83 = vector.broadcast %cst_8 : f32 to vector<8x1xf32>
    %84 = vector.broadcast %81 : vector<1x384xf32> to vector<8x384xf32>
    %85 = arith.mulf %57, %84 : vector<8x384xf32>
    %cst_9 = arith.constant dense<0.000000e+00> : vector<8xf32>
    %86 = vector.multi_reduction <add>, %85, %cst_9 [1] : vector<8x384xf32> to vector<8xf32>
    %87 = vector.shape_cast %86 : vector<8xf32> to vector<8x1xf32>
    %88 = arith.addf %82, %87 : vector<8x1xf32>
    %89 = arith.mulf %85, %57 : vector<8x384xf32>
    %cst_10 = arith.constant dense<0.000000e+00> : vector<8xf32>
    %90 = vector.multi_reduction <add>, %89, %cst_10 [1] : vector<8x384xf32> to vector<8xf32>
    %91 = vector.shape_cast %90 : vector<8xf32> to vector<8x1xf32>
    %92 = arith.addf %83, %91 : vector<8x1xf32>
    %cst_11 = arith.constant 3.906250e-03 : f32
    %93 = vector.broadcast %cst_11 : f32 to vector<8x1xf32>
    %94 = arith.mulf %88, %93 : vector<8x1xf32>
    %cst_12 = arith.constant 3.906250e-03 : f32
    %95 = vector.broadcast %cst_12 : f32 to vector<8x1xf32>
    %96 = arith.mulf %92, %95 : vector<8x1xf32>
    %97 = arith.mulf %94, %94 : vector<8x1xf32>
    %98 = arith.subf %96, %97 : vector<8x1xf32>
    %cst_13 = arith.constant 0.000000e+00 : f32
    %99 = vector.broadcast %cst_13 : f32 to vector<8x1xf32>
    %100 = arith.maximumf %98, %99 : vector<8x1xf32>
    %cst_14 = arith.constant 9.99999974E-6 : f32
    %101 = vector.broadcast %cst_14 : f32 to vector<8x1xf32>
    %102 = arith.addf %100, %101 : vector<8x1xf32>
    %103 = math.rsqrt %102 : vector<8x1xf32>
    %104 = vector.broadcast %94 : vector<8x1xf32> to vector<8x384xf32>
    %105 = arith.subf %57, %104 : vector<8x384xf32>
    %106 = vector.broadcast %103 : vector<8x1xf32> to vector<8x384xf32>
    %107 = arith.mulf %105, %106 : vector<8x384xf32>
    %cst_15 = arith.constant 0.000000e+00 : f32
    %108 = vector.broadcast %cst_15 : f32 to vector<8x384xf32>
    %109 = arith.maximumf %107, %108 : vector<8x384xf32>
    %110 = arith.truncf %109 : vector<8x384xf32> to vector<8x384xbf16>
    %c0_16 = arith.constant 0 : index
    %c0_17 = arith.constant 0 : index
    %c0_18 = arith.constant 0 : index
    %111 = vector.load %arg3[%c0_16, %c0_17, %c0_18] : memref<1x8x384xbf16, #tpu.memory_space<vmem>>, vector<1x8x384xbf16>
    %112 = vector.shape_cast %111 : vector<1x8x384xbf16> to vector<8x384xbf16>
    %113 = vector.shape_cast %110 : vector<8x384xbf16> to vector<1x8x384xbf16>
    tpu.vector_store %arg3[%c0_16, %c0_17, %c0_18], %113 {strides = array<i32>} : memref<1x8x384xbf16, #tpu.memory_space<vmem>>, vector<1x8x384xbf16>,
    return
  }
  func.func @transform_0(%arg0: i32) -> (i32, i32, i32) {
    %c0_i32 = arith.constant 0 : i32
    %c0_i32_0 = arith.constant 0 : i32
    %c0_i32_1 = arith.constant 0 : i32
    return %arg0, %c0_i32, %c0_i32_0 : i32, i32, i32
  }
  func.func @transform_1(%arg0: i32) -> (i32, i32) {
    %c0_i32 = arith.constant 0 : i32
    %c0_i32_0 = arith.constant 0 : i32
    %c0_i32_1 = arith.constant 0 : i32
    return %c0_i32, %c0_i32_0 : i32, i32
  }
  func.func @transform_2(%arg0: i32) -> (i32, i32, i32) {
    %c0_i32 = arith.constant 0 : i32
    %c0_i32_0 = arith.constant 0 : i32
    %c0_i32_1 = arith.constant 0 : i32
    return %arg0, %c0_i32, %c0_i32_0 : i32, i32, i32
  }
}

module attributes {stable_mosaic.version = 11 : i64} {
  func.func @_conv_kernel(%arg0: i32, %arg1: memref<1x32x138xbf16, #tpu.memory_space<vmem>>, %arg2: memref<16x72xf32, #tpu.memory_space<vmem>>, %arg3: memref<1x16x128xbf16, #tpu.memory_space<vmem>>) attributes {dimension_semantics = [#tpu.dimension_semantics<parallel>], iteration_bounds = array<i64: 2>, scalar_prefetch = 0 : i64, scratch_operands = 0 : i64, tpu.core_type = #tpu.core_type<tc>, window_params = [{transform_indices = @transform_0, window_bounds = array<i64: 1, 32, 138>}, {pipeline_mode = #tpu.pipeline_mode<synchronous>, transform_indices = @transform_1, window_bounds = array<i64: 16, 72>}, {transform_indices = @transform_2, window_bounds = array<i64: 1, 16, 128>}]} {
    %c0 = arith.constant 0 : index
    %c0_0 = arith.constant 0 : index
    %c0_1 = arith.constant 0 : index
    %0 = vector.load %arg1[%c0, %c0_0, %c0_1] : memref<1x32x138xbf16, #tpu.memory_space<vmem>>, vector<1x32x138xbf16>
    %1 = vector.shape_cast %0 : vector<1x32x138xbf16> to vector<32x138xbf16>
    %2 = arith.extf %1 : vector<32x138xbf16> to vector<32x138xf32>
    %c0_2 = arith.constant 0 : index
    %c0_3 = arith.constant 0 : index
    %3 = vector.load %arg2[%c0_2, %c0_3] : memref<16x72xf32, #tpu.memory_space<vmem>>, vector<16x72xf32>
    %4 = vector.extract_strided_slice %2 {offsets = [0, 0], sizes = [8, 128], strides = [1, 1]} : vector<32x138xf32> to vector<8x128xf32>
    %5 = vector.extract_strided_slice %2 {offsets = [8, 0], sizes = [8, 128], strides = [1, 1]} : vector<32x138xf32> to vector<8x128xf32>
    %6 = vector.extract_strided_slice %2 {offsets = [0, 1], sizes = [8, 128], strides = [1, 1]} : vector<32x138xf32> to vector<8x128xf32>
    %7 = vector.extract_strided_slice %2 {offsets = [16, 0], sizes = [8, 128], strides = [1, 1]} : vector<32x138xf32> to vector<8x128xf32>
    %8 = vector.extract_strided_slice %2 {offsets = [24, 0], sizes = [8, 128], strides = [1, 1]} : vector<32x138xf32> to vector<8x128xf32>
    %9 = vector.extract_strided_slice %2 {offsets = [16, 1], sizes = [8, 128], strides = [1, 1]} : vector<32x138xf32> to vector<8x128xf32>
    %10 = vector.extract_strided_slice %2 {offsets = [0, 9], sizes = [8, 128], strides = [1, 1]} : vector<32x138xf32> to vector<8x128xf32>
    %11 = vector.extract_strided_slice %2 {offsets = [8, 9], sizes = [8, 128], strides = [1, 1]} : vector<32x138xf32> to vector<8x128xf32>
    %12 = vector.extract_strided_slice %2 {offsets = [0, 10], sizes = [8, 128], strides = [1, 1]} : vector<32x138xf32> to vector<8x128xf32>
    %13 = tpu.concatenate %4, %5, %6, %7, %8, %9, %10, %11, %12 in 0 : vector<8x128xf32>, vector<8x128xf32>, vector<8x128xf32>, vector<8x128xf32>, vector<8x128xf32>, vector<8x128xf32>, vector<8x128xf32>, vector<8x128xf32>, vector<8x128xf32> -> vector<72x128xf32>
    %cst = arith.constant dense<0.000000e+00> : vector<16x128xf32>
    %14 = tpu.matmul %3, %13, %cst {dimension_numbers = #tpu.dot_dimension_numbers<[1], [0], [0], [1], [0, 0, 1, 1], [], []>} : vector<16x72xf32>, vector<72x128xf32>, vector<16x128xf32> -> vector<16x128xf32>
    %15 = tpu.iota {dimensions = array<i32: 1>} : vector<1x128xi32>
    %c9_i32 = arith.constant 9 : i32
    %c0_i32 = arith.constant 0 : i32
    %16 = arith.cmpi eq, %c9_i32, %c0_i32 : i32
    %c1_i32 = arith.constant 1 : i32
    %17 = arith.select %16, %c1_i32, %c9_i32 : i32
    %18 = vector.broadcast %17 : i32 to vector<1x128xi32>
    %19 = arith.remsi %15, %18 : vector<1x128xi32>
    %c0_i32_4 = arith.constant 0 : i32
    %20 = vector.broadcast %c0_i32_4 : i32 to vector<1x128xi32>
    %21 = arith.cmpi ne, %19, %20 : vector<1x128xi32>
    %c0_i32_5 = arith.constant 0 : i32
    %22 = vector.broadcast %c0_i32_5 : i32 to vector<1x128xi32>
    %23 = arith.cmpi slt, %19, %22 : vector<1x128xi32>
    %c0_i32_6 = arith.constant 0 : i32
    %24 = arith.cmpi slt, %17, %c0_i32_6 : i32
    %25 = vector.broadcast %24 : i1 to vector<1x128xi1>
    %26 = vector.broadcast %25 : vector<1x128xi1> to vector<1x128xi1>
    %27 = arith.xori %23, %26 : vector<1x128xi1>
    %28 = arith.andi %27, %21 : vector<1x128xi1>
    %29 = vector.broadcast %17 : i32 to vector<1x128xi32>
    %30 = arith.addi %19, %29 : vector<1x128xi32>
    %31 = arith.select %28, %30, %19 : vector<1x128xi1>, vector<1x128xi32>
    %c8_i32 = arith.constant 8 : i32
    %32 = vector.broadcast %c8_i32 : i32 to vector<1x128xi32>
    %33 = arith.cmpi slt, %31, %32 : vector<1x128xi32>
    %c72_i32 = arith.constant 72 : i32
    %34 = vector.broadcast %c72_i32 : i32 to vector<1x128xi32>
    %35 = arith.cmpi slt, %15, %34 : vector<1x128xi32>
    %36 = arith.andi %33, %35 : vector<1x128xi1>
    %37 = arith.extui %36 : vector<1x128xi1> to vector<1x128xi32>
    %38 = arith.sitofp %37 : vector<1x128xi32> to vector<1x128xf32>
    %cst_7 = arith.constant 0.000000e+00 : f32
    %39 = vector.broadcast %cst_7 : f32 to vector<16x1xf32>
    %cst_8 = arith.constant 0.000000e+00 : f32
    %40 = vector.broadcast %cst_8 : f32 to vector<16x1xf32>
    %41 = vector.broadcast %38 : vector<1x128xf32> to vector<16x128xf32>
    %42 = arith.mulf %14, %41 : vector<16x128xf32>
    %cst_9 = arith.constant dense<0.000000e+00> : vector<16xf32>
    %43 = vector.multi_reduction <add>, %42, %cst_9 [1] : vector<16x128xf32> to vector<16xf32>
    %44 = vector.shape_cast %43 : vector<16xf32> to vector<16x1xf32>
    %45 = arith.addf %39, %44 : vector<16x1xf32>
    %46 = arith.mulf %42, %14 : vector<16x128xf32>
    %cst_10 = arith.constant dense<0.000000e+00> : vector<16xf32>
    %47 = vector.multi_reduction <add>, %46, %cst_10 [1] : vector<16x128xf32> to vector<16xf32>
    %48 = vector.shape_cast %47 : vector<16xf32> to vector<16x1xf32>
    %49 = arith.addf %40, %48 : vector<16x1xf32>
    %cst_11 = arith.constant 1.562500e-02 : f32
    %50 = vector.broadcast %cst_11 : f32 to vector<16x1xf32>
    %51 = arith.mulf %45, %50 : vector<16x1xf32>
    %cst_12 = arith.constant 1.562500e-02 : f32
    %52 = vector.broadcast %cst_12 : f32 to vector<16x1xf32>
    %53 = arith.mulf %49, %52 : vector<16x1xf32>
    %54 = arith.mulf %51, %51 : vector<16x1xf32>
    %55 = arith.subf %53, %54 : vector<16x1xf32>
    %cst_13 = arith.constant 0.000000e+00 : f32
    %56 = vector.broadcast %cst_13 : f32 to vector<16x1xf32>
    %57 = arith.maximumf %55, %56 : vector<16x1xf32>
    %cst_14 = arith.constant 9.99999974E-6 : f32
    %58 = vector.broadcast %cst_14 : f32 to vector<16x1xf32>
    %59 = arith.addf %57, %58 : vector<16x1xf32>
    %60 = math.rsqrt %59 : vector<16x1xf32>
    %61 = vector.broadcast %51 : vector<16x1xf32> to vector<16x128xf32>
    %62 = arith.subf %14, %61 : vector<16x128xf32>
    %63 = vector.broadcast %60 : vector<16x1xf32> to vector<16x128xf32>
    %64 = arith.mulf %62, %63 : vector<16x128xf32>
    %cst_15 = arith.constant 0.000000e+00 : f32
    %65 = vector.broadcast %cst_15 : f32 to vector<16x128xf32>
    %66 = arith.maximumf %64, %65 : vector<16x128xf32>
    %67 = arith.truncf %66 : vector<16x128xf32> to vector<16x128xbf16>
    %c0_16 = arith.constant 0 : index
    %c0_17 = arith.constant 0 : index
    %c0_18 = arith.constant 0 : index
    %68 = vector.load %arg3[%c0_16, %c0_17, %c0_18] : memref<1x16x128xbf16, #tpu.memory_space<vmem>>, vector<1x16x128xbf16>
    %69 = vector.shape_cast %68 : vector<1x16x128xbf16> to vector<16x128xbf16>
    %70 = vector.shape_cast %67 : vector<16x128xbf16> to vector<1x16x128xbf16>
    tpu.vector_store %arg3[%c0_16, %c0_17, %c0_18], %70 {strides = array<i32>} : memref<1x16x128xbf16, #tpu.memory_space<vmem>>, vector<1x16x128xbf16>,
    return
  }
  func.func @transform_0(%arg0: i32) -> (i32, i32, i32) {
    %c0_i32 = arith.constant 0 : i32
    %c0_i32_0 = arith.constant 0 : i32
    %c0_i32_1 = arith.constant 0 : i32
    return %arg0, %c0_i32, %c0_i32_0 : i32, i32, i32
  }
  func.func @transform_1(%arg0: i32) -> (i32, i32) {
    %c0_i32 = arith.constant 0 : i32
    %c0_i32_0 = arith.constant 0 : i32
    %c0_i32_1 = arith.constant 0 : i32
    return %c0_i32, %c0_i32_0 : i32, i32
  }
  func.func @transform_2(%arg0: i32) -> (i32, i32, i32) {
    %c0_i32 = arith.constant 0 : i32
    %c0_i32_0 = arith.constant 0 : i32
    %c0_i32_1 = arith.constant 0 : i32
    return %arg0, %c0_i32, %c0_i32_0 : i32, i32, i32
  }
}

module attributes {stable_mosaic.version = 11 : i64} {
  func.func @_conv_kernel(%arg0: i32, %arg1: memref<1x64x134xbf16, #tpu.memory_space<vmem>>, %arg2: memref<32x144xf32, #tpu.memory_space<vmem>>, %arg3: memref<1x32x128xbf16, #tpu.memory_space<vmem>>) attributes {dimension_semantics = [#tpu.dimension_semantics<parallel>], iteration_bounds = array<i64: 2>, scalar_prefetch = 0 : i64, scratch_operands = 0 : i64, tpu.core_type = #tpu.core_type<tc>, window_params = [{transform_indices = @transform_0, window_bounds = array<i64: 1, 64, 134>}, {pipeline_mode = #tpu.pipeline_mode<synchronous>, transform_indices = @transform_1, window_bounds = array<i64: 32, 144>}, {transform_indices = @transform_2, window_bounds = array<i64: 1, 32, 128>}]} {
    %c0 = arith.constant 0 : index
    %c0_0 = arith.constant 0 : index
    %c0_1 = arith.constant 0 : index
    %0 = vector.load %arg1[%c0, %c0_0, %c0_1] : memref<1x64x134xbf16, #tpu.memory_space<vmem>>, vector<1x64x134xbf16>
    %1 = vector.shape_cast %0 : vector<1x64x134xbf16> to vector<64x134xbf16>
    %2 = arith.extf %1 : vector<64x134xbf16> to vector<64x134xf32>
    %c0_2 = arith.constant 0 : index
    %c0_3 = arith.constant 0 : index
    %3 = vector.load %arg2[%c0_2, %c0_3] : memref<32x144xf32, #tpu.memory_space<vmem>>, vector<32x144xf32>
    %4 = vector.extract_strided_slice %2 {offsets = [0, 0], sizes = [16, 128], strides = [1, 1]} : vector<64x134xf32> to vector<16x128xf32>
    %5 = vector.extract_strided_slice %2 {offsets = [16, 0], sizes = [16, 128], strides = [1, 1]} : vector<64x134xf32> to vector<16x128xf32>
    %6 = vector.extract_strided_slice %2 {offsets = [0, 1], sizes = [16, 128], strides = [1, 1]} : vector<64x134xf32> to vector<16x128xf32>
    %7 = vector.extract_strided_slice %2 {offsets = [32, 0], sizes = [16, 128], strides = [1, 1]} : vector<64x134xf32> to vector<16x128xf32>
    %8 = vector.extract_strided_slice %2 {offsets = [48, 0], sizes = [16, 128], strides = [1, 1]} : vector<64x134xf32> to vector<16x128xf32>
    %9 = vector.extract_strided_slice %2 {offsets = [32, 1], sizes = [16, 128], strides = [1, 1]} : vector<64x134xf32> to vector<16x128xf32>
    %10 = vector.extract_strided_slice %2 {offsets = [0, 5], sizes = [16, 128], strides = [1, 1]} : vector<64x134xf32> to vector<16x128xf32>
    %11 = vector.extract_strided_slice %2 {offsets = [16, 5], sizes = [16, 128], strides = [1, 1]} : vector<64x134xf32> to vector<16x128xf32>
    %12 = vector.extract_strided_slice %2 {offsets = [0, 6], sizes = [16, 128], strides = [1, 1]} : vector<64x134xf32> to vector<16x128xf32>
    %13 = tpu.concatenate %4, %5, %6, %7, %8, %9, %10, %11, %12 in 0 : vector<16x128xf32>, vector<16x128xf32>, vector<16x128xf32>, vector<16x128xf32>, vector<16x128xf32>, vector<16x128xf32>, vector<16x128xf32>, vector<16x128xf32>, vector<16x128xf32> -> vector<144x128xf32>
    %cst = arith.constant dense<0.000000e+00> : vector<32x128xf32>
    %14 = tpu.matmul %3, %13, %cst {dimension_numbers = #tpu.dot_dimension_numbers<[1], [0], [0], [1], [0, 0, 1, 1], [], []>} : vector<32x144xf32>, vector<144x128xf32>, vector<32x128xf32> -> vector<32x128xf32>
    %15 = tpu.iota {dimensions = array<i32: 1>} : vector<1x128xi32>
    %c5_i32 = arith.constant 5 : i32
    %c0_i32 = arith.constant 0 : i32
    %16 = arith.cmpi eq, %c5_i32, %c0_i32 : i32
    %c1_i32 = arith.constant 1 : i32
    %17 = arith.select %16, %c1_i32, %c5_i32 : i32
    %18 = vector.broadcast %17 : i32 to vector<1x128xi32>
    %19 = arith.remsi %15, %18 : vector<1x128xi32>
    %c0_i32_4 = arith.constant 0 : i32
    %20 = vector.broadcast %c0_i32_4 : i32 to vector<1x128xi32>
    %21 = arith.cmpi ne, %19, %20 : vector<1x128xi32>
    %c0_i32_5 = arith.constant 0 : i32
    %22 = vector.broadcast %c0_i32_5 : i32 to vector<1x128xi32>
    %23 = arith.cmpi slt, %19, %22 : vector<1x128xi32>
    %c0_i32_6 = arith.constant 0 : i32
    %24 = arith.cmpi slt, %17, %c0_i32_6 : i32
    %25 = vector.broadcast %24 : i1 to vector<1x128xi1>
    %26 = vector.broadcast %25 : vector<1x128xi1> to vector<1x128xi1>
    %27 = arith.xori %23, %26 : vector<1x128xi1>
    %28 = arith.andi %27, %21 : vector<1x128xi1>
    %29 = vector.broadcast %17 : i32 to vector<1x128xi32>
    %30 = arith.addi %19, %29 : vector<1x128xi32>
    %31 = arith.select %28, %30, %19 : vector<1x128xi1>, vector<1x128xi32>
    %c4_i32 = arith.constant 4 : i32
    %32 = vector.broadcast %c4_i32 : i32 to vector<1x128xi32>
    %33 = arith.cmpi slt, %31, %32 : vector<1x128xi32>
    %c20_i32 = arith.constant 20 : i32
    %34 = vector.broadcast %c20_i32 : i32 to vector<1x128xi32>
    %35 = arith.cmpi slt, %15, %34 : vector<1x128xi32>
    %36 = arith.andi %33, %35 : vector<1x128xi1>
    %37 = arith.extui %36 : vector<1x128xi1> to vector<1x128xi32>
    %38 = arith.sitofp %37 : vector<1x128xi32> to vector<1x128xf32>
    %cst_7 = arith.constant 0.000000e+00 : f32
    %39 = vector.broadcast %cst_7 : f32 to vector<32x1xf32>
    %cst_8 = arith.constant 0.000000e+00 : f32
    %40 = vector.broadcast %cst_8 : f32 to vector<32x1xf32>
    %41 = vector.broadcast %38 : vector<1x128xf32> to vector<32x128xf32>
    %42 = arith.mulf %14, %41 : vector<32x128xf32>
    %cst_9 = arith.constant dense<0.000000e+00> : vector<32xf32>
    %43 = vector.multi_reduction <add>, %42, %cst_9 [1] : vector<32x128xf32> to vector<32xf32>
    %44 = vector.shape_cast %43 : vector<32xf32> to vector<32x1xf32>
    %45 = arith.addf %39, %44 : vector<32x1xf32>
    %46 = arith.mulf %42, %14 : vector<32x128xf32>
    %cst_10 = arith.constant dense<0.000000e+00> : vector<32xf32>
    %47 = vector.multi_reduction <add>, %46, %cst_10 [1] : vector<32x128xf32> to vector<32xf32>
    %48 = vector.shape_cast %47 : vector<32xf32> to vector<32x1xf32>
    %49 = arith.addf %40, %48 : vector<32x1xf32>
    %cst_11 = arith.constant 6.250000e-02 : f32
    %50 = vector.broadcast %cst_11 : f32 to vector<32x1xf32>
    %51 = arith.mulf %45, %50 : vector<32x1xf32>
    %cst_12 = arith.constant 6.250000e-02 : f32
    %52 = vector.broadcast %cst_12 : f32 to vector<32x1xf32>
    %53 = arith.mulf %49, %52 : vector<32x1xf32>
    %54 = arith.mulf %51, %51 : vector<32x1xf32>
    %55 = arith.subf %53, %54 : vector<32x1xf32>
    %cst_13 = arith.constant 0.000000e+00 : f32
    %56 = vector.broadcast %cst_13 : f32 to vector<32x1xf32>
    %57 = arith.maximumf %55, %56 : vector<32x1xf32>
    %cst_14 = arith.constant 9.99999974E-6 : f32
    %58 = vector.broadcast %cst_14 : f32 to vector<32x1xf32>
    %59 = arith.addf %57, %58 : vector<32x1xf32>
    %60 = math.rsqrt %59 : vector<32x1xf32>
    %61 = vector.broadcast %51 : vector<32x1xf32> to vector<32x128xf32>
    %62 = arith.subf %14, %61 : vector<32x128xf32>
    %63 = vector.broadcast %60 : vector<32x1xf32> to vector<32x128xf32>
    %64 = arith.mulf %62, %63 : vector<32x128xf32>
    %cst_15 = arith.constant 0.000000e+00 : f32
    %65 = vector.broadcast %cst_15 : f32 to vector<32x128xf32>
    %66 = arith.maximumf %64, %65 : vector<32x128xf32>
    %67 = arith.truncf %66 : vector<32x128xf32> to vector<32x128xbf16>
    %c0_16 = arith.constant 0 : index
    %c0_17 = arith.constant 0 : index
    %c0_18 = arith.constant 0 : index
    %68 = vector.load %arg3[%c0_16, %c0_17, %c0_18] : memref<1x32x128xbf16, #tpu.memory_space<vmem>>, vector<1x32x128xbf16>
    %69 = vector.shape_cast %68 : vector<1x32x128xbf16> to vector<32x128xbf16>
    %70 = vector.shape_cast %67 : vector<32x128xbf16> to vector<1x32x128xbf16>
    tpu.vector_store %arg3[%c0_16, %c0_17, %c0_18], %70 {strides = array<i32>} : memref<1x32x128xbf16, #tpu.memory_space<vmem>>, vector<1x32x128xbf16>,
    return
  }
  func.func @transform_0(%arg0: i32) -> (i32, i32, i32) {
    %c0_i32 = arith.constant 0 : i32
    %c0_i32_0 = arith.constant 0 : i32
    %c0_i32_1 = arith.constant 0 : i32
    return %arg0, %c0_i32, %c0_i32_0 : i32, i32, i32
  }
  func.func @transform_1(%arg0: i32) -> (i32, i32) {
    %c0_i32 = arith.constant 0 : i32
    %c0_i32_0 = arith.constant 0 : i32
    %c0_i32_1 = arith.constant 0 : i32
    return %c0_i32, %c0_i32_0 : i32, i32
  }
  func.func @transform_2(%arg0: i32) -> (i32, i32, i32) {
    %c0_i32 = arith.constant 0 : i32
    %c0_i32_0 = arith.constant 0 : i32
    %c0_i32_1 = arith.constant 0 : i32
    return %arg0, %c0_i32, %c0_i32_0 : i32, i32, i32
  }
}

module attributes {stable_mosaic.version = 11 : i64} {
  func.func @_conv_kernel(%arg0: i32, %arg1: memref<1x32x142xbf16, #tpu.memory_space<vmem>>, %arg2: memref<32x288xf32, #tpu.memory_space<vmem>>, %arg3: memref<1x32x128xbf16, #tpu.memory_space<vmem>>) attributes {dimension_semantics = [#tpu.dimension_semantics<parallel>], iteration_bounds = array<i64: 2>, scalar_prefetch = 0 : i64, scratch_operands = 0 : i64, tpu.core_type = #tpu.core_type<tc>, window_params = [{transform_indices = @transform_0, window_bounds = array<i64: 1, 32, 142>}, {pipeline_mode = #tpu.pipeline_mode<synchronous>, transform_indices = @transform_1, window_bounds = array<i64: 32, 288>}, {transform_indices = @transform_2, window_bounds = array<i64: 1, 32, 128>}]} {
    %c0 = arith.constant 0 : index
    %c0_0 = arith.constant 0 : index
    %c0_1 = arith.constant 0 : index
    %0 = vector.load %arg1[%c0, %c0_0, %c0_1] : memref<1x32x142xbf16, #tpu.memory_space<vmem>>, vector<1x32x142xbf16>
    %1 = vector.shape_cast %0 : vector<1x32x142xbf16> to vector<32x142xbf16>
    %2 = arith.extf %1 : vector<32x142xbf16> to vector<32x142xf32>
    %c0_2 = arith.constant 0 : index
    %c0_3 = arith.constant 0 : index
    %3 = vector.load %arg2[%c0_2, %c0_3] : memref<32x288xf32, #tpu.memory_space<vmem>>, vector<32x288xf32>
    %4 = vector.extract_strided_slice %2 {offsets = [0, 0], sizes = [32, 128], strides = [1, 1]} : vector<32x142xf32> to vector<32x128xf32>
    %5 = vector.extract_strided_slice %2 {offsets = [0, 1], sizes = [32, 128], strides = [1, 1]} : vector<32x142xf32> to vector<32x128xf32>
    %6 = vector.extract_strided_slice %2 {offsets = [0, 2], sizes = [32, 128], strides = [1, 1]} : vector<32x142xf32> to vector<32x128xf32>
    %7 = vector.extract_strided_slice %2 {offsets = [0, 6], sizes = [32, 128], strides = [1, 1]} : vector<32x142xf32> to vector<32x128xf32>
    %8 = vector.extract_strided_slice %2 {offsets = [0, 7], sizes = [32, 128], strides = [1, 1]} : vector<32x142xf32> to vector<32x128xf32>
    %9 = vector.extract_strided_slice %2 {offsets = [0, 8], sizes = [32, 128], strides = [1, 1]} : vector<32x142xf32> to vector<32x128xf32>
    %10 = vector.extract_strided_slice %2 {offsets = [0, 12], sizes = [32, 128], strides = [1, 1]} : vector<32x142xf32> to vector<32x128xf32>
    %11 = vector.extract_strided_slice %2 {offsets = [0, 13], sizes = [32, 128], strides = [1, 1]} : vector<32x142xf32> to vector<32x128xf32>
    %12 = vector.extract_strided_slice %2 {offsets = [0, 14], sizes = [32, 128], strides = [1, 1]} : vector<32x142xf32> to vector<32x128xf32>
    %13 = tpu.concatenate %4, %5, %6, %7, %8, %9, %10, %11, %12 in 0 : vector<32x128xf32>, vector<32x128xf32>, vector<32x128xf32>, vector<32x128xf32>, vector<32x128xf32>, vector<32x128xf32>, vector<32x128xf32>, vector<32x128xf32>, vector<32x128xf32> -> vector<288x128xf32>
    %cst = arith.constant dense<0.000000e+00> : vector<32x128xf32>
    %14 = tpu.matmul %3, %13, %cst {dimension_numbers = #tpu.dot_dimension_numbers<[1], [0], [0], [1], [0, 0, 1, 1], [], []>} : vector<32x288xf32>, vector<288x128xf32>, vector<32x128xf32> -> vector<32x128xf32>
    %15 = tpu.iota {dimensions = array<i32: 1>} : vector<1x128xi32>
    %c6_i32 = arith.constant 6 : i32
    %c0_i32 = arith.constant 0 : i32
    %16 = arith.cmpi eq, %c6_i32, %c0_i32 : i32
    %c1_i32 = arith.constant 1 : i32
    %17 = arith.select %16, %c1_i32, %c6_i32 : i32
    %18 = vector.broadcast %17 : i32 to vector<1x128xi32>
    %19 = arith.remsi %15, %18 : vector<1x128xi32>
    %c0_i32_4 = arith.constant 0 : i32
    %20 = vector.broadcast %c0_i32_4 : i32 to vector<1x128xi32>
    %21 = arith.cmpi ne, %19, %20 : vector<1x128xi32>
    %c0_i32_5 = arith.constant 0 : i32
    %22 = vector.broadcast %c0_i32_5 : i32 to vector<1x128xi32>
    %23 = arith.cmpi slt, %19, %22 : vector<1x128xi32>
    %c0_i32_6 = arith.constant 0 : i32
    %24 = arith.cmpi slt, %17, %c0_i32_6 : i32
    %25 = vector.broadcast %24 : i1 to vector<1x128xi1>
    %26 = vector.broadcast %25 : vector<1x128xi1> to vector<1x128xi1>
    %27 = arith.xori %23, %26 : vector<1x128xi1>
    %28 = arith.andi %27, %21 : vector<1x128xi1>
    %29 = vector.broadcast %17 : i32 to vector<1x128xi32>
    %30 = arith.addi %19, %29 : vector<1x128xi32>
    %31 = arith.select %28, %30, %19 : vector<1x128xi1>, vector<1x128xi32>
    %c4_i32 = arith.constant 4 : i32
    %32 = vector.broadcast %c4_i32 : i32 to vector<1x128xi32>
    %33 = arith.cmpi slt, %31, %32 : vector<1x128xi32>
    %c24_i32 = arith.constant 24 : i32
    %34 = vector.broadcast %c24_i32 : i32 to vector<1x128xi32>
    %35 = arith.cmpi slt, %15, %34 : vector<1x128xi32>
    %36 = arith.andi %33, %35 : vector<1x128xi1>
    %37 = arith.extui %36 : vector<1x128xi1> to vector<1x128xi32>
    %38 = arith.sitofp %37 : vector<1x128xi32> to vector<1x128xf32>
    %cst_7 = arith.constant 0.000000e+00 : f32
    %39 = vector.broadcast %cst_7 : f32 to vector<32x1xf32>
    %cst_8 = arith.constant 0.000000e+00 : f32
    %40 = vector.broadcast %cst_8 : f32 to vector<32x1xf32>
    %41 = vector.broadcast %38 : vector<1x128xf32> to vector<32x128xf32>
    %42 = arith.mulf %14, %41 : vector<32x128xf32>
    %cst_9 = arith.constant dense<0.000000e+00> : vector<32xf32>
    %43 = vector.multi_reduction <add>, %42, %cst_9 [1] : vector<32x128xf32> to vector<32xf32>
    %44 = vector.shape_cast %43 : vector<32xf32> to vector<32x1xf32>
    %45 = arith.addf %39, %44 : vector<32x1xf32>
    %46 = arith.mulf %42, %14 : vector<32x128xf32>
    %cst_10 = arith.constant dense<0.000000e+00> : vector<32xf32>
    %47 = vector.multi_reduction <add>, %46, %cst_10 [1] : vector<32x128xf32> to vector<32xf32>
    %48 = vector.shape_cast %47 : vector<32xf32> to vector<32x1xf32>
    %49 = arith.addf %40, %48 : vector<32x1xf32>
    %cst_11 = arith.constant 6.250000e-02 : f32
    %50 = vector.broadcast %cst_11 : f32 to vector<32x1xf32>
    %51 = arith.mulf %45, %50 : vector<32x1xf32>
    %cst_12 = arith.constant 6.250000e-02 : f32
    %52 = vector.broadcast %cst_12 : f32 to vector<32x1xf32>
    %53 = arith.mulf %49, %52 : vector<32x1xf32>
    %54 = arith.mulf %51, %51 : vector<32x1xf32>
    %55 = arith.subf %53, %54 : vector<32x1xf32>
    %cst_13 = arith.constant 0.000000e+00 : f32
    %56 = vector.broadcast %cst_13 : f32 to vector<32x1xf32>
    %57 = arith.maximumf %55, %56 : vector<32x1xf32>
    %cst_14 = arith.constant 9.99999974E-6 : f32
    %58 = vector.broadcast %cst_14 : f32 to vector<32x1xf32>
    %59 = arith.addf %57, %58 : vector<32x1xf32>
    %60 = math.rsqrt %59 : vector<32x1xf32>
    %61 = vector.broadcast %51 : vector<32x1xf32> to vector<32x128xf32>
    %62 = arith.subf %14, %61 : vector<32x128xf32>
    %63 = vector.broadcast %60 : vector<32x1xf32> to vector<32x128xf32>
    %64 = arith.mulf %62, %63 : vector<32x128xf32>
    %cst_15 = arith.constant 0.000000e+00 : f32
    %65 = vector.broadcast %cst_15 : f32 to vector<32x128xf32>
    %66 = arith.maximumf %64, %65 : vector<32x128xf32>
    %67 = arith.truncf %66 : vector<32x128xf32> to vector<32x128xbf16>
    %c0_16 = arith.constant 0 : index
    %c0_17 = arith.constant 0 : index
    %c0_18 = arith.constant 0 : index
    %68 = vector.load %arg3[%c0_16, %c0_17, %c0_18] : memref<1x32x128xbf16, #tpu.memory_space<vmem>>, vector<1x32x128xbf16>
    %69 = vector.shape_cast %68 : vector<1x32x128xbf16> to vector<32x128xbf16>
    %70 = vector.shape_cast %67 : vector<32x128xbf16> to vector<1x32x128xbf16>
    tpu.vector_store %arg3[%c0_16, %c0_17, %c0_18], %70 {strides = array<i32>} : memref<1x32x128xbf16, #tpu.memory_space<vmem>>, vector<1x32x128xbf16>,
    return
  }
  func.func @transform_0(%arg0: i32) -> (i32, i32, i32) {
    %c0_i32 = arith.constant 0 : i32
    %c0_i32_0 = arith.constant 0 : i32
    %c0_i32_1 = arith.constant 0 : i32
    return %arg0, %c0_i32, %c0_i32_0 : i32, i32, i32
  }
  func.func @transform_1(%arg0: i32) -> (i32, i32) {
    %c0_i32 = arith.constant 0 : i32
    %c0_i32_0 = arith.constant 0 : i32
    %c0_i32_1 = arith.constant 0 : i32
    return %c0_i32, %c0_i32_0 : i32, i32
  }
  func.func @transform_2(%arg0: i32) -> (i32, i32, i32) {
    %c0_i32 = arith.constant 0 : i32
    %c0_i32_0 = arith.constant 0 : i32
    %c0_i32_1 = arith.constant 0 : i32
    return %arg0, %c0_i32, %c0_i32_0 : i32, i32, i32
  }
}

module attributes {stable_mosaic.version = 11 : i64} {
  func.func @_conv_kernel(%arg0: i32, %arg1: memref<1x32x142xbf16, #tpu.memory_space<vmem>>, %arg2: memref<32x288xf32, #tpu.memory_space<vmem>>, %arg3: memref<1x32x128xbf16, #tpu.memory_space<vmem>>, %arg4: memref<1x32x128xbf16, #tpu.memory_space<vmem>>) attributes {dimension_semantics = [#tpu.dimension_semantics<parallel>], iteration_bounds = array<i64: 2>, scalar_prefetch = 0 : i64, scratch_operands = 0 : i64, tpu.core_type = #tpu.core_type<tc>, window_params = [{transform_indices = @transform_0, window_bounds = array<i64: 1, 32, 142>}, {pipeline_mode = #tpu.pipeline_mode<synchronous>, transform_indices = @transform_1, window_bounds = array<i64: 32, 288>}, {transform_indices = @transform_2, window_bounds = array<i64: 1, 32, 128>}, {transform_indices = @transform_3, window_bounds = array<i64: 1, 32, 128>}]} {
    %c0 = arith.constant 0 : index
    %c0_0 = arith.constant 0 : index
    %c0_1 = arith.constant 0 : index
    %0 = vector.load %arg1[%c0, %c0_0, %c0_1] : memref<1x32x142xbf16, #tpu.memory_space<vmem>>, vector<1x32x142xbf16>
    %1 = vector.shape_cast %0 : vector<1x32x142xbf16> to vector<32x142xbf16>
    %2 = arith.extf %1 : vector<32x142xbf16> to vector<32x142xf32>
    %c0_2 = arith.constant 0 : index
    %c0_3 = arith.constant 0 : index
    %3 = vector.load %arg2[%c0_2, %c0_3] : memref<32x288xf32, #tpu.memory_space<vmem>>, vector<32x288xf32>
    %4 = vector.extract_strided_slice %2 {offsets = [0, 0], sizes = [32, 128], strides = [1, 1]} : vector<32x142xf32> to vector<32x128xf32>
    %5 = vector.extract_strided_slice %2 {offsets = [0, 1], sizes = [32, 128], strides = [1, 1]} : vector<32x142xf32> to vector<32x128xf32>
    %6 = vector.extract_strided_slice %2 {offsets = [0, 2], sizes = [32, 128], strides = [1, 1]} : vector<32x142xf32> to vector<32x128xf32>
    %7 = vector.extract_strided_slice %2 {offsets = [0, 6], sizes = [32, 128], strides = [1, 1]} : vector<32x142xf32> to vector<32x128xf32>
    %8 = vector.extract_strided_slice %2 {offsets = [0, 7], sizes = [32, 128], strides = [1, 1]} : vector<32x142xf32> to vector<32x128xf32>
    %9 = vector.extract_strided_slice %2 {offsets = [0, 8], sizes = [32, 128], strides = [1, 1]} : vector<32x142xf32> to vector<32x128xf32>
    %10 = vector.extract_strided_slice %2 {offsets = [0, 12], sizes = [32, 128], strides = [1, 1]} : vector<32x142xf32> to vector<32x128xf32>
    %11 = vector.extract_strided_slice %2 {offsets = [0, 13], sizes = [32, 128], strides = [1, 1]} : vector<32x142xf32> to vector<32x128xf32>
    %12 = vector.extract_strided_slice %2 {offsets = [0, 14], sizes = [32, 128], strides = [1, 1]} : vector<32x142xf32> to vector<32x128xf32>
    %13 = tpu.concatenate %4, %5, %6, %7, %8, %9, %10, %11, %12 in 0 : vector<32x128xf32>, vector<32x128xf32>, vector<32x128xf32>, vector<32x128xf32>, vector<32x128xf32>, vector<32x128xf32>, vector<32x128xf32>, vector<32x128xf32>, vector<32x128xf32> -> vector<288x128xf32>
    %cst = arith.constant dense<0.000000e+00> : vector<32x128xf32>
    %14 = tpu.matmul %3, %13, %cst {dimension_numbers = #tpu.dot_dimension_numbers<[1], [0], [0], [1], [0, 0, 1, 1], [], []>} : vector<32x288xf32>, vector<288x128xf32>, vector<32x128xf32> -> vector<32x128xf32>
    %15 = tpu.iota {dimensions = array<i32: 1>} : vector<1x128xi32>
    %c6_i32 = arith.constant 6 : i32
    %c0_i32 = arith.constant 0 : i32
    %16 = arith.cmpi eq, %c6_i32, %c0_i32 : i32
    %c1_i32 = arith.constant 1 : i32
    %17 = arith.select %16, %c1_i32, %c6_i32 : i32
    %18 = vector.broadcast %17 : i32 to vector<1x128xi32>
    %19 = arith.remsi %15, %18 : vector<1x128xi32>
    %c0_i32_4 = arith.constant 0 : i32
    %20 = vector.broadcast %c0_i32_4 : i32 to vector<1x128xi32>
    %21 = arith.cmpi ne, %19, %20 : vector<1x128xi32>
    %c0_i32_5 = arith.constant 0 : i32
    %22 = vector.broadcast %c0_i32_5 : i32 to vector<1x128xi32>
    %23 = arith.cmpi slt, %19, %22 : vector<1x128xi32>
    %c0_i32_6 = arith.constant 0 : i32
    %24 = arith.cmpi slt, %17, %c0_i32_6 : i32
    %25 = vector.broadcast %24 : i1 to vector<1x128xi1>
    %26 = vector.broadcast %25 : vector<1x128xi1> to vector<1x128xi1>
    %27 = arith.xori %23, %26 : vector<1x128xi1>
    %28 = arith.andi %27, %21 : vector<1x128xi1>
    %29 = vector.broadcast %17 : i32 to vector<1x128xi32>
    %30 = arith.addi %19, %29 : vector<1x128xi32>
    %31 = arith.select %28, %30, %19 : vector<1x128xi1>, vector<1x128xi32>
    %c4_i32 = arith.constant 4 : i32
    %32 = vector.broadcast %c4_i32 : i32 to vector<1x128xi32>
    %33 = arith.cmpi slt, %31, %32 : vector<1x128xi32>
    %c24_i32 = arith.constant 24 : i32
    %34 = vector.broadcast %c24_i32 : i32 to vector<1x128xi32>
    %35 = arith.cmpi slt, %15, %34 : vector<1x128xi32>
    %36 = arith.andi %33, %35 : vector<1x128xi1>
    %37 = arith.extui %36 : vector<1x128xi1> to vector<1x128xi32>
    %38 = arith.sitofp %37 : vector<1x128xi32> to vector<1x128xf32>
    %cst_7 = arith.constant 0.000000e+00 : f32
    %39 = vector.broadcast %cst_7 : f32 to vector<32x1xf32>
    %cst_8 = arith.constant 0.000000e+00 : f32
    %40 = vector.broadcast %cst_8 : f32 to vector<32x1xf32>
    %41 = vector.broadcast %38 : vector<1x128xf32> to vector<32x128xf32>
    %42 = arith.mulf %14, %41 : vector<32x128xf32>
    %cst_9 = arith.constant dense<0.000000e+00> : vector<32xf32>
    %43 = vector.multi_reduction <add>, %42, %cst_9 [1] : vector<32x128xf32> to vector<32xf32>
    %44 = vector.shape_cast %43 : vector<32xf32> to vector<32x1xf32>
    %45 = arith.addf %39, %44 : vector<32x1xf32>
    %46 = arith.mulf %42, %14 : vector<32x128xf32>
    %cst_10 = arith.constant dense<0.000000e+00> : vector<32xf32>
    %47 = vector.multi_reduction <add>, %46, %cst_10 [1] : vector<32x128xf32> to vector<32xf32>
    %48 = vector.shape_cast %47 : vector<32xf32> to vector<32x1xf32>
    %49 = arith.addf %40, %48 : vector<32x1xf32>
    %cst_11 = arith.constant 6.250000e-02 : f32
    %50 = vector.broadcast %cst_11 : f32 to vector<32x1xf32>
    %51 = arith.mulf %45, %50 : vector<32x1xf32>
    %cst_12 = arith.constant 6.250000e-02 : f32
    %52 = vector.broadcast %cst_12 : f32 to vector<32x1xf32>
    %53 = arith.mulf %49, %52 : vector<32x1xf32>
    %54 = arith.mulf %51, %51 : vector<32x1xf32>
    %55 = arith.subf %53, %54 : vector<32x1xf32>
    %cst_13 = arith.constant 0.000000e+00 : f32
    %56 = vector.broadcast %cst_13 : f32 to vector<32x1xf32>
    %57 = arith.maximumf %55, %56 : vector<32x1xf32>
    %cst_14 = arith.constant 9.99999974E-6 : f32
    %58 = vector.broadcast %cst_14 : f32 to vector<32x1xf32>
    %59 = arith.addf %57, %58 : vector<32x1xf32>
    %60 = math.rsqrt %59 : vector<32x1xf32>
    %61 = vector.broadcast %51 : vector<32x1xf32> to vector<32x128xf32>
    %62 = arith.subf %14, %61 : vector<32x128xf32>
    %63 = vector.broadcast %60 : vector<32x1xf32> to vector<32x128xf32>
    %64 = arith.mulf %62, %63 : vector<32x128xf32>
    %c0_15 = arith.constant 0 : index
    %c0_16 = arith.constant 0 : index
    %c0_17 = arith.constant 0 : index
    %65 = vector.load %arg3[%c0_15, %c0_16, %c0_17] : memref<1x32x128xbf16, #tpu.memory_space<vmem>>, vector<1x32x128xbf16>
    %66 = vector.shape_cast %65 : vector<1x32x128xbf16> to vector<32x128xbf16>
    %67 = arith.extf %66 : vector<32x128xbf16> to vector<32x128xf32>
    %cst_18 = arith.constant 1.000000e+00 : f32
    %68 = vector.broadcast %cst_18 : f32 to vector<32x128xf32>
    %69 = arith.mulf %68, %64 : vector<32x128xf32>
    %70 = arith.addf %67, %69 : vector<32x128xf32>
    %71 = arith.truncf %70 : vector<32x128xf32> to vector<32x128xbf16>
    %c0_19 = arith.constant 0 : index
    %c0_20 = arith.constant 0 : index
    %c0_21 = arith.constant 0 : index
    %72 = vector.load %arg4[%c0_19, %c0_20, %c0_21] : memref<1x32x128xbf16, #tpu.memory_space<vmem>>, vector<1x32x128xbf16>
    %73 = vector.shape_cast %72 : vector<1x32x128xbf16> to vector<32x128xbf16>
    %74 = vector.shape_cast %71 : vector<32x128xbf16> to vector<1x32x128xbf16>
    tpu.vector_store %arg4[%c0_19, %c0_20, %c0_21], %74 {strides = array<i32>} : memref<1x32x128xbf16, #tpu.memory_space<vmem>>, vector<1x32x128xbf16>,
    return
  }
  func.func @transform_0(%arg0: i32) -> (i32, i32, i32) {
    %c0_i32 = arith.constant 0 : i32
    %c0_i32_0 = arith.constant 0 : i32
    %c0_i32_1 = arith.constant 0 : i32
    return %arg0, %c0_i32, %c0_i32_0 : i32, i32, i32
  }
  func.func @transform_1(%arg0: i32) -> (i32, i32) {
    %c0_i32 = arith.constant 0 : i32
    %c0_i32_0 = arith.constant 0 : i32
    %c0_i32_1 = arith.constant 0 : i32
    return %c0_i32, %c0_i32_0 : i32, i32
  }
  func.func @transform_2(%arg0: i32) -> (i32, i32, i32) {
    %c0_i32 = arith.constant 0 : i32
    %c0_i32_0 = arith.constant 0 : i32
    %c0_i32_1 = arith.constant 0 : i32
    return %arg0, %c0_i32, %c0_i32_0 : i32, i32, i32
  }
  func.func @transform_3(%arg0: i32) -> (i32, i32, i32) {
    %c0_i32 = arith.constant 0 : i32
    %c0_i32_0 = arith.constant 0 : i32
    %c0_i32_1 = arith.constant 0 : i32
    return %arg0, %c0_i32, %c0_i32_0 : i32, i32, i32
  }
}

module attributes {stable_mosaic.version = 11 : i64} {
  func.func @_conv_kernel(%arg0: i32, %arg1: memref<1x32x134xbf16, #tpu.memory_space<vmem>>, %arg2: memref<16x288xf32, #tpu.memory_space<vmem>>, %arg3: memref<1x64x128xbf16, #tpu.memory_space<vmem>>) attributes {dimension_semantics = [#tpu.dimension_semantics<parallel>], iteration_bounds = array<i64: 2>, scalar_prefetch = 0 : i64, scratch_operands = 0 : i64, tpu.core_type = #tpu.core_type<tc>, window_params = [{transform_indices = @transform_0, window_bounds = array<i64: 1, 32, 134>}, {pipeline_mode = #tpu.pipeline_mode<synchronous>, transform_indices = @transform_1, window_bounds = array<i64: 16, 288>}, {transform_indices = @transform_2, window_bounds = array<i64: 1, 64, 128>}]} {
    %c0 = arith.constant 0 : index
    %c0_0 = arith.constant 0 : index
    %c0_1 = arith.constant 0 : index
    %0 = vector.load %arg1[%c0, %c0_0, %c0_1] : memref<1x32x134xbf16, #tpu.memory_space<vmem>>, vector<1x32x134xbf16>
    %1 = vector.shape_cast %0 : vector<1x32x134xbf16> to vector<32x134xbf16>
    %2 = arith.extf %1 : vector<32x134xbf16> to vector<32x134xf32>
    %c0_2 = arith.constant 0 : index
    %c0_3 = arith.constant 0 : index
    %3 = vector.load %arg2[%c0_2, %c0_3] : memref<16x288xf32, #tpu.memory_space<vmem>>, vector<16x288xf32>
    %4 = vector.extract_strided_slice %2 {offsets = [0, 0], sizes = [32, 128], strides = [1, 1]} : vector<32x134xf32> to vector<32x128xf32>
    %5 = vector.extract_strided_slice %3 {offsets = [0, 0], sizes = [16, 32], strides = [1, 1]} : vector<16x288xf32> to vector<16x32xf32>
    %cst = arith.constant dense<0.000000e+00> : vector<16x128xf32>
    %6 = tpu.matmul %5, %4, %cst {dimension_numbers = #tpu.dot_dimension_numbers<[1], [0], [0], [1], [0, 0, 1, 1], [], []>} : vector<16x32xf32>, vector<32x128xf32>, vector<16x128xf32> -> vector<16x128xf32>
    %7 = vector.extract_strided_slice %2 {offsets = [0, 0], sizes = [32, 128], strides = [1, 1]} : vector<32x134xf32> to vector<32x128xf32>
    %8 = vector.extract_strided_slice %2 {offsets = [0, 1], sizes = [32, 128], strides = [1, 1]} : vector<32x134xf32> to vector<32x128xf32>
    %9 = tpu.concatenate %7, %8 in 0 : vector<32x128xf32>, vector<32x128xf32> -> vector<64x128xf32>
    %10 = vector.extract_strided_slice %3 {offsets = [0, 32], sizes = [16, 64], strides = [1, 1]} : vector<16x288xf32> to vector<16x64xf32>
    %cst_4 = arith.constant dense<0.000000e+00> : vector<16x128xf32>
    %11 = tpu.matmul %10, %9, %cst_4 {dimension_numbers = #tpu.dot_dimension_numbers<[1], [0], [0], [1], [0, 0, 1, 1], [], []>} : vector<16x64xf32>, vector<64x128xf32>, vector<16x128xf32> -> vector<16x128xf32>
    %12 = vector.extract_strided_slice %2 {offsets = [0, 0], sizes = [32, 128], strides = [1, 1]} : vector<32x134xf32> to vector<32x128xf32>
    %13 = vector.extract_strided_slice %2 {offsets = [0, 5], sizes = [32, 128], strides = [1, 1]} : vector<32x134xf32> to vector<32x128xf32>
    %14 = tpu.concatenate %12, %13 in 0 : vector<32x128xf32>, vector<32x128xf32> -> vector<64x128xf32>
    %15 = vector.extract_strided_slice %3 {offsets = [0, 96], sizes = [16, 64], strides = [1, 1]} : vector<16x288xf32> to vector<16x64xf32>
    %cst_5 = arith.constant dense<0.000000e+00> : vector<16x128xf32>
    %16 = tpu.matmul %15, %14, %cst_5 {dimension_numbers = #tpu.dot_dimension_numbers<[1], [0], [0], [1], [0, 0, 1, 1], [], []>} : vector<16x64xf32>, vector<64x128xf32>, vector<16x128xf32> -> vector<16x128xf32>
    %17 = vector.extract_strided_slice %2 {offsets = [0, 0], sizes = [32, 128], strides = [1, 1]} : vector<32x134xf32> to vector<32x128xf32>
    %18 = vector.extract_strided_slice %2 {offsets = [0, 1], sizes = [32, 128], strides = [1, 1]} : vector<32x134xf32> to vector<32x128xf32>
    %19 = vector.extract_strided_slice %2 {offsets = [0, 5], sizes = [32, 128], strides = [1, 1]} : vector<32x134xf32> to vector<32x128xf32>
    %20 = vector.extract_strided_slice %2 {offsets = [0, 6], sizes = [32, 128], strides = [1, 1]} : vector<32x134xf32> to vector<32x128xf32>
    %21 = tpu.concatenate %17, %18, %19, %20 in 0 : vector<32x128xf32>, vector<32x128xf32>, vector<32x128xf32>, vector<32x128xf32> -> vector<128x128xf32>
    %22 = vector.extract_strided_slice %3 {offsets = [0, 160], sizes = [16, 128], strides = [1, 1]} : vector<16x288xf32> to vector<16x128xf32>
    %cst_6 = arith.constant dense<0.000000e+00> : vector<16x128xf32>
    %23 = tpu.matmul %22, %21, %cst_6 {dimension_numbers = #tpu.dot_dimension_numbers<[1], [0], [0], [1], [0, 0, 1, 1], [], []>} : vector<16x128xf32>, vector<128x128xf32>, vector<16x128xf32> -> vector<16x128xf32>
    %24 = tpu.iota {dimensions = array<i32: 1>} : vector<1x128xi32>
    %c5_i32 = arith.constant 5 : i32
    %c0_i32 = arith.constant 0 : i32
    %25 = arith.cmpi eq, %c5_i32, %c0_i32 : i32
    %c1_i32 = arith.constant 1 : i32
    %26 = arith.select %25, %c1_i32, %c5_i32 : i32
    %27 = vector.broadcast %26 : i32 to vector<1x128xi32>
    %28 = arith.remsi %24, %27 : vector<1x128xi32>
    %c0_i32_7 = arith.constant 0 : i32
    %29 = vector.broadcast %c0_i32_7 : i32 to vector<1x128xi32>
    %30 = arith.cmpi ne, %28, %29 : vector<1x128xi32>
    %c0_i32_8 = arith.constant 0 : i32
    %31 = vector.broadcast %c0_i32_8 : i32 to vector<1x128xi32>
    %32 = arith.cmpi slt, %28, %31 : vector<1x128xi32>
    %c0_i32_9 = arith.constant 0 : i32
    %33 = arith.cmpi slt, %26, %c0_i32_9 : i32
    %34 = vector.broadcast %33 : i1 to vector<1x128xi1>
    %35 = vector.broadcast %34 : vector<1x128xi1> to vector<1x128xi1>
    %36 = arith.xori %32, %35 : vector<1x128xi1>
    %37 = arith.andi %36, %30 : vector<1x128xi1>
    %38 = vector.broadcast %26 : i32 to vector<1x128xi32>
    %39 = arith.addi %28, %38 : vector<1x128xi32>
    %40 = arith.select %37, %39, %28 : vector<1x128xi1>, vector<1x128xi32>
    %c4_i32 = arith.constant 4 : i32
    %41 = vector.broadcast %c4_i32 : i32 to vector<1x128xi32>
    %42 = arith.cmpi slt, %40, %41 : vector<1x128xi32>
    %c20_i32 = arith.constant 20 : i32
    %43 = vector.broadcast %c20_i32 : i32 to vector<1x128xi32>
    %44 = arith.cmpi slt, %24, %43 : vector<1x128xi32>
    %45 = arith.andi %42, %44 : vector<1x128xi1>
    %46 = arith.extui %45 : vector<1x128xi1> to vector<1x128xi32>
    %47 = arith.sitofp %46 : vector<1x128xi32> to vector<1x128xf32>
    %cst_10 = arith.constant 0.000000e+00 : f32
    %48 = vector.broadcast %cst_10 : f32 to vector<16x1xf32>
    %cst_11 = arith.constant 0.000000e+00 : f32
    %49 = vector.broadcast %cst_11 : f32 to vector<16x1xf32>
    %50 = vector.broadcast %47 : vector<1x128xf32> to vector<16x128xf32>
    %51 = arith.mulf %6, %50 : vector<16x128xf32>
    %cst_12 = arith.constant dense<0.000000e+00> : vector<16xf32>
    %52 = vector.multi_reduction <add>, %51, %cst_12 [1] : vector<16x128xf32> to vector<16xf32>
    %53 = vector.shape_cast %52 : vector<16xf32> to vector<16x1xf32>
    %54 = arith.addf %48, %53 : vector<16x1xf32>
    %55 = arith.mulf %51, %6 : vector<16x128xf32>
    %cst_13 = arith.constant dense<0.000000e+00> : vector<16xf32>
    %56 = vector.multi_reduction <add>, %55, %cst_13 [1] : vector<16x128xf32> to vector<16xf32>
    %57 = vector.shape_cast %56 : vector<16xf32> to vector<16x1xf32>
    %58 = arith.addf %49, %57 : vector<16x1xf32>
    %59 = vector.broadcast %47 : vector<1x128xf32> to vector<16x128xf32>
    %60 = arith.mulf %11, %59 : vector<16x128xf32>
    %cst_14 = arith.constant dense<0.000000e+00> : vector<16xf32>
    %61 = vector.multi_reduction <add>, %60, %cst_14 [1] : vector<16x128xf32> to vector<16xf32>
    %62 = vector.shape_cast %61 : vector<16xf32> to vector<16x1xf32>
    %63 = arith.addf %54, %62 : vector<16x1xf32>
    %64 = arith.mulf %60, %11 : vector<16x128xf32>
    %cst_15 = arith.constant dense<0.000000e+00> : vector<16xf32>
    %65 = vector.multi_reduction <add>, %64, %cst_15 [1] : vector<16x128xf32> to vector<16xf32>
    %66 = vector.shape_cast %65 : vector<16xf32> to vector<16x1xf32>
    %67 = arith.addf %58, %66 : vector<16x1xf32>
    %68 = vector.broadcast %47 : vector<1x128xf32> to vector<16x128xf32>
    %69 = arith.mulf %16, %68 : vector<16x128xf32>
    %cst_16 = arith.constant dense<0.000000e+00> : vector<16xf32>
    %70 = vector.multi_reduction <add>, %69, %cst_16 [1] : vector<16x128xf32> to vector<16xf32>
    %71 = vector.shape_cast %70 : vector<16xf32> to vector<16x1xf32>
    %72 = arith.addf %63, %71 : vector<16x1xf32>
    %73 = arith.mulf %69, %16 : vector<16x128xf32>
    %cst_17 = arith.constant dense<0.000000e+00> : vector<16xf32>
    %74 = vector.multi_reduction <add>, %73, %cst_17 [1] : vector<16x128xf32> to vector<16xf32>
    %75 = vector.shape_cast %74 : vector<16xf32> to vector<16x1xf32>
    %76 = arith.addf %67, %75 : vector<16x1xf32>
    %77 = vector.broadcast %47 : vector<1x128xf32> to vector<16x128xf32>
    %78 = arith.mulf %23, %77 : vector<16x128xf32>
    %cst_18 = arith.constant dense<0.000000e+00> : vector<16xf32>
    %79 = vector.multi_reduction <add>, %78, %cst_18 [1] : vector<16x128xf32> to vector<16xf32>
    %80 = vector.shape_cast %79 : vector<16xf32> to vector<16x1xf32>
    %81 = arith.addf %72, %80 : vector<16x1xf32>
    %82 = arith.mulf %78, %23 : vector<16x128xf32>
    %cst_19 = arith.constant dense<0.000000e+00> : vector<16xf32>
    %83 = vector.multi_reduction <add>, %82, %cst_19 [1] : vector<16x128xf32> to vector<16xf32>
    %84 = vector.shape_cast %83 : vector<16xf32> to vector<16x1xf32>
    %85 = arith.addf %76, %84 : vector<16x1xf32>
    %cst_20 = arith.constant 1.562500e-02 : f32
    %86 = vector.broadcast %cst_20 : f32 to vector<16x1xf32>
    %87 = arith.mulf %81, %86 : vector<16x1xf32>
    %cst_21 = arith.constant 1.562500e-02 : f32
    %88 = vector.broadcast %cst_21 : f32 to vector<16x1xf32>
    %89 = arith.mulf %85, %88 : vector<16x1xf32>
    %90 = arith.mulf %87, %87 : vector<16x1xf32>
    %91 = arith.subf %89, %90 : vector<16x1xf32>
    %cst_22 = arith.constant 0.000000e+00 : f32
    %92 = vector.broadcast %cst_22 : f32 to vector<16x1xf32>
    %93 = arith.maximumf %91, %92 : vector<16x1xf32>
    %cst_23 = arith.constant 9.99999974E-6 : f32
    %94 = vector.broadcast %cst_23 : f32 to vector<16x1xf32>
    %95 = arith.addf %93, %94 : vector<16x1xf32>
    %96 = math.rsqrt %95 : vector<16x1xf32>
    %97 = vector.broadcast %87 : vector<16x1xf32> to vector<16x128xf32>
    %98 = arith.subf %6, %97 : vector<16x128xf32>
    %99 = vector.broadcast %96 : vector<16x1xf32> to vector<16x128xf32>
    %100 = arith.mulf %98, %99 : vector<16x128xf32>
    %101 = vector.broadcast %87 : vector<16x1xf32> to vector<16x128xf32>
    %102 = arith.subf %11, %101 : vector<16x128xf32>
    %103 = vector.broadcast %96 : vector<16x1xf32> to vector<16x128xf32>
    %104 = arith.mulf %102, %103 : vector<16x128xf32>
    %105 = vector.broadcast %87 : vector<16x1xf32> to vector<16x128xf32>
    %106 = arith.subf %16, %105 : vector<16x128xf32>
    %107 = vector.broadcast %96 : vector<16x1xf32> to vector<16x128xf32>
    %108 = arith.mulf %106, %107 : vector<16x128xf32>
    %109 = vector.broadcast %87 : vector<16x1xf32> to vector<16x128xf32>
    %110 = arith.subf %23, %109 : vector<16x128xf32>
    %111 = vector.broadcast %96 : vector<16x1xf32> to vector<16x128xf32>
    %112 = arith.mulf %110, %111 : vector<16x128xf32>
    %cst_24 = arith.constant 0.000000e+00 : f32
    %113 = vector.broadcast %cst_24 : f32 to vector<16x128xf32>
    %114 = arith.maximumf %100, %113 : vector<16x128xf32>
    %cst_25 = arith.constant 0.000000e+00 : f32
    %115 = vector.broadcast %cst_25 : f32 to vector<16x128xf32>
    %116 = arith.maximumf %104, %115 : vector<16x128xf32>
    %cst_26 = arith.constant 0.000000e+00 : f32
    %117 = vector.broadcast %cst_26 : f32 to vector<16x128xf32>
    %118 = arith.maximumf %108, %117 : vector<16x128xf32>
    %cst_27 = arith.constant 0.000000e+00 : f32
    %119 = vector.broadcast %cst_27 : f32 to vector<16x128xf32>
    %120 = arith.maximumf %112, %119 : vector<16x128xf32>
    %121 = tpu.concatenate %114, %116, %118, %120 in 0 : vector<16x128xf32>, vector<16x128xf32>, vector<16x128xf32>, vector<16x128xf32> -> vector<64x128xf32>
    %122 = arith.truncf %121 : vector<64x128xf32> to vector<64x128xbf16>
    %c0_28 = arith.constant 0 : index
    %c0_29 = arith.constant 0 : index
    %c0_30 = arith.constant 0 : index
    %123 = vector.load %arg3[%c0_28, %c0_29, %c0_30] : memref<1x64x128xbf16, #tpu.memory_space<vmem>>, vector<1x64x128xbf16>
    %124 = vector.shape_cast %123 : vector<1x64x128xbf16> to vector<64x128xbf16>
    %125 = vector.shape_cast %122 : vector<64x128xbf16> to vector<1x64x128xbf16>
    tpu.vector_store %arg3[%c0_28, %c0_29, %c0_30], %125 {strides = array<i32>} : memref<1x64x128xbf16, #tpu.memory_space<vmem>>, vector<1x64x128xbf16>,
    return
  }
  func.func @transform_0(%arg0: i32) -> (i32, i32, i32) {
    %c0_i32 = arith.constant 0 : i32
    %c0_i32_0 = arith.constant 0 : i32
    %c0_i32_1 = arith.constant 0 : i32
    return %arg0, %c0_i32, %c0_i32_0 : i32, i32, i32
  }
  func.func @transform_1(%arg0: i32) -> (i32, i32) {
    %c0_i32 = arith.constant 0 : i32
    %c0_i32_0 = arith.constant 0 : i32
    %c0_i32_1 = arith.constant 0 : i32
    return %c0_i32, %c0_i32_0 : i32, i32
  }
  func.func @transform_2(%arg0: i32) -> (i32, i32, i32) {
    %c0_i32 = arith.constant 0 : i32
    %c0_i32_0 = arith.constant 0 : i32
    %c0_i32_1 = arith.constant 0 : i32
    return %arg0, %c0_i32, %c0_i32_0 : i32, i32, i32
  }
}

module attributes {stable_mosaic.version = 11 : i64} {
  func.func @_conv_kernel(%arg0: i32, %arg1: memref<1x16x138xbf16, #tpu.memory_space<vmem>>, %arg2: memref<8x144xf32, #tpu.memory_space<vmem>>, %arg3: memref<1x32x128xbf16, #tpu.memory_space<vmem>>) attributes {dimension_semantics = [#tpu.dimension_semantics<parallel>], iteration_bounds = array<i64: 2>, scalar_prefetch = 0 : i64, scratch_operands = 0 : i64, tpu.core_type = #tpu.core_type<tc>, window_params = [{transform_indices = @transform_0, window_bounds = array<i64: 1, 16, 138>}, {pipeline_mode = #tpu.pipeline_mode<synchronous>, transform_indices = @transform_1, window_bounds = array<i64: 8, 144>}, {transform_indices = @transform_2, window_bounds = array<i64: 1, 32, 128>}]} {
    %c0 = arith.constant 0 : index
    %c0_0 = arith.constant 0 : index
    %c0_1 = arith.constant 0 : index
    %0 = vector.load %arg1[%c0, %c0_0, %c0_1] : memref<1x16x138xbf16, #tpu.memory_space<vmem>>, vector<1x16x138xbf16>
    %1 = vector.shape_cast %0 : vector<1x16x138xbf16> to vector<16x138xbf16>
    %2 = arith.extf %1 : vector<16x138xbf16> to vector<16x138xf32>
    %c0_2 = arith.constant 0 : index
    %c0_3 = arith.constant 0 : index
    %3 = vector.load %arg2[%c0_2, %c0_3] : memref<8x144xf32, #tpu.memory_space<vmem>>, vector<8x144xf32>
    %4 = vector.extract_strided_slice %2 {offsets = [0, 0], sizes = [16, 128], strides = [1, 1]} : vector<16x138xf32> to vector<16x128xf32>
    %5 = vector.extract_strided_slice %3 {offsets = [0, 0], sizes = [8, 16], strides = [1, 1]} : vector<8x144xf32> to vector<8x16xf32>
    %cst = arith.constant dense<0.000000e+00> : vector<8x128xf32>
    %6 = tpu.matmul %5, %4, %cst {dimension_numbers = #tpu.dot_dimension_numbers<[1], [0], [0], [1], [0, 0, 1, 1], [], []>} : vector<8x16xf32>, vector<16x128xf32>, vector<8x128xf32> -> vector<8x128xf32>
    %7 = vector.extract_strided_slice %2 {offsets = [0, 0], sizes = [16, 128], strides = [1, 1]} : vector<16x138xf32> to vector<16x128xf32>
    %8 = vector.extract_strided_slice %2 {offsets = [0, 1], sizes = [16, 128], strides = [1, 1]} : vector<16x138xf32> to vector<16x128xf32>
    %9 = tpu.concatenate %7, %8 in 0 : vector<16x128xf32>, vector<16x128xf32> -> vector<32x128xf32>
    %10 = vector.extract_strided_slice %3 {offsets = [0, 16], sizes = [8, 32], strides = [1, 1]} : vector<8x144xf32> to vector<8x32xf32>
    %cst_4 = arith.constant dense<0.000000e+00> : vector<8x128xf32>
    %11 = tpu.matmul %10, %9, %cst_4 {dimension_numbers = #tpu.dot_dimension_numbers<[1], [0], [0], [1], [0, 0, 1, 1], [], []>} : vector<8x32xf32>, vector<32x128xf32>, vector<8x128xf32> -> vector<8x128xf32>
    %12 = vector.extract_strided_slice %2 {offsets = [0, 0], sizes = [16, 128], strides = [1, 1]} : vector<16x138xf32> to vector<16x128xf32>
    %13 = vector.extract_strided_slice %2 {offsets = [0, 9], sizes = [16, 128], strides = [1, 1]} : vector<16x138xf32> to vector<16x128xf32>
    %14 = tpu.concatenate %12, %13 in 0 : vector<16x128xf32>, vector<16x128xf32> -> vector<32x128xf32>
    %15 = vector.extract_strided_slice %3 {offsets = [0, 48], sizes = [8, 32], strides = [1, 1]} : vector<8x144xf32> to vector<8x32xf32>
    %cst_5 = arith.constant dense<0.000000e+00> : vector<8x128xf32>
    %16 = tpu.matmul %15, %14, %cst_5 {dimension_numbers = #tpu.dot_dimension_numbers<[1], [0], [0], [1], [0, 0, 1, 1], [], []>} : vector<8x32xf32>, vector<32x128xf32>, vector<8x128xf32> -> vector<8x128xf32>
    %17 = vector.extract_strided_slice %2 {offsets = [0, 0], sizes = [16, 128], strides = [1, 1]} : vector<16x138xf32> to vector<16x128xf32>
    %18 = vector.extract_strided_slice %2 {offsets = [0, 1], sizes = [16, 128], strides = [1, 1]} : vector<16x138xf32> to vector<16x128xf32>
    %19 = vector.extract_strided_slice %2 {offsets = [0, 9], sizes = [16, 128], strides = [1, 1]} : vector<16x138xf32> to vector<16x128xf32>
    %20 = vector.extract_strided_slice %2 {offsets = [0, 10], sizes = [16, 128], strides = [1, 1]} : vector<16x138xf32> to vector<16x128xf32>
    %21 = tpu.concatenate %17, %18, %19, %20 in 0 : vector<16x128xf32>, vector<16x128xf32>, vector<16x128xf32>, vector<16x128xf32> -> vector<64x128xf32>
    %22 = vector.extract_strided_slice %3 {offsets = [0, 80], sizes = [8, 64], strides = [1, 1]} : vector<8x144xf32> to vector<8x64xf32>
    %cst_6 = arith.constant dense<0.000000e+00> : vector<8x128xf32>
    %23 = tpu.matmul %22, %21, %cst_6 {dimension_numbers = #tpu.dot_dimension_numbers<[1], [0], [0], [1], [0, 0, 1, 1], [], []>} : vector<8x64xf32>, vector<64x128xf32>, vector<8x128xf32> -> vector<8x128xf32>
    %24 = tpu.iota {dimensions = array<i32: 1>} : vector<1x128xi32>
    %c9_i32 = arith.constant 9 : i32
    %c0_i32 = arith.constant 0 : i32
    %25 = arith.cmpi eq, %c9_i32, %c0_i32 : i32
    %c1_i32 = arith.constant 1 : i32
    %26 = arith.select %25, %c1_i32, %c9_i32 : i32
    %27 = vector.broadcast %26 : i32 to vector<1x128xi32>
    %28 = arith.remsi %24, %27 : vector<1x128xi32>
    %c0_i32_7 = arith.constant 0 : i32
    %29 = vector.broadcast %c0_i32_7 : i32 to vector<1x128xi32>
    %30 = arith.cmpi ne, %28, %29 : vector<1x128xi32>
    %c0_i32_8 = arith.constant 0 : i32
    %31 = vector.broadcast %c0_i32_8 : i32 to vector<1x128xi32>
    %32 = arith.cmpi slt, %28, %31 : vector<1x128xi32>
    %c0_i32_9 = arith.constant 0 : i32
    %33 = arith.cmpi slt, %26, %c0_i32_9 : i32
    %34 = vector.broadcast %33 : i1 to vector<1x128xi1>
    %35 = vector.broadcast %34 : vector<1x128xi1> to vector<1x128xi1>
    %36 = arith.xori %32, %35 : vector<1x128xi1>
    %37 = arith.andi %36, %30 : vector<1x128xi1>
    %38 = vector.broadcast %26 : i32 to vector<1x128xi32>
    %39 = arith.addi %28, %38 : vector<1x128xi32>
    %40 = arith.select %37, %39, %28 : vector<1x128xi1>, vector<1x128xi32>
    %c8_i32 = arith.constant 8 : i32
    %41 = vector.broadcast %c8_i32 : i32 to vector<1x128xi32>
    %42 = arith.cmpi slt, %40, %41 : vector<1x128xi32>
    %c72_i32 = arith.constant 72 : i32
    %43 = vector.broadcast %c72_i32 : i32 to vector<1x128xi32>
    %44 = arith.cmpi slt, %24, %43 : vector<1x128xi32>
    %45 = arith.andi %42, %44 : vector<1x128xi1>
    %46 = arith.extui %45 : vector<1x128xi1> to vector<1x128xi32>
    %47 = arith.sitofp %46 : vector<1x128xi32> to vector<1x128xf32>
    %cst_10 = arith.constant 0.000000e+00 : f32
    %48 = vector.broadcast %cst_10 : f32 to vector<8x1xf32>
    %cst_11 = arith.constant 0.000000e+00 : f32
    %49 = vector.broadcast %cst_11 : f32 to vector<8x1xf32>
    %50 = vector.broadcast %47 : vector<1x128xf32> to vector<8x128xf32>
    %51 = arith.mulf %6, %50 : vector<8x128xf32>
    %cst_12 = arith.constant dense<0.000000e+00> : vector<8xf32>
    %52 = vector.multi_reduction <add>, %51, %cst_12 [1] : vector<8x128xf32> to vector<8xf32>
    %53 = vector.shape_cast %52 : vector<8xf32> to vector<8x1xf32>
    %54 = arith.addf %48, %53 : vector<8x1xf32>
    %55 = arith.mulf %51, %6 : vector<8x128xf32>
    %cst_13 = arith.constant dense<0.000000e+00> : vector<8xf32>
    %56 = vector.multi_reduction <add>, %55, %cst_13 [1] : vector<8x128xf32> to vector<8xf32>
    %57 = vector.shape_cast %56 : vector<8xf32> to vector<8x1xf32>
    %58 = arith.addf %49, %57 : vector<8x1xf32>
    %59 = vector.broadcast %47 : vector<1x128xf32> to vector<8x128xf32>
    %60 = arith.mulf %11, %59 : vector<8x128xf32>
    %cst_14 = arith.constant dense<0.000000e+00> : vector<8xf32>
    %61 = vector.multi_reduction <add>, %60, %cst_14 [1] : vector<8x128xf32> to vector<8xf32>
    %62 = vector.shape_cast %61 : vector<8xf32> to vector<8x1xf32>
    %63 = arith.addf %54, %62 : vector<8x1xf32>
    %64 = arith.mulf %60, %11 : vector<8x128xf32>
    %cst_15 = arith.constant dense<0.000000e+00> : vector<8xf32>
    %65 = vector.multi_reduction <add>, %64, %cst_15 [1] : vector<8x128xf32> to vector<8xf32>
    %66 = vector.shape_cast %65 : vector<8xf32> to vector<8x1xf32>
    %67 = arith.addf %58, %66 : vector<8x1xf32>
    %68 = vector.broadcast %47 : vector<1x128xf32> to vector<8x128xf32>
    %69 = arith.mulf %16, %68 : vector<8x128xf32>
    %cst_16 = arith.constant dense<0.000000e+00> : vector<8xf32>
    %70 = vector.multi_reduction <add>, %69, %cst_16 [1] : vector<8x128xf32> to vector<8xf32>
    %71 = vector.shape_cast %70 : vector<8xf32> to vector<8x1xf32>
    %72 = arith.addf %63, %71 : vector<8x1xf32>
    %73 = arith.mulf %69, %16 : vector<8x128xf32>
    %cst_17 = arith.constant dense<0.000000e+00> : vector<8xf32>
    %74 = vector.multi_reduction <add>, %73, %cst_17 [1] : vector<8x128xf32> to vector<8xf32>
    %75 = vector.shape_cast %74 : vector<8xf32> to vector<8x1xf32>
    %76 = arith.addf %67, %75 : vector<8x1xf32>
    %77 = vector.broadcast %47 : vector<1x128xf32> to vector<8x128xf32>
    %78 = arith.mulf %23, %77 : vector<8x128xf32>
    %cst_18 = arith.constant dense<0.000000e+00> : vector<8xf32>
    %79 = vector.multi_reduction <add>, %78, %cst_18 [1] : vector<8x128xf32> to vector<8xf32>
    %80 = vector.shape_cast %79 : vector<8xf32> to vector<8x1xf32>
    %81 = arith.addf %72, %80 : vector<8x1xf32>
    %82 = arith.mulf %78, %23 : vector<8x128xf32>
    %cst_19 = arith.constant dense<0.000000e+00> : vector<8xf32>
    %83 = vector.multi_reduction <add>, %82, %cst_19 [1] : vector<8x128xf32> to vector<8xf32>
    %84 = vector.shape_cast %83 : vector<8xf32> to vector<8x1xf32>
    %85 = arith.addf %76, %84 : vector<8x1xf32>
    %cst_20 = arith.constant 3.906250e-03 : f32
    %86 = vector.broadcast %cst_20 : f32 to vector<8x1xf32>
    %87 = arith.mulf %81, %86 : vector<8x1xf32>
    %cst_21 = arith.constant 3.906250e-03 : f32
    %88 = vector.broadcast %cst_21 : f32 to vector<8x1xf32>
    %89 = arith.mulf %85, %88 : vector<8x1xf32>
    %90 = arith.mulf %87, %87 : vector<8x1xf32>
    %91 = arith.subf %89, %90 : vector<8x1xf32>
    %cst_22 = arith.constant 0.000000e+00 : f32
    %92 = vector.broadcast %cst_22 : f32 to vector<8x1xf32>
    %93 = arith.maximumf %91, %92 : vector<8x1xf32>
    %cst_23 = arith.constant 9.99999974E-6 : f32
    %94 = vector.broadcast %cst_23 : f32 to vector<8x1xf32>
    %95 = arith.addf %93, %94 : vector<8x1xf32>
    %96 = math.rsqrt %95 : vector<8x1xf32>
    %97 = vector.broadcast %87 : vector<8x1xf32> to vector<8x128xf32>
    %98 = arith.subf %6, %97 : vector<8x128xf32>
    %99 = vector.broadcast %96 : vector<8x1xf32> to vector<8x128xf32>
    %100 = arith.mulf %98, %99 : vector<8x128xf32>
    %101 = vector.broadcast %87 : vector<8x1xf32> to vector<8x128xf32>
    %102 = arith.subf %11, %101 : vector<8x128xf32>
    %103 = vector.broadcast %96 : vector<8x1xf32> to vector<8x128xf32>
    %104 = arith.mulf %102, %103 : vector<8x128xf32>
    %105 = vector.broadcast %87 : vector<8x1xf32> to vector<8x128xf32>
    %106 = arith.subf %16, %105 : vector<8x128xf32>
    %107 = vector.broadcast %96 : vector<8x1xf32> to vector<8x128xf32>
    %108 = arith.mulf %106, %107 : vector<8x128xf32>
    %109 = vector.broadcast %87 : vector<8x1xf32> to vector<8x128xf32>
    %110 = arith.subf %23, %109 : vector<8x128xf32>
    %111 = vector.broadcast %96 : vector<8x1xf32> to vector<8x128xf32>
    %112 = arith.mulf %110, %111 : vector<8x128xf32>
    %cst_24 = arith.constant 0.000000e+00 : f32
    %113 = vector.broadcast %cst_24 : f32 to vector<8x128xf32>
    %114 = arith.maximumf %100, %113 : vector<8x128xf32>
    %cst_25 = arith.constant 0.000000e+00 : f32
    %115 = vector.broadcast %cst_25 : f32 to vector<8x128xf32>
    %116 = arith.maximumf %104, %115 : vector<8x128xf32>
    %cst_26 = arith.constant 0.000000e+00 : f32
    %117 = vector.broadcast %cst_26 : f32 to vector<8x128xf32>
    %118 = arith.maximumf %108, %117 : vector<8x128xf32>
    %cst_27 = arith.constant 0.000000e+00 : f32
    %119 = vector.broadcast %cst_27 : f32 to vector<8x128xf32>
    %120 = arith.maximumf %112, %119 : vector<8x128xf32>
    %121 = tpu.concatenate %114, %116, %118, %120 in 0 : vector<8x128xf32>, vector<8x128xf32>, vector<8x128xf32>, vector<8x128xf32> -> vector<32x128xf32>
    %122 = arith.truncf %121 : vector<32x128xf32> to vector<32x128xbf16>
    %c0_28 = arith.constant 0 : index
    %c0_29 = arith.constant 0 : index
    %c0_30 = arith.constant 0 : index
    %123 = vector.load %arg3[%c0_28, %c0_29, %c0_30] : memref<1x32x128xbf16, #tpu.memory_space<vmem>>, vector<1x32x128xbf16>
    %124 = vector.shape_cast %123 : vector<1x32x128xbf16> to vector<32x128xbf16>
    %125 = vector.shape_cast %122 : vector<32x128xbf16> to vector<1x32x128xbf16>
    tpu.vector_store %arg3[%c0_28, %c0_29, %c0_30], %125 {strides = array<i32>} : memref<1x32x128xbf16, #tpu.memory_space<vmem>>, vector<1x32x128xbf16>,
    return
  }
  func.func @transform_0(%arg0: i32) -> (i32, i32, i32) {
    %c0_i32 = arith.constant 0 : i32
    %c0_i32_0 = arith.constant 0 : i32
    %c0_i32_1 = arith.constant 0 : i32
    return %arg0, %c0_i32, %c0_i32_0 : i32, i32, i32
  }
  func.func @transform_1(%arg0: i32) -> (i32, i32) {
    %c0_i32 = arith.constant 0 : i32
    %c0_i32_0 = arith.constant 0 : i32
    %c0_i32_1 = arith.constant 0 : i32
    return %c0_i32, %c0_i32_0 : i32, i32
  }
  func.func @transform_2(%arg0: i32) -> (i32, i32, i32) {
    %c0_i32 = arith.constant 0 : i32
    %c0_i32_0 = arith.constant 0 : i32
    %c0_i32_1 = arith.constant 0 : i32
    return %arg0, %c0_i32, %c0_i32_0 : i32, i32, i32
  }
}

module attributes {stable_mosaic.version = 11 : i64} {
  func.func @_conv_kernel(%arg0: i32, %arg1: memref<1x8x522xbf16, #tpu.memory_space<vmem>>, %arg2: memref<3x392xf32, #tpu.memory_space<vmem>>, %arg3: memref<3x1xf32, #tpu.memory_space<vmem>>, %arg4: memref<1x3x384xf32, #tpu.memory_space<vmem>>) attributes {dimension_semantics = [#tpu.dimension_semantics<parallel>], iteration_bounds = array<i64: 2>, scalar_prefetch = 0 : i64, scratch_operands = 0 : i64, tpu.core_type = #tpu.core_type<tc>, window_params = [{transform_indices = @transform_0, window_bounds = array<i64: 1, 8, 522>}, {pipeline_mode = #tpu.pipeline_mode<synchronous>, transform_indices = @transform_1, window_bounds = array<i64: 3, 392>}, {pipeline_mode = #tpu.pipeline_mode<synchronous>, transform_indices = @transform_2, window_bounds = array<i64: 3, 1>}, {transform_indices = @transform_3, window_bounds = array<i64: 1, 3, 384>}]} {
    %c0 = arith.constant 0 : index
    %c0_0 = arith.constant 0 : index
    %c0_1 = arith.constant 0 : index
    %0 = vector.load %arg1[%c0, %c0_0, %c0_1] : memref<1x8x522xbf16, #tpu.memory_space<vmem>>, vector<1x8x522xbf16>
    %1 = vector.shape_cast %0 : vector<1x8x522xbf16> to vector<8x522xbf16>
    %2 = arith.extf %1 : vector<8x522xbf16> to vector<8x522xf32>
    %c0_2 = arith.constant 0 : index
    %c0_3 = arith.constant 0 : index
    %3 = vector.load %arg2[%c0_2, %c0_3] : memref<3x392xf32, #tpu.memory_space<vmem>>, vector<3x392xf32>
    %4 = vector.extract_strided_slice %2 {offsets = [0, 0], sizes = [8, 384], strides = [1, 1]} : vector<8x522xf32> to vector<8x384xf32>
    %5 = vector.extract_strided_slice %2 {offsets = [0, 1], sizes = [8, 384], strides = [1, 1]} : vector<8x522xf32> to vector<8x384xf32>
    %6 = vector.extract_strided_slice %2 {offsets = [0, 2], sizes = [8, 384], strides = [1, 1]} : vector<8x522xf32> to vector<8x384xf32>
    %7 = vector.extract_strided_slice %2 {offsets = [0, 3], sizes = [8, 384], strides = [1, 1]} : vector<8x522xf32> to vector<8x384xf32>
    %8 = vector.extract_strided_slice %2 {offsets = [0, 4], sizes = [8, 384], strides = [1, 1]} : vector<8x522xf32> to vector<8x384xf32>
    %9 = vector.extract_strided_slice %2 {offsets = [0, 5], sizes = [8, 384], strides = [1, 1]} : vector<8x522xf32> to vector<8x384xf32>
    %10 = vector.extract_strided_slice %2 {offsets = [0, 6], sizes = [8, 384], strides = [1, 1]} : vector<8x522xf32> to vector<8x384xf32>
    %11 = vector.extract_strided_slice %2 {offsets = [0, 22], sizes = [8, 384], strides = [1, 1]} : vector<8x522xf32> to vector<8x384xf32>
    %12 = vector.extract_strided_slice %2 {offsets = [0, 23], sizes = [8, 384], strides = [1, 1]} : vector<8x522xf32> to vector<8x384xf32>
    %13 = vector.extract_strided_slice %2 {offsets = [0, 24], sizes = [8, 384], strides = [1, 1]} : vector<8x522xf32> to vector<8x384xf32>
    %14 = vector.extract_strided_slice %2 {offsets = [0, 25], sizes = [8, 384], strides = [1, 1]} : vector<8x522xf32> to vector<8x384xf32>
    %15 = vector.extract_strided_slice %2 {offsets = [0, 26], sizes = [8, 384], strides = [1, 1]} : vector<8x522xf32> to vector<8x384xf32>
    %16 = vector.extract_strided_slice %2 {offsets = [0, 27], sizes = [8, 384], strides = [1, 1]} : vector<8x522xf32> to vector<8x384xf32>
    %17 = vector.extract_strided_slice %2 {offsets = [0, 28], sizes = [8, 384], strides = [1, 1]} : vector<8x522xf32> to vector<8x384xf32>
    %18 = vector.extract_strided_slice %2 {offsets = [0, 44], sizes = [8, 384], strides = [1, 1]} : vector<8x522xf32> to vector<8x384xf32>
    %19 = vector.extract_strided_slice %2 {offsets = [0, 45], sizes = [8, 384], strides = [1, 1]} : vector<8x522xf32> to vector<8x384xf32>
    %20 = vector.extract_strided_slice %2 {offsets = [0, 46], sizes = [8, 384], strides = [1, 1]} : vector<8x522xf32> to vector<8x384xf32>
    %21 = vector.extract_strided_slice %2 {offsets = [0, 47], sizes = [8, 384], strides = [1, 1]} : vector<8x522xf32> to vector<8x384xf32>
    %22 = vector.extract_strided_slice %2 {offsets = [0, 48], sizes = [8, 384], strides = [1, 1]} : vector<8x522xf32> to vector<8x384xf32>
    %23 = vector.extract_strided_slice %2 {offsets = [0, 49], sizes = [8, 384], strides = [1, 1]} : vector<8x522xf32> to vector<8x384xf32>
    %24 = vector.extract_strided_slice %2 {offsets = [0, 50], sizes = [8, 384], strides = [1, 1]} : vector<8x522xf32> to vector<8x384xf32>
    %25 = vector.extract_strided_slice %2 {offsets = [0, 66], sizes = [8, 384], strides = [1, 1]} : vector<8x522xf32> to vector<8x384xf32>
    %26 = vector.extract_strided_slice %2 {offsets = [0, 67], sizes = [8, 384], strides = [1, 1]} : vector<8x522xf32> to vector<8x384xf32>
    %27 = vector.extract_strided_slice %2 {offsets = [0, 68], sizes = [8, 384], strides = [1, 1]} : vector<8x522xf32> to vector<8x384xf32>
    %28 = vector.extract_strided_slice %2 {offsets = [0, 69], sizes = [8, 384], strides = [1, 1]} : vector<8x522xf32> to vector<8x384xf32>
    %29 = vector.extract_strided_slice %2 {offsets = [0, 70], sizes = [8, 384], strides = [1, 1]} : vector<8x522xf32> to vector<8x384xf32>
    %30 = vector.extract_strided_slice %2 {offsets = [0, 71], sizes = [8, 384], strides = [1, 1]} : vector<8x522xf32> to vector<8x384xf32>
    %31 = vector.extract_strided_slice %2 {offsets = [0, 72], sizes = [8, 384], strides = [1, 1]} : vector<8x522xf32> to vector<8x384xf32>
    %32 = vector.extract_strided_slice %2 {offsets = [0, 88], sizes = [8, 384], strides = [1, 1]} : vector<8x522xf32> to vector<8x384xf32>
    %33 = vector.extract_strided_slice %2 {offsets = [0, 89], sizes = [8, 384], strides = [1, 1]} : vector<8x522xf32> to vector<8x384xf32>
    %34 = vector.extract_strided_slice %2 {offsets = [0, 90], sizes = [8, 384], strides = [1, 1]} : vector<8x522xf32> to vector<8x384xf32>
    %35 = vector.extract_strided_slice %2 {offsets = [0, 91], sizes = [8, 384], strides = [1, 1]} : vector<8x522xf32> to vector<8x384xf32>
    %36 = vector.extract_strided_slice %2 {offsets = [0, 92], sizes = [8, 384], strides = [1, 1]} : vector<8x522xf32> to vector<8x384xf32>
    %37 = vector.extract_strided_slice %2 {offsets = [0, 93], sizes = [8, 384], strides = [1, 1]} : vector<8x522xf32> to vector<8x384xf32>
    %38 = vector.extract_strided_slice %2 {offsets = [0, 94], sizes = [8, 384], strides = [1, 1]} : vector<8x522xf32> to vector<8x384xf32>
    %39 = vector.extract_strided_slice %2 {offsets = [0, 110], sizes = [8, 384], strides = [1, 1]} : vector<8x522xf32> to vector<8x384xf32>
    %40 = vector.extract_strided_slice %2 {offsets = [0, 111], sizes = [8, 384], strides = [1, 1]} : vector<8x522xf32> to vector<8x384xf32>
    %41 = vector.extract_strided_slice %2 {offsets = [0, 112], sizes = [8, 384], strides = [1, 1]} : vector<8x522xf32> to vector<8x384xf32>
    %42 = vector.extract_strided_slice %2 {offsets = [0, 113], sizes = [8, 384], strides = [1, 1]} : vector<8x522xf32> to vector<8x384xf32>
    %43 = vector.extract_strided_slice %2 {offsets = [0, 114], sizes = [8, 384], strides = [1, 1]} : vector<8x522xf32> to vector<8x384xf32>
    %44 = vector.extract_strided_slice %2 {offsets = [0, 115], sizes = [8, 384], strides = [1, 1]} : vector<8x522xf32> to vector<8x384xf32>
    %45 = vector.extract_strided_slice %2 {offsets = [0, 116], sizes = [8, 384], strides = [1, 1]} : vector<8x522xf32> to vector<8x384xf32>
    %46 = vector.extract_strided_slice %2 {offsets = [0, 132], sizes = [8, 384], strides = [1, 1]} : vector<8x522xf32> to vector<8x384xf32>
    %47 = vector.extract_strided_slice %2 {offsets = [0, 133], sizes = [8, 384], strides = [1, 1]} : vector<8x522xf32> to vector<8x384xf32>
    %48 = vector.extract_strided_slice %2 {offsets = [0, 134], sizes = [8, 384], strides = [1, 1]} : vector<8x522xf32> to vector<8x384xf32>
    %49 = vector.extract_strided_slice %2 {offsets = [0, 135], sizes = [8, 384], strides = [1, 1]} : vector<8x522xf32> to vector<8x384xf32>
    %50 = vector.extract_strided_slice %2 {offsets = [0, 136], sizes = [8, 384], strides = [1, 1]} : vector<8x522xf32> to vector<8x384xf32>
    %51 = vector.extract_strided_slice %2 {offsets = [0, 137], sizes = [8, 384], strides = [1, 1]} : vector<8x522xf32> to vector<8x384xf32>
    %52 = vector.extract_strided_slice %2 {offsets = [0, 138], sizes = [8, 384], strides = [1, 1]} : vector<8x522xf32> to vector<8x384xf32>
    %53 = tpu.concatenate %4, %5, %6, %7, %8, %9, %10, %11, %12, %13, %14, %15, %16, %17, %18, %19 in 0 : vector<8x384xf32>, vector<8x384xf32>, vector<8x384xf32>, vector<8x384xf32>, vector<8x384xf32>, vector<8x384xf32>, vector<8x384xf32>, vector<8x384xf32>, vector<8x384xf32>, vector<8x384xf32>, vector<8x384xf32>, vector<8x384xf32>, vector<8x384xf32>, vector<8x384xf32>, vector<8x384xf32>, vector<8x384xf32> -> vector<128x384xf32>
    %54 = tpu.concatenate %20, %21, %22, %23, %24, %25, %26, %27, %28, %29, %30, %31, %32, %33, %34, %35 in 0 : vector<8x384xf32>, vector<8x384xf32>, vector<8x384xf32>, vector<8x384xf32>, vector<8x384xf32>, vector<8x384xf32>, vector<8x384xf32>, vector<8x384xf32>, vector<8x384xf32>, vector<8x384xf32>, vector<8x384xf32>, vector<8x384xf32>, vector<8x384xf32>, vector<8x384xf32>, vector<8x384xf32>, vector<8x384xf32> -> vector<128x384xf32>
    %55 = tpu.concatenate %36, %37, %38, %39, %40, %41, %42, %43, %44, %45, %46, %47, %48, %49, %50, %51 in 0 : vector<8x384xf32>, vector<8x384xf32>, vector<8x384xf32>, vector<8x384xf32>, vector<8x384xf32>, vector<8x384xf32>, vector<8x384xf32>, vector<8x384xf32>, vector<8x384xf32>, vector<8x384xf32>, vector<8x384xf32>, vector<8x384xf32>, vector<8x384xf32>, vector<8x384xf32>, vector<8x384xf32>, vector<8x384xf32> -> vector<128x384xf32>
    %56 = tpu.concatenate %53, %54, %55, %52 in 0 : vector<128x384xf32>, vector<128x384xf32>, vector<128x384xf32>, vector<8x384xf32> -> vector<392x384xf32>
    %cst = arith.constant dense<0.000000e+00> : vector<3x384xf32>
    %57 = tpu.matmul %3, %56, %cst {dimension_numbers = #tpu.dot_dimension_numbers<[1], [0], [0], [1], [0, 0, 1, 1], [], []>} : vector<3x392xf32>, vector<392x384xf32>, vector<3x384xf32> -> vector<3x384xf32>
    %c0_4 = arith.constant 0 : index
    %c0_5 = arith.constant 0 : index
    %58 = vector.load %arg3[%c0_4, %c0_5] : memref<3x1xf32, #tpu.memory_space<vmem>>, vector<3x1xf32>
    %59 = vector.broadcast %58 : vector<3x1xf32> to vector<3x384xf32>
    %60 = arith.addf %57, %59 : vector<3x384xf32>
    %61 = math.tanh %60 : vector<3x384xf32>
    %c0_6 = arith.constant 0 : index
    %c0_7 = arith.constant 0 : index
    %c0_8 = arith.constant 0 : index
    %62 = vector.load %arg4[%c0_6, %c0_7, %c0_8] : memref<1x3x384xf32, #tpu.memory_space<vmem>>, vector<1x3x384xf32>
    %63 = vector.shape_cast %62 : vector<1x3x384xf32> to vector<3x384xf32>
    %64 = vector.shape_cast %61 : vector<3x384xf32> to vector<1x3x384xf32>
    tpu.vector_store %arg4[%c0_6, %c0_7, %c0_8], %64 {strides = array<i32>} : memref<1x3x384xf32, #tpu.memory_space<vmem>>, vector<1x3x384xf32>,
    return
  }
  func.func @transform_0(%arg0: i32) -> (i32, i32, i32) {
    %c0_i32 = arith.constant 0 : i32
    %c0_i32_0 = arith.constant 0 : i32
    %c0_i32_1 = arith.constant 0 : i32
    return %arg0, %c0_i32, %c0_i32_0 : i32, i32, i32
  }
  func.func @transform_1(%arg0: i32) -> (i32, i32) {
    %c0_i32 = arith.constant 0 : i32
    %c0_i32_0 = arith.constant 0 : i32
    %c0_i32_1 = arith.constant 0 : i32
    return %c0_i32, %c0_i32_0 : i32, i32
  }
  func.func @transform_2(%arg0: i32) -> (i32, i32) {
    %c0_i32 = arith.constant 0 : i32
    %c0_i32_0 = arith.constant 0 : i32
    %c0_i32_1 = arith.constant 0 : i32
    return %c0_i32, %c0_i32_0 : i32, i32
  }
  func.func @transform_3(%arg0: i32) -> (i32, i32, i32) {
    %c0_i32 = arith.constant 0 : i32
    %c0_i32_0 = arith.constant 0 : i32
    %c0_i32_1 = arith.constant 0 : i32
    return %arg0, %c0_i32, %c0_i32_0 : i32, i32, i32
  }
}

</mosaic_0001>

<llo_original>
// kernel: _lambda_.10
$region0: #{_lambda_.10}
  #allocation0 [shape = 'u32[]', space=smem, size = 0x4, offset = 0x4, fixed_abs, tag = 'smem constant byte address 0x4 - core index']
  #allocation1 [shape = 'u32[144,128]{1,0:T(1,128)}', space=vmem, size = 0x12000, scoped, tag = 'internal scratch']
  %s0 = inlined_call_operand.vmem [shape: bf16[2,8,522], index: 0, kind: input, shape index: {}]
  %s1 = inlined_call_operand.vmem [shape: f32[8,392], index: 1, kind: input, shape index: {}]
  %s2 = inlined_call_operand.vmem [shape: bf16[2,8,384], index: 2, kind: output, shape index: {}]
  %s3 = sld [smem:[#allocation0]]
  $region41: #{_lambda_.10} parent=0
    _
  %s5 = ssub.s32 1, %s3
  %s6 = scalar_select 0, %s5, %s3
  loop: start=0, step=1, limit=4
  $region2: #{_lambda_.10} parent=0 // loop_pre_header
    _
  $region3: #{_lambda_.10} parent=0 // loop_header
    %s8 = sphi 0, %s12
    %p9 = scmp.ge.s32.totalorder %s8, 4
    %s18 = sphi 0, %s20
    %s21 = sphi 0, %s18
    %s22 = sphi 0, %s21
    %s38 = sphi 0, %s22
    %s42 = sphi 0, %s42
    %s44 = sphi 0, %s42
    %s45 = sphi 0, %s44
    %s59 = sphi 0, %s45
    %s65 = sphi 0, %s67
    %s68 = sphi 0, %s65
    %s69 = sphi 0, %s68
    %s85 = sphi 0, %s69
  $region4: #{_lambda_.10} parent=0 // loop_header_branch
    %11 = sbr.rel (%p9) target = $region8
  $region5: #{_lambda_.10} parent=0 // loop_body
    %s13 = ssub.s32 %s8, 1
    %s14 = ssub.s32 %s8, 2
    %s15 = sadd.s32 %s8, 1
    %s16 = ssub.s32 %s8, %s15
    %p17 = scmp.eq.s32.totalorder %s16, 0
    %s19 = sadd.s32 %s18, 1
    %s20 = scalar_select %p17, %s18, %s19
    %p23 = pneg %p17
    %p24 = scmp.eq.s32.totalorder %s8, 1
    %p25 = por %p23, %p24
    %p26 = scmp.ne.s32.totalorder %s18, %s21
    %p27 = scmp.eq.s32.totalorder %s8, 0
    %p28 = por %p26, %p27
    %p29 = scmp.ne.s32.totalorder %s18, %s21
    %p30 = scmp.eq.s32.totalorder %s13, 1
    %p31 = por %p29, %p30
    %p32 = scmp.ne.s32.totalorder %s21, %s22
    %p33 = scmp.eq.s32.totalorder %s13, 0
    %p34 = por %p32, %p33
    %p35 = scmp.ne.s32.totalorder %s21, %s22
    %p36 = scmp.eq.s32.totalorder %s14, 1
    %p37 = por %p35, %p36
    %p39 = scmp.ne.s32.totalorder %s22, %s38
    %p40 = scmp.eq.s32.totalorder %s14, 0
    %p41 = por %p39, %p40
    %s43 = sadd.s32 %s42, 1
    %p46 = scmp.eq.s32.totalorder %s8, 1
    %p47 = scmp.ne.s32.totalorder %s42, %s44
    %p48 = scmp.eq.s32.totalorder %s8, 0
    %p49 = por %p47, %p48
    %p50 = scmp.ne.s32.totalorder %s42, %s44
    %p51 = scmp.eq.s32.totalorder %s13, 1
    %p52 = por %p50, %p51
    %p53 = scmp.ne.s32.totalorder %s44, %s45
    %p54 = scmp.eq.s32.totalorder %s13, 0
    %p55 = por %p53, %p54
    %p56 = scmp.ne.s32.totalorder %s44, %s45
    %p57 = scmp.eq.s32.totalorder %s14, 1
    %p58 = por %p56, %p57
    %p60 = scmp.ne.s32.totalorder %s45, %s59
    %p61 = scmp.eq.s32.totalorder %s14, 0
    %p62 = por %p60, %p61
    %s63 = ssub.s32 %s8, %s15
    %p64 = scmp.eq.s32.totalorder %s63, 0
    %s66 = sadd.s32 %s65, 1
    %s67 = scalar_select %p64, %s65, %s66
    %p70 = pneg %p64
    %p71 = scmp.eq.s32.totalorder %s8, 1
    %p72 = por %p70, %p71
    %p73 = scmp.ne.s32.totalorder %s65, %s68
    %p74 = scmp.eq.s32.totalorder %s8, 0
    %p75 = por %p73, %p74
    %p76 = scmp.ne.s32.totalorder %s65, %s68
    %p77 = scmp.eq.s32.totalorder %s13, 1
    %p78 = por %p76, %p77
    %p79 = scmp.ne.s32.totalorder %s68, %s69
    %p80 = scmp.eq.s32.totalorder %s13, 0
    %p81 = por %p79, %p80
    %p82 = scmp.ne.s32.totalorder %s68, %s69
    %p83 = scmp.eq.s32.totalorder %s14, 1
    %p84 = por %p82, %p83
    %p86 = scmp.ne.s32.totalorder %s69, %s85
    %p87 = scmp.eq.s32.totalorder %s14, 0
    %p88 = por %p86, %p87
    %p89 = scmp.le.s32.totalorder 1, %s8
    %p90 = scmp.lt.s32.totalorder %s8, 3
    %p91 = pnand %p89, %p90
    %p92 = pneg %p91
    // Predicated region
    $region9: #{_lambda_.10} parent=5 // pred_check
      _
    $region10: #{_lambda_.10} parent=5 // pred_check_branch
      %94 = sbr.rel (%p91) target = $region12
    $region11: #{_lambda_.10} parent=5 // pred_region
      %s95 = ssub.s32 %s8, 1
      // Predicated region
      $region13: #{_lambda_.10} parent=11 // pred_check
        %p96 = pneg %p55
      $region14: #{_lambda_.10} parent=11 // pred_check_branch
        %98 = sbr.rel (%p96) target = $region16
      $region15: #{_lambda_.10} parent=11 // pred_region
        _
      $region16: #{_lambda_.10} parent=11 // pred_fallthru
        _
    $region12: #{_lambda_.10} parent=5 // pred_fallthru
      _
    %p99 = scmp.lt.s32.totalorder %s8, 2
    // Predicated region
    $region17: #{_lambda_.10} parent=5 // pred_check
      %p100 = pneg %p99
    $region18: #{_lambda_.10} parent=5 // pred_check_branch
      %102 = sbr.rel (%p100) target = $region20
    $region19: #{_lambda_.10} parent=5 // pred_region
      // Predicated region
      $region21: #{_lambda_.10} parent=19 // pred_check
        %p103 = pneg %p28
      $region22: #{_lambda_.10} parent=19 // pred_check_branch
        %105 = sbr.rel (%p103) target = $region24
      $region23: #{_lambda_.10} parent=19 // pred_region
        %p106 = scmp.lt.s32.totalorder %s8, 1
        %s107 = scalar_select %p106, %s8, 1
        %s108 = smul.addr %s107, 5
        %s109 = smul.addr %s108, 4
        %s110 = scalar_lea.vmem %s0, %s109
      $region24: #{_lambda_.10} parent=19 // pred_fallthru
        _
    $region20: #{_lambda_.10} parent=5 // pred_fallthru
      _
    %p111 = scmp.le.s32.totalorder 1, %s8
    %p112 = scmp.lt.s32.totalorder %s8, 3
    %p113 = pnand %p111, %p112
    %p114 = pneg %p113
    // Predicated region
    $region25: #{_lambda_.10} parent=5 // pred_check
      _
    $region26: #{_lambda_.10} parent=5 // pred_check_branch
      %116 = sbr.rel (%p113) target = $region28
    $region27: #{_lambda_.10} parent=5 // pred_region
      %s117 = ssub.s32 %s8, 1
      %p118 = scmp.lt.s32.totalorder %s13, 1
      %s119 = scalar_select %p118, %s13, 1
      %s120 = smul.addr %s119, 5
      %s121 = smul.addr %s120, 4
      %s122 = scalar_lea.vmem %s0, %s121
      %p123 = pneg %p34
      %p124 = pneg %p31
      %p125 = pneg %p55
      %p126 = pneg %p52
      %p127 = pneg %p81
      %p128 = pneg %p78
      %p129 = scmp.lt.s32.totalorder %s13, 1
      %s130 = scalar_select %p129, %s13, 1
      %s131 = smul.addr %s130, 3
      %s132 = smul.addr %s131, 4
      %s133 = scalar_lea.vmem %s2, %s132
      %p134 = scmp.lt.s32.totalorder %s13, 1
      %s135 = scalar_select %p134, %s13, 1
      %s136 = smul.addr %s135, 5
      %s137 = smul.addr %s136, 4
      %s138 = scalar_lea.vmem %s0, %s137
      %p139 = scmp.lt.s32.totalorder %s13, 1
      %s140 = scalar_select %p139, %s13, 1
      %s141 = smul.addr %s140, 3
      %s142 = smul.addr %s141, 4
      %s143 = scalar_lea.vmem %s2, %s142
      %v144 = vld [vmem:[%s138] sm:$0xff]
      %v145 = vld [vmem:[%s138 + $0x8] sm:$0xff]
      %v146 = vld [vmem:[%s138 + $0x10] sm:$0xf]
      %v147 = vunpack.c.l.bf16 %v144
      %v148 = vunpack.c.h.bf16 %v144
      %v149 = vunpack.c.l.bf16 %v145
      %v150 = vunpack.c.h.bf16 %v145
      %v151 = vunpack.c.l.bf16 %v146
      %v152 = vld [vmem:[%s1] sm:$0xff]
      %v153 = vld [vmem:[%s1 + $0x8] sm:$0xff]
      %v154 = vld [vmem:[%s1 + $0x10] sm:$0xff]
      %v155 = vld [vmem:[%s1 + $0x18] sm:$0xff]
      %160 = vrot.lane.b32.xlu0 %v147, 127
      %v161 = vpop.permute.xlu0 %160
      %162 = vrot.lane.b32.xlu0 %v148, 127
      %v163 = vpop.permute.xlu0 %162
      %164 = vrot.lane.b32.xlu0 %v149, 127
      %v165 = vpop.permute.xlu0 %164
      %166 = vrot.lane.b32.xlu0 %v150, 127
      %v167 = vpop.permute.xlu0 %166
      %vm168 = vcmask 1039360
      %v169 = vsel %vm168, %v161, %v163
      %v170 = vsel %vm168, %v163, %v165
      %v171 = vsel %vm168, %v165, %v167
      %175 = vrot.lane.b32.xlu0 %v147, 126
      %v176 = vpop.permute.xlu0 %175
      %177 = vrot.lane.b32.xlu0 %v148, 126
      %v178 = vpop.permute.xlu0 %177
      %179 = vrot.lane.b32.xlu0 %v149, 126
      %v180 = vpop.permute.xlu0 %179
      %181 = vrot.lane.b32.xlu0 %v150, 126
      %v182 = vpop.permute.xlu0 %181
      %vm183 = vcmask 1031168
      %v184 = vsel %vm183, %v176, %v178
      %v185 = vsel %vm183, %v178, %v180
      %v186 = vsel %vm183, %v180, %v182
      %190 = vrot.lane.b32.xlu0 %v147, 125
      %v191 = vpop.permute.xlu0 %190
      %192 = vrot.lane.b32.xlu0 %v148, 125
      %v193 = vpop.permute.xlu0 %192
      %194 = vrot.lane.b32.xlu0 %v149, 125
      %v195 = vpop.permute.xlu0 %194
      %196 = vrot.lane.b32.xlu0 %v150, 125
      %v197 = vpop.permute.xlu0 %196
      %vm198 = vcmask 1022976
      %v199 = vsel %vm198, %v191, %v193
      %v200 = vsel %vm198, %v193, %v195
      %v201 = vsel %vm198, %v195, %v197
      %205 = vrot.lane.b32.xlu0 %v147, 124
      %v206 = vpop.permute.xlu0 %205
      %207 = vrot.lane.b32.xlu0 %v148, 124
      %v208 = vpop.permute.xlu0 %207
      %209 = vrot.lane.b32.xlu0 %v149, 124
      %v210 = vpop.permute.xlu0 %209
      %211 = vrot.lane.b32.xlu0 %v150, 124
      %v212 = vpop.permute.xlu0 %211
      %vm213 = vcmask 1014784
      %v214 = vsel %vm213, %v206, %v208
      %v215 = vsel %vm213, %v208, %v210
      %v216 = vsel %vm213, %v210, %v212
      %220 = vrot.lane.b32.xlu0 %v147, 123
      %v221 = vpop.permute.xlu0 %220
      %222 = vrot.lane.b32.xlu0 %v148, 123
      %v223 = vpop.permute.xlu0 %222
      %224 = vrot.lane.b32.xlu0 %v149, 123
      %v225 = vpop.permute.xlu0 %224
      %226 = vrot.lane.b32.xlu0 %v150, 123
      %v227 = vpop.permute.xlu0 %226
      %vm228 = vcmask 1006592
      %v229 = vsel %vm228, %v221, %v223
      %v230 = vsel %vm228, %v223, %v225
      %v231 = vsel %vm228, %v225, %v227
      %235 = vrot.lane.b32.xlu0 %v147, 122
      %v236 = vpop.permute.xlu0 %235
      %237 = vrot.lane.b32.xlu0 %v148, 122
      %v238 = vpop.permute.xlu0 %237
      %239 = vrot.lane.b32.xlu0 %v149, 122
      %v240 = vpop.permute.xlu0 %239
      %241 = vrot.lane.b32.xlu0 %v150, 122
      %v242 = vpop.permute.xlu0 %241
      %vm243 = vcmask 998400
      %v244 = vsel %vm243, %v236, %v238
      %v245 = vsel %vm243, %v238, %v240
      %v246 = vsel %vm243, %v240, %v242
      %250 = vrot.lane.b32.xlu0 %v147, 106
      %v251 = vpop.permute.xlu0 %250
      %252 = vrot.lane.b32.xlu0 %v148, 106
      %v253 = vpop.permute.xlu0 %252
      %254 = vrot.lane.b32.xlu0 %v149, 106
      %v255 = vpop.permute.xlu0 %254
      %256 = vrot.lane.b32.xlu0 %v150, 106
      %v257 = vpop.permute.xlu0 %256
      %vm258 = vcmask 867328
      %v259 = vsel %vm258, %v251, %v253
      %v260 = vsel %vm258, %v253, %v255
      %v261 = vsel %vm258, %v255, %v257
      %265 = vrot.lane.b32.xlu0 %v147, 105
      %v266 = vpop.permute.xlu0 %265
      %267 = vrot.lane.b32.xlu0 %v148, 105
      %v268 = vpop.permute.xlu0 %267
      %269 = vrot.lane.b32.xlu0 %v149, 105
      %v270 = vpop.permute.xlu0 %269
      %271 = vrot.lane.b32.xlu0 %v150, 105
      %v272 = vpop.permute.xlu0 %271
      %vm273 = vcmask 859136
      %v274 = vsel %vm273, %v266, %v268
      %v275 = vsel %vm273, %v268, %v270
      %v276 = vsel %vm273, %v270, %v272
      %280 = vrot.lane.b32.xlu0 %v147, 104
      %v281 = vpop.permute.xlu0 %280
      %282 = vrot.lane.b32.xlu0 %v148, 104
      %v283 = vpop.permute.xlu0 %282
      %284 = vrot.lane.b32.xlu0 %v149, 104
      %v285 = vpop.permute.xlu0 %284
      %286 = vrot.lane.b32.xlu0 %v150, 104
      %v287 = vpop.permute.xlu0 %286
      %vm288 = vcmask 850944
      %v289 = vsel %vm288, %v281, %v283
      %v290 = vsel %vm288, %v283, %v285
      %v291 = vsel %vm288, %v285, %v287
      %295 = vrot.lane.b32.xlu0 %v147, 103
      %v296 = vpop.permute.xlu0 %295
      %297 = vrot.lane.b32.xlu0 %v148, 103
      %v298 = vpop.permute.xlu0 %297
      %299 = vrot.lane.b32.xlu0 %v149, 103
      %v300 = vpop.permute.xlu0 %299
      %301 = vrot.lane.b32.xlu0 %v150, 103
      %v302 = vpop.permute.xlu0 %301
      %vm303 = vcmask 842752
      %v304 = vsel %vm303, %v296, %v298
      %v305 = vsel %vm303, %v298, %v300
      %v306 = vsel %vm303, %v300, %v302
      %310 = vrot.lane.b32.xlu0 %v147, 102
      %v311 = vpop.permute.xlu0 %310
      %312 = vrot.lane.b32.xlu0 %v148, 102
      %v313 = vpop.permute.xlu0 %312
      %314 = vrot.lane.b32.xlu0 %v149, 102
      %v315 = vpop.permute.xlu0 %314
      %316 = vrot.lane.b32.xlu0 %v150, 102
      %v317 = vpop.permute.xlu0 %316
      %vm318 = vcmask 834560
      %v319 = vsel %vm318, %v311, %v313
      %v320 = vsel %vm318, %v313, %v315
      %v321 = vsel %vm318, %v315, %v317
      %325 = vrot.lane.b32.xlu0 %v147, 101
      %v326 = vpop.permute.xlu0 %325
      %327 = vrot.lane.b32.xlu0 %v148, 101
      %v328 = vpop.permute.xlu0 %327
      %329 = vrot.lane.b32.xlu0 %v149, 101
      %v330 = vpop.permute.xlu0 %329
      %331 = vrot.lane.b32.xlu0 %v150, 101
      %v332 = vpop.permute.xlu0 %331
      %vm333 = vcmask 826368
      %v334 = vsel %vm333, %v326, %v328
      %v335 = vsel %vm333, %v328, %v330
      %v336 = vsel %vm333, %v330, %v332
      %340 = vrot.lane.b32.xlu0 %v147, 100
      %v341 = vpop.permute.xlu0 %340
      %342 = vrot.lane.b32.xlu0 %v148, 100
      %v343 = vpop.permute.xlu0 %342
      %344 = vrot.lane.b32.xlu0 %v149, 100
      %v345 = vpop.permute.xlu0 %344
      %346 = vrot.lane.b32.xlu0 %v150, 100
      %v347 = vpop.permute.xlu0 %346
      %vm348 = vcmask 818176
      %v349 = vsel %vm348, %v341, %v343
      %v350 = vsel %vm348, %v343, %v345
      %v351 = vsel %vm348, %v345, %v347
      %355 = vrot.lane.b32.xlu0 %v147, 84
      %v356 = vpop.permute.xlu0 %355
      %357 = vrot.lane.b32.xlu0 %v148, 84
      %v358 = vpop.permute.xlu0 %357
      %359 = vrot.lane.b32.xlu0 %v149, 84
      %v360 = vpop.permute.xlu0 %359
      %361 = vrot.lane.b32.xlu0 %v150, 84
      %v362 = vpop.permute.xlu0 %361
      %vm363 = vcmask 687104
      %v364 = vsel %vm363, %v356, %v358
      %v365 = vsel %vm363, %v358, %v360
      %v366 = vsel %vm363, %v360, %v362
      %370 = vrot.lane.b32.xlu0 %v147, 83
      %v371 = vpop.permute.xlu0 %370
      %372 = vrot.lane.b32.xlu0 %v148, 83
      %v373 = vpop.permute.xlu0 %372
      %374 = vrot.lane.b32.xlu0 %v149, 83
      %v375 = vpop.permute.xlu0 %374
      %376 = vrot.lane.b32.xlu0 %v150, 83
      %v377 = vpop.permute.xlu0 %376
      %vm378 = vcmask 678912
      %v379 = vsel %vm378, %v371, %v373
      %v380 = vsel %vm378, %v373, %v375
      %v381 = vsel %vm378, %v375, %v377
      %385 = vrot.lane.b32.xlu0 %v147, 108
      %v386 = vpop.permute.xlu0 %385
      %387 = vrot.lane.b32.xlu0 %v148, 108
      %v388 = vpop.permute.xlu0 %387
      %389 = vrot.lane.b32.xlu0 %v149, 108
      %v390 = vpop.permute.xlu0 %389
      %391 = vrot.lane.b32.xlu0 %v150, 108
      %v392 = vpop.permute.xlu0 %391
      %vm393 = vcmask 883712
      %v394 = vsel %vm393, %v386, %v388
      %v395 = vsel %vm393, %v388, %v390
      %v396 = vsel %vm393, %v390, %v392
      %397 = vrot.lane.b32.xlu0 %v147, 107
      %v398 = vpop.permute.xlu0 %397
      %399 = vrot.lane.b32.xlu0 %v148, 107
      %v400 = vpop.permute.xlu0 %399
      %401 = vrot.lane.b32.xlu0 %v149, 107
      %v402 = vpop.permute.xlu0 %401
      %403 = vrot.lane.b32.xlu0 %v150, 107
      %v404 = vpop.permute.xlu0 %403
      %vm405 = vcmask 875520
      %v406 = vsel %vm405, %v398, %v400
      %v407 = vsel %vm405, %v400, %v402
      %v408 = vsel %vm405, %v402, %v404
      %409 = vrot.lane.b32.xlu0 %v147, 86
      %v410 = vpop.permute.xlu0 %409
      %411 = vrot.lane.b32.xlu0 %v148, 86
      %v412 = vpop.permute.xlu0 %411
      %413 = vrot.lane.b32.xlu0 %v149, 86
      %v414 = vpop.permute.xlu0 %413
      %415 = vrot.lane.b32.xlu0 %v150, 86
      %v416 = vpop.permute.xlu0 %415
      %vm417 = vcmask 703488
      %v418 = vsel %vm417, %v410, %v412
      %v419 = vsel %vm417, %v412, %v414
      %v420 = vsel %vm417, %v414, %v416
      %421 = vrot.lane.b32.xlu0 %v147, 85
      %v422 = vpop.permute.xlu0 %421
      %423 = vrot.lane.b32.xlu0 %v148, 85
      %v424 = vpop.permute.xlu0 %423
      %425 = vrot.lane.b32.xlu0 %v149, 85
      %v426 = vpop.permute.xlu0 %425
      %427 = vrot.lane.b32.xlu0 %v150, 85
      %v428 = vpop.permute.xlu0 %427
      %vm429 = vcmask 695296
      %v430 = vsel %vm429, %v422, %v424
      %v431 = vsel %vm429, %v424, %v426
      %v432 = vsel %vm429, %v426, %v428
      %433 = vrot.lane.b32.xlu0 %v147, 110
      %v434 = vpop.permute.xlu0 %433
      %435 = vrot.lane.b32.xlu0 %v148, 110
      %v436 = vpop.permute.xlu0 %435
      %437 = vrot.lane.b32.xlu0 %v149, 110
      %v438 = vpop.permute.xlu0 %437
      %439 = vrot.lane.b32.xlu0 %v150, 110
      %v440 = vpop.permute.xlu0 %439
      %vm441 = vcmask 900096
      %v442 = vsel %vm441, %v434, %v436
      %v443 = vsel %vm441, %v436, %v438
      %v444 = vsel %vm441, %v438, %v440
      %445 = vrot.lane.b32.xlu0 %v147, 109
      %v446 = vpop.permute.xlu0 %445
      %447 = vrot.lane.b32.xlu0 %v148, 109
      %v448 = vpop.permute.xlu0 %447
      %449 = vrot.lane.b32.xlu0 %v149, 109
      %v450 = vpop.permute.xlu0 %449
      %451 = vrot.lane.b32.xlu0 %v150, 109
      %v452 = vpop.permute.xlu0 %451
      %vm453 = vcmask 891904
      %v454 = vsel %vm453, %v446, %v448
      %v455 = vsel %vm453, %v448, %v450
      %v456 = vsel %vm453, %v450, %v452
      %458 = vrot.lane.b32.xlu0 %v148, 88
      %v459 = vpop.permute.xlu0 %458
      %460 = vrot.lane.b32.xlu0 %v149, 88
      %v461 = vpop.permute.xlu0 %460
      %462 = vrot.lane.b32.xlu0 %v150, 88
      %v463 = vpop.permute.xlu0 %462
      %464 = vrot.lane.b32.xlu0 %v151, 88
      %v465 = vpop.permute.xlu0 %464
      %vm466 = vcmask 719872
      %v467 = vsel %vm466, %v459, %v461
      %v468 = vsel %vm466, %v461, %v463
      %v469 = vsel %vm466, %v463, %v465
      %470 = vrot.lane.b32.xlu0 %v148, 87
      %v471 = vpop.permute.xlu0 %470
      %472 = vrot.lane.b32.xlu0 %v149, 87
      %v473 = vpop.permute.xlu0 %472
      %474 = vrot.lane.b32.xlu0 %v150, 87
      %v475 = vpop.permute.xlu0 %474
      %476 = vrot.lane.b32.xlu0 %v151, 87
      %v477 = vpop.permute.xlu0 %476
      %vm478 = vcmask 711680
      %v479 = vsel %vm478, %v471, %v473
      %v480 = vsel %vm478, %v473, %v475
      %v481 = vsel %vm478, %v475, %v477
      %482 = vrot.lane.b32.xlu0 %v151, 86
      %v483 = vpop.permute.xlu0 %482
      %v484 = vsel %vm417, %v416, %v483
      %485 = vrot.lane.b32.xlu0 %v151, 85
      %v486 = vpop.permute.xlu0 %485
      %v487 = vsel %vm429, %v428, %v486
      %488 = vrot.lane.b32.xlu0 %v151, 84
      %v489 = vpop.permute.xlu0 %488
      %v490 = vsel %vm363, %v362, %v489
      %491 = vrot.lane.b32.xlu0 %v151, 83
      %v492 = vpop.permute.xlu0 %491
      %v493 = vsel %vm378, %v377, %v492
      %494 = vrot.lane.b32.xlu0 %v147, 82
      %v495 = vpop.permute.xlu0 %494
      %496 = vrot.lane.b32.xlu0 %v148, 82
      %v497 = vpop.permute.xlu0 %496
      %498 = vrot.lane.b32.xlu0 %v149, 82
      %v499 = vpop.permute.xlu0 %498
      %500 = vrot.lane.b32.xlu0 %v150, 82
      %v501 = vpop.permute.xlu0 %500
      %502 = vrot.lane.b32.xlu0 %v169, 82
      %v503 = vpop.permute.xlu0 %502
      %504 = vrot.lane.b32.xlu0 %v170, 82
      %v505 = vpop.permute.xlu0 %504
      %506 = vrot.lane.b32.xlu0 %v171, 82
      %v507 = vpop.permute.xlu0 %506
      %508 = vrot.lane.b32.xlu0 %v167, 82
      %v509 = vpop.permute.xlu0 %508
      %510 = vrot.lane.b32.xlu0 %v184, 82
      %v511 = vpop.permute.xlu0 %510
      %512 = vrot.lane.b32.xlu0 %v185, 82
      %v513 = vpop.permute.xlu0 %512
      %514 = vrot.lane.b32.xlu0 %v186, 82
      %v515 = vpop.permute.xlu0 %514
      %516 = vrot.lane.b32.xlu0 %v182, 82
      %v517 = vpop.permute.xlu0 %516
      %518 = vrot.lane.b32.xlu0 %v199, 82
      %v519 = vpop.permute.xlu0 %518
      %520 = vrot.lane.b32.xlu0 %v200, 82
      %v521 = vpop.permute.xlu0 %520
      %522 = vrot.lane.b32.xlu0 %v201, 82
      %v523 = vpop.permute.xlu0 %522
      %524 = vrot.lane.b32.xlu0 %v197, 82
      %v525 = vpop.permute.xlu0 %524
      %526 = vrot.lane.b32.xlu0 %v214, 82
      %v527 = vpop.permute.xlu0 %526
      %528 = vrot.lane.b32.xlu0 %v215, 82
      %v529 = vpop.permute.xlu0 %528
      %530 = vrot.lane.b32.xlu0 %v216, 82
      %v531 = vpop.permute.xlu0 %530
      %532 = vrot.lane.b32.xlu0 %v212, 82
      %v533 = vpop.permute.xlu0 %532
      %534 = vrot.lane.b32.xlu0 %v394, 82
      %v535 = vpop.permute.xlu0 %534
      %536 = vrot.lane.b32.xlu0 %v395, 82
      %v537 = vpop.permute.xlu0 %536
      %538 = vrot.lane.b32.xlu0 %v396, 82
      %v539 = vpop.permute.xlu0 %538
      %540 = vrot.lane.b32.xlu0 %v392, 82
      %v541 = vpop.permute.xlu0 %540
      %542 = vrot.lane.b32.xlu0 %v406, 82
      %v543 = vpop.permute.xlu0 %542
      %544 = vrot.lane.b32.xlu0 %v407, 82
      %v545 = vpop.permute.xlu0 %544
      %546 = vrot.lane.b32.xlu0 %v408, 82
      %v547 = vpop.permute.xlu0 %546
      %548 = vrot.lane.b32.xlu0 %v404, 82
      %v549 = vpop.permute.xlu0 %548
      %550 = vrot.lane.b32.xlu0 %v259, 82
      %v551 = vpop.permute.xlu0 %550
      %552 = vrot.lane.b32.xlu0 %v260, 82
      %v553 = vpop.permute.xlu0 %552
      %554 = vrot.lane.b32.xlu0 %v261, 82
      %v555 = vpop.permute.xlu0 %554
      %556 = vrot.lane.b32.xlu0 %v257, 82
      %v557 = vpop.permute.xlu0 %556
      %558 = vrot.lane.b32.xlu0 %v274, 82
      %v559 = vpop.permute.xlu0 %558
      %560 = vrot.lane.b32.xlu0 %v275, 82
      %v561 = vpop.permute.xlu0 %560
      %562 = vrot.lane.b32.xlu0 %v276, 82
      %v563 = vpop.permute.xlu0 %562
      %564 = vrot.lane.b32.xlu0 %v272, 82
      %v565 = vpop.permute.xlu0 %564
      %566 = vrot.lane.b32.xlu0 %v289, 82
      %v567 = vpop.permute.xlu0 %566
      %568 = vrot.lane.b32.xlu0 %v290, 82
      %v569 = vpop.permute.xlu0 %568
      %570 = vrot.lane.b32.xlu0 %v291, 82
      %v571 = vpop.permute.xlu0 %570
      %572 = vrot.lane.b32.xlu0 %v287, 82
      %v573 = vpop.permute.xlu0 %572
      %574 = vrot.lane.b32.xlu0 %v304, 82
      %v575 = vpop.permute.xlu0 %574
      %576 = vrot.lane.b32.xlu0 %v305, 82
      %v577 = vpop.permute.xlu0 %576
      %578 = vrot.lane.b32.xlu0 %v306, 82
      %v579 = vpop.permute.xlu0 %578
      %580 = vrot.lane.b32.xlu0 %v302, 82
      %v581 = vpop.permute.xlu0 %580
      %582 = vrot.lane.b32.xlu0 %v319, 82
      %v583 = vpop.permute.xlu0 %582
      %584 = vrot.lane.b32.xlu0 %v320, 82
      %v585 = vpop.permute.xlu0 %584
      %586 = vrot.lane.b32.xlu0 %v321, 82
      %v587 = vpop.permute.xlu0 %586
      %588 = vrot.lane.b32.xlu0 %v317, 82
      %v589 = vpop.permute.xlu0 %588
      %590 = vrot.lane.b32.xlu0 %v418, 82
      %v591 = vpop.permute.xlu0 %590
      %592 = vrot.lane.b32.xlu0 %v419, 82
      %v593 = vpop.permute.xlu0 %592
      %594 = vrot.lane.b32.xlu0 %v420, 82
      %v595 = vpop.permute.xlu0 %594
      %596 = vrot.lane.b32.xlu0 %v416, 82
      %v597 = vpop.permute.xlu0 %596
      %598 = vrot.lane.b32.xlu0 %v430, 82
      %v599 = vpop.permute.xlu0 %598
      %600 = vrot.lane.b32.xlu0 %v431, 82
      %v601 = vpop.permute.xlu0 %600
      %602 = vrot.lane.b32.xlu0 %v432, 82
      %v603 = vpop.permute.xlu0 %602
      %604 = vrot.lane.b32.xlu0 %v428, 82
      %v605 = vpop.permute.xlu0 %604
      %606 = vrot.lane.b32.xlu0 %v364, 82
      %v607 = vpop.permute.xlu0 %606
      %608 = vrot.lane.b32.xlu0 %v365, 82
      %v609 = vpop.permute.xlu0 %608
      %610 = vrot.lane.b32.xlu0 %v366, 82
      %v611 = vpop.permute.xlu0 %610
      %612 = vrot.lane.b32.xlu0 %v362, 82
      %v613 = vpop.permute.xlu0 %612
      %614 = vrot.lane.b32.xlu0 %v379, 82
      %v615 = vpop.permute.xlu0 %614
      %616 = vrot.lane.b32.xlu0 %v380, 82
      %v617 = vpop.permute.xlu0 %616
      %618 = vrot.lane.b32.xlu0 %v381, 82
      %v619 = vpop.permute.xlu0 %618
      %620 = vrot.lane.b32.xlu0 %v377, 82
      %v621 = vpop.permute.xlu0 %620
      %vm622 = vcmask 670720
      %v623 = vsel %vm622, %v495, %v497
      %v624 = vsel %vm622, %v497, %v499
      %v625 = vsel %vm622, %v499, %v501
      %v626 = vsel %vm622, %v503, %v505
      %v627 = vsel %vm622, %v505, %v507
      %v628 = vsel %vm622, %v507, %v509
      %v629 = vsel %vm622, %v511, %v513
      %v630 = vsel %vm622, %v513, %v515
      %v631 = vsel %vm622, %v515, %v517
      %v632 = vsel %vm622, %v519, %v521
      %v633 = vsel %vm622, %v521, %v523
      %v634 = vsel %vm622, %v523, %v525
      %v635 = vsel %vm622, %v527, %v529
      %v636 = vsel %vm622, %v529, %v531
      %v637 = vsel %vm622, %v531, %v533
      %v638 = vsel %vm622, %v535, %v537
      %v639 = vsel %vm622, %v537, %v539
      %v640 = vsel %vm622, %v539, %v541
      %v641 = vsel %vm622, %v543, %v545
      %v642 = vsel %vm622, %v545, %v547
      %v643 = vsel %vm622, %v547, %v549
      %v644 = vsel %vm622, %v551, %v553
      %v645 = vsel %vm622, %v553, %v555
      %v646 = vsel %vm622, %v555, %v557
      %v647 = vsel %vm622, %v559, %v561
      %v648 = vsel %vm622, %v561, %v563
      %v649 = vsel %vm622, %v563, %v565
      %v650 = vsel %vm622, %v567, %v569
      %v651 = vsel %vm622, %v569, %v571
      %v652 = vsel %vm622, %v571, %v573
      %v653 = vsel %vm622, %v575, %v577
      %v654 = vsel %vm622, %v577, %v579
      %v655 = vsel %vm622, %v579, %v581
      %v656 = vsel %vm622, %v583, %v585
      %v657 = vsel %vm622, %v585, %v587
      %v658 = vsel %vm622, %v587, %v589
      %v659 = vsel %vm622, %v591, %v593
      %v660 = vsel %vm622, %v593, %v595
      %v661 = vsel %vm622, %v595, %v597
      %v662 = vsel %vm622, %v599, %v601
      %v663 = vsel %vm622, %v601, %v603
      %v664 = vsel %vm622, %v603, %v605
      %v665 = vsel %vm622, %v607, %v609
      %v666 = vsel %vm622, %v609, %v611
      %v667 = vsel %vm622, %v611, %v613
      %v668 = vsel %vm622, %v615, %v617
      %v669 = vsel %vm622, %v617, %v619
      %v670 = vsel %vm622, %v619, %v621
      %719 = vrot.lane.b32.xlu0 %v147, 36
      %v720 = vpop.permute.xlu0 %719
      %721 = vrot.lane.b32.xlu0 %v148, 36
      %v722 = vpop.permute.xlu0 %721
      %723 = vrot.lane.b32.xlu0 %v149, 36
      %v724 = vpop.permute.xlu0 %723
      %725 = vrot.lane.b32.xlu0 %v150, 36
      %v726 = vpop.permute.xlu0 %725
      %727 = vrot.lane.b32.xlu0 %v169, 36
      %v728 = vpop.permute.xlu0 %727
      %729 = vrot.lane.b32.xlu0 %v170, 36
      %v730 = vpop.permute.xlu0 %729
      %731 = vrot.lane.b32.xlu0 %v171, 36
      %v732 = vpop.permute.xlu0 %731
      %733 = vrot.lane.b32.xlu0 %v167, 36
      %v734 = vpop.permute.xlu0 %733
      %735 = vrot.lane.b32.xlu0 %v184, 36
      %v736 = vpop.permute.xlu0 %735
      %737 = vrot.lane.b32.xlu0 %v185, 36
      %v738 = vpop.permute.xlu0 %737
      %739 = vrot.lane.b32.xlu0 %v186, 36
      %v740 = vpop.permute.xlu0 %739
      %741 = vrot.lane.b32.xlu0 %v182, 36
      %v742 = vpop.permute.xlu0 %741
      %743 = vrot.lane.b32.xlu0 %v442, 36
      %v744 = vpop.permute.xlu0 %743
      %745 = vrot.lane.b32.xlu0 %v443, 36
      %v746 = vpop.permute.xlu0 %745
      %747 = vrot.lane.b32.xlu0 %v444, 36
      %v748 = vpop.permute.xlu0 %747
      %749 = vrot.lane.b32.xlu0 %v440, 36
      %v750 = vpop.permute.xlu0 %749
      %751 = vrot.lane.b32.xlu0 %v454, 36
      %v752 = vpop.permute.xlu0 %751
      %753 = vrot.lane.b32.xlu0 %v455, 36
      %v754 = vpop.permute.xlu0 %753
      %755 = vrot.lane.b32.xlu0 %v456, 36
      %v756 = vpop.permute.xlu0 %755
      %757 = vrot.lane.b32.xlu0 %v452, 36
      %v758 = vpop.permute.xlu0 %757
      %759 = vrot.lane.b32.xlu0 %v394, 36
      %v760 = vpop.permute.xlu0 %759
      %761 = vrot.lane.b32.xlu0 %v395, 36
      %v762 = vpop.permute.xlu0 %761
      %763 = vrot.lane.b32.xlu0 %v396, 36
      %v764 = vpop.permute.xlu0 %763
      %765 = vrot.lane.b32.xlu0 %v392, 36
      %v766 = vpop.permute.xlu0 %765
      %767 = vrot.lane.b32.xlu0 %v406, 36
      %v768 = vpop.permute.xlu0 %767
      %769 = vrot.lane.b32.xlu0 %v407, 36
      %v770 = vpop.permute.xlu0 %769
      %771 = vrot.lane.b32.xlu0 %v408, 36
      %v772 = vpop.permute.xlu0 %771
      %773 = vrot.lane.b32.xlu0 %v404, 36
      %v774 = vpop.permute.xlu0 %773
      %775 = vrot.lane.b32.xlu0 %v259, 36
      %v776 = vpop.permute.xlu0 %775
      %777 = vrot.lane.b32.xlu0 %v260, 36
      %v778 = vpop.permute.xlu0 %777
      %779 = vrot.lane.b32.xlu0 %v261, 36
      %v780 = vpop.permute.xlu0 %779
      %781 = vrot.lane.b32.xlu0 %v257, 36
      %v782 = vpop.permute.xlu0 %781
      %783 = vrot.lane.b32.xlu0 %v274, 36
      %v784 = vpop.permute.xlu0 %783
      %785 = vrot.lane.b32.xlu0 %v275, 36
      %v786 = vpop.permute.xlu0 %785
      %787 = vrot.lane.b32.xlu0 %v276, 36
      %v788 = vpop.permute.xlu0 %787
      %789 = vrot.lane.b32.xlu0 %v272, 36
      %v790 = vpop.permute.xlu0 %789
      %791 = vrot.lane.b32.xlu0 %v289, 36
      %v792 = vpop.permute.xlu0 %791
      %793 = vrot.lane.b32.xlu0 %v290, 36
      %v794 = vpop.permute.xlu0 %793
      %795 = vrot.lane.b32.xlu0 %v291, 36
      %v796 = vpop.permute.xlu0 %795
      %797 = vrot.lane.b32.xlu0 %v287, 36
      %v798 = vpop.permute.xlu0 %797
      %799 = vrot.lane.b32.xlu0 %v459, 36
      %v800 = vpop.permute.xlu0 %799
      %801 = vrot.lane.b32.xlu0 %v467, 36
      %v802 = vpop.permute.xlu0 %801
      %803 = vrot.lane.b32.xlu0 %v468, 36
      %v804 = vpop.permute.xlu0 %803
      %805 = vrot.lane.b32.xlu0 %v469, 36
      %v806 = vpop.permute.xlu0 %805
      %807 = vrot.lane.b32.xlu0 %v471, 36
      %v808 = vpop.permute.xlu0 %807
      %809 = vrot.lane.b32.xlu0 %v479, 36
      %v810 = vpop.permute.xlu0 %809
      %811 = vrot.lane.b32.xlu0 %v480, 36
      %v812 = vpop.permute.xlu0 %811
      %813 = vrot.lane.b32.xlu0 %v481, 36
      %v814 = vpop.permute.xlu0 %813
      %815 = vrot.lane.b32.xlu0 %v412, 36
      %v816 = vpop.permute.xlu0 %815
      %817 = vrot.lane.b32.xlu0 %v419, 36
      %v818 = vpop.permute.xlu0 %817
      %819 = vrot.lane.b32.xlu0 %v420, 36
      %v820 = vpop.permute.xlu0 %819
      %821 = vrot.lane.b32.xlu0 %v484, 36
      %v822 = vpop.permute.xlu0 %821
      %823 = vrot.lane.b32.xlu0 %v424, 36
      %v824 = vpop.permute.xlu0 %823
      %825 = vrot.lane.b32.xlu0 %v431, 36
      %v826 = vpop.permute.xlu0 %825
      %827 = vrot.lane.b32.xlu0 %v432, 36
      %v828 = vpop.permute.xlu0 %827
      %829 = vrot.lane.b32.xlu0 %v487, 36
      %v830 = vpop.permute.xlu0 %829
      %831 = vrot.lane.b32.xlu0 %v358, 36
      %v832 = vpop.permute.xlu0 %831
      %833 = vrot.lane.b32.xlu0 %v365, 36
      %v834 = vpop.permute.xlu0 %833
      %835 = vrot.lane.b32.xlu0 %v366, 36
      %v836 = vpop.permute.xlu0 %835
      %837 = vrot.lane.b32.xlu0 %v490, 36
      %v838 = vpop.permute.xlu0 %837
      %839 = vrot.lane.b32.xlu0 %v373, 36
      %v840 = vpop.permute.xlu0 %839
      %841 = vrot.lane.b32.xlu0 %v380, 36
      %v842 = vpop.permute.xlu0 %841
      %843 = vrot.lane.b32.xlu0 %v381, 36
      %v844 = vpop.permute.xlu0 %843
      %845 = vrot.lane.b32.xlu0 %v493, 36
      %v846 = vpop.permute.xlu0 %845
      %vm847 = vcmask 293888
      %v848 = vsel %vm847, %v720, %v722
      %v849 = vsel %vm847, %v722, %v724
      %v850 = vsel %vm847, %v724, %v726
      %v851 = vsel %vm847, %v728, %v730
      %v852 = vsel %vm847, %v730, %v732
      %v853 = vsel %vm847, %v732, %v734
      %v854 = vsel %vm847, %v736, %v738
      %v855 = vsel %vm847, %v738, %v740
      %v856 = vsel %vm847, %v740, %v742
      %v857 = vsel %vm847, %v744, %v746
      %v858 = vsel %vm847, %v746, %v748
      %v859 = vsel %vm847, %v748, %v750
      %v860 = vsel %vm847, %v752, %v754
      %v861 = vsel %vm847, %v754, %v756
      %v862 = vsel %vm847, %v756, %v758
      %v863 = vsel %vm847, %v760, %v762
      %v864 = vsel %vm847, %v762, %v764
      %v865 = vsel %vm847, %v764, %v766
      %v866 = vsel %vm847, %v768, %v770
      %v867 = vsel %vm847, %v770, %v772
      %v868 = vsel %vm847, %v772, %v774
      %v869 = vsel %vm847, %v776, %v778
      %v870 = vsel %vm847, %v778, %v780
      %v871 = vsel %vm847, %v780, %v782
      %v872 = vsel %vm847, %v784, %v786
      %v873 = vsel %vm847, %v786, %v788
      %v874 = vsel %vm847, %v788, %v790
      %v875 = vsel %vm847, %v792, %v794
      %v876 = vsel %vm847, %v794, %v796
      %v877 = vsel %vm847, %v796, %v798
      %v878 = vsel %vm847, %v800, %v802
      %v879 = vsel %vm847, %v802, %v804
      %v880 = vsel %vm847, %v804, %v806
      %v881 = vsel %vm847, %v808, %v810
      %v882 = vsel %vm847, %v810, %v812
      %v883 = vsel %vm847, %v812, %v814
      %v884 = vsel %vm847, %v816, %v818
      %v885 = vsel %vm847, %v818, %v820
      %v886 = vsel %vm847, %v820, %v822
      %v887 = vsel %vm847, %v824, %v826
      %v888 = vsel %vm847, %v826, %v828
      %v889 = vsel %vm847, %v828, %v830
      %v890 = vsel %vm847, %v832, %v834
      %v891 = vsel %vm847, %v834, %v836
      %v892 = vsel %vm847, %v836, %v838
      %v893 = vsel %vm847, %v840, %v842
      %v894 = vsel %vm847, %v842, %v844
      %v895 = vsel %vm847, %v844, %v846
      %944 = vrot.lane.b32.xlu0 %v148, 118
      %v945 = vpop.permute.xlu0 %944
      %946 = vrot.lane.b32.xlu0 %v149, 118
      %v947 = vpop.permute.xlu0 %946
      %948 = vrot.lane.b32.xlu0 %v150, 118
      %v949 = vpop.permute.xlu0 %948
      %950 = vrot.lane.b32.xlu0 %v151, 118
      %v951 = vpop.permute.xlu0 %950
      %vm952 = vcmask 965632
      %v953 = vsel %vm952, %v945, %v947
      %v954 = vsel %vm952, %v947, %v949
      %v955 = vsel %vm952, %v949, %v951
      %vm959 = vcmask 64512
      %v961 = vsel %vm959, %v155, 0
      %963 = vmatprep.subr.mxu0 %v380
      %964 = vmatpush1.msra.mxu0 %v379
      %965 = vmatprep.subr.mxu0 %v365
      %966 = vmatpush1.msra.mxu0 %v364
      %967 = vmatprep.subr.mxu0 %v350
      %968 = vmatpush1.msra.mxu0 %v349
      %969 = vmatprep.subr.mxu0 %v335
      %970 = vmatpush1.msra.mxu0 %v334
      %971 = vmatprep.subr.mxu0 %v320
      %972 = vmatpush1.msra.mxu0 %v319
      %973 = vmatprep.subr.mxu0 %v305
      %974 = vmatpush1.msra.mxu0 %v304
      %975 = vmatprep.subr.mxu0 %v290
      %976 = vmatpush1.msra.mxu0 %v289
      %977 = vmatprep.subr.mxu0 %v275
      %978 = vmatpush1.msra.mxu0 %v274
      %979 = vmatprep.subr.mxu0 %v260
      %980 = vmatpush1.msra.mxu0 %v259
      %981 = vmatprep.subr.mxu0 %v245
      %982 = vmatpush1.msra.mxu0 %v244
      %983 = vmatprep.subr.mxu0 %v230
      %984 = vmatpush1.msra.mxu0 %v229
      %985 = vmatprep.subr.mxu0 %v215
      %986 = vmatpush1.msra.mxu0 %v214
      %987 = vmatprep.subr.mxu0 %v200
      %988 = vmatpush1.msra.mxu0 %v199
      %989 = vmatprep.subr.mxu0 %v185
      %990 = vmatpush1.msra.mxu0 %v184
      %991 = vmatprep.subr.mxu0 %v170
      %992 = vmatpush1.msra.mxu0 %v169
      %993 = vmatprep.subr.mxu0 %v148
      %994 = vmatpush1.msra.mxu0 %v147
      %995 = vmatprep.subr.mxu0 %v669
      %996 = vmatpush2.msra.mxu0 %v668
      %997 = vmatprep.subr.mxu0 %v666
      %998 = vmatpush2.msra.mxu0 %v665
      %999 = vmatprep.subr.mxu0 %v663
      %1000 = vmatpush2.msra.mxu0 %v662
      %1001 = vmatprep.subr.mxu0 %v660
      %1002 = vmatpush2.msra.mxu0 %v659
      %1003 = vmatprep.subr.mxu0 %v657
      %1004 = vmatpush2.msra.mxu0 %v656
      %1005 = vmatprep.subr.mxu0 %v654
      %1006 = vmatpush2.msra.mxu0 %v653
      %1007 = vmatprep.subr.mxu0 %v651
      %1008 = vmatpush2.msra.mxu0 %v650
      %1009 = vmatprep.subr.mxu0 %v648
      %1010 = vmatpush2.msra.mxu0 %v647
      %1011 = vmatprep.subr.mxu0 %v645
      %1012 = vmatpush2.msra.mxu0 %v644
      %1013 = vmatprep.subr.mxu0 %v642
      %1014 = vmatpush2.msra.mxu0 %v641
      %1015 = vmatprep.subr.mxu0 %v639
      %1016 = vmatpush2.msra.mxu0 %v638
      %1017 = vmatprep.subr.mxu0 %v636
      %1018 = vmatpush2.msra.mxu0 %v635
      %1019 = vmatprep.subr.mxu0 %v633
      %1020 = vmatpush2.msra.mxu0 %v632
      %1021 = vmatprep.subr.mxu0 %v630
      %1022 = vmatpush2.msra.mxu0 %v629
      %1023 = vmatprep.subr.mxu0 %v627
      %1024 = vmatpush2.msra.mxu0 %v626
      %1025 = vmatprep.subr.mxu0 %v624
      %1026 = vmatpush2.msra.mxu0 %v623
      %1027 = vmatprep.mubr.f32.mxu0 %v153
      %1028 = vmatmul.mubr.f32.gmra.mxu0 %v152
      %v1029 = vpop.f32.mrf.mxu0
      %v1030 = vadd.f32 0.0, %v1029
      %v1031 = vpop.f32.mrf.mxu0
      %v1032 = vadd.f32 0.0, %v1031
      %1033 = vdwg.mxu0
      %1034 = vmatprep.subr.mxu0 %v894
      %1035 = vmatpush1.msra.mxu0 %v893
      %1036 = vmatprep.subr.mxu0 %v891
      %1037 = vmatpush1.msra.mxu0 %v890
      %1038 = vmatprep.subr.mxu0 %v888
      %1039 = vmatpush1.msra.mxu0 %v887
      %1040 = vmatprep.subr.mxu0 %v885
      %1041 = vmatpush1.msra.mxu0 %v884
      %1042 = vmatprep.subr.mxu0 %v882
      %1043 = vmatpush1.msra.mxu0 %v881
      %1044 = vmatprep.subr.mxu0 %v879
      %1045 = vmatpush1.msra.mxu0 %v878
      %1046 = vmatprep.subr.mxu0 %v876
      %1047 = vmatpush1.msra.mxu0 %v875
      %1048 = vmatprep.subr.mxu0 %v873
      %1049 = vmatpush1.msra.mxu0 %v872
      %1050 = vmatprep.subr.mxu0 %v870
      %1051 = vmatpush1.msra.mxu0 %v869
      %1052 = vmatprep.subr.mxu0 %v867
      %1053 = vmatpush1.msra.mxu0 %v866
      %1054 = vmatprep.subr.mxu0 %v864
      %1055 = vmatpush1.msra.mxu0 %v863
      %1056 = vmatprep.subr.mxu0 %v861
      %1057 = vmatpush1.msra.mxu0 %v860
      %1058 = vmatprep.subr.mxu0 %v858
      %1059 = vmatpush1.msra.mxu0 %v857
      %1060 = vmatprep.subr.mxu0 %v855
      %1061 = vmatpush1.msra.mxu0 %v854
      %1062 = vmatprep.subr.mxu0 %v852
      %1063 = vmatpush1.msra.mxu0 %v851
      %1064 = vmatprep.subr.mxu0 %v849
      %1065 = vmatpush1.msra.mxu0 %v848
      %1066 = vmatprep.subr.mxu0 0.0
      %1067 = vmatpush2.msra.mxu0 0.0
      %1068 = vmatprep.subr.mxu0 0.0
      %1069 = vmatpush2.msra.mxu0 0.0
      %1070 = vmatprep.subr.mxu0 0.0
      %1071 = vmatpush2.msra.mxu0 0.0
      %1072 = vmatprep.subr.mxu0 0.0
      %1073 = vmatpush2.msra.mxu0 0.0
      %1074 = vmatprep.subr.mxu0 0.0
      %1075 = vmatpush2.msra.mxu0 0.0
      %1076 = vmatprep.subr.mxu0 0.0
      %1077 = vmatpush2.msra.mxu0 0.0
      %1078 = vmatprep.subr.mxu0 0.0
      %1079 = vmatpush2.msra.mxu0 0.0
      %1080 = vmatprep.subr.mxu0 0.0
      %1081 = vmatpush2.msra.mxu0 0.0
      %1082 = vmatprep.subr.mxu0 0.0
      %1083 = vmatpush2.msra.mxu0 0.0
      %1084 = vmatprep.subr.mxu0 0.0
      %1085 = vmatpush2.msra.mxu0 0.0
      %1086 = vmatprep.subr.mxu0 0.0
      %1087 = vmatpush2.msra.mxu0 0.0
      %1088 = vmatprep.subr.mxu0 0.0
      %1089 = vmatpush2.msra.mxu0 0.0
      %1090 = vmatprep.subr.mxu0 0.0
      %1091 = vmatpush2.msra.mxu0 0.0
      %1092 = vmatprep.subr.mxu0 0.0
      %1093 = vmatpush2.msra.mxu0 0.0
      %1094 = vmatprep.subr.mxu0 0.0
      %1095 = vmatpush2.msra.mxu0 0.0
      %1096 = vmatprep.subr.mxu0 %v954
      %1097 = vmatpush2.msra.mxu0 %v953
      %1098 = vmatprep.mubr.f32.mxu0 %v961
      %1099 = vmatmul.mubr.f32.gmra.mxu0 %v154
      %v1100 = vpop.f32.mrf.mxu0
      %v1101 = vadd.f32 %v1030, %v1100
      %v1102 = vpop.f32.mrf.mxu0
      %v1103 = vadd.f32 %v1032, %v1102
      %1104 = vdwg.mxu0
      %1105 = vmatprep.subr.mxu0 0.0
      %1106 = vmatpush1.msra.mxu0 %v381
      %1107 = vmatprep.subr.mxu0 0.0
      %1108 = vmatpush1.msra.mxu0 %v366
      %1109 = vmatprep.subr.mxu0 0.0
      %1110 = vmatpush1.msra.mxu0 %v351
      %1111 = vmatprep.subr.mxu0 0.0
      %1112 = vmatpush1.msra.mxu0 %v336
      %1113 = vmatprep.subr.mxu0 0.0
      %1114 = vmatpush1.msra.mxu0 %v321
      %1115 = vmatprep.subr.mxu0 0.0
      %1116 = vmatpush1.msra.mxu0 %v306
      %1117 = vmatprep.subr.mxu0 0.0
      %1118 = vmatpush1.msra.mxu0 %v291
      %1119 = vmatprep.subr.mxu0 0.0
      %1120 = vmatpush1.msra.mxu0 %v276
      %1121 = vmatprep.subr.mxu0 0.0
      %1122 = vmatpush1.msra.mxu0 %v261
      %1123 = vmatprep.subr.mxu0 0.0
      %1124 = vmatpush1.msra.mxu0 %v246
      %1125 = vmatprep.subr.mxu0 0.0
      %1126 = vmatpush1.msra.mxu0 %v231
      %1127 = vmatprep.subr.mxu0 0.0
      %1128 = vmatpush1.msra.mxu0 %v216
      %1129 = vmatprep.subr.mxu0 0.0
      %1130 = vmatpush1.msra.mxu0 %v201
      %1131 = vmatprep.subr.mxu0 0.0
      %1132 = vmatpush1.msra.mxu0 %v186
      %1133 = vmatprep.subr.mxu0 0.0
      %1134 = vmatpush1.msra.mxu0 %v171
      %1135 = vmatprep.subr.mxu0 0.0
      %1136 = vmatpush1.msra.mxu0 %v149
      %1137 = vmatprep.subr.mxu0 0.0
      %1138 = vmatpush2.msra.mxu0 %v670
      %1139 = vmatprep.subr.mxu0 0.0
      %1140 = vmatpush2.msra.mxu0 %v667
      %1141 = vmatprep.subr.mxu0 0.0
      %1142 = vmatpush2.msra.mxu0 %v664
      %1143 = vmatprep.subr.mxu0 0.0
      %1144 = vmatpush2.msra.mxu0 %v661
      %1145 = vmatprep.subr.mxu0 0.0
      %1146 = vmatpush2.msra.mxu0 %v658
      %1147 = vmatprep.subr.mxu0 0.0
      %1148 = vmatpush2.msra.mxu0 %v655
      %1149 = vmatprep.subr.mxu0 0.0
      %1150 = vmatpush2.msra.mxu0 %v652
      %1151 = vmatprep.subr.mxu0 0.0
      %1152 = vmatpush2.msra.mxu0 %v649
      %1153 = vmatprep.subr.mxu0 0.0
      %1154 = vmatpush2.msra.mxu0 %v646
      %1155 = vmatprep.subr.mxu0 0.0
      %1156 = vmatpush2.msra.mxu0 %v643
      %1157 = vmatprep.subr.mxu0 0.0
      %1158 = vmatpush2.msra.mxu0 %v640
      %1159 = vmatprep.subr.mxu0 0.0
      %1160 = vmatpush2.msra.mxu0 %v637
      %1161 = vmatprep.subr.mxu0 0.0
      %1162 = vmatpush2.msra.mxu0 %v634
      %1163 = vmatprep.subr.mxu0 0.0
      %1164 = vmatpush2.msra.mxu0 %v631
      %1165 = vmatprep.subr.mxu0 0.0
      %1166 = vmatpush2.msra.mxu0 %v628
      %1167 = vmatprep.subr.mxu0 0.0
      %1168 = vmatpush2.msra.mxu0 %v625
      %1169 = vmatprep.mubr.f32.mxu0 %v153
      %1170 = vmatmul.mubr.f32.gmra.mxu0 %v152
      %v1171 = vpop.f32.mrf.mxu0
      %v1172 = vadd.f32 0.0, %v1171
      %v1173 = vpop.f32.mrf.mxu0
      %1174 = vdwg.mxu0
      %1175 = vmatprep.subr.mxu0 0.0
      %1176 = vmatpush1.msra.mxu0 %v895
      %1177 = vmatprep.subr.mxu0 0.0
      %1178 = vmatpush1.msra.mxu0 %v892
      %1179 = vmatprep.subr.mxu0 0.0
      %1180 = vmatpush1.msra.mxu0 %v889
      %1181 = vmatprep.subr.mxu0 0.0
      %1182 = vmatpush1.msra.mxu0 %v886
      %1183 = vmatprep.subr.mxu0 0.0
      %1184 = vmatpush1.msra.mxu0 %v883
      %1185 = vmatprep.subr.mxu0 0.0
      %1186 = vmatpush1.msra.mxu0 %v880
      %1187 = vmatprep.subr.mxu0 0.0
      %1188 = vmatpush1.msra.mxu0 %v877
      %1189 = vmatprep.subr.mxu0 0.0
      %1190 = vmatpush1.msra.mxu0 %v874
      %1191 = vmatprep.subr.mxu0 0.0
      %1192 = vmatpush1.msra.mxu0 %v871
      %1193 = vmatprep.subr.mxu0 0.0
      %1194 = vmatpush1.msra.mxu0 %v868
      %1195 = vmatprep.subr.mxu0 0.0
      %1196 = vmatpush1.msra.mxu0 %v865
      %1197 = vmatprep.subr.mxu0 0.0
      %1198 = vmatpush1.msra.mxu0 %v862
      %1199 = vmatprep.subr.mxu0 0.0
      %1200 = vmatpush1.msra.mxu0 %v859
      %1201 = vmatprep.subr.mxu0 0.0
      %1202 = vmatpush1.msra.mxu0 %v856
      %1203 = vmatprep.subr.mxu0 0.0
      %1204 = vmatpush1.msra.mxu0 %v853
      %1205 = vmatprep.subr.mxu0 0.0
      %1206 = vmatpush1.msra.mxu0 %v850
      %1207 = vmatprep.subr.mxu0 0.0
      %1208 = vmatpush2.msra.mxu0 0.0
      %1209 = vmatprep.subr.mxu0 0.0
      %1210 = vmatpush2.msra.mxu0 0.0
      %1211 = vmatprep.subr.mxu0 0.0
      %1212 = vmatpush2.msra.mxu0 0.0
      %1213 = vmatprep.subr.mxu0 0.0
      %1214 = vmatpush2.msra.mxu0 0.0
      %1215 = vmatprep.subr.mxu0 0.0
      %1216 = vmatpush2.msra.mxu0 0.0
      %1217 = vmatprep.subr.mxu0 0.0
      %1218 = vmatpush2.msra.mxu0 0.0
      %1219 = vmatprep.subr.mxu0 0.0
      %1220 = vmatpush2.msra.mxu0 0.0
      %1221 = vmatprep.subr.mxu0 0.0
      %1222 = vmatpush2.msra.mxu0 0.0
      %1223 = vmatprep.subr.mxu0 0.0
      %1224 = vmatpush2.msra.mxu0 0.0
      %1225 = vmatprep.subr.mxu0 0.0
      %1226 = vmatpush2.msra.mxu0 0.0
      %1227 = vmatprep.subr.mxu0 0.0
      %1228 = vmatpush2.msra.mxu0 0.0
      %1229 = vmatprep.subr.mxu0 0.0
      %1230 = vmatpush2.msra.mxu0 0.0
      %1231 = vmatprep.subr.mxu0 0.0
      %1232 = vmatpush2.msra.mxu0 0.0
      %1233 = vmatprep.subr.mxu0 0.0
      %1234 = vmatpush2.msra.mxu0 0.0
      %1235 = vmatprep.subr.mxu0 0.0
      %1236 = vmatpush2.msra.mxu0 0.0
      %1237 = vmatprep.subr.mxu0 0.0
      %1238 = vmatpush2.msra.mxu0 %v955
      %1239 = vmatprep.mubr.f32.mxu0 %v961
      %1240 = vmatmul.mubr.f32.gmra.mxu0 %v154
      %v1241 = vpop.f32.mrf.mxu0
      %v1242 = vadd.f32 %v1172, %v1241
      %v1243 = vpop.f32.mrf.mxu0
      %1244 = vdwg.mxu0
      %v1245 = vlaneseq
      %v1246 = vand.u32 %v1245, 127
      %v1247 = vadd.s32 %v1246, 128
      %v1248 = vadd.s32 %v1246, 256
      %vm1249 = vcmp.lt.s32.totalorder %v1246, 0
      %v1250 = vsub.s32 0, %v1246
      %v1251 = vsel %vm1249, %v1250, %v1246
      %v1252 = vmul.u32.u64.compose %v1251, 3123612579
      %v1253 = vextract.low.u32 %v1252
      %v1254 = vextract.high.u32 %v1252
      %v1255 = vshrl.u32 %v1254, 4
      %v1256 = vmul.u32 %v1255, 22
      %v1257 = vsub.s32 %v1251, %v1256
      %v1258 = vsub.s32 0, %v1257
      %v1259 = vsel %vm1249, %v1258, %v1257
      %vm1260 = vcmp.lt.s32.totalorder %v1247, 0
      %v1261 = vsub.s32 0, %v1247
      %v1262 = vsel %vm1260, %v1261, %v1247
      %v1263 = vmul.u32.u64.compose %v1262, 3123612579
      %v1264 = vextract.low.u32 %v1263
      %v1265 = vextract.high.u32 %v1263
      %v1266 = vshrl.u32 %v1265, 4
      %v1267 = vmul.u32 %v1266, 22
      %v1268 = vsub.s32 %v1262, %v1267
      %v1269 = vsub.s32 0, %v1268
      %v1270 = vsel %vm1260, %v1269, %v1268
      %vm1271 = vcmp.lt.s32.totalorder %v1248, 0
      %v1272 = vsub.s32 0, %v1248
      %v1273 = vsel %vm1271, %v1272, %v1248
      %v1274 = vmul.u32.u64.compose %v1273, 3123612579
      %v1275 = vextract.low.u32 %v1274
      %v1276 = vextract.high.u32 %v1274
      %v1277 = vshrl.u32 %v1276, 4
      %v1278 = vmul.u32 %v1277, 22
      %v1279 = vsub.s32 %v1273, %v1278
      %v1280 = vsub.s32 0, %v1279
      %v1281 = vsel %vm1271, %v1280, %v1279
      %vm1282 = vcmp.ne.s32.totalorder %v1259, 0
      %vm1283 = vcmp.ne.s32.totalorder %v1270, 0
      %vm1284 = vcmp.ne.s32.totalorder %v1281, 0
      %vm1285 = vcmp.lt.s32.totalorder %v1259, 0
      %vm1286 = vcmp.lt.s32.totalorder %v1270, 0
      %vm1287 = vcmp.lt.s32.totalorder %v1281, 0
      %vm1288 = vmand %vm1285, %vm1282
      %vm1289 = vmand %vm1286, %vm1283
      %vm1290 = vmand %vm1287, %vm1284
      %v1291 = vadd.s32 %v1259, 22
      %v1292 = vadd.s32 %v1270, 22
      %v1293 = vadd.s32 %v1281, 22
      %v1294 = vsel %vm1288, %v1291, %v1259
      %v1295 = vsel %vm1289, %v1292, %v1270
      %v1296 = vsel %vm1290, %v1293, %v1281
      %vm1297 = vcmp.lt.s32.totalorder %v1294, 16
      %vm1298 = vcmp.lt.s32.totalorder %v1295, 16
      %vm1299 = vcmp.lt.s32.totalorder %v1296, 16
      %vm1300 = vcmp.lt.s32.totalorder %v1246, 352
      %vm1301 = vcmp.lt.s32.totalorder %v1247, 352
      %vm1302 = vcmp.lt.s32.totalorder %v1248, 352
      %vm1303 = vmand %vm1297, %vm1300
      %vm1304 = vmand %vm1298, %vm1301
      %vm1305 = vmand %vm1299, %vm1302
      %v1306 = vsel %vm1303, 1, 0
      %v1307 = vsel %vm1304, 1, 0
      %v1308 = vsel %vm1305, 1, 0
      %v1309 = vcvt.s32.f32 %v1306
      %v1310 = vcvt.s32.f32 %v1307
      %v1311 = vcvt.s32.f32 %v1308
      %v1312 = vmul.f32 %v1101, %v1309
      %v1313 = vmul.f32 %v1103, %v1310
      %v1314 = vmul.f32 %v1242, %v1311
      %v1315 = vadd.f32 %v1312, %v1313
      %v1316 = vadd.f32 %v1315, %v1314
      %1317 = vadd.xlane.f32.xlu0 %v1316
      %v1318 = vpop.xlane.xlu0 %1317
      %v1319 = vadd.f32 %v1318, 0.0
      %v1320 = vmul.f32 %v1312, %v1101
      %v1321 = vmul.f32 %v1313, %v1103
      %v1322 = vmul.f32 %v1314, %v1242
      %v1323 = vadd.f32 %v1320, %v1321
      %v1324 = vadd.f32 %v1323, %v1322
      %1325 = vadd.xlane.f32.xlu0 %v1324
      %v1326 = vpop.xlane.xlu0 %1325
      %v1327 = vadd.f32 %v1326, 0.0
      %v1328 = vmul.f32 %v1319, 0.00390625
      %v1329 = vmul.f32 %v1327, 0.00390625
      %v1330 = vmul.f32 %v1328, %v1328
      %v1331 = vsub.f32 %v1329, %v1330
      %v1332 = vmax.f32 %v1331, 0.0
      %v1333 = vadd.f32 %v1332, 1e-05
      %v1334 = vrsqrt.pop %v1333
      %v1335 = vsub.f32 %v1101, %v1328
      %v1336 = vsub.f32 %v1103, %v1328
      %v1337 = vsub.f32 %v1242, %v1328
      %v1338 = vmul.f32 %v1335, %v1334
      %v1339 = vmul.f32 %v1336, %v1334
      %v1340 = vmul.f32 %v1337, %v1334
      %v1341 = vmax.f32 %v1338, 0.0
      %v1342 = vmax.f32 %v1339, 0.0
      %v1343 = vmax.f32 %v1340, 0.0
      %v1344 = vpack.c.bf16 %v1341, %v1341
      %v1345 = vpack.c.bf16 %v1342, %v1342
      %v1346 = vpack.c.bf16 %v1343, %v1343
      %v1350 = vunpack.c.l.b16 %v1344
      %v1351 = vunpack.c.l.b16 %v1345
      %v1352 = vunpack.c.l.b16 %v1346
      %v1353 = vpack.c.b16 %v1351, %v1350
      %v1354 = vpack.c.b16 %v1352, %v1352
      %1357 = vst [vmem:[%s143] sm:$0xff] %v1353
      %1358 = vst [vmem:[%s143 + $0x8] sm:$0xf] %v1354
      %p1359 = scmp.lt.s32.totalorder %s13, 1
      %s1360 = scalar_select %p1359, %s13, 1
      %s1361 = smul.addr %s1360, 3
      %s1362 = smul.addr %s1361, 4
      %s1363 = scalar_lea.vmem %s2, %s1362
      // Predicated region
      $region29: #{_lambda_.10} parent=27 // pred_check
        %p1364 = pneg %p78
      $region30: #{_lambda_.10} parent=27 // pred_check_branch
        %1366 = sbr.rel (%p1364) target = $region32
      $region31: #{_lambda_.10} parent=27 // pred_region
        _
      $region32: #{_lambda_.10} parent=27 // pred_fallthru
        _
    $region28: #{_lambda_.10} parent=5 // pred_fallthru
      _
    %p1367 = scmp.le.s32.totalorder 2, %s8
    // Predicated region
    $region33: #{_lambda_.10} parent=5 // pred_check
      %p1368 = pneg %p1367
    $region34: #{_lambda_.10} parent=5 // pred_check_branch
      %1370 = sbr.rel (%p1368) target = $region36
    $region35: #{_lambda_.10} parent=5 // pred_region
      %s1371 = ssub.s32 %s8, 2
      // Predicated region
      $region37: #{_lambda_.10} parent=35 // pred_check
        %p1372 = pneg %p84
      $region38: #{_lambda_.10} parent=35 // pred_check_branch
        %1374 = sbr.rel (%p1372) target = $region40
      $region39: #{_lambda_.10} parent=35 // pred_region
        %p1375 = scmp.lt.s32.totalorder %s14, 1
        %s1376 = scalar_select %p1375, %s14, 1
        %s1377 = smul.addr %s1376, 3
        %s1378 = smul.addr %s1377, 4
        %s1379 = scalar_lea.vmem %s2, %s1378
      $region40: #{_lambda_.10} parent=35 // pred_fallthru
        _
    $region36: #{_lambda_.10} parent=5 // pred_fallthru
      _
  $region6: #{_lambda_.10} parent=0 // loop_footer
    %s12 = sadd.s32 1, %s8
  $region7: #{_lambda_.10} parent=0 // loop_footer_branch
    %7 = sbr.rel target = $region3
  $region8: #{_lambda_.10} parent=0 // loop_exit
    _

// kernel: _lambda_.11
$region0: #{_lambda_.11}
  #allocation0 [shape = 'u32[]', space=smem, size = 0x4, offset = 0x4, fixed_abs, tag = 'smem constant byte address 0x4 - core index']
  #allocation1 [shape = 'u32[144,128]{1,0:T(1,128)}', space=vmem, size = 0x12000, scoped, tag = 'internal scratch']
  %s0 = inlined_call_operand.vmem [shape: bf16[2,32,138], index: 0, kind: input, shape index: {}]
  %s1 = inlined_call_operand.vmem [shape: f32[16,72], index: 1, kind: input, shape index: {}]
  %s2 = inlined_call_operand.vmem [shape: bf16[2,16,128], index: 2, kind: output, shape index: {}]
  %s3 = sld [smem:[#allocation0]]
  $region41: #{_lambda_.11} parent=0
    _
  %s5 = ssub.s32 1, %s3
  %s6 = scalar_select 0, %s5, %s3
  loop: start=0, step=1, limit=4
  $region2: #{_lambda_.11} parent=0 // loop_pre_header
    _
  $region3: #{_lambda_.11} parent=0 // loop_header
    %s8 = sphi 0, %s12
    %p9 = scmp.ge.s32.totalorder %s8, 4
    %s18 = sphi 0, %s20
    %s21 = sphi 0, %s18
    %s22 = sphi 0, %s21
    %s38 = sphi 0, %s22
    %s42 = sphi 0, %s42
    %s44 = sphi 0, %s42
    %s45 = sphi 0, %s44
    %s59 = sphi 0, %s45
    %s65 = sphi 0, %s67
    %s68 = sphi 0, %s65
    %s69 = sphi 0, %s68
    %s85 = sphi 0, %s69
  $region4: #{_lambda_.11} parent=0 // loop_header_branch
    %11 = sbr.rel (%p9) target = $region8
  $region5: #{_lambda_.11} parent=0 // loop_body
    %s13 = ssub.s32 %s8, 1
    %s14 = ssub.s32 %s8, 2
    %s15 = sadd.s32 %s8, 1
    %s16 = ssub.s32 %s8, %s15
    %p17 = scmp.eq.s32.totalorder %s16, 0
    %s19 = sadd.s32 %s18, 1
    %s20 = scalar_select %p17, %s18, %s19
    %p23 = pneg %p17
    %p24 = scmp.eq.s32.totalorder %s8, 1
    %p25 = por %p23, %p24
    %p26 = scmp.ne.s32.totalorder %s18, %s21
    %p27 = scmp.eq.s32.totalorder %s8, 0
    %p28 = por %p26, %p27
    %p29 = scmp.ne.s32.totalorder %s18, %s21
    %p30 = scmp.eq.s32.totalorder %s13, 1
    %p31 = por %p29, %p30
    %p32 = scmp.ne.s32.totalorder %s21, %s22
    %p33 = scmp.eq.s32.totalorder %s13, 0
    %p34 = por %p32, %p33
    %p35 = scmp.ne.s32.totalorder %s21, %s22
    %p36 = scmp.eq.s32.totalorder %s14, 1
    %p37 = por %p35, %p36
    %p39 = scmp.ne.s32.totalorder %s22, %s38
    %p40 = scmp.eq.s32.totalorder %s14, 0
    %p41 = por %p39, %p40
    %s43 = sadd.s32 %s42, 1
    %p46 = scmp.eq.s32.totalorder %s8, 1
    %p47 = scmp.ne.s32.totalorder %s42, %s44
    %p48 = scmp.eq.s32.totalorder %s8, 0
    %p49 = por %p47, %p48
    %p50 = scmp.ne.s32.totalorder %s42, %s44
    %p51 = scmp.eq.s32.totalorder %s13, 1
    %p52 = por %p50, %p51
    %p53 = scmp.ne.s32.totalorder %s44, %s45
    %p54 = scmp.eq.s32.totalorder %s13, 0
    %p55 = por %p53, %p54
    %p56 = scmp.ne.s32.totalorder %s44, %s45
    %p57 = scmp.eq.s32.totalorder %s14, 1
    %p58 = por %p56, %p57
    %p60 = scmp.ne.s32.totalorder %s45, %s59
    %p61 = scmp.eq.s32.totalorder %s14, 0
    %p62 = por %p60, %p61
    %s63 = ssub.s32 %s8, %s15
    %p64 = scmp.eq.s32.totalorder %s63, 0
    %s66 = sadd.s32 %s65, 1
    %s67 = scalar_select %p64, %s65, %s66
    %p70 = pneg %p64
    %p71 = scmp.eq.s32.totalorder %s8, 1
    %p72 = por %p70, %p71
    %p73 = scmp.ne.s32.totalorder %s65, %s68
    %p74 = scmp.eq.s32.totalorder %s8, 0
    %p75 = por %p73, %p74
    %p76 = scmp.ne.s32.totalorder %s65, %s68
    %p77 = scmp.eq.s32.totalorder %s13, 1
    %p78 = por %p76, %p77
    %p79 = scmp.ne.s32.totalorder %s68, %s69
    %p80 = scmp.eq.s32.totalorder %s13, 0
    %p81 = por %p79, %p80
    %p82 = scmp.ne.s32.totalorder %s68, %s69
    %p83 = scmp.eq.s32.totalorder %s14, 1
    %p84 = por %p82, %p83
    %p86 = scmp.ne.s32.totalorder %s69, %s85
    %p87 = scmp.eq.s32.totalorder %s14, 0
    %p88 = por %p86, %p87
    %p89 = scmp.le.s32.totalorder 1, %s8
    %p90 = scmp.lt.s32.totalorder %s8, 3
    %p91 = pnand %p89, %p90
    %p92 = pneg %p91
    // Predicated region
    $region9: #{_lambda_.11} parent=5 // pred_check
      _
    $region10: #{_lambda_.11} parent=5 // pred_check_branch
      %94 = sbr.rel (%p91) target = $region12
    $region11: #{_lambda_.11} parent=5 // pred_region
      %s95 = ssub.s32 %s8, 1
      // Predicated region
      $region13: #{_lambda_.11} parent=11 // pred_check
        %p96 = pneg %p55
      $region14: #{_lambda_.11} parent=11 // pred_check_branch
        %98 = sbr.rel (%p96) target = $region16
      $region15: #{_lambda_.11} parent=11 // pred_region
        _
      $region16: #{_lambda_.11} parent=11 // pred_fallthru
        _
    $region12: #{_lambda_.11} parent=5 // pred_fallthru
      _
    %p99 = scmp.lt.s32.totalorder %s8, 2
    // Predicated region
    $region17: #{_lambda_.11} parent=5 // pred_check
      %p100 = pneg %p99
    $region18: #{_lambda_.11} parent=5 // pred_check_branch
      %102 = sbr.rel (%p100) target = $region20
    $region19: #{_lambda_.11} parent=5 // pred_region
      // Predicated region
      $region21: #{_lambda_.11} parent=19 // pred_check
        %p103 = pneg %p28
      $region22: #{_lambda_.11} parent=19 // pred_check_branch
        %105 = sbr.rel (%p103) target = $region24
      $region23: #{_lambda_.11} parent=19 // pred_region
        %p106 = scmp.lt.s32.totalorder %s8, 1
        %s107 = scalar_select %p106, %s8, 1
        %s108 = smul.addr %s107, 8
        %s109 = smul.addr %s108, 4
        %s110 = scalar_lea.vmem %s0, %s109
      $region24: #{_lambda_.11} parent=19 // pred_fallthru
        _
    $region20: #{_lambda_.11} parent=5 // pred_fallthru
      _
    %p111 = scmp.le.s32.totalorder 1, %s8
    %p112 = scmp.lt.s32.totalorder %s8, 3
    %p113 = pnand %p111, %p112
    %p114 = pneg %p113
    // Predicated region
    $region25: #{_lambda_.11} parent=5 // pred_check
      _
    $region26: #{_lambda_.11} parent=5 // pred_check_branch
      %116 = sbr.rel (%p113) target = $region28
    $region27: #{_lambda_.11} parent=5 // pred_region
      %s117 = ssub.s32 %s8, 1
      %p118 = scmp.lt.s32.totalorder %s13, 1
      %s119 = scalar_select %p118, %s13, 1
      %s120 = smul.addr %s119, 8
      %s121 = smul.addr %s120, 4
      %s122 = scalar_lea.vmem %s0, %s121
      %p123 = pneg %p34
      %p124 = pneg %p31
      %p125 = pneg %p55
      %p126 = pneg %p52
      %p127 = pneg %p81
      %p128 = pneg %p78
      %p129 = scmp.lt.s32.totalorder %s13, 1
      %s130 = scalar_select %p129, %s13, 1
      %s131 = smul.addr %s130, 2
      %s132 = smul.addr %s131, 4
      %s133 = scalar_lea.vmem %s2, %s132
      %p134 = scmp.lt.s32.totalorder %s13, 1
      %s135 = scalar_select %p134, %s13, 1
      %s136 = smul.addr %s135, 8
      %s137 = smul.addr %s136, 4
      %s138 = scalar_lea.vmem %s0, %s137
      %p139 = scmp.lt.s32.totalorder %s13, 1
      %s140 = scalar_select %p139, %s13, 1
      %s141 = smul.addr %s140, 2
      %s142 = smul.addr %s141, 4
      %s143 = scalar_lea.vmem %s2, %s142
      %v144 = vld [vmem:[%s138] sm:$0xff]
      %v145 = vld [vmem:[%s138 + $0x8] sm:$0xff]
      %v146 = vld [vmem:[%s138 + $0x10] sm:$0xff]
      %v147 = vld [vmem:[%s138 + $0x18] sm:$0xff]
      %v148 = vunpack.c.l.bf16 %v144
      %v149 = vunpack.c.h.bf16 %v144
      %v150 = vunpack.c.l.bf16 %v145
      %v151 = vunpack.c.h.bf16 %v145
      %v152 = vunpack.c.l.bf16 %v146
      %v153 = vunpack.c.h.bf16 %v146
      %v154 = vunpack.c.l.bf16 %v147
      %v155 = vld [vmem:[%s1] sm:$0xff]
      %v156 = vld [vmem:[%s1 + $0x8] sm:$0xff]
      %159 = vrot.lane.b32.xlu0 %v148, 127
      %v160 = vpop.permute.xlu0 %159
      %161 = vrot.lane.b32.xlu0 %v149, 127
      %v162 = vpop.permute.xlu0 %161
      %vm163 = vcmask 1039360
      %v164 = vsel %vm163, %v160, %v162
      %168 = vrot.lane.b32.xlu0 %v152, 127
      %v169 = vpop.permute.xlu0 %168
      %170 = vrot.lane.b32.xlu0 %v153, 127
      %v171 = vpop.permute.xlu0 %170
      %v172 = vsel %vm163, %v169, %v171
      %174 = vrot.lane.b32.xlu0 %v148, 119
      %v175 = vpop.permute.xlu0 %174
      %176 = vrot.lane.b32.xlu0 %v149, 119
      %v177 = vpop.permute.xlu0 %176
      %vm178 = vcmask 973824
      %v179 = vsel %vm178, %v175, %v177
      %183 = vrot.lane.b32.xlu0 %v150, 119
      %v184 = vpop.permute.xlu0 %183
      %185 = vrot.lane.b32.xlu0 %v151, 119
      %v186 = vpop.permute.xlu0 %185
      %v187 = vsel %vm178, %v184, %v186
      %189 = vrot.lane.b32.xlu0 %v148, 118
      %v190 = vpop.permute.xlu0 %189
      %191 = vrot.lane.b32.xlu0 %v149, 118
      %v192 = vpop.permute.xlu0 %191
      %vm193 = vcmask 965632
      %v194 = vsel %vm193, %v190, %v192
      %vm196 = vcmask 588800
      %v198 = vsel %vm196, %v155, 0
      %v201 = vsel %vm196, %v156, 0
      %203 = vmatprep.subr.mxu0 0.0
      %204 = vmatpush1.msra.mxu0 0.0
      %205 = vmatprep.subr.mxu0 0.0
      %206 = vmatpush1.msra.mxu0 0.0
      %207 = vmatprep.subr.mxu0 0.0
      %208 = vmatpush1.msra.mxu0 0.0
      %209 = vmatprep.subr.mxu0 0.0
      %210 = vmatpush1.msra.mxu0 0.0
      %211 = vmatprep.subr.mxu0 0.0
      %212 = vmatpush1.msra.mxu0 0.0
      %213 = vmatprep.subr.mxu0 0.0
      %214 = vmatpush1.msra.mxu0 0.0
      %215 = vmatprep.subr.mxu0 0.0
      %216 = vmatpush1.msra.mxu0 0.0
      %217 = vmatprep.subr.mxu0 0.0
      %218 = vmatpush1.msra.mxu0 %v194
      %219 = vmatprep.subr.mxu0 0.0
      %220 = vmatpush1.msra.mxu0 %v187
      %221 = vmatprep.subr.mxu0 0.0
      %222 = vmatpush1.msra.mxu0 %v179
      %223 = vmatprep.subr.mxu0 0.0
      %224 = vmatpush1.msra.mxu0 %v172
      %225 = vmatprep.subr.mxu0 0.0
      %226 = vmatpush1.msra.mxu0 %v154
      %227 = vmatprep.subr.mxu0 0.0
      %228 = vmatpush1.msra.mxu0 %v152
      %229 = vmatprep.subr.mxu0 0.0
      %230 = vmatpush1.msra.mxu0 %v164
      %231 = vmatprep.subr.mxu0 0.0
      %232 = vmatpush1.msra.mxu0 %v150
      %233 = vmatprep.subr.mxu0 0.0
      %234 = vmatpush1.msra.mxu0 %v148
      %235 = vmatprep.subr.mxu0 0.0
      %236 = vmatpush2.msra.mxu0 0.0
      %237 = vmatprep.subr.mxu0 0.0
      %238 = vmatpush2.msra.mxu0 0.0
      %239 = vmatprep.subr.mxu0 0.0
      %240 = vmatpush2.msra.mxu0 0.0
      %241 = vmatprep.subr.mxu0 0.0
      %242 = vmatpush2.msra.mxu0 0.0
      %243 = vmatprep.subr.mxu0 0.0
      %244 = vmatpush2.msra.mxu0 0.0
      %245 = vmatprep.subr.mxu0 0.0
      %246 = vmatpush2.msra.mxu0 0.0
      %247 = vmatprep.subr.mxu0 0.0
      %248 = vmatpush2.msra.mxu0 0.0
      %249 = vmatprep.subr.mxu0 0.0
      %250 = vmatpush2.msra.mxu0 0.0
      %251 = vmatprep.subr.mxu0 0.0
      %252 = vmatpush2.msra.mxu0 0.0
      %253 = vmatprep.subr.mxu0 0.0
      %254 = vmatpush2.msra.mxu0 0.0
      %255 = vmatprep.subr.mxu0 0.0
      %256 = vmatpush2.msra.mxu0 0.0
      %257 = vmatprep.subr.mxu0 0.0
      %258 = vmatpush2.msra.mxu0 0.0
      %259 = vmatprep.subr.mxu0 0.0
      %260 = vmatpush2.msra.mxu0 0.0
      %261 = vmatprep.subr.mxu0 0.0
      %262 = vmatpush2.msra.mxu0 0.0
      %263 = vmatprep.subr.mxu0 0.0
      %264 = vmatpush2.msra.mxu0 0.0
      %265 = vmatprep.subr.mxu0 0.0
      %266 = vmatpush2.msra.mxu0 0.0
      %267 = vmatprep.mubr.f32.mxu0 0.0
      %268 = vmatmul.mubr.f32.gmra.mxu0 %v198
      %v269 = vpop.f32.mrf.mxu0
      %v270 = vadd.f32 0.0, %v269
      %v271 = vpop.f32.mrf.mxu0
      %272 = vmatprep.mubr.f32.mxu0 0.0
      %273 = vmatmul.mubr.f32.gmra.mxu0 %v201
      %v274 = vpop.f32.mrf.mxu0
      %v275 = vadd.f32 0.0, %v274
      %v276 = vpop.f32.mrf.mxu0
      %277 = vdwg.mxu0
      %v278 = vlaneseq
      %v279 = vand.u32 %v278, 127
      %vm280 = vcmp.lt.s32.totalorder %v279, 0
      %v281 = vsub.s32 0, %v279
      %v282 = vsel %vm280, %v281, %v279
      %v283 = vmul.u32.u64.compose %v282, 3817748708
      %v284 = vextract.low.u32 %v283
      %v285 = vextract.high.u32 %v283
      %v286 = vshrl.u32 %v285, 3
      %v287 = vmul.u32 %v286, 9
      %v288 = vsub.s32 %v282, %v287
      %v289 = vsub.s32 0, %v288
      %v290 = vsel %vm280, %v289, %v288
      %vm291 = vcmp.ne.s32.totalorder %v290, 0
      %vm292 = vcmp.lt.s32.totalorder %v290, 0
      %vm293 = vmand %vm292, %vm291
      %v294 = vadd.s32 %v290, 9
      %v295 = vsel %vm293, %v294, %v290
      %vm296 = vcmp.lt.s32.totalorder %v295, 8
      %vm297 = vcmp.lt.s32.totalorder %v279, 72
      %vm298 = vmand %vm296, %vm297
      %v299 = vsel %vm298, 1, 0
      %v300 = vcvt.s32.f32 %v299
      %v301 = vmul.f32 %v270, %v300
      %v302 = vmul.f32 %v275, %v300
      %303 = vadd.xlane.f32.xlu0 %v301
      %v304 = vpop.xlane.xlu0 %303
      %305 = vadd.xlane.f32.xlu0 %v302
      %v306 = vpop.xlane.xlu0 %305
      %v307 = vadd.f32 %v304, 0.0
      %v308 = vadd.f32 %v306, 0.0
      %v309 = vmul.f32 %v301, %v270
      %v310 = vmul.f32 %v302, %v275
      %311 = vadd.xlane.f32.xlu0 %v309
      %v312 = vpop.xlane.xlu0 %311
      %313 = vadd.xlane.f32.xlu0 %v310
      %v314 = vpop.xlane.xlu0 %313
      %v315 = vadd.f32 %v312, 0.0
      %v316 = vadd.f32 %v314, 0.0
      %v317 = vmul.f32 %v307, 0.015625
      %v318 = vmul.f32 %v308, 0.015625
      %v319 = vmul.f32 %v315, 0.015625
      %v320 = vmul.f32 %v316, 0.015625
      %v321 = vmul.f32 %v317, %v317
      %v322 = vmul.f32 %v318, %v318
      %v323 = vsub.f32 %v319, %v321
      %v324 = vsub.f32 %v320, %v322
      %v325 = vmax.f32 %v323, 0.0
      %v326 = vmax.f32 %v324, 0.0
      %v327 = vadd.f32 %v325, 1e-05
      %v328 = vadd.f32 %v326, 1e-05
      %v329 = vrsqrt.pop %v327
      %v330 = vrsqrt.pop %v328
      %v331 = vsub.f32 %v270, %v317
      %v332 = vsub.f32 %v275, %v318
      %v333 = vmul.f32 %v331, %v329
      %v334 = vmul.f32 %v332, %v330
      %v335 = vmax.f32 %v333, 0.0
      %v336 = vmax.f32 %v334, 0.0
      %v337 = vpack.c.bf16 %v336, %v335
      %v339 = vunpack.c.l.b16 %v337
      %v340 = vunpack.c.h.b16 %v337
      %v341 = vpack.c.b16 %v339, %v339
      %v342 = vpack.c.b16 %v340, %v340
      %345 = vst [vmem:[%s143] sm:$0xf] %v341
      %346 = vst [vmem:[%s143 + $0x4] sm:$0xf] %v342
      %p347 = scmp.lt.s32.totalorder %s13, 1
      %s348 = scalar_select %p347, %s13, 1
      %s349 = smul.addr %s348, 2
      %s350 = smul.addr %s349, 4
      %s351 = scalar_lea.vmem %s2, %s350
      // Predicated region
      $region29: #{_lambda_.11} parent=27 // pred_check
        %p352 = pneg %p78
      $region30: #{_lambda_.11} parent=27 // pred_check_branch
        %354 = sbr.rel (%p352) target = $region32
      $region31: #{_lambda_.11} parent=27 // pred_region
        _
      $region32: #{_lambda_.11} parent=27 // pred_fallthru
        _
    $region28: #{_lambda_.11} parent=5 // pred_fallthru
      _
    %p355 = scmp.le.s32.totalorder 2, %s8
    // Predicated region
    $region33: #{_lambda_.11} parent=5 // pred_check
      %p356 = pneg %p355
    $region34: #{_lambda_.11} parent=5 // pred_check_branch
      %358 = sbr.rel (%p356) target = $region36
    $region35: #{_lambda_.11} parent=5 // pred_region
      %s359 = ssub.s32 %s8, 2
      // Predicated region
      $region37: #{_lambda_.11} parent=35 // pred_check
        %p360 = pneg %p84
      $region38: #{_lambda_.11} parent=35 // pred_check_branch
        %362 = sbr.rel (%p360) target = $region40
      $region39: #{_lambda_.11} parent=35 // pred_region
        %p363 = scmp.lt.s32.totalorder %s14, 1
        %s364 = scalar_select %p363, %s14, 1
        %s365 = smul.addr %s364, 2
        %s366 = smul.addr %s365, 4
        %s367 = scalar_lea.vmem %s2, %s366
      $region40: #{_lambda_.11} parent=35 // pred_fallthru
        _
    $region36: #{_lambda_.11} parent=5 // pred_fallthru
      _
  $region6: #{_lambda_.11} parent=0 // loop_footer
    %s12 = sadd.s32 1, %s8
  $region7: #{_lambda_.11} parent=0 // loop_footer_branch
    %7 = sbr.rel target = $region3
  $region8: #{_lambda_.11} parent=0 // loop_exit
    _

// kernel: _lambda_.12
$region0: #{_lambda_.12}
  #allocation0 [shape = 'u32[]', space=smem, size = 0x4, offset = 0x4, fixed_abs, tag = 'smem constant byte address 0x4 - core index']
  #allocation1 [shape = 'u32[144,128]{1,0:T(1,128)}', space=vmem, size = 0x12000, scoped, tag = 'internal scratch']
  %s0 = inlined_call_operand.vmem [shape: bf16[2,64,134], index: 0, kind: input, shape index: {}]
  %s1 = inlined_call_operand.vmem [shape: f32[32,144], index: 1, kind: input, shape index: {}]
  %s2 = inlined_call_operand.vmem [shape: bf16[2,32,128], index: 2, kind: output, shape index: {}]
  %s3 = sld [smem:[#allocation0]]
  $region41: #{_lambda_.12} parent=0
    _
  %s5 = ssub.s32 1, %s3
  %s6 = scalar_select 0, %s5, %s3
  loop: start=0, step=1, limit=4
  $region2: #{_lambda_.12} parent=0 // loop_pre_header
    _
  $region3: #{_lambda_.12} parent=0 // loop_header
    %s8 = sphi 0, %s12
    %p9 = scmp.ge.s32.totalorder %s8, 4
    %s18 = sphi 0, %s20
    %s21 = sphi 0, %s18
    %s22 = sphi 0, %s21
    %s38 = sphi 0, %s22
    %s42 = sphi 0, %s42
    %s44 = sphi 0, %s42
    %s45 = sphi 0, %s44
    %s59 = sphi 0, %s45
    %s65 = sphi 0, %s67
    %s68 = sphi 0, %s65
    %s69 = sphi 0, %s68
    %s85 = sphi 0, %s69
  $region4: #{_lambda_.12} parent=0 // loop_header_branch
    %11 = sbr.rel (%p9) target = $region8
  $region5: #{_lambda_.12} parent=0 // loop_body
    %s13 = ssub.s32 %s8, 1
    %s14 = ssub.s32 %s8, 2
    %s15 = sadd.s32 %s8, 1
    %s16 = ssub.s32 %s8, %s15
    %p17 = scmp.eq.s32.totalorder %s16, 0
    %s19 = sadd.s32 %s18, 1
    %s20 = scalar_select %p17, %s18, %s19
    %p23 = pneg %p17
    %p24 = scmp.eq.s32.totalorder %s8, 1
    %p25 = por %p23, %p24
    %p26 = scmp.ne.s32.totalorder %s18, %s21
    %p27 = scmp.eq.s32.totalorder %s8, 0
    %p28 = por %p26, %p27
    %p29 = scmp.ne.s32.totalorder %s18, %s21
    %p30 = scmp.eq.s32.totalorder %s13, 1
    %p31 = por %p29, %p30
    %p32 = scmp.ne.s32.totalorder %s21, %s22
    %p33 = scmp.eq.s32.totalorder %s13, 0
    %p34 = por %p32, %p33
    %p35 = scmp.ne.s32.totalorder %s21, %s22
    %p36 = scmp.eq.s32.totalorder %s14, 1
    %p37 = por %p35, %p36
    %p39 = scmp.ne.s32.totalorder %s22, %s38
    %p40 = scmp.eq.s32.totalorder %s14, 0
    %p41 = por %p39, %p40
    %s43 = sadd.s32 %s42, 1
    %p46 = scmp.eq.s32.totalorder %s8, 1
    %p47 = scmp.ne.s32.totalorder %s42, %s44
    %p48 = scmp.eq.s32.totalorder %s8, 0
    %p49 = por %p47, %p48
    %p50 = scmp.ne.s32.totalorder %s42, %s44
    %p51 = scmp.eq.s32.totalorder %s13, 1
    %p52 = por %p50, %p51
    %p53 = scmp.ne.s32.totalorder %s44, %s45
    %p54 = scmp.eq.s32.totalorder %s13, 0
    %p55 = por %p53, %p54
    %p56 = scmp.ne.s32.totalorder %s44, %s45
    %p57 = scmp.eq.s32.totalorder %s14, 1
    %p58 = por %p56, %p57
    %p60 = scmp.ne.s32.totalorder %s45, %s59
    %p61 = scmp.eq.s32.totalorder %s14, 0
    %p62 = por %p60, %p61
    %s63 = ssub.s32 %s8, %s15
    %p64 = scmp.eq.s32.totalorder %s63, 0
    %s66 = sadd.s32 %s65, 1
    %s67 = scalar_select %p64, %s65, %s66
    %p70 = pneg %p64
    %p71 = scmp.eq.s32.totalorder %s8, 1
    %p72 = por %p70, %p71
    %p73 = scmp.ne.s32.totalorder %s65, %s68
    %p74 = scmp.eq.s32.totalorder %s8, 0
    %p75 = por %p73, %p74
    %p76 = scmp.ne.s32.totalorder %s65, %s68
    %p77 = scmp.eq.s32.totalorder %s13, 1
    %p78 = por %p76, %p77
    %p79 = scmp.ne.s32.totalorder %s68, %s69
    %p80 = scmp.eq.s32.totalorder %s13, 0
    %p81 = por %p79, %p80
    %p82 = scmp.ne.s32.totalorder %s68, %s69
    %p83 = scmp.eq.s32.totalorder %s14, 1
    %p84 = por %p82, %p83
    %p86 = scmp.ne.s32.totalorder %s69, %s85
    %p87 = scmp.eq.s32.totalorder %s14, 0
    %p88 = por %p86, %p87
    %p89 = scmp.le.s32.totalorder 1, %s8
    %p90 = scmp.lt.s32.totalorder %s8, 3
    %p91 = pnand %p89, %p90
    %p92 = pneg %p91
    // Predicated region
    $region9: #{_lambda_.12} parent=5 // pred_check
      _
    $region10: #{_lambda_.12} parent=5 // pred_check_branch
      %94 = sbr.rel (%p91) target = $region12
    $region11: #{_lambda_.12} parent=5 // pred_region
      %s95 = ssub.s32 %s8, 1
      // Predicated region
      $region13: #{_lambda_.12} parent=11 // pred_check
        %p96 = pneg %p55
      $region14: #{_lambda_.12} parent=11 // pred_check_branch
        %98 = sbr.rel (%p96) target = $region16
      $region15: #{_lambda_.12} parent=11 // pred_region
        _
      $region16: #{_lambda_.12} parent=11 // pred_fallthru
        _
    $region12: #{_lambda_.12} parent=5 // pred_fallthru
      _
    %p99 = scmp.lt.s32.totalorder %s8, 2
    // Predicated region
    $region17: #{_lambda_.12} parent=5 // pred_check
      %p100 = pneg %p99
    $region18: #{_lambda_.12} parent=5 // pred_check_branch
      %102 = sbr.rel (%p100) target = $region20
    $region19: #{_lambda_.12} parent=5 // pred_region
      // Predicated region
      $region21: #{_lambda_.12} parent=19 // pred_check
        %p103 = pneg %p28
      $region22: #{_lambda_.12} parent=19 // pred_check_branch
        %105 = sbr.rel (%p103) target = $region24
      $region23: #{_lambda_.12} parent=19 // pred_region
        %p106 = scmp.lt.s32.totalorder %s8, 1
        %s107 = scalar_select %p106, %s8, 1
        %s108 = smul.addr %s107, 16
        %s109 = smul.addr %s108, 4
        %s110 = scalar_lea.vmem %s0, %s109
      $region24: #{_lambda_.12} parent=19 // pred_fallthru
        _
    $region20: #{_lambda_.12} parent=5 // pred_fallthru
      _
    %p111 = scmp.le.s32.totalorder 1, %s8
    %p112 = scmp.lt.s32.totalorder %s8, 3
    %p113 = pnand %p111, %p112
    %p114 = pneg %p113
    // Predicated region
    $region25: #{_lambda_.12} parent=5 // pred_check
      _
    $region26: #{_lambda_.12} parent=5 // pred_check_branch
      %116 = sbr.rel (%p113) target = $region28
    $region27: #{_lambda_.12} parent=5 // pred_region
      %s117 = ssub.s32 %s8, 1
      %p118 = scmp.lt.s32.totalorder %s13, 1
      %s119 = scalar_select %p118, %s13, 1
      %s120 = smul.addr %s119, 16
      %s121 = smul.addr %s120, 4
      %s122 = scalar_lea.vmem %s0, %s121
      %p123 = pneg %p34
      %p124 = pneg %p31
      %p125 = pneg %p55
      %p126 = pneg %p52
      %p127 = pneg %p81
      %p128 = pneg %p78
      %p129 = scmp.lt.s32.totalorder %s13, 1
      %s130 = scalar_select %p129, %s13, 1
      %s131 = smul.addr %s130, 4
      %s132 = smul.addr %s131, 4
      %s133 = scalar_lea.vmem %s2, %s132
      %p134 = scmp.lt.s32.totalorder %s13, 1
      %s135 = scalar_select %p134, %s13, 1
      %s136 = smul.addr %s135, 16
      %s137 = smul.addr %s136, 4
      %s138 = scalar_lea.vmem %s0, %s137
      %p139 = scmp.lt.s32.totalorder %s13, 1
      %s140 = scalar_select %p139, %s13, 1
      %s141 = smul.addr %s140, 4
      %s142 = smul.addr %s141, 4
      %s143 = scalar_lea.vmem %s2, %s142
      %v144 = vld [vmem:[%s138] sm:$0xff]
      %v145 = vld [vmem:[%s138 + $0x8] sm:$0xff]
      %v146 = vld [vmem:[%s138 + $0x10] sm:$0xff]
      %v147 = vld [vmem:[%s138 + $0x18] sm:$0xff]
      %v148 = vld [vmem:[%s138 + $0x20] sm:$0xff]
      %v149 = vld [vmem:[%s138 + $0x28] sm:$0xff]
      %v150 = vld [vmem:[%s138 + $0x30] sm:$0xff]
      %v151 = vld [vmem:[%s138 + $0x38] sm:$0xff]
      %v152 = vunpack.c.l.bf16 %v144
      %v153 = vunpack.c.h.bf16 %v144
      %v154 = vunpack.c.l.bf16 %v145
      %v155 = vunpack.c.h.bf16 %v145
      %v156 = vunpack.c.l.bf16 %v146
      %v157 = vunpack.c.h.bf16 %v146
      %v158 = vunpack.c.l.bf16 %v147
      %v159 = vunpack.c.h.bf16 %v147
      %v160 = vunpack.c.l.bf16 %v148
      %v161 = vunpack.c.h.bf16 %v148
      %v162 = vunpack.c.l.bf16 %v149
      %v163 = vunpack.c.h.bf16 %v149
      %v164 = vunpack.c.l.bf16 %v150
      %v165 = vunpack.c.l.bf16 %v151
      %v166 = vld [vmem:[%s1] sm:$0xff]
      %v167 = vld [vmem:[%s1 + $0x8] sm:$0xff]
      %v168 = vld [vmem:[%s1 + $0x10] sm:$0xff]
      %v169 = vld [vmem:[%s1 + $0x18] sm:$0xff]
      %v170 = vld [vmem:[%s1 + $0x20] sm:$0xff]
      %v171 = vld [vmem:[%s1 + $0x28] sm:$0xff]
      %v172 = vld [vmem:[%s1 + $0x30] sm:$0xff]
      %v173 = vld [vmem:[%s1 + $0x38] sm:$0xff]
      %178 = vrot.lane.b32.xlu0 %v152, 127
      %v179 = vpop.permute.xlu0 %178
      %180 = vrot.lane.b32.xlu0 %v153, 127
      %v181 = vpop.permute.xlu0 %180
      %182 = vrot.lane.b32.xlu0 %v154, 127
      %v183 = vpop.permute.xlu0 %182
      %184 = vrot.lane.b32.xlu0 %v155, 127
      %v185 = vpop.permute.xlu0 %184
      %vm186 = vcmask 1039360
      %v187 = vsel %vm186, %v179, %v181
      %v188 = vsel %vm186, %v183, %v185
      %195 = vrot.lane.b32.xlu0 %v160, 127
      %v196 = vpop.permute.xlu0 %195
      %197 = vrot.lane.b32.xlu0 %v161, 127
      %v198 = vpop.permute.xlu0 %197
      %199 = vrot.lane.b32.xlu0 %v162, 127
      %v200 = vpop.permute.xlu0 %199
      %201 = vrot.lane.b32.xlu0 %v163, 127
      %v202 = vpop.permute.xlu0 %201
      %v203 = vsel %vm186, %v196, %v198
      %v204 = vsel %vm186, %v200, %v202
      %207 = vrot.lane.b32.xlu0 %v152, 123
      %v208 = vpop.permute.xlu0 %207
      %209 = vrot.lane.b32.xlu0 %v153, 123
      %v210 = vpop.permute.xlu0 %209
      %211 = vrot.lane.b32.xlu0 %v154, 123
      %v212 = vpop.permute.xlu0 %211
      %213 = vrot.lane.b32.xlu0 %v155, 123
      %v214 = vpop.permute.xlu0 %213
      %vm215 = vcmask 1006592
      %v216 = vsel %vm215, %v208, %v210
      %v217 = vsel %vm215, %v212, %v214
      %224 = vrot.lane.b32.xlu0 %v156, 123
      %v225 = vpop.permute.xlu0 %224
      %226 = vrot.lane.b32.xlu0 %v157, 123
      %v227 = vpop.permute.xlu0 %226
      %228 = vrot.lane.b32.xlu0 %v158, 123
      %v229 = vpop.permute.xlu0 %228
      %230 = vrot.lane.b32.xlu0 %v159, 123
      %v231 = vpop.permute.xlu0 %230
      %v232 = vsel %vm215, %v225, %v227
      %v233 = vsel %vm215, %v229, %v231
      %236 = vrot.lane.b32.xlu0 %v152, 122
      %v237 = vpop.permute.xlu0 %236
      %238 = vrot.lane.b32.xlu0 %v153, 122
      %v239 = vpop.permute.xlu0 %238
      %240 = vrot.lane.b32.xlu0 %v154, 122
      %v241 = vpop.permute.xlu0 %240
      %242 = vrot.lane.b32.xlu0 %v155, 122
      %v243 = vpop.permute.xlu0 %242
      %vm244 = vcmask 998400
      %v245 = vsel %vm244, %v237, %v239
      %v246 = vsel %vm244, %v241, %v243
      %vm249 = vcmask 130048
      %v251 = vsel %vm249, %v167, 0
      %v254 = vsel %vm249, %v169, 0
      %v257 = vsel %vm249, %v171, 0
      %v260 = vsel %vm249, %v173, 0
      %262 = vmatprep.subr.mxu0 0.0
      %263 = vmatpush1.msra.mxu0 %v233
      %264 = vmatprep.subr.mxu0 0.0
      %265 = vmatpush1.msra.mxu0 %v232
      %266 = vmatprep.subr.mxu0 0.0
      %267 = vmatpush1.msra.mxu0 %v217
      %268 = vmatprep.subr.mxu0 0.0
      %269 = vmatpush1.msra.mxu0 %v216
      %270 = vmatprep.subr.mxu0 0.0
      %271 = vmatpush1.msra.mxu0 %v204
      %272 = vmatprep.subr.mxu0 0.0
      %273 = vmatpush1.msra.mxu0 %v203
      %274 = vmatprep.subr.mxu0 0.0
      %275 = vmatpush1.msra.mxu0 %v165
      %276 = vmatprep.subr.mxu0 0.0
      %277 = vmatpush1.msra.mxu0 %v164
      %278 = vmatprep.subr.mxu0 0.0
      %279 = vmatpush1.msra.mxu0 %v162
      %280 = vmatprep.subr.mxu0 0.0
      %281 = vmatpush1.msra.mxu0 %v160
      %282 = vmatprep.subr.mxu0 0.0
      %283 = vmatpush1.msra.mxu0 %v188
      %284 = vmatprep.subr.mxu0 0.0
      %285 = vmatpush1.msra.mxu0 %v187
      %286 = vmatprep.subr.mxu0 0.0
      %287 = vmatpush1.msra.mxu0 %v158
      %288 = vmatprep.subr.mxu0 0.0
      %289 = vmatpush1.msra.mxu0 %v156
      %290 = vmatprep.subr.mxu0 0.0
      %291 = vmatpush1.msra.mxu0 %v154
      %292 = vmatprep.subr.mxu0 0.0
      %293 = vmatpush1.msra.mxu0 %v152
      %294 = vmatprep.subr.mxu0 0.0
      %295 = vmatpush2.msra.mxu0 0.0
      %296 = vmatprep.subr.mxu0 0.0
      %297 = vmatpush2.msra.mxu0 0.0
      %298 = vmatprep.subr.mxu0 0.0
      %299 = vmatpush2.msra.mxu0 0.0
      %300 = vmatprep.subr.mxu0 0.0
      %301 = vmatpush2.msra.mxu0 0.0
      %302 = vmatprep.subr.mxu0 0.0
      %303 = vmatpush2.msra.mxu0 0.0
      %304 = vmatprep.subr.mxu0 0.0
      %305 = vmatpush2.msra.mxu0 0.0
      %306 = vmatprep.subr.mxu0 0.0
      %307 = vmatpush2.msra.mxu0 0.0
      %308 = vmatprep.subr.mxu0 0.0
      %309 = vmatpush2.msra.mxu0 0.0
      %310 = vmatprep.subr.mxu0 0.0
      %311 = vmatpush2.msra.mxu0 0.0
      %312 = vmatprep.subr.mxu0 0.0
      %313 = vmatpush2.msra.mxu0 0.0
      %314 = vmatprep.subr.mxu0 0.0
      %315 = vmatpush2.msra.mxu0 0.0
      %316 = vmatprep.subr.mxu0 0.0
      %317 = vmatpush2.msra.mxu0 0.0
      %318 = vmatprep.subr.mxu0 0.0
      %319 = vmatpush2.msra.mxu0 0.0
      %320 = vmatprep.subr.mxu0 0.0
      %321 = vmatpush2.msra.mxu0 0.0
      %322 = vmatprep.subr.mxu0 0.0
      %323 = vmatpush2.msra.mxu0 %v246
      %324 = vmatprep.subr.mxu0 0.0
      %325 = vmatpush2.msra.mxu0 %v245
      %326 = vmatprep.mubr.f32.mxu0 %v251
      %327 = vmatmul.mubr.f32.gmra.mxu0 %v166
      %v328 = vpop.f32.mrf.mxu0
      %v329 = vadd.f32 0.0, %v328
      %v330 = vpop.f32.mrf.mxu0
      %331 = vmatprep.mubr.f32.mxu0 %v254
      %332 = vmatmul.mubr.f32.gmra.mxu0 %v168
      %v333 = vpop.f32.mrf.mxu0
      %v334 = vadd.f32 0.0, %v333
      %v335 = vpop.f32.mrf.mxu0
      %336 = vmatprep.mubr.f32.mxu0 %v257
      %337 = vmatmul.mubr.f32.gmra.mxu0 %v170
      %v338 = vpop.f32.mrf.mxu0
      %v339 = vadd.f32 0.0, %v338
      %v340 = vpop.f32.mrf.mxu0
      %341 = vmatprep.mubr.f32.mxu0 %v260
      %342 = vmatmul.mubr.f32.gmra.mxu0 %v172
      %v343 = vpop.f32.mrf.mxu0
      %v344 = vadd.f32 0.0, %v343
      %v345 = vpop.f32.mrf.mxu0
      %346 = vdwg.mxu0
      %v347 = vlaneseq
      %v348 = vand.u32 %v347, 127
      %vm349 = vcmp.lt.s32.totalorder %v348, 0
      %v350 = vsub.s32 0, %v348
      %v351 = vsel %vm349, %v350, %v348
      %v352 = vmul.u32.u64.compose %v351, 3435973837
      %v353 = vextract.low.u32 %v352
      %v354 = vextract.high.u32 %v352
      %v355 = vshrl.u32 %v354, 2
      %v356 = vmul.u32 %v355, 5
      %v357 = vsub.s32 %v351, %v356
      %v358 = vsub.s32 0, %v357
      %v359 = vsel %vm349, %v358, %v357
      %vm360 = vcmp.ne.s32.totalorder %v359, 0
      %vm361 = vcmp.lt.s32.totalorder %v359, 0
      %vm362 = vmand %vm361, %vm360
      %v363 = vadd.s32 %v359, 5
      %v364 = vsel %vm362, %v363, %v359
      %vm365 = vcmp.lt.s32.totalorder %v364, 4
      %vm366 = vcmp.lt.s32.totalorder %v348, 20
      %vm367 = vmand %vm365, %vm366
      %v368 = vsel %vm367, 1, 0
      %v369 = vcvt.s32.f32 %v368
      %v370 = vmul.f32 %v329, %v369
      %v371 = vmul.f32 %v334, %v369
      %v372 = vmul.f32 %v339, %v369
      %v373 = vmul.f32 %v344, %v369
      %374 = vadd.xlane.f32.xlu0 %v370
      %v375 = vpop.xlane.xlu0 %374
      %376 = vadd.xlane.f32.xlu0 %v371
      %v377 = vpop.xlane.xlu0 %376
      %378 = vadd.xlane.f32.xlu0 %v372
      %v379 = vpop.xlane.xlu0 %378
      %380 = vadd.xlane.f32.xlu0 %v373
      %v381 = vpop.xlane.xlu0 %380
      %v382 = vadd.f32 %v375, 0.0
      %v383 = vadd.f32 %v377, 0.0
      %v384 = vadd.f32 %v379, 0.0
      %v385 = vadd.f32 %v381, 0.0
      %v386 = vmul.f32 %v370, %v329
      %v387 = vmul.f32 %v371, %v334
      %v388 = vmul.f32 %v372, %v339
      %v389 = vmul.f32 %v373, %v344
      %390 = vadd.xlane.f32.xlu0 %v386
      %v391 = vpop.xlane.xlu0 %390
      %392 = vadd.xlane.f32.xlu0 %v387
      %v393 = vpop.xlane.xlu0 %392
      %394 = vadd.xlane.f32.xlu0 %v388
      %v395 = vpop.xlane.xlu0 %394
      %396 = vadd.xlane.f32.xlu0 %v389
      %v397 = vpop.xlane.xlu0 %396
      %v398 = vadd.f32 %v391, 0.0
      %v399 = vadd.f32 %v393, 0.0
      %v400 = vadd.f32 %v395, 0.0
      %v401 = vadd.f32 %v397, 0.0
      %v402 = vmul.f32 %v382, 0.0625
      %v403 = vmul.f32 %v383, 0.0625
      %v404 = vmul.f32 %v384, 0.0625
      %v405 = vmul.f32 %v385, 0.0625
      %v406 = vmul.f32 %v398, 0.0625
      %v407 = vmul.f32 %v399, 0.0625
      %v408 = vmul.f32 %v400, 0.0625
      %v409 = vmul.f32 %v401, 0.0625
      %v410 = vmul.f32 %v402, %v402
      %v411 = vmul.f32 %v403, %v403
      %v412 = vmul.f32 %v404, %v404
      %v413 = vmul.f32 %v405, %v405
      %v414 = vsub.f32 %v406, %v410
      %v415 = vsub.f32 %v407, %v411
      %v416 = vsub.f32 %v408, %v412
      %v417 = vsub.f32 %v409, %v413
      %v418 = vmax.f32 %v414, 0.0
      %v419 = vmax.f32 %v415, 0.0
      %v420 = vmax.f32 %v416, 0.0
      %v421 = vmax.f32 %v417, 0.0
      %v422 = vadd.f32 %v418, 1e-05
      %v423 = vadd.f32 %v419, 1e-05
      %v424 = vadd.f32 %v420, 1e-05
      %v425 = vadd.f32 %v421, 1e-05
      %v426 = vrsqrt.pop %v422
      %v427 = vrsqrt.pop %v423
      %v428 = vrsqrt.pop %v424
      %v429 = vrsqrt.pop %v425
      %v430 = vsub.f32 %v329, %v402
      %v431 = vsub.f32 %v334, %v403
      %v432 = vsub.f32 %v339, %v404
      %v433 = vsub.f32 %v344, %v405
      %v434 = vmul.f32 %v430, %v426
      %v435 = vmul.f32 %v431, %v427
      %v436 = vmul.f32 %v432, %v428
      %v437 = vmul.f32 %v433, %v429
      %v438 = vmax.f32 %v434, 0.0
      %v439 = vmax.f32 %v435, 0.0
      %v440 = vmax.f32 %v436, 0.0
      %v441 = vmax.f32 %v437, 0.0
      %v442 = vpack.c.bf16 %v439, %v438
      %v443 = vpack.c.bf16 %v441, %v440
      %v446 = vunpack.c.l.b16 %v442
      %v447 = vunpack.c.h.b16 %v442
      %v448 = vunpack.c.l.b16 %v443
      %v449 = vunpack.c.h.b16 %v443
      %v450 = vpack.c.b16 %v446, %v446
      %v451 = vpack.c.b16 %v447, %v447
      %v452 = vpack.c.b16 %v448, %v448
      %v453 = vpack.c.b16 %v449, %v449
      %458 = vst [vmem:[%s143] sm:$0xf] %v450
      %459 = vst [vmem:[%s143 + $0x4] sm:$0xf] %v451
      %460 = vst [vmem:[%s143 + $0x8] sm:$0xf] %v452
      %461 = vst [vmem:[%s143 + $0xc] sm:$0xf] %v453
      %p462 = scmp.lt.s32.totalorder %s13, 1
      %s463 = scalar_select %p462, %s13, 1
      %s464 = smul.addr %s463, 4
      %s465 = smul.addr %s464, 4
      %s466 = scalar_lea.vmem %s2, %s465
      // Predicated region
      $region29: #{_lambda_.12} parent=27 // pred_check
        %p467 = pneg %p78
      $region30: #{_lambda_.12} parent=27 // pred_check_branch
        %469 = sbr.rel (%p467) target = $region32
      $region31: #{_lambda_.12} parent=27 // pred_region
        _
      $region32: #{_lambda_.12} parent=27 // pred_fallthru
        _
    $region28: #{_lambda_.12} parent=5 // pred_fallthru
      _
    %p470 = scmp.le.s32.totalorder 2, %s8
    // Predicated region
    $region33: #{_lambda_.12} parent=5 // pred_check
      %p471 = pneg %p470
    $region34: #{_lambda_.12} parent=5 // pred_check_branch
      %473 = sbr.rel (%p471) target = $region36
    $region35: #{_lambda_.12} parent=5 // pred_region
      %s474 = ssub.s32 %s8, 2
      // Predicated region
      $region37: #{_lambda_.12} parent=35 // pred_check
        %p475 = pneg %p84
      $region38: #{_lambda_.12} parent=35 // pred_check_branch
        %477 = sbr.rel (%p475) target = $region40
      $region39: #{_lambda_.12} parent=35 // pred_region
        %p478 = scmp.lt.s32.totalorder %s14, 1
        %s479 = scalar_select %p478, %s14, 1
        %s480 = smul.addr %s479, 4
        %s481 = smul.addr %s480, 4
        %s482 = scalar_lea.vmem %s2, %s481
      $region40: #{_lambda_.12} parent=35 // pred_fallthru
        _
    $region36: #{_lambda_.12} parent=5 // pred_fallthru
      _
  $region6: #{_lambda_.12} parent=0 // loop_footer
    %s12 = sadd.s32 1, %s8
  $region7: #{_lambda_.12} parent=0 // loop_footer_branch
    %7 = sbr.rel target = $region3
  $region8: #{_lambda_.12} parent=0 // loop_exit
    _

// kernel: _lambda_.13
$region0: #{_lambda_.13}
  #allocation0 [shape = 'u32[]', space=smem, size = 0x4, offset = 0x4, fixed_abs, tag = 'smem constant byte address 0x4 - core index']
  #allocation1 [shape = 'u32[144,128]{1,0:T(1,128)}', space=vmem, size = 0x12000, scoped, tag = 'internal scratch']
  %s0 = inlined_call_operand.vmem [shape: bf16[2,32,142], index: 0, kind: input, shape index: {}]
  %s1 = inlined_call_operand.vmem [shape: f32[32,288], index: 1, kind: input, shape index: {}]
  %s2 = inlined_call_operand.vmem [shape: bf16[2,32,128], index: 2, kind: output, shape index: {}]
  %s3 = sld [smem:[#allocation0]]
  $region41: #{_lambda_.13} parent=0
    _
  %s5 = ssub.s32 1, %s3
  %s6 = scalar_select 0, %s5, %s3
  loop: start=0, step=1, limit=4
  $region2: #{_lambda_.13} parent=0 // loop_pre_header
    _
  $region3: #{_lambda_.13} parent=0 // loop_header
    %s8 = sphi 0, %s12
    %p9 = scmp.ge.s32.totalorder %s8, 4
    %s18 = sphi 0, %s20
    %s21 = sphi 0, %s18
    %s22 = sphi 0, %s21
    %s38 = sphi 0, %s22
    %s42 = sphi 0, %s42
    %s44 = sphi 0, %s42
    %s45 = sphi 0, %s44
    %s59 = sphi 0, %s45
    %s65 = sphi 0, %s67
    %s68 = sphi 0, %s65
    %s69 = sphi 0, %s68
    %s85 = sphi 0, %s69
  $region4: #{_lambda_.13} parent=0 // loop_header_branch
    %11 = sbr.rel (%p9) target = $region8
  $region5: #{_lambda_.13} parent=0 // loop_body
    %s13 = ssub.s32 %s8, 1
    %s14 = ssub.s32 %s8, 2
    %s15 = sadd.s32 %s8, 1
    %s16 = ssub.s32 %s8, %s15
    %p17 = scmp.eq.s32.totalorder %s16, 0
    %s19 = sadd.s32 %s18, 1
    %s20 = scalar_select %p17, %s18, %s19
    %p23 = pneg %p17
    %p24 = scmp.eq.s32.totalorder %s8, 1
    %p25 = por %p23, %p24
    %p26 = scmp.ne.s32.totalorder %s18, %s21
    %p27 = scmp.eq.s32.totalorder %s8, 0
    %p28 = por %p26, %p27
    %p29 = scmp.ne.s32.totalorder %s18, %s21
    %p30 = scmp.eq.s32.totalorder %s13, 1
    %p31 = por %p29, %p30
    %p32 = scmp.ne.s32.totalorder %s21, %s22
    %p33 = scmp.eq.s32.totalorder %s13, 0
    %p34 = por %p32, %p33
    %p35 = scmp.ne.s32.totalorder %s21, %s22
    %p36 = scmp.eq.s32.totalorder %s14, 1
    %p37 = por %p35, %p36
    %p39 = scmp.ne.s32.totalorder %s22, %s38
    %p40 = scmp.eq.s32.totalorder %s14, 0
    %p41 = por %p39, %p40
    %s43 = sadd.s32 %s42, 1
    %p46 = scmp.eq.s32.totalorder %s8, 1
    %p47 = scmp.ne.s32.totalorder %s42, %s44
    %p48 = scmp.eq.s32.totalorder %s8, 0
    %p49 = por %p47, %p48
    %p50 = scmp.ne.s32.totalorder %s42, %s44
    %p51 = scmp.eq.s32.totalorder %s13, 1
    %p52 = por %p50, %p51
    %p53 = scmp.ne.s32.totalorder %s44, %s45
    %p54 = scmp.eq.s32.totalorder %s13, 0
    %p55 = por %p53, %p54
    %p56 = scmp.ne.s32.totalorder %s44, %s45
    %p57 = scmp.eq.s32.totalorder %s14, 1
    %p58 = por %p56, %p57
    %p60 = scmp.ne.s32.totalorder %s45, %s59
    %p61 = scmp.eq.s32.totalorder %s14, 0
    %p62 = por %p60, %p61
    %s63 = ssub.s32 %s8, %s15
    %p64 = scmp.eq.s32.totalorder %s63, 0
    %s66 = sadd.s32 %s65, 1
    %s67 = scalar_select %p64, %s65, %s66
    %p70 = pneg %p64
    %p71 = scmp.eq.s32.totalorder %s8, 1
    %p72 = por %p70, %p71
    %p73 = scmp.ne.s32.totalorder %s65, %s68
    %p74 = scmp.eq.s32.totalorder %s8, 0
    %p75 = por %p73, %p74
    %p76 = scmp.ne.s32.totalorder %s65, %s68
    %p77 = scmp.eq.s32.totalorder %s13, 1
    %p78 = por %p76, %p77
    %p79 = scmp.ne.s32.totalorder %s68, %s69
    %p80 = scmp.eq.s32.totalorder %s13, 0
    %p81 = por %p79, %p80
    %p82 = scmp.ne.s32.totalorder %s68, %s69
    %p83 = scmp.eq.s32.totalorder %s14, 1
    %p84 = por %p82, %p83
    %p86 = scmp.ne.s32.totalorder %s69, %s85
    %p87 = scmp.eq.s32.totalorder %s14, 0
    %p88 = por %p86, %p87
    %p89 = scmp.le.s32.totalorder 1, %s8
    %p90 = scmp.lt.s32.totalorder %s8, 3
    %p91 = pnand %p89, %p90
    %p92 = pneg %p91
    // Predicated region
    $region9: #{_lambda_.13} parent=5 // pred_check
      _
    $region10: #{_lambda_.13} parent=5 // pred_check_branch
      %94 = sbr.rel (%p91) target = $region12
    $region11: #{_lambda_.13} parent=5 // pred_region
      %s95 = ssub.s32 %s8, 1
      // Predicated region
      $region13: #{_lambda_.13} parent=11 // pred_check
        %p96 = pneg %p55
      $region14: #{_lambda_.13} parent=11 // pred_check_branch
        %98 = sbr.rel (%p96) target = $region16
      $region15: #{_lambda_.13} parent=11 // pred_region
        _
      $region16: #{_lambda_.13} parent=11 // pred_fallthru
        _
    $region12: #{_lambda_.13} parent=5 // pred_fallthru
      _
    %p99 = scmp.lt.s32.totalorder %s8, 2
    // Predicated region
    $region17: #{_lambda_.13} parent=5 // pred_check
      %p100 = pneg %p99
    $region18: #{_lambda_.13} parent=5 // pred_check_branch
      %102 = sbr.rel (%p100) target = $region20
    $region19: #{_lambda_.13} parent=5 // pred_region
      // Predicated region
      $region21: #{_lambda_.13} parent=19 // pred_check
        %p103 = pneg %p28
      $region22: #{_lambda_.13} parent=19 // pred_check_branch
        %105 = sbr.rel (%p103) target = $region24
      $region23: #{_lambda_.13} parent=19 // pred_region
        %p106 = scmp.lt.s32.totalorder %s8, 1
        %s107 = scalar_select %p106, %s8, 1
        %s108 = smul.addr %s107, 8
        %s109 = smul.addr %s108, 4
        %s110 = scalar_lea.vmem %s0, %s109
      $region24: #{_lambda_.13} parent=19 // pred_fallthru
        _
    $region20: #{_lambda_.13} parent=5 // pred_fallthru
      _
    %p111 = scmp.le.s32.totalorder 1, %s8
    %p112 = scmp.lt.s32.totalorder %s8, 3
    %p113 = pnand %p111, %p112
    %p114 = pneg %p113
    // Predicated region
    $region25: #{_lambda_.13} parent=5 // pred_check
      _
    $region26: #{_lambda_.13} parent=5 // pred_check_branch
      %116 = sbr.rel (%p113) target = $region28
    $region27: #{_lambda_.13} parent=5 // pred_region
      %s117 = ssub.s32 %s8, 1
      %p118 = scmp.lt.s32.totalorder %s13, 1
      %s119 = scalar_select %p118, %s13, 1
      %s120 = smul.addr %s119, 8
      %s121 = smul.addr %s120, 4
      %s122 = scalar_lea.vmem %s0, %s121
      %p123 = pneg %p34
      %p124 = pneg %p31
      %p125 = pneg %p55
      %p126 = pneg %p52
      %p127 = pneg %p81
      %p128 = pneg %p78
      %p129 = scmp.lt.s32.totalorder %s13, 1
      %s130 = scalar_select %p129, %s13, 1
      %s131 = smul.addr %s130, 4
      %s132 = smul.addr %s131, 4
      %s133 = scalar_lea.vmem %s2, %s132
      %p134 = scmp.lt.s32.totalorder %s13, 1
      %s135 = scalar_select %p134, %s13, 1
      %s136 = smul.addr %s135, 8
      %s137 = smul.addr %s136, 4
      %s138 = scalar_lea.vmem %s0, %s137
      %p139 = scmp.lt.s32.totalorder %s13, 1
      %s140 = scalar_select %p139, %s13, 1
      %s141 = smul.addr %s140, 4
      %s142 = smul.addr %s141, 4
      %s143 = scalar_lea.vmem %s2, %s142
      %v144 = vld [vmem:[%s138] sm:$0xff]
      %v145 = vld [vmem:[%s138 + $0x8] sm:$0xff]
      %v146 = vld [vmem:[%s138 + $0x10] sm:$0xff]
      %v147 = vld [vmem:[%s138 + $0x18] sm:$0xff]
      %v148 = vunpack.c.l.bf16 %v144
      %v149 = vunpack.c.h.bf16 %v144
      %v150 = vunpack.c.l.bf16 %v145
      %v151 = vunpack.c.h.bf16 %v145
      %v152 = vunpack.c.l.bf16 %v146
      %v153 = vunpack.c.h.bf16 %v146
      %v154 = vunpack.c.l.bf16 %v147
      %v155 = vunpack.c.h.bf16 %v147
      %v156 = vld [vmem:[%s1] sm:$0xff]
      %v157 = vld [vmem:[%s1 + $0x8] sm:$0xff]
      %v158 = vld [vmem:[%s1 + $0x10] sm:$0xff]
      %v159 = vld [vmem:[%s1 + $0x18] sm:$0xff]
      %v160 = vld [vmem:[%s1 + $0x20] sm:$0xff]
      %v161 = vld [vmem:[%s1 + $0x28] sm:$0xff]
      %v162 = vld [vmem:[%s1 + $0x30] sm:$0xff]
      %v163 = vld [vmem:[%s1 + $0x38] sm:$0xff]
      %v164 = vld [vmem:[%s1 + $0x40] sm:$0xff]
      %v165 = vld [vmem:[%s1 + $0x48] sm:$0xff]
      %v166 = vld [vmem:[%s1 + $0x50] sm:$0xff]
      %v167 = vld [vmem:[%s1 + $0x58] sm:$0xff]
      %176 = vrot.lane.b32.xlu0 %v148, 127
      %v177 = vpop.permute.xlu0 %176
      %178 = vrot.lane.b32.xlu0 %v149, 127
      %v179 = vpop.permute.xlu0 %178
      %180 = vrot.lane.b32.xlu0 %v150, 127
      %v181 = vpop.permute.xlu0 %180
      %182 = vrot.lane.b32.xlu0 %v151, 127
      %v183 = vpop.permute.xlu0 %182
      %184 = vrot.lane.b32.xlu0 %v152, 127
      %v185 = vpop.permute.xlu0 %184
      %186 = vrot.lane.b32.xlu0 %v153, 127
      %v187 = vpop.permute.xlu0 %186
      %188 = vrot.lane.b32.xlu0 %v154, 127
      %v189 = vpop.permute.xlu0 %188
      %190 = vrot.lane.b32.xlu0 %v155, 127
      %v191 = vpop.permute.xlu0 %190
      %vm192 = vcmask 1039360
      %v193 = vsel %vm192, %v177, %v179
      %v194 = vsel %vm192, %v181, %v183
      %v195 = vsel %vm192, %v185, %v187
      %v196 = vsel %vm192, %v189, %v191
      %201 = vrot.lane.b32.xlu0 %v148, 126
      %v202 = vpop.permute.xlu0 %201
      %203 = vrot.lane.b32.xlu0 %v149, 126
      %v204 = vpop.permute.xlu0 %203
      %205 = vrot.lane.b32.xlu0 %v150, 126
      %v206 = vpop.permute.xlu0 %205
      %207 = vrot.lane.b32.xlu0 %v151, 126
      %v208 = vpop.permute.xlu0 %207
      %209 = vrot.lane.b32.xlu0 %v152, 126
      %v210 = vpop.permute.xlu0 %209
      %211 = vrot.lane.b32.xlu0 %v153, 126
      %v212 = vpop.permute.xlu0 %211
      %213 = vrot.lane.b32.xlu0 %v154, 126
      %v214 = vpop.permute.xlu0 %213
      %215 = vrot.lane.b32.xlu0 %v155, 126
      %v216 = vpop.permute.xlu0 %215
      %vm217 = vcmask 1031168
      %v218 = vsel %vm217, %v202, %v204
      %v219 = vsel %vm217, %v206, %v208
      %v220 = vsel %vm217, %v210, %v212
      %v221 = vsel %vm217, %v214, %v216
      %226 = vrot.lane.b32.xlu0 %v148, 122
      %v227 = vpop.permute.xlu0 %226
      %228 = vrot.lane.b32.xlu0 %v149, 122
      %v229 = vpop.permute.xlu0 %228
      %230 = vrot.lane.b32.xlu0 %v150, 122
      %v231 = vpop.permute.xlu0 %230
      %232 = vrot.lane.b32.xlu0 %v151, 122
      %v233 = vpop.permute.xlu0 %232
      %234 = vrot.lane.b32.xlu0 %v152, 122
      %v235 = vpop.permute.xlu0 %234
      %236 = vrot.lane.b32.xlu0 %v153, 122
      %v237 = vpop.permute.xlu0 %236
      %238 = vrot.lane.b32.xlu0 %v154, 122
      %v239 = vpop.permute.xlu0 %238
      %240 = vrot.lane.b32.xlu0 %v155, 122
      %v241 = vpop.permute.xlu0 %240
      %vm242 = vcmask 998400
      %v243 = vsel %vm242, %v227, %v229
      %v244 = vsel %vm242, %v231, %v233
      %v245 = vsel %vm242, %v235, %v237
      %v246 = vsel %vm242, %v239, %v241
      %251 = vrot.lane.b32.xlu0 %v148, 121
      %v252 = vpop.permute.xlu0 %251
      %253 = vrot.lane.b32.xlu0 %v149, 121
      %v254 = vpop.permute.xlu0 %253
      %255 = vrot.lane.b32.xlu0 %v150, 121
      %v256 = vpop.permute.xlu0 %255
      %257 = vrot.lane.b32.xlu0 %v151, 121
      %v258 = vpop.permute.xlu0 %257
      %259 = vrot.lane.b32.xlu0 %v152, 121
      %v260 = vpop.permute.xlu0 %259
      %261 = vrot.lane.b32.xlu0 %v153, 121
      %v262 = vpop.permute.xlu0 %261
      %263 = vrot.lane.b32.xlu0 %v154, 121
      %v264 = vpop.permute.xlu0 %263
      %265 = vrot.lane.b32.xlu0 %v155, 121
      %v266 = vpop.permute.xlu0 %265
      %vm267 = vcmask 990208
      %v268 = vsel %vm267, %v252, %v254
      %v269 = vsel %vm267, %v256, %v258
      %v270 = vsel %vm267, %v260, %v262
      %v271 = vsel %vm267, %v264, %v266
      %276 = vrot.lane.b32.xlu0 %v148, 120
      %v277 = vpop.permute.xlu0 %276
      %278 = vrot.lane.b32.xlu0 %v149, 120
      %v279 = vpop.permute.xlu0 %278
      %280 = vrot.lane.b32.xlu0 %v150, 120
      %v281 = vpop.permute.xlu0 %280
      %282 = vrot.lane.b32.xlu0 %v151, 120
      %v283 = vpop.permute.xlu0 %282
      %284 = vrot.lane.b32.xlu0 %v152, 120
      %v285 = vpop.permute.xlu0 %284
      %286 = vrot.lane.b32.xlu0 %v153, 120
      %v287 = vpop.permute.xlu0 %286
      %288 = vrot.lane.b32.xlu0 %v154, 120
      %v289 = vpop.permute.xlu0 %288
      %290 = vrot.lane.b32.xlu0 %v155, 120
      %v291 = vpop.permute.xlu0 %290
      %vm292 = vcmask 982016
      %v293 = vsel %vm292, %v277, %v279
      %v294 = vsel %vm292, %v281, %v283
      %v295 = vsel %vm292, %v285, %v287
      %v296 = vsel %vm292, %v289, %v291
      %301 = vrot.lane.b32.xlu0 %v148, 116
      %v302 = vpop.permute.xlu0 %301
      %303 = vrot.lane.b32.xlu0 %v149, 116
      %v304 = vpop.permute.xlu0 %303
      %305 = vrot.lane.b32.xlu0 %v150, 116
      %v306 = vpop.permute.xlu0 %305
      %307 = vrot.lane.b32.xlu0 %v151, 116
      %v308 = vpop.permute.xlu0 %307
      %309 = vrot.lane.b32.xlu0 %v152, 116
      %v310 = vpop.permute.xlu0 %309
      %311 = vrot.lane.b32.xlu0 %v153, 116
      %v312 = vpop.permute.xlu0 %311
      %313 = vrot.lane.b32.xlu0 %v154, 116
      %v314 = vpop.permute.xlu0 %313
      %315 = vrot.lane.b32.xlu0 %v155, 116
      %v316 = vpop.permute.xlu0 %315
      %vm317 = vcmask 949248
      %v318 = vsel %vm317, %v302, %v304
      %v319 = vsel %vm317, %v306, %v308
      %v320 = vsel %vm317, %v310, %v312
      %v321 = vsel %vm317, %v314, %v316
      %326 = vrot.lane.b32.xlu0 %v148, 115
      %v327 = vpop.permute.xlu0 %326
      %328 = vrot.lane.b32.xlu0 %v149, 115
      %v329 = vpop.permute.xlu0 %328
      %330 = vrot.lane.b32.xlu0 %v150, 115
      %v331 = vpop.permute.xlu0 %330
      %332 = vrot.lane.b32.xlu0 %v151, 115
      %v333 = vpop.permute.xlu0 %332
      %334 = vrot.lane.b32.xlu0 %v152, 115
      %v335 = vpop.permute.xlu0 %334
      %336 = vrot.lane.b32.xlu0 %v153, 115
      %v337 = vpop.permute.xlu0 %336
      %338 = vrot.lane.b32.xlu0 %v154, 115
      %v339 = vpop.permute.xlu0 %338
      %340 = vrot.lane.b32.xlu0 %v155, 115
      %v341 = vpop.permute.xlu0 %340
      %vm342 = vcmask 941056
      %v343 = vsel %vm342, %v327, %v329
      %v344 = vsel %vm342, %v331, %v333
      %v345 = vsel %vm342, %v335, %v337
      %v346 = vsel %vm342, %v339, %v341
      %351 = vrot.lane.b32.xlu0 %v148, 114
      %v352 = vpop.permute.xlu0 %351
      %353 = vrot.lane.b32.xlu0 %v149, 114
      %v354 = vpop.permute.xlu0 %353
      %355 = vrot.lane.b32.xlu0 %v150, 114
      %v356 = vpop.permute.xlu0 %355
      %357 = vrot.lane.b32.xlu0 %v151, 114
      %v358 = vpop.permute.xlu0 %357
      %359 = vrot.lane.b32.xlu0 %v152, 114
      %v360 = vpop.permute.xlu0 %359
      %361 = vrot.lane.b32.xlu0 %v153, 114
      %v362 = vpop.permute.xlu0 %361
      %363 = vrot.lane.b32.xlu0 %v154, 114
      %v364 = vpop.permute.xlu0 %363
      %365 = vrot.lane.b32.xlu0 %v155, 114
      %v366 = vpop.permute.xlu0 %365
      %vm367 = vcmask 932864
      %v368 = vsel %vm367, %v352, %v354
      %v369 = vsel %vm367, %v356, %v358
      %v370 = vsel %vm367, %v360, %v362
      %v371 = vsel %vm367, %v364, %v366
      %vm376 = vcmask 261120
      %v378 = vsel %vm376, %v158, 0
      %v381 = vsel %vm376, %v161, 0
      %v384 = vsel %vm376, %v164, 0
      %v387 = vsel %vm376, %v167, 0
      %389 = vmatprep.subr.mxu0 0.0
      %390 = vmatpush1.msra.mxu0 %v246
      %391 = vmatprep.subr.mxu0 0.0
      %392 = vmatpush1.msra.mxu0 %v245
      %393 = vmatprep.subr.mxu0 0.0
      %394 = vmatpush1.msra.mxu0 %v244
      %395 = vmatprep.subr.mxu0 0.0
      %396 = vmatpush1.msra.mxu0 %v243
      %397 = vmatprep.subr.mxu0 0.0
      %398 = vmatpush1.msra.mxu0 %v221
      %399 = vmatprep.subr.mxu0 0.0
      %400 = vmatpush1.msra.mxu0 %v220
      %401 = vmatprep.subr.mxu0 0.0
      %402 = vmatpush1.msra.mxu0 %v219
      %403 = vmatprep.subr.mxu0 0.0
      %404 = vmatpush1.msra.mxu0 %v218
      %405 = vmatprep.subr.mxu0 0.0
      %406 = vmatpush1.msra.mxu0 %v196
      %407 = vmatprep.subr.mxu0 0.0
      %408 = vmatpush1.msra.mxu0 %v195
      %409 = vmatprep.subr.mxu0 0.0
      %410 = vmatpush1.msra.mxu0 %v194
      %411 = vmatprep.subr.mxu0 0.0
      %412 = vmatpush1.msra.mxu0 %v193
      %413 = vmatprep.subr.mxu0 0.0
      %414 = vmatpush1.msra.mxu0 %v154
      %415 = vmatprep.subr.mxu0 0.0
      %416 = vmatpush1.msra.mxu0 %v152
      %417 = vmatprep.subr.mxu0 0.0
      %418 = vmatpush1.msra.mxu0 %v150
      %419 = vmatprep.subr.mxu0 0.0
      %420 = vmatpush1.msra.mxu0 %v148
      %421 = vmatprep.subr.mxu0 0.0
      %422 = vmatpush2.msra.mxu0 %v346
      %423 = vmatprep.subr.mxu0 0.0
      %424 = vmatpush2.msra.mxu0 %v345
      %425 = vmatprep.subr.mxu0 0.0
      %426 = vmatpush2.msra.mxu0 %v344
      %427 = vmatprep.subr.mxu0 0.0
      %428 = vmatpush2.msra.mxu0 %v343
      %429 = vmatprep.subr.mxu0 0.0
      %430 = vmatpush2.msra.mxu0 %v321
      %431 = vmatprep.subr.mxu0 0.0
      %432 = vmatpush2.msra.mxu0 %v320
      %433 = vmatprep.subr.mxu0 0.0
      %434 = vmatpush2.msra.mxu0 %v319
      %435 = vmatprep.subr.mxu0 0.0
      %436 = vmatpush2.msra.mxu0 %v318
      %437 = vmatprep.subr.mxu0 0.0
      %438 = vmatpush2.msra.mxu0 %v296
      %439 = vmatprep.subr.mxu0 0.0
      %440 = vmatpush2.msra.mxu0 %v295
      %441 = vmatprep.subr.mxu0 0.0
      %442 = vmatpush2.msra.mxu0 %v294
      %443 = vmatprep.subr.mxu0 0.0
      %444 = vmatpush2.msra.mxu0 %v293
      %445 = vmatprep.subr.mxu0 0.0
      %446 = vmatpush2.msra.mxu0 %v271
      %447 = vmatprep.subr.mxu0 0.0
      %448 = vmatpush2.msra.mxu0 %v270
      %449 = vmatprep.subr.mxu0 0.0
      %450 = vmatpush2.msra.mxu0 %v269
      %451 = vmatprep.subr.mxu0 0.0
      %452 = vmatpush2.msra.mxu0 %v268
      %453 = vmatprep.mubr.f32.mxu0 %v157
      %454 = vmatmul.mubr.f32.gmra.mxu0 %v156
      %v455 = vpop.f32.mrf.mxu0
      %v456 = vadd.f32 0.0, %v455
      %v457 = vpop.f32.mrf.mxu0
      %458 = vmatprep.mubr.f32.mxu0 %v160
      %459 = vmatmul.mubr.f32.gmra.mxu0 %v159
      %v460 = vpop.f32.mrf.mxu0
      %v461 = vadd.f32 0.0, %v460
      %v462 = vpop.f32.mrf.mxu0
      %463 = vmatprep.mubr.f32.mxu0 %v163
      %464 = vmatmul.mubr.f32.gmra.mxu0 %v162
      %v465 = vpop.f32.mrf.mxu0
      %v466 = vadd.f32 0.0, %v465
      %v467 = vpop.f32.mrf.mxu0
      %468 = vmatprep.mubr.f32.mxu0 %v166
      %469 = vmatmul.mubr.f32.gmra.mxu0 %v165
      %v470 = vpop.f32.mrf.mxu0
      %v471 = vadd.f32 0.0, %v470
      %v472 = vpop.f32.mrf.mxu0
      %473 = vdwg.mxu0
      %474 = vmatprep.subr.mxu0 0.0
      %475 = vmatpush1.msra.mxu0 0.0
      %476 = vmatprep.subr.mxu0 0.0
      %477 = vmatpush1.msra.mxu0 0.0
      %478 = vmatprep.subr.mxu0 0.0
      %479 = vmatpush1.msra.mxu0 0.0
      %480 = vmatprep.subr.mxu0 0.0
      %481 = vmatpush1.msra.mxu0 0.0
      %482 = vmatprep.subr.mxu0 0.0
      %483 = vmatpush1.msra.mxu0 0.0
      %484 = vmatprep.subr.mxu0 0.0
      %485 = vmatpush1.msra.mxu0 0.0
      %486 = vmatprep.subr.mxu0 0.0
      %487 = vmatpush1.msra.mxu0 0.0
      %488 = vmatprep.subr.mxu0 0.0
      %489 = vmatpush1.msra.mxu0 0.0
      %490 = vmatprep.subr.mxu0 0.0
      %491 = vmatpush1.msra.mxu0 0.0
      %492 = vmatprep.subr.mxu0 0.0
      %493 = vmatpush1.msra.mxu0 0.0
      %494 = vmatprep.subr.mxu0 0.0
      %495 = vmatpush1.msra.mxu0 0.0
      %496 = vmatprep.subr.mxu0 0.0
      %497 = vmatpush1.msra.mxu0 0.0
      %498 = vmatprep.subr.mxu0 0.0
      %499 = vmatpush1.msra.mxu0 %v371
      %500 = vmatprep.subr.mxu0 0.0
      %501 = vmatpush1.msra.mxu0 %v370
      %502 = vmatprep.subr.mxu0 0.0
      %503 = vmatpush1.msra.mxu0 %v369
      %504 = vmatprep.subr.mxu0 0.0
      %505 = vmatpush1.msra.mxu0 %v368
      %506 = vmatprep.subr.mxu0 0.0
      %507 = vmatpush2.msra.mxu0 0.0
      %508 = vmatprep.subr.mxu0 0.0
      %509 = vmatpush2.msra.mxu0 0.0
      %510 = vmatprep.subr.mxu0 0.0
      %511 = vmatpush2.msra.mxu0 0.0
      %512 = vmatprep.subr.mxu0 0.0
      %513 = vmatpush2.msra.mxu0 0.0
      %514 = vmatprep.subr.mxu0 0.0
      %515 = vmatpush2.msra.mxu0 0.0
      %516 = vmatprep.subr.mxu0 0.0
      %517 = vmatpush2.msra.mxu0 0.0
      %518 = vmatprep.subr.mxu0 0.0
      %519 = vmatpush2.msra.mxu0 0.0
      %520 = vmatprep.subr.mxu0 0.0
      %521 = vmatpush2.msra.mxu0 0.0
      %522 = vmatprep.subr.mxu0 0.0
      %523 = vmatpush2.msra.mxu0 0.0
      %524 = vmatprep.subr.mxu0 0.0
      %525 = vmatpush2.msra.mxu0 0.0
      %526 = vmatprep.subr.mxu0 0.0
      %527 = vmatpush2.msra.mxu0 0.0
      %528 = vmatprep.subr.mxu0 0.0
      %529 = vmatpush2.msra.mxu0 0.0
      %530 = vmatprep.subr.mxu0 0.0
      %531 = vmatpush2.msra.mxu0 0.0
      %532 = vmatprep.subr.mxu0 0.0
      %533 = vmatpush2.msra.mxu0 0.0
      %534 = vmatprep.subr.mxu0 0.0
      %535 = vmatpush2.msra.mxu0 0.0
      %536 = vmatprep.subr.mxu0 0.0
      %537 = vmatpush2.msra.mxu0 0.0
      %538 = vmatprep.mubr.f32.mxu0 0.0
      %539 = vmatmul.mubr.f32.gmra.mxu0 %v378
      %v540 = vpop.f32.mrf.mxu0
      %v541 = vadd.f32 %v456, %v540
      %v542 = vpop.f32.mrf.mxu0
      %543 = vmatprep.mubr.f32.mxu0 0.0
      %544 = vmatmul.mubr.f32.gmra.mxu0 %v381
      %v545 = vpop.f32.mrf.mxu0
      %v546 = vadd.f32 %v461, %v545
      %v547 = vpop.f32.mrf.mxu0
      %548 = vmatprep.mubr.f32.mxu0 0.0
      %549 = vmatmul.mubr.f32.gmra.mxu0 %v384
      %v550 = vpop.f32.mrf.mxu0
      %v551 = vadd.f32 %v466, %v550
      %v552 = vpop.f32.mrf.mxu0
      %553 = vmatprep.mubr.f32.mxu0 0.0
      %554 = vmatmul.mubr.f32.gmra.mxu0 %v387
      %v555 = vpop.f32.mrf.mxu0
      %v556 = vadd.f32 %v471, %v555
      %v557 = vpop.f32.mrf.mxu0
      %558 = vdwg.mxu0
      %v559 = vlaneseq
      %v560 = vand.u32 %v559, 127
      %vm561 = vcmp.lt.s32.totalorder %v560, 0
      %v562 = vsub.s32 0, %v560
      %v563 = vsel %vm561, %v562, %v560
      %v564 = vmul.u32.u64.compose %v563, 2863311531
      %v565 = vextract.low.u32 %v564
      %v566 = vextract.high.u32 %v564
      %v567 = vshrl.u32 %v566, 2
      %v568 = vmul.u32 %v567, 6
      %v569 = vsub.s32 %v563, %v568
      %v570 = vsub.s32 0, %v569
      %v571 = vsel %vm561, %v570, %v569
      %vm572 = vcmp.ne.s32.totalorder %v571, 0
      %vm573 = vcmp.lt.s32.totalorder %v571, 0
      %vm574 = vmand %vm573, %vm572
      %v575 = vadd.s32 %v571, 6
      %v576 = vsel %vm574, %v575, %v571
      %vm577 = vcmp.lt.s32.totalorder %v576, 4
      %vm578 = vcmp.lt.s32.totalorder %v560, 24
      %vm579 = vmand %vm577, %vm578
      %v580 = vsel %vm579, 1, 0
      %v581 = vcvt.s32.f32 %v580
      %v582 = vmul.f32 %v541, %v581
      %v583 = vmul.f32 %v546, %v581
      %v584 = vmul.f32 %v551, %v581
      %v585 = vmul.f32 %v556, %v581
      %586 = vadd.xlane.f32.xlu0 %v582
      %v587 = vpop.xlane.xlu0 %586
      %588 = vadd.xlane.f32.xlu0 %v583
      %v589 = vpop.xlane.xlu0 %588
      %590 = vadd.xlane.f32.xlu0 %v584
      %v591 = vpop.xlane.xlu0 %590
      %592 = vadd.xlane.f32.xlu0 %v585
      %v593 = vpop.xlane.xlu0 %592
      %v594 = vadd.f32 %v587, 0.0
      %v595 = vadd.f32 %v589, 0.0
      %v596 = vadd.f32 %v591, 0.0
      %v597 = vadd.f32 %v593, 0.0
      %v598 = vmul.f32 %v582, %v541
      %v599 = vmul.f32 %v583, %v546
      %v600 = vmul.f32 %v584, %v551
      %v601 = vmul.f32 %v585, %v556
      %602 = vadd.xlane.f32.xlu0 %v598
      %v603 = vpop.xlane.xlu0 %602
      %604 = vadd.xlane.f32.xlu0 %v599
      %v605 = vpop.xlane.xlu0 %604
      %606 = vadd.xlane.f32.xlu0 %v600
      %v607 = vpop.xlane.xlu0 %606
      %608 = vadd.xlane.f32.xlu0 %v601
      %v609 = vpop.xlane.xlu0 %608
      %v610 = vadd.f32 %v603, 0.0
      %v611 = vadd.f32 %v605, 0.0
      %v612 = vadd.f32 %v607, 0.0
      %v613 = vadd.f32 %v609, 0.0
      %v614 = vmul.f32 %v594, 0.0625
      %v615 = vmul.f32 %v595, 0.0625
      %v616 = vmul.f32 %v596, 0.0625
      %v617 = vmul.f32 %v597, 0.0625
      %v618 = vmul.f32 %v610, 0.0625
      %v619 = vmul.f32 %v611, 0.0625
      %v620 = vmul.f32 %v612, 0.0625
      %v621 = vmul.f32 %v613, 0.0625
      %v622 = vmul.f32 %v614, %v614
      %v623 = vmul.f32 %v615, %v615
      %v624 = vmul.f32 %v616, %v616
      %v625 = vmul.f32 %v617, %v617
      %v626 = vsub.f32 %v618, %v622
      %v627 = vsub.f32 %v619, %v623
      %v628 = vsub.f32 %v620, %v624
      %v629 = vsub.f32 %v621, %v625
      %v630 = vmax.f32 %v626, 0.0
      %v631 = vmax.f32 %v627, 0.0
      %v632 = vmax.f32 %v628, 0.0
      %v633 = vmax.f32 %v629, 0.0
      %v634 = vadd.f32 %v630, 1e-05
      %v635 = vadd.f32 %v631, 1e-05
      %v636 = vadd.f32 %v632, 1e-05
      %v637 = vadd.f32 %v633, 1e-05
      %v638 = vrsqrt.pop %v634
      %v639 = vrsqrt.pop %v635
      %v640 = vrsqrt.pop %v636
      %v641 = vrsqrt.pop %v637
      %v642 = vsub.f32 %v541, %v614
      %v643 = vsub.f32 %v546, %v615
      %v644 = vsub.f32 %v551, %v616
      %v645 = vsub.f32 %v556, %v617
      %v646 = vmul.f32 %v642, %v638
      %v647 = vmul.f32 %v643, %v639
      %v648 = vmul.f32 %v644, %v640
      %v649 = vmul.f32 %v645, %v641
      %v650 = vmax.f32 %v646, 0.0
      %v651 = vmax.f32 %v647, 0.0
      %v652 = vmax.f32 %v648, 0.0
      %v653 = vmax.f32 %v649, 0.0
      %v654 = vpack.c.bf16 %v651, %v650
      %v655 = vpack.c.bf16 %v653, %v652
      %v658 = vunpack.c.l.b16 %v654
      %v659 = vunpack.c.h.b16 %v654
      %v660 = vunpack.c.l.b16 %v655
      %v661 = vunpack.c.h.b16 %v655
      %v662 = vpack.c.b16 %v658, %v658
      %v663 = vpack.c.b16 %v659, %v659
      %v664 = vpack.c.b16 %v660, %v660
      %v665 = vpack.c.b16 %v661, %v661
      %670 = vst [vmem:[%s143] sm:$0xf] %v662
      %671 = vst [vmem:[%s143 + $0x4] sm:$0xf] %v663
      %672 = vst [vmem:[%s143 + $0x8] sm:$0xf] %v664
      %673 = vst [vmem:[%s143 + $0xc] sm:$0xf] %v665
      %p674 = scmp.lt.s32.totalorder %s13, 1
      %s675 = scalar_select %p674, %s13, 1
      %s676 = smul.addr %s675, 4
      %s677 = smul.addr %s676, 4
      %s678 = scalar_lea.vmem %s2, %s677
      // Predicated region
      $region29: #{_lambda_.13} parent=27 // pred_check
        %p679 = pneg %p78
      $region30: #{_lambda_.13} parent=27 // pred_check_branch
        %681 = sbr.rel (%p679) target = $region32
      $region31: #{_lambda_.13} parent=27 // pred_region
        _
      $region32: #{_lambda_.13} parent=27 // pred_fallthru
        _
    $region28: #{_lambda_.13} parent=5 // pred_fallthru
      _
    %p682 = scmp.le.s32.totalorder 2, %s8
    // Predicated region
    $region33: #{_lambda_.13} parent=5 // pred_check
      %p683 = pneg %p682
    $region34: #{_lambda_.13} parent=5 // pred_check_branch
      %685 = sbr.rel (%p683) target = $region36
    $region35: #{_lambda_.13} parent=5 // pred_region
      %s686 = ssub.s32 %s8, 2
      // Predicated region
      $region37: #{_lambda_.13} parent=35 // pred_check
        %p687 = pneg %p84
      $region38: #{_lambda_.13} parent=35 // pred_check_branch
        %689 = sbr.rel (%p687) target = $region40
      $region39: #{_lambda_.13} parent=35 // pred_region
        %p690 = scmp.lt.s32.totalorder %s14, 1
        %s691 = scalar_select %p690, %s14, 1
        %s692 = smul.addr %s691, 4
        %s693 = smul.addr %s692, 4
        %s694 = scalar_lea.vmem %s2, %s693
      $region40: #{_lambda_.13} parent=35 // pred_fallthru
        _
    $region36: #{_lambda_.13} parent=5 // pred_fallthru
      _
  $region6: #{_lambda_.13} parent=0 // loop_footer
    %s12 = sadd.s32 1, %s8
  $region7: #{_lambda_.13} parent=0 // loop_footer_branch
    %7 = sbr.rel target = $region3
  $region8: #{_lambda_.13} parent=0 // loop_exit
    _

// kernel: _lambda_.17
$region0: #{_lambda_.17}
  #allocation0 [shape = 'u32[]', space=smem, size = 0x4, offset = 0x4, fixed_abs, tag = 'smem constant byte address 0x4 - core index']
  #allocation1 [shape = 'u32[144,128]{1,0:T(1,128)}', space=vmem, size = 0x12000, scoped, tag = 'internal scratch']
  %s0 = inlined_call_operand.vmem [shape: bf16[2,32,134], index: 0, kind: input, shape index: {}]
  %s1 = inlined_call_operand.vmem [shape: f32[16,288], index: 1, kind: input, shape index: {}]
  %s2 = inlined_call_operand.vmem [shape: bf16[2,64,128], index: 2, kind: output, shape index: {}]
  %s3 = sld [smem:[#allocation0]]
  $region41: #{_lambda_.17} parent=0
    _
  %s5 = ssub.s32 1, %s3
  %s6 = scalar_select 0, %s5, %s3
  loop: start=0, step=1, limit=4
  $region2: #{_lambda_.17} parent=0 // loop_pre_header
    _
  $region3: #{_lambda_.17} parent=0 // loop_header
    %s8 = sphi 0, %s12
    %p9 = scmp.ge.s32.totalorder %s8, 4
    %s18 = sphi 0, %s20
    %s21 = sphi 0, %s18
    %s22 = sphi 0, %s21
    %s38 = sphi 0, %s22
    %s42 = sphi 0, %s42
    %s44 = sphi 0, %s42
    %s45 = sphi 0, %s44
    %s59 = sphi 0, %s45
    %s65 = sphi 0, %s67
    %s68 = sphi 0, %s65
    %s69 = sphi 0, %s68
    %s85 = sphi 0, %s69
  $region4: #{_lambda_.17} parent=0 // loop_header_branch
    %11 = sbr.rel (%p9) target = $region8
  $region5: #{_lambda_.17} parent=0 // loop_body
    %s13 = ssub.s32 %s8, 1
    %s14 = ssub.s32 %s8, 2
    %s15 = sadd.s32 %s8, 1
    %s16 = ssub.s32 %s8, %s15
    %p17 = scmp.eq.s32.totalorder %s16, 0
    %s19 = sadd.s32 %s18, 1
    %s20 = scalar_select %p17, %s18, %s19
    %p23 = pneg %p17
    %p24 = scmp.eq.s32.totalorder %s8, 1
    %p25 = por %p23, %p24
    %p26 = scmp.ne.s32.totalorder %s18, %s21
    %p27 = scmp.eq.s32.totalorder %s8, 0
    %p28 = por %p26, %p27
    %p29 = scmp.ne.s32.totalorder %s18, %s21
    %p30 = scmp.eq.s32.totalorder %s13, 1
    %p31 = por %p29, %p30
    %p32 = scmp.ne.s32.totalorder %s21, %s22
    %p33 = scmp.eq.s32.totalorder %s13, 0
    %p34 = por %p32, %p33
    %p35 = scmp.ne.s32.totalorder %s21, %s22
    %p36 = scmp.eq.s32.totalorder %s14, 1
    %p37 = por %p35, %p36
    %p39 = scmp.ne.s32.totalorder %s22, %s38
    %p40 = scmp.eq.s32.totalorder %s14, 0
    %p41 = por %p39, %p40
    %s43 = sadd.s32 %s42, 1
    %p46 = scmp.eq.s32.totalorder %s8, 1
    %p47 = scmp.ne.s32.totalorder %s42, %s44
    %p48 = scmp.eq.s32.totalorder %s8, 0
    %p49 = por %p47, %p48
    %p50 = scmp.ne.s32.totalorder %s42, %s44
    %p51 = scmp.eq.s32.totalorder %s13, 1
    %p52 = por %p50, %p51
    %p53 = scmp.ne.s32.totalorder %s44, %s45
    %p54 = scmp.eq.s32.totalorder %s13, 0
    %p55 = por %p53, %p54
    %p56 = scmp.ne.s32.totalorder %s44, %s45
    %p57 = scmp.eq.s32.totalorder %s14, 1
    %p58 = por %p56, %p57
    %p60 = scmp.ne.s32.totalorder %s45, %s59
    %p61 = scmp.eq.s32.totalorder %s14, 0
    %p62 = por %p60, %p61
    %s63 = ssub.s32 %s8, %s15
    %p64 = scmp.eq.s32.totalorder %s63, 0
    %s66 = sadd.s32 %s65, 1
    %s67 = scalar_select %p64, %s65, %s66
    %p70 = pneg %p64
    %p71 = scmp.eq.s32.totalorder %s8, 1
    %p72 = por %p70, %p71
    %p73 = scmp.ne.s32.totalorder %s65, %s68
    %p74 = scmp.eq.s32.totalorder %s8, 0
    %p75 = por %p73, %p74
    %p76 = scmp.ne.s32.totalorder %s65, %s68
    %p77 = scmp.eq.s32.totalorder %s13, 1
    %p78 = por %p76, %p77
    %p79 = scmp.ne.s32.totalorder %s68, %s69
    %p80 = scmp.eq.s32.totalorder %s13, 0
    %p81 = por %p79, %p80
    %p82 = scmp.ne.s32.totalorder %s68, %s69
    %p83 = scmp.eq.s32.totalorder %s14, 1
    %p84 = por %p82, %p83
    %p86 = scmp.ne.s32.totalorder %s69, %s85
    %p87 = scmp.eq.s32.totalorder %s14, 0
    %p88 = por %p86, %p87
    %p89 = scmp.le.s32.totalorder 1, %s8
    %p90 = scmp.lt.s32.totalorder %s8, 3
    %p91 = pnand %p89, %p90
    %p92 = pneg %p91
    // Predicated region
    $region9: #{_lambda_.17} parent=5 // pred_check
      _
    $region10: #{_lambda_.17} parent=5 // pred_check_branch
      %94 = sbr.rel (%p91) target = $region12
    $region11: #{_lambda_.17} parent=5 // pred_region
      %s95 = ssub.s32 %s8, 1
      // Predicated region
      $region13: #{_lambda_.17} parent=11 // pred_check
        %p96 = pneg %p55
      $region14: #{_lambda_.17} parent=11 // pred_check_branch
        %98 = sbr.rel (%p96) target = $region16
      $region15: #{_lambda_.17} parent=11 // pred_region
        _
      $region16: #{_lambda_.17} parent=11 // pred_fallthru
        _
    $region12: #{_lambda_.17} parent=5 // pred_fallthru
      _
    %p99 = scmp.lt.s32.totalorder %s8, 2
    // Predicated region
    $region17: #{_lambda_.17} parent=5 // pred_check
      %p100 = pneg %p99
    $region18: #{_lambda_.17} parent=5 // pred_check_branch
      %102 = sbr.rel (%p100) target = $region20
    $region19: #{_lambda_.17} parent=5 // pred_region
      // Predicated region
      $region21: #{_lambda_.17} parent=19 // pred_check
        %p103 = pneg %p28
      $region22: #{_lambda_.17} parent=19 // pred_check_branch
        %105 = sbr.rel (%p103) target = $region24
      $region23: #{_lambda_.17} parent=19 // pred_region
        %p106 = scmp.lt.s32.totalorder %s8, 1
        %s107 = scalar_select %p106, %s8, 1
        %s108 = smul.addr %s107, 8
        %s109 = smul.addr %s108, 4
        %s110 = scalar_lea.vmem %s0, %s109
      $region24: #{_lambda_.17} parent=19 // pred_fallthru
        _
    $region20: #{_lambda_.17} parent=5 // pred_fallthru
      _
    %p111 = scmp.le.s32.totalorder 1, %s8
    %p112 = scmp.lt.s32.totalorder %s8, 3
    %p113 = pnand %p111, %p112
    %p114 = pneg %p113
    // Predicated region
    $region25: #{_lambda_.17} parent=5 // pred_check
      _
    $region26: #{_lambda_.17} parent=5 // pred_check_branch
      %116 = sbr.rel (%p113) target = $region28
    $region27: #{_lambda_.17} parent=5 // pred_region
      %s117 = ssub.s32 %s8, 1
      %p118 = scmp.lt.s32.totalorder %s13, 1
      %s119 = scalar_select %p118, %s13, 1
      %s120 = smul.addr %s119, 8
      %s121 = smul.addr %s120, 4
      %s122 = scalar_lea.vmem %s0, %s121
      %p123 = pneg %p34
      %p124 = pneg %p31
      %p125 = pneg %p55
      %p126 = pneg %p52
      %p127 = pneg %p81
      %p128 = pneg %p78
      %p129 = scmp.lt.s32.totalorder %s13, 1
      %s130 = scalar_select %p129, %s13, 1
      %s131 = smul.addr %s130, 8
      %s132 = smul.addr %s131, 4
      %s133 = scalar_lea.vmem %s2, %s132
      %p134 = scmp.lt.s32.totalorder %s13, 1
      %s135 = scalar_select %p134, %s13, 1
      %s136 = smul.addr %s135, 8
      %s137 = smul.addr %s136, 4
      %s138 = scalar_lea.vmem %s0, %s137
      %p139 = scmp.lt.s32.totalorder %s13, 1
      %s140 = scalar_select %p139, %s13, 1
      %s141 = smul.addr %s140, 8
      %s142 = smul.addr %s141, 4
      %s143 = scalar_lea.vmem %s2, %s142
      %v144 = vld [vmem:[%s138] sm:$0xff]
      %v145 = vld [vmem:[%s138 + $0x8] sm:$0xff]
      %v146 = vld [vmem:[%s138 + $0x10] sm:$0xff]
      %v147 = vld [vmem:[%s138 + $0x18] sm:$0xff]
      %v148 = vunpack.c.l.bf16 %v144
      %v149 = vunpack.c.h.bf16 %v144
      %v150 = vunpack.c.l.bf16 %v145
      %v151 = vunpack.c.h.bf16 %v145
      %v152 = vunpack.c.l.bf16 %v146
      %v153 = vunpack.c.h.bf16 %v146
      %v154 = vunpack.c.l.bf16 %v147
      %v155 = vunpack.c.h.bf16 %v147
      %v156 = vld [vmem:[%s1] sm:$0xff]
      %v157 = vld [vmem:[%s1 + $0x8] sm:$0xff]
      %v158 = vld [vmem:[%s1 + $0x10] sm:$0xff]
      %v159 = vld [vmem:[%s1 + $0x18] sm:$0xff]
      %v160 = vld [vmem:[%s1 + $0x20] sm:$0xff]
      %v161 = vld [vmem:[%s1 + $0x28] sm:$0xff]
      %vm162 = vcmask 261120
      %v164 = vsel %vm162, %v156, 0
      %v167 = vsel %vm162, %v159, 0
      %169 = vmatprep.subr.mxu0 0.0
      %170 = vmatpush1.msra.mxu0 0.0
      %171 = vmatprep.subr.mxu0 0.0
      %172 = vmatpush1.msra.mxu0 0.0
      %173 = vmatprep.subr.mxu0 0.0
      %174 = vmatpush1.msra.mxu0 0.0
      %175 = vmatprep.subr.mxu0 0.0
      %176 = vmatpush1.msra.mxu0 0.0
      %177 = vmatprep.subr.mxu0 0.0
      %178 = vmatpush1.msra.mxu0 0.0
      %179 = vmatprep.subr.mxu0 0.0
      %180 = vmatpush1.msra.mxu0 0.0
      %181 = vmatprep.subr.mxu0 0.0
      %182 = vmatpush1.msra.mxu0 0.0
      %183 = vmatprep.subr.mxu0 0.0
      %184 = vmatpush1.msra.mxu0 0.0
      %185 = vmatprep.subr.mxu0 0.0
      %186 = vmatpush1.msra.mxu0 0.0
      %187 = vmatprep.subr.mxu0 0.0
      %188 = vmatpush1.msra.mxu0 0.0
      %189 = vmatprep.subr.mxu0 0.0
      %190 = vmatpush1.msra.mxu0 0.0
      %191 = vmatprep.subr.mxu0 0.0
      %192 = vmatpush1.msra.mxu0 0.0
      %193 = vmatprep.subr.mxu0 0.0
      %194 = vmatpush1.msra.mxu0 %v154
      %195 = vmatprep.subr.mxu0 0.0
      %196 = vmatpush1.msra.mxu0 %v152
      %197 = vmatprep.subr.mxu0 0.0
      %198 = vmatpush1.msra.mxu0 %v150
      %199 = vmatprep.subr.mxu0 0.0
      %200 = vmatpush1.msra.mxu0 %v148
      %201 = vmatprep.subr.mxu0 0.0
      %202 = vmatpush2.msra.mxu0 0.0
      %203 = vmatprep.subr.mxu0 0.0
      %204 = vmatpush2.msra.mxu0 0.0
      %205 = vmatprep.subr.mxu0 0.0
      %206 = vmatpush2.msra.mxu0 0.0
      %207 = vmatprep.subr.mxu0 0.0
      %208 = vmatpush2.msra.mxu0 0.0
      %209 = vmatprep.subr.mxu0 0.0
      %210 = vmatpush2.msra.mxu0 0.0
      %211 = vmatprep.subr.mxu0 0.0
      %212 = vmatpush2.msra.mxu0 0.0
      %213 = vmatprep.subr.mxu0 0.0
      %214 = vmatpush2.msra.mxu0 0.0
      %215 = vmatprep.subr.mxu0 0.0
      %216 = vmatpush2.msra.mxu0 0.0
      %217 = vmatprep.subr.mxu0 0.0
      %218 = vmatpush2.msra.mxu0 0.0
      %219 = vmatprep.subr.mxu0 0.0
      %220 = vmatpush2.msra.mxu0 0.0
      %221 = vmatprep.subr.mxu0 0.0
      %222 = vmatpush2.msra.mxu0 0.0
      %223 = vmatprep.subr.mxu0 0.0
      %224 = vmatpush2.msra.mxu0 0.0
      %225 = vmatprep.subr.mxu0 0.0
      %226 = vmatpush2.msra.mxu0 0.0
      %227 = vmatprep.subr.mxu0 0.0
      %228 = vmatpush2.msra.mxu0 0.0
      %229 = vmatprep.subr.mxu0 0.0
      %230 = vmatpush2.msra.mxu0 0.0
      %231 = vmatprep.subr.mxu0 0.0
      %232 = vmatpush2.msra.mxu0 0.0
      %233 = vmatprep.mubr.f32.mxu0 0.0
      %234 = vmatmul.mubr.f32.gmra.mxu0 %v164
      %v235 = vpop.f32.mrf.mxu0
      %v236 = vadd.f32 0.0, %v235
      %v237 = vpop.f32.mrf.mxu0
      %238 = vmatprep.mubr.f32.mxu0 0.0
      %239 = vmatmul.mubr.f32.gmra.mxu0 %v167
      %v240 = vpop.f32.mrf.mxu0
      %v241 = vadd.f32 0.0, %v240
      %v242 = vpop.f32.mrf.mxu0
      %243 = vdwg.mxu0
      %252 = vrot.lane.b32.xlu0 %v148, 127
      %v253 = vpop.permute.xlu0 %252
      %254 = vrot.lane.b32.xlu0 %v149, 127
      %v255 = vpop.permute.xlu0 %254
      %256 = vrot.lane.b32.xlu0 %v150, 127
      %v257 = vpop.permute.xlu0 %256
      %258 = vrot.lane.b32.xlu0 %v151, 127
      %v259 = vpop.permute.xlu0 %258
      %260 = vrot.lane.b32.xlu0 %v152, 127
      %v261 = vpop.permute.xlu0 %260
      %262 = vrot.lane.b32.xlu0 %v153, 127
      %v263 = vpop.permute.xlu0 %262
      %264 = vrot.lane.b32.xlu0 %v154, 127
      %v265 = vpop.permute.xlu0 %264
      %266 = vrot.lane.b32.xlu0 %v155, 127
      %v267 = vpop.permute.xlu0 %266
      %vm268 = vcmask 1039360
      %v269 = vsel %vm268, %v253, %v255
      %v270 = vsel %vm268, %v257, %v259
      %v271 = vsel %vm268, %v261, %v263
      %v272 = vsel %vm268, %v265, %v267
      %277 = vrot.lane.b32.xlu0 %v156, 96
      %v278 = vpop.permute.xlu0 %277
      %279 = vrot.lane.b32.xlu0 %v159, 96
      %v280 = vpop.permute.xlu0 %279
      %vm281 = vcmask 523264
      %v282 = vsel %vm281, %v278, 0
      %v284 = vsel %vm281, %v280, 0
      %286 = vmatprep.subr.mxu0 0.0
      %287 = vmatpush1.msra.mxu0 0.0
      %288 = vmatprep.subr.mxu0 0.0
      %289 = vmatpush1.msra.mxu0 0.0
      %290 = vmatprep.subr.mxu0 0.0
      %291 = vmatpush1.msra.mxu0 0.0
      %292 = vmatprep.subr.mxu0 0.0
      %293 = vmatpush1.msra.mxu0 0.0
      %294 = vmatprep.subr.mxu0 0.0
      %295 = vmatpush1.msra.mxu0 0.0
      %296 = vmatprep.subr.mxu0 0.0
      %297 = vmatpush1.msra.mxu0 0.0
      %298 = vmatprep.subr.mxu0 0.0
      %299 = vmatpush1.msra.mxu0 0.0
      %300 = vmatprep.subr.mxu0 0.0
      %301 = vmatpush1.msra.mxu0 0.0
      %302 = vmatprep.subr.mxu0 0.0
      %303 = vmatpush1.msra.mxu0 %v272
      %304 = vmatprep.subr.mxu0 0.0
      %305 = vmatpush1.msra.mxu0 %v271
      %306 = vmatprep.subr.mxu0 0.0
      %307 = vmatpush1.msra.mxu0 %v270
      %308 = vmatprep.subr.mxu0 0.0
      %309 = vmatpush1.msra.mxu0 %v269
      %310 = vmatprep.subr.mxu0 0.0
      %311 = vmatpush1.msra.mxu0 %v154
      %312 = vmatprep.subr.mxu0 0.0
      %313 = vmatpush1.msra.mxu0 %v152
      %314 = vmatprep.subr.mxu0 0.0
      %315 = vmatpush1.msra.mxu0 %v150
      %316 = vmatprep.subr.mxu0 0.0
      %317 = vmatpush1.msra.mxu0 %v148
      %318 = vmatprep.subr.mxu0 0.0
      %319 = vmatpush2.msra.mxu0 0.0
      %320 = vmatprep.subr.mxu0 0.0
      %321 = vmatpush2.msra.mxu0 0.0
      %322 = vmatprep.subr.mxu0 0.0
      %323 = vmatpush2.msra.mxu0 0.0
      %324 = vmatprep.subr.mxu0 0.0
      %325 = vmatpush2.msra.mxu0 0.0
      %326 = vmatprep.subr.mxu0 0.0
      %327 = vmatpush2.msra.mxu0 0.0
      %328 = vmatprep.subr.mxu0 0.0
      %329 = vmatpush2.msra.mxu0 0.0
      %330 = vmatprep.subr.mxu0 0.0
      %331 = vmatpush2.msra.mxu0 0.0
      %332 = vmatprep.subr.mxu0 0.0
      %333 = vmatpush2.msra.mxu0 0.0
      %334 = vmatprep.subr.mxu0 0.0
      %335 = vmatpush2.msra.mxu0 0.0
      %336 = vmatprep.subr.mxu0 0.0
      %337 = vmatpush2.msra.mxu0 0.0
      %338 = vmatprep.subr.mxu0 0.0
      %339 = vmatpush2.msra.mxu0 0.0
      %340 = vmatprep.subr.mxu0 0.0
      %341 = vmatpush2.msra.mxu0 0.0
      %342 = vmatprep.subr.mxu0 0.0
      %343 = vmatpush2.msra.mxu0 0.0
      %344 = vmatprep.subr.mxu0 0.0
      %345 = vmatpush2.msra.mxu0 0.0
      %346 = vmatprep.subr.mxu0 0.0
      %347 = vmatpush2.msra.mxu0 0.0
      %348 = vmatprep.subr.mxu0 0.0
      %349 = vmatpush2.msra.mxu0 0.0
      %350 = vmatprep.mubr.f32.mxu0 0.0
      %351 = vmatmul.mubr.f32.gmra.mxu0 %v282
      %v352 = vpop.f32.mrf.mxu0
      %v353 = vadd.f32 0.0, %v352
      %v354 = vpop.f32.mrf.mxu0
      %355 = vmatprep.mubr.f32.mxu0 0.0
      %356 = vmatmul.mubr.f32.gmra.mxu0 %v284
      %v357 = vpop.f32.mrf.mxu0
      %v358 = vadd.f32 0.0, %v357
      %v359 = vpop.f32.mrf.mxu0
      %360 = vdwg.mxu0
      %361 = vrot.lane.b32.xlu0 %v148, 123
      %v362 = vpop.permute.xlu0 %361
      %363 = vrot.lane.b32.xlu0 %v149, 123
      %v364 = vpop.permute.xlu0 %363
      %365 = vrot.lane.b32.xlu0 %v150, 123
      %v366 = vpop.permute.xlu0 %365
      %367 = vrot.lane.b32.xlu0 %v151, 123
      %v368 = vpop.permute.xlu0 %367
      %369 = vrot.lane.b32.xlu0 %v152, 123
      %v370 = vpop.permute.xlu0 %369
      %371 = vrot.lane.b32.xlu0 %v153, 123
      %v372 = vpop.permute.xlu0 %371
      %373 = vrot.lane.b32.xlu0 %v154, 123
      %v374 = vpop.permute.xlu0 %373
      %375 = vrot.lane.b32.xlu0 %v155, 123
      %v376 = vpop.permute.xlu0 %375
      %vm377 = vcmask 1006592
      %v378 = vsel %vm377, %v362, %v364
      %v379 = vsel %vm377, %v366, %v368
      %v380 = vsel %vm377, %v370, %v372
      %v381 = vsel %vm377, %v374, %v376
      %388 = vrot.lane.b32.xlu0 %v156, 32
      %v389 = vpop.permute.xlu0 %388
      %390 = vrot.lane.b32.xlu0 %v157, 32
      %v391 = vpop.permute.xlu0 %390
      %392 = vrot.lane.b32.xlu0 %v159, 32
      %v393 = vpop.permute.xlu0 %392
      %394 = vrot.lane.b32.xlu0 %v160, 32
      %v395 = vpop.permute.xlu0 %394
      %v396 = vsel %vm162, %v389, %v391
      %v397 = vsel %vm162, %v393, %v395
      %v398 = vsel %vm281, %v396, 0
      %v400 = vsel %vm281, %v397, 0
      %402 = vmatprep.subr.mxu0 0.0
      %403 = vmatpush1.msra.mxu0 0.0
      %404 = vmatprep.subr.mxu0 0.0
      %405 = vmatpush1.msra.mxu0 0.0
      %406 = vmatprep.subr.mxu0 0.0
      %407 = vmatpush1.msra.mxu0 0.0
      %408 = vmatprep.subr.mxu0 0.0
      %409 = vmatpush1.msra.mxu0 0.0
      %410 = vmatprep.subr.mxu0 0.0
      %411 = vmatpush1.msra.mxu0 0.0
      %412 = vmatprep.subr.mxu0 0.0
      %413 = vmatpush1.msra.mxu0 0.0
      %414 = vmatprep.subr.mxu0 0.0
      %415 = vmatpush1.msra.mxu0 0.0
      %416 = vmatprep.subr.mxu0 0.0
      %417 = vmatpush1.msra.mxu0 0.0
      %418 = vmatprep.subr.mxu0 0.0
      %419 = vmatpush1.msra.mxu0 %v381
      %420 = vmatprep.subr.mxu0 0.0
      %421 = vmatpush1.msra.mxu0 %v380
      %422 = vmatprep.subr.mxu0 0.0
      %423 = vmatpush1.msra.mxu0 %v379
      %424 = vmatprep.subr.mxu0 0.0
      %425 = vmatpush1.msra.mxu0 %v378
      %426 = vmatprep.subr.mxu0 0.0
      %427 = vmatpush1.msra.mxu0 %v154
      %428 = vmatprep.subr.mxu0 0.0
      %429 = vmatpush1.msra.mxu0 %v152
      %430 = vmatprep.subr.mxu0 0.0
      %431 = vmatpush1.msra.mxu0 %v150
      %432 = vmatprep.subr.mxu0 0.0
      %433 = vmatpush1.msra.mxu0 %v148
      %434 = vmatprep.subr.mxu0 0.0
      %435 = vmatpush2.msra.mxu0 0.0
      %436 = vmatprep.subr.mxu0 0.0
      %437 = vmatpush2.msra.mxu0 0.0
      %438 = vmatprep.subr.mxu0 0.0
      %439 = vmatpush2.msra.mxu0 0.0
      %440 = vmatprep.subr.mxu0 0.0
      %441 = vmatpush2.msra.mxu0 0.0
      %442 = vmatprep.subr.mxu0 0.0
      %443 = vmatpush2.msra.mxu0 0.0
      %444 = vmatprep.subr.mxu0 0.0
      %445 = vmatpush2.msra.mxu0 0.0
      %446 = vmatprep.subr.mxu0 0.0
      %447 = vmatpush2.msra.mxu0 0.0
      %448 = vmatprep.subr.mxu0 0.0
      %449 = vmatpush2.msra.mxu0 0.0
      %450 = vmatprep.subr.mxu0 0.0
      %451 = vmatpush2.msra.mxu0 0.0
      %452 = vmatprep.subr.mxu0 0.0
      %453 = vmatpush2.msra.mxu0 0.0
      %454 = vmatprep.subr.mxu0 0.0
      %455 = vmatpush2.msra.mxu0 0.0
      %456 = vmatprep.subr.mxu0 0.0
      %457 = vmatpush2.msra.mxu0 0.0
      %458 = vmatprep.subr.mxu0 0.0
      %459 = vmatpush2.msra.mxu0 0.0
      %460 = vmatprep.subr.mxu0 0.0
      %461 = vmatpush2.msra.mxu0 0.0
      %462 = vmatprep.subr.mxu0 0.0
      %463 = vmatpush2.msra.mxu0 0.0
      %464 = vmatprep.subr.mxu0 0.0
      %465 = vmatpush2.msra.mxu0 0.0
      %466 = vmatprep.mubr.f32.mxu0 0.0
      %467 = vmatmul.mubr.f32.gmra.mxu0 %v398
      %v468 = vpop.f32.mrf.mxu0
      %v469 = vadd.f32 0.0, %v468
      %v470 = vpop.f32.mrf.mxu0
      %471 = vmatprep.mubr.f32.mxu0 0.0
      %472 = vmatmul.mubr.f32.gmra.mxu0 %v400
      %v473 = vpop.f32.mrf.mxu0
      %v474 = vadd.f32 0.0, %v473
      %v475 = vpop.f32.mrf.mxu0
      %476 = vdwg.mxu0
      %477 = vrot.lane.b32.xlu0 %v148, 122
      %v478 = vpop.permute.xlu0 %477
      %479 = vrot.lane.b32.xlu0 %v149, 122
      %v480 = vpop.permute.xlu0 %479
      %481 = vrot.lane.b32.xlu0 %v150, 122
      %v482 = vpop.permute.xlu0 %481
      %483 = vrot.lane.b32.xlu0 %v151, 122
      %v484 = vpop.permute.xlu0 %483
      %485 = vrot.lane.b32.xlu0 %v152, 122
      %v486 = vpop.permute.xlu0 %485
      %487 = vrot.lane.b32.xlu0 %v153, 122
      %v488 = vpop.permute.xlu0 %487
      %489 = vrot.lane.b32.xlu0 %v154, 122
      %v490 = vpop.permute.xlu0 %489
      %491 = vrot.lane.b32.xlu0 %v155, 122
      %v492 = vpop.permute.xlu0 %491
      %vm493 = vcmask 998400
      %v494 = vsel %vm493, %v478, %v480
      %v495 = vsel %vm493, %v482, %v484
      %v496 = vsel %vm493, %v486, %v488
      %v497 = vsel %vm493, %v490, %v492
      %504 = vrot.lane.b32.xlu0 %v157, 96
      %v505 = vpop.permute.xlu0 %504
      %506 = vrot.lane.b32.xlu0 %v158, 96
      %v507 = vpop.permute.xlu0 %506
      %508 = vrot.lane.b32.xlu0 %v160, 96
      %v509 = vpop.permute.xlu0 %508
      %510 = vrot.lane.b32.xlu0 %v161, 96
      %v511 = vpop.permute.xlu0 %510
      %vm512 = vcmask 785408
      %v513 = vsel %vm512, %v505, %v507
      %v514 = vsel %vm512, %v509, %v511
      %517 = vmatprep.subr.mxu0 0.0
      %518 = vmatpush1.msra.mxu0 %v497
      %519 = vmatprep.subr.mxu0 0.0
      %520 = vmatpush1.msra.mxu0 %v496
      %521 = vmatprep.subr.mxu0 0.0
      %522 = vmatpush1.msra.mxu0 %v495
      %523 = vmatprep.subr.mxu0 0.0
      %524 = vmatpush1.msra.mxu0 %v494
      %525 = vmatprep.subr.mxu0 0.0
      %526 = vmatpush1.msra.mxu0 %v381
      %527 = vmatprep.subr.mxu0 0.0
      %528 = vmatpush1.msra.mxu0 %v380
      %529 = vmatprep.subr.mxu0 0.0
      %530 = vmatpush1.msra.mxu0 %v379
      %531 = vmatprep.subr.mxu0 0.0
      %532 = vmatpush1.msra.mxu0 %v378
      %533 = vmatprep.subr.mxu0 0.0
      %534 = vmatpush1.msra.mxu0 %v272
      %535 = vmatprep.subr.mxu0 0.0
      %536 = vmatpush1.msra.mxu0 %v271
      %537 = vmatprep.subr.mxu0 0.0
      %538 = vmatpush1.msra.mxu0 %v270
      %539 = vmatprep.subr.mxu0 0.0
      %540 = vmatpush1.msra.mxu0 %v269
      %541 = vmatprep.subr.mxu0 0.0
      %542 = vmatpush1.msra.mxu0 %v154
      %543 = vmatprep.subr.mxu0 0.0
      %544 = vmatpush1.msra.mxu0 %v152
      %545 = vmatprep.subr.mxu0 0.0
      %546 = vmatpush1.msra.mxu0 %v150
      %547 = vmatprep.subr.mxu0 0.0
      %548 = vmatpush1.msra.mxu0 %v148
      %549 = vmatprep.subr.mxu0 0.0
      %550 = vmatpush2.msra.mxu0 0.0
      %551 = vmatprep.subr.mxu0 0.0
      %552 = vmatpush2.msra.mxu0 0.0
      %553 = vmatprep.subr.mxu0 0.0
      %554 = vmatpush2.msra.mxu0 0.0
      %555 = vmatprep.subr.mxu0 0.0
      %556 = vmatpush2.msra.mxu0 0.0
      %557 = vmatprep.subr.mxu0 0.0
      %558 = vmatpush2.msra.mxu0 0.0
      %559 = vmatprep.subr.mxu0 0.0
      %560 = vmatpush2.msra.mxu0 0.0
      %561 = vmatprep.subr.mxu0 0.0
      %562 = vmatpush2.msra.mxu0 0.0
      %563 = vmatprep.subr.mxu0 0.0
      %564 = vmatpush2.msra.mxu0 0.0
      %565 = vmatprep.subr.mxu0 0.0
      %566 = vmatpush2.msra.mxu0 0.0
      %567 = vmatprep.subr.mxu0 0.0
      %568 = vmatpush2.msra.mxu0 0.0
      %569 = vmatprep.subr.mxu0 0.0
      %570 = vmatpush2.msra.mxu0 0.0
      %571 = vmatprep.subr.mxu0 0.0
      %572 = vmatpush2.msra.mxu0 0.0
      %573 = vmatprep.subr.mxu0 0.0
      %574 = vmatpush2.msra.mxu0 0.0
      %575 = vmatprep.subr.mxu0 0.0
      %576 = vmatpush2.msra.mxu0 0.0
      %577 = vmatprep.subr.mxu0 0.0
      %578 = vmatpush2.msra.mxu0 0.0
      %579 = vmatprep.subr.mxu0 0.0
      %580 = vmatpush2.msra.mxu0 0.0
      %581 = vmatprep.mubr.f32.mxu0 0.0
      %582 = vmatmul.mubr.f32.gmra.mxu0 %v513
      %v583 = vpop.f32.mrf.mxu0
      %v584 = vadd.f32 0.0, %v583
      %v585 = vpop.f32.mrf.mxu0
      %586 = vmatprep.mubr.f32.mxu0 0.0
      %587 = vmatmul.mubr.f32.gmra.mxu0 %v514
      %v588 = vpop.f32.mrf.mxu0
      %v589 = vadd.f32 0.0, %v588
      %v590 = vpop.f32.mrf.mxu0
      %591 = vdwg.mxu0
      %v592 = vlaneseq
      %v593 = vand.u32 %v592, 127
      %vm594 = vcmp.lt.s32.totalorder %v593, 0
      %v595 = vsub.s32 0, %v593
      %v596 = vsel %vm594, %v595, %v593
      %v597 = vmul.u32.u64.compose %v596, 3435973837
      %v598 = vextract.low.u32 %v597
      %v599 = vextract.high.u32 %v597
      %v600 = vshrl.u32 %v599, 2
      %v601 = vmul.u32 %v600, 5
      %v602 = vsub.s32 %v596, %v601
      %v603 = vsub.s32 0, %v602
      %v604 = vsel %vm594, %v603, %v602
      %vm605 = vcmp.ne.s32.totalorder %v604, 0
      %vm606 = vcmp.lt.s32.totalorder %v604, 0
      %vm607 = vmand %vm606, %vm605
      %v608 = vadd.s32 %v604, 5
      %v609 = vsel %vm607, %v608, %v604
      %vm610 = vcmp.lt.s32.totalorder %v609, 4
      %vm611 = vcmp.lt.s32.totalorder %v593, 20
      %vm612 = vmand %vm610, %vm611
      %v613 = vsel %vm612, 1, 0
      %v614 = vcvt.s32.f32 %v613
      %v615 = vmul.f32 %v236, %v614
      %v616 = vmul.f32 %v241, %v614
      %617 = vadd.xlane.f32.xlu0 %v615
      %v618 = vpop.xlane.xlu0 %617
      %619 = vadd.xlane.f32.xlu0 %v616
      %v620 = vpop.xlane.xlu0 %619
      %v621 = vadd.f32 %v618, 0.0
      %v622 = vadd.f32 %v620, 0.0
      %v623 = vmul.f32 %v615, %v236
      %v624 = vmul.f32 %v616, %v241
      %625 = vadd.xlane.f32.xlu0 %v623
      %v626 = vpop.xlane.xlu0 %625
      %627 = vadd.xlane.f32.xlu0 %v624
      %v628 = vpop.xlane.xlu0 %627
      %v629 = vadd.f32 %v626, 0.0
      %v630 = vadd.f32 %v628, 0.0
      %v631 = vmul.f32 %v353, %v614
      %v632 = vmul.f32 %v358, %v614
      %633 = vadd.xlane.f32.xlu0 %v631
      %v634 = vpop.xlane.xlu0 %633
      %635 = vadd.xlane.f32.xlu0 %v632
      %v636 = vpop.xlane.xlu0 %635
      %v637 = vadd.f32 %v621, %v634
      %v638 = vadd.f32 %v622, %v636
      %v639 = vmul.f32 %v631, %v353
      %v640 = vmul.f32 %v632, %v358
      %641 = vadd.xlane.f32.xlu0 %v639
      %v642 = vpop.xlane.xlu0 %641
      %643 = vadd.xlane.f32.xlu0 %v640
      %v644 = vpop.xlane.xlu0 %643
      %v645 = vadd.f32 %v629, %v642
      %v646 = vadd.f32 %v630, %v644
      %v647 = vmul.f32 %v469, %v614
      %v648 = vmul.f32 %v474, %v614
      %649 = vadd.xlane.f32.xlu0 %v647
      %v650 = vpop.xlane.xlu0 %649
      %651 = vadd.xlane.f32.xlu0 %v648
      %v652 = vpop.xlane.xlu0 %651
      %v653 = vadd.f32 %v637, %v650
      %v654 = vadd.f32 %v638, %v652
      %v655 = vmul.f32 %v647, %v469
      %v656 = vmul.f32 %v648, %v474
      %657 = vadd.xlane.f32.xlu0 %v655
      %v658 = vpop.xlane.xlu0 %657
      %659 = vadd.xlane.f32.xlu0 %v656
      %v660 = vpop.xlane.xlu0 %659
      %v661 = vadd.f32 %v645, %v658
      %v662 = vadd.f32 %v646, %v660
      %v663 = vmul.f32 %v584, %v614
      %v664 = vmul.f32 %v589, %v614
      %665 = vadd.xlane.f32.xlu0 %v663
      %v666 = vpop.xlane.xlu0 %665
      %667 = vadd.xlane.f32.xlu0 %v664
      %v668 = vpop.xlane.xlu0 %667
      %v669 = vadd.f32 %v653, %v666
      %v670 = vadd.f32 %v654, %v668
      %v671 = vmul.f32 %v663, %v584
      %v672 = vmul.f32 %v664, %v589
      %673 = vadd.xlane.f32.xlu0 %v671
      %v674 = vpop.xlane.xlu0 %673
      %675 = vadd.xlane.f32.xlu0 %v672
      %v676 = vpop.xlane.xlu0 %675
      %v677 = vadd.f32 %v661, %v674
      %v678 = vadd.f32 %v662, %v676
      %v679 = vmul.f32 %v669, 0.015625
      %v680 = vmul.f32 %v670, 0.015625
      %v681 = vmul.f32 %v677, 0.015625
      %v682 = vmul.f32 %v678, 0.015625
      %v683 = vmul.f32 %v679, %v679
      %v684 = vmul.f32 %v680, %v680
      %v685 = vsub.f32 %v681, %v683
      %v686 = vsub.f32 %v682, %v684
      %v687 = vmax.f32 %v685, 0.0
      %v688 = vmax.f32 %v686, 0.0
      %v689 = vadd.f32 %v687, 1e-05
      %v690 = vadd.f32 %v688, 1e-05
      %v691 = vrsqrt.pop %v689
      %v692 = vrsqrt.pop %v690
      %v693 = vsub.f32 %v236, %v679
      %v694 = vsub.f32 %v241, %v680
      %v695 = vmul.f32 %v693, %v691
      %v696 = vmul.f32 %v694, %v692
      %v697 = vsub.f32 %v353, %v679
      %v698 = vsub.f32 %v358, %v680
      %v699 = vmul.f32 %v697, %v691
      %v700 = vmul.f32 %v698, %v692
      %v701 = vsub.f32 %v469, %v679
      %v702 = vsub.f32 %v474, %v680
      %v703 = vmul.f32 %v701, %v691
      %v704 = vmul.f32 %v702, %v692
      %v705 = vsub.f32 %v584, %v679
      %v706 = vsub.f32 %v589, %v680
      %v707 = vmul.f32 %v705, %v691
      %v708 = vmul.f32 %v706, %v692
      %v709 = vmax.f32 %v695, 0.0
      %v710 = vmax.f32 %v696, 0.0
      %v711 = vmax.f32 %v699, 0.0
      %v712 = vmax.f32 %v700, 0.0
      %v713 = vmax.f32 %v703, 0.0
      %v714 = vmax.f32 %v704, 0.0
      %v715 = vmax.f32 %v707, 0.0
      %v716 = vmax.f32 %v708, 0.0
      %v717 = vpack.c.bf16 %v710, %v709
      %v718 = vpack.c.bf16 %v712, %v711
      %v719 = vpack.c.bf16 %v714, %v713
      %v720 = vpack.c.bf16 %v716, %v715
      %v725 = vunpack.c.l.b16 %v717
      %v726 = vunpack.c.h.b16 %v717
      %v727 = vunpack.c.l.b16 %v718
      %v728 = vunpack.c.h.b16 %v718
      %v729 = vunpack.c.l.b16 %v719
      %v730 = vunpack.c.h.b16 %v719
      %v731 = vunpack.c.l.b16 %v720
      %v732 = vunpack.c.h.b16 %v720
      %v733 = vpack.c.b16 %v725, %v725
      %v734 = vpack.c.b16 %v726, %v726
      %v735 = vpack.c.b16 %v727, %v727
      %v736 = vpack.c.b16 %v728, %v728
      %v737 = vpack.c.b16 %v729, %v729
      %v738 = vpack.c.b16 %v730, %v730
      %v739 = vpack.c.b16 %v731, %v731
      %v740 = vpack.c.b16 %v732, %v732
      %749 = vst [vmem:[%s143] sm:$0xf] %v733
      %750 = vst [vmem:[%s143 + $0x4] sm:$0xf] %v734
      %751 = vst [vmem:[%s143 + $0x8] sm:$0xf] %v735
      %752 = vst [vmem:[%s143 + $0xc] sm:$0xf] %v736
      %753 = vst [vmem:[%s143 + $0x10] sm:$0xf] %v737
      %754 = vst [vmem:[%s143 + $0x14] sm:$0xf] %v738
      %755 = vst [vmem:[%s143 + $0x18] sm:$0xf] %v739
      %756 = vst [vmem:[%s143 + $0x1c] sm:$0xf] %v740
      %p757 = scmp.lt.s32.totalorder %s13, 1
      %s758 = scalar_select %p757, %s13, 1
      %s759 = smul.addr %s758, 8
      %s760 = smul.addr %s759, 4
      %s761 = scalar_lea.vmem %s2, %s760
      // Predicated region
      $region29: #{_lambda_.17} parent=27 // pred_check
        %p762 = pneg %p78
      $region30: #{_lambda_.17} parent=27 // pred_check_branch
        %764 = sbr.rel (%p762) target = $region32
      $region31: #{_lambda_.17} parent=27 // pred_region
        _
      $region32: #{_lambda_.17} parent=27 // pred_fallthru
        _
    $region28: #{_lambda_.17} parent=5 // pred_fallthru
      _
    %p765 = scmp.le.s32.totalorder 2, %s8
    // Predicated region
    $region33: #{_lambda_.17} parent=5 // pred_check
      %p766 = pneg %p765
    $region34: #{_lambda_.17} parent=5 // pred_check_branch
      %768 = sbr.rel (%p766) target = $region36
    $region35: #{_lambda_.17} parent=5 // pred_region
      %s769 = ssub.s32 %s8, 2
      // Predicated region
      $region37: #{_lambda_.17} parent=35 // pred_check
        %p770 = pneg %p84
      $region38: #{_lambda_.17} parent=35 // pred_check_branch
        %772 = sbr.rel (%p770) target = $region40
      $region39: #{_lambda_.17} parent=35 // pred_region
        %p773 = scmp.lt.s32.totalorder %s14, 1
        %s774 = scalar_select %p773, %s14, 1
        %s775 = smul.addr %s774, 8
        %s776 = smul.addr %s775, 4
        %s777 = scalar_lea.vmem %s2, %s776
      $region40: #{_lambda_.17} parent=35 // pred_fallthru
        _
    $region36: #{_lambda_.17} parent=5 // pred_fallthru
      _
  $region6: #{_lambda_.17} parent=0 // loop_footer
    %s12 = sadd.s32 1, %s8
  $region7: #{_lambda_.17} parent=0 // loop_footer_branch
    %7 = sbr.rel target = $region3
  $region8: #{_lambda_.17} parent=0 // loop_exit
    _

// kernel: _lambda_.14
$region0: #{_lambda_.14}
  #allocation0 [shape = 'u32[]', space=smem, size = 0x4, offset = 0x4, fixed_abs, tag = 'smem constant byte address 0x4 - core index']
  #allocation1 [shape = 'u32[144,128]{1,0:T(1,128)}', space=vmem, size = 0x12000, scoped, tag = 'internal scratch']
  %s0 = inlined_call_operand.vmem [shape: bf16[2,32,142], index: 0, kind: input, shape index: {}]
  %s1 = inlined_call_operand.vmem [shape: f32[32,288], index: 1, kind: input, shape index: {}]
  %s2 = inlined_call_operand.vmem [shape: bf16[2,32,128], index: 2, kind: input, shape index: {}]
  %s3 = inlined_call_operand.vmem [shape: bf16[2,32,128], index: 3, kind: output, shape index: {}]
  %s4 = sld [smem:[#allocation0]]
  $region45: #{_lambda_.14} parent=0
    _
  %s6 = ssub.s32 1, %s4
  %s7 = scalar_select 0, %s6, %s4
  loop: start=0, step=1, limit=4
  $region2: #{_lambda_.14} parent=0 // loop_pre_header
    _
  $region3: #{_lambda_.14} parent=0 // loop_header
    %s9 = sphi 0, %s13
    %p10 = scmp.ge.s32.totalorder %s9, 4
    %s19 = sphi 0, %s21
    %s22 = sphi 0, %s19
    %s23 = sphi 0, %s22
    %s39 = sphi 0, %s23
    %s43 = sphi 0, %s43
    %s45 = sphi 0, %s43
    %s46 = sphi 0, %s45
    %s60 = sphi 0, %s46
    %s66 = sphi 0, %s68
    %s69 = sphi 0, %s66
    %s70 = sphi 0, %s69
    %s86 = sphi 0, %s70
    %s92 = sphi 0, %s94
    %s95 = sphi 0, %s92
    %s96 = sphi 0, %s95
    %s112 = sphi 0, %s96
  $region4: #{_lambda_.14} parent=0 // loop_header_branch
    %12 = sbr.rel (%p10) target = $region8
  $region5: #{_lambda_.14} parent=0 // loop_body
    %s14 = ssub.s32 %s9, 1
    %s15 = ssub.s32 %s9, 2
    %s16 = sadd.s32 %s9, 1
    %s17 = ssub.s32 %s9, %s16
    %p18 = scmp.eq.s32.totalorder %s17, 0
    %s20 = sadd.s32 %s19, 1
    %s21 = scalar_select %p18, %s19, %s20
    %p24 = pneg %p18
    %p25 = scmp.eq.s32.totalorder %s9, 1
    %p26 = por %p24, %p25
    %p27 = scmp.ne.s32.totalorder %s19, %s22
    %p28 = scmp.eq.s32.totalorder %s9, 0
    %p29 = por %p27, %p28
    %p30 = scmp.ne.s32.totalorder %s19, %s22
    %p31 = scmp.eq.s32.totalorder %s14, 1
    %p32 = por %p30, %p31
    %p33 = scmp.ne.s32.totalorder %s22, %s23
    %p34 = scmp.eq.s32.totalorder %s14, 0
    %p35 = por %p33, %p34
    %p36 = scmp.ne.s32.totalorder %s22, %s23
    %p37 = scmp.eq.s32.totalorder %s15, 1
    %p38 = por %p36, %p37
    %p40 = scmp.ne.s32.totalorder %s23, %s39
    %p41 = scmp.eq.s32.totalorder %s15, 0
    %p42 = por %p40, %p41
    %s44 = sadd.s32 %s43, 1
    %p47 = scmp.eq.s32.totalorder %s9, 1
    %p48 = scmp.ne.s32.totalorder %s43, %s45
    %p49 = scmp.eq.s32.totalorder %s9, 0
    %p50 = por %p48, %p49
    %p51 = scmp.ne.s32.totalorder %s43, %s45
    %p52 = scmp.eq.s32.totalorder %s14, 1
    %p53 = por %p51, %p52
    %p54 = scmp.ne.s32.totalorder %s45, %s46
    %p55 = scmp.eq.s32.totalorder %s14, 0
    %p56 = por %p54, %p55
    %p57 = scmp.ne.s32.totalorder %s45, %s46
    %p58 = scmp.eq.s32.totalorder %s15, 1
    %p59 = por %p57, %p58
    %p61 = scmp.ne.s32.totalorder %s46, %s60
    %p62 = scmp.eq.s32.totalorder %s15, 0
    %p63 = por %p61, %p62
    %s64 = ssub.s32 %s9, %s16
    %p65 = scmp.eq.s32.totalorder %s64, 0
    %s67 = sadd.s32 %s66, 1
    %s68 = scalar_select %p65, %s66, %s67
    %p71 = pneg %p65
    %p72 = scmp.eq.s32.totalorder %s9, 1
    %p73 = por %p71, %p72
    %p74 = scmp.ne.s32.totalorder %s66, %s69
    %p75 = scmp.eq.s32.totalorder %s9, 0
    %p76 = por %p74, %p75
    %p77 = scmp.ne.s32.totalorder %s66, %s69
    %p78 = scmp.eq.s32.totalorder %s14, 1
    %p79 = por %p77, %p78
    %p80 = scmp.ne.s32.totalorder %s69, %s70
    %p81 = scmp.eq.s32.totalorder %s14, 0
    %p82 = por %p80, %p81
    %p83 = scmp.ne.s32.totalorder %s69, %s70
    %p84 = scmp.eq.s32.totalorder %s15, 1
    %p85 = por %p83, %p84
    %p87 = scmp.ne.s32.totalorder %s70, %s86
    %p88 = scmp.eq.s32.totalorder %s15, 0
    %p89 = por %p87, %p88
    %s90 = ssub.s32 %s9, %s16
    %p91 = scmp.eq.s32.totalorder %s90, 0
    %s93 = sadd.s32 %s92, 1
    %s94 = scalar_select %p91, %s92, %s93
    %p97 = pneg %p91
    %p98 = scmp.eq.s32.totalorder %s9, 1
    %p99 = por %p97, %p98
    %p100 = scmp.ne.s32.totalorder %s92, %s95
    %p101 = scmp.eq.s32.totalorder %s9, 0
    %p102 = por %p100, %p101
    %p103 = scmp.ne.s32.totalorder %s92, %s95
    %p104 = scmp.eq.s32.totalorder %s14, 1
    %p105 = por %p103, %p104
    %p106 = scmp.ne.s32.totalorder %s95, %s96
    %p107 = scmp.eq.s32.totalorder %s14, 0
    %p108 = por %p106, %p107
    %p109 = scmp.ne.s32.totalorder %s95, %s96
    %p110 = scmp.eq.s32.totalorder %s15, 1
    %p111 = por %p109, %p110
    %p113 = scmp.ne.s32.totalorder %s96, %s112
    %p114 = scmp.eq.s32.totalorder %s15, 0
    %p115 = por %p113, %p114
    %p116 = scmp.le.s32.totalorder 1, %s9
    %p117 = scmp.lt.s32.totalorder %s9, 3
    %p118 = pnand %p116, %p117
    %p119 = pneg %p118
    // Predicated region
    $region9: #{_lambda_.14} parent=5 // pred_check
      _
    $region10: #{_lambda_.14} parent=5 // pred_check_branch
      %121 = sbr.rel (%p118) target = $region12
    $region11: #{_lambda_.14} parent=5 // pred_region
      %s122 = ssub.s32 %s9, 1
      // Predicated region
      $region13: #{_lambda_.14} parent=11 // pred_check
        %p123 = pneg %p56
      $region14: #{_lambda_.14} parent=11 // pred_check_branch
        %125 = sbr.rel (%p123) target = $region16
      $region15: #{_lambda_.14} parent=11 // pred_region
        _
      $region16: #{_lambda_.14} parent=11 // pred_fallthru
        _
    $region12: #{_lambda_.14} parent=5 // pred_fallthru
      _
    %p126 = scmp.lt.s32.totalorder %s9, 2
    // Predicated region
    $region17: #{_lambda_.14} parent=5 // pred_check
      %p127 = pneg %p126
    $region18: #{_lambda_.14} parent=5 // pred_check_branch
      %129 = sbr.rel (%p127) target = $region20
    $region19: #{_lambda_.14} parent=5 // pred_region
      // Predicated region
      $region21: #{_lambda_.14} parent=19 // pred_check
        %p130 = pneg %p29
      $region22: #{_lambda_.14} parent=19 // pred_check_branch
        %132 = sbr.rel (%p130) target = $region24
      $region23: #{_lambda_.14} parent=19 // pred_region
        %p133 = scmp.lt.s32.totalorder %s9, 1
        %s134 = scalar_select %p133, %s9, 1
        %s135 = smul.addr %s134, 8
        %s136 = smul.addr %s135, 4
        %s137 = scalar_lea.vmem %s0, %s136
      $region24: #{_lambda_.14} parent=19 // pred_fallthru
        _
      // Predicated region
      $region25: #{_lambda_.14} parent=19 // pred_check
        %p138 = pneg %p76
      $region26: #{_lambda_.14} parent=19 // pred_check_branch
        %140 = sbr.rel (%p138) target = $region28
      $region27: #{_lambda_.14} parent=19 // pred_region
        %p141 = scmp.lt.s32.totalorder %s9, 1
        %s142 = scalar_select %p141, %s9, 1
        %s143 = smul.addr %s142, 4
        %s144 = smul.addr %s143, 4
        %s145 = scalar_lea.vmem %s2, %s144
      $region28: #{_lambda_.14} parent=19 // pred_fallthru
        _
    $region20: #{_lambda_.14} parent=5 // pred_fallthru
      _
    %p146 = scmp.le.s32.totalorder 1, %s9
    %p147 = scmp.lt.s32.totalorder %s9, 3
    %p148 = pnand %p146, %p147
    %p149 = pneg %p148
    // Predicated region
    $region29: #{_lambda_.14} parent=5 // pred_check
      _
    $region30: #{_lambda_.14} parent=5 // pred_check_branch
      %151 = sbr.rel (%p148) target = $region32
    $region31: #{_lambda_.14} parent=5 // pred_region
      %s152 = ssub.s32 %s9, 1
      %p153 = scmp.lt.s32.totalorder %s14, 1
      %s154 = scalar_select %p153, %s14, 1
      %s155 = smul.addr %s154, 8
      %s156 = smul.addr %s155, 4
      %s157 = scalar_lea.vmem %s0, %s156
      %p158 = pneg %p35
      %p159 = pneg %p32
      %p160 = pneg %p56
      %p161 = pneg %p53
      %p162 = scmp.lt.s32.totalorder %s14, 1
      %s163 = scalar_select %p162, %s14, 1
      %s164 = smul.addr %s163, 4
      %s165 = smul.addr %s164, 4
      %s166 = scalar_lea.vmem %s2, %s165
      %p167 = pneg %p82
      %p168 = pneg %p79
      %p169 = pneg %p108
      %p170 = pneg %p105
      %p171 = scmp.lt.s32.totalorder %s14, 1
      %s172 = scalar_select %p171, %s14, 1
      %s173 = smul.addr %s172, 4
      %s174 = smul.addr %s173, 4
      %s175 = scalar_lea.vmem %s3, %s174
      %p176 = scmp.lt.s32.totalorder %s14, 1
      %s177 = scalar_select %p176, %s14, 1
      %s178 = smul.addr %s177, 8
      %s179 = smul.addr %s178, 4
      %s180 = scalar_lea.vmem %s0, %s179
      %p181 = scmp.lt.s32.totalorder %s14, 1
      %s182 = scalar_select %p181, %s14, 1
      %s183 = smul.addr %s182, 4
      %s184 = smul.addr %s183, 4
      %s185 = scalar_lea.vmem %s2, %s184
      %p186 = scmp.lt.s32.totalorder %s14, 1
      %s187 = scalar_select %p186, %s14, 1
      %s188 = smul.addr %s187, 4
      %s189 = smul.addr %s188, 4
      %s190 = scalar_lea.vmem %s3, %s189
      %v191 = vld [vmem:[%s180] sm:$0xff]
      %v192 = vld [vmem:[%s180 + $0x8] sm:$0xff]
      %v193 = vld [vmem:[%s180 + $0x10] sm:$0xff]
      %v194 = vld [vmem:[%s180 + $0x18] sm:$0xff]
      %v195 = vunpack.c.l.bf16 %v191
      %v196 = vunpack.c.h.bf16 %v191
      %v197 = vunpack.c.l.bf16 %v192
      %v198 = vunpack.c.h.bf16 %v192
      %v199 = vunpack.c.l.bf16 %v193
      %v200 = vunpack.c.h.bf16 %v193
      %v201 = vunpack.c.l.bf16 %v194
      %v202 = vunpack.c.h.bf16 %v194
      %v203 = vld [vmem:[%s1] sm:$0xff]
      %v204 = vld [vmem:[%s1 + $0x8] sm:$0xff]
      %v205 = vld [vmem:[%s1 + $0x10] sm:$0xff]
      %v206 = vld [vmem:[%s1 + $0x18] sm:$0xff]
      %v207 = vld [vmem:[%s1 + $0x20] sm:$0xff]
      %v208 = vld [vmem:[%s1 + $0x28] sm:$0xff]
      %v209 = vld [vmem:[%s1 + $0x30] sm:$0xff]
      %v210 = vld [vmem:[%s1 + $0x38] sm:$0xff]
      %v211 = vld [vmem:[%s1 + $0x40] sm:$0xff]
      %v212 = vld [vmem:[%s1 + $0x48] sm:$0xff]
      %v213 = vld [vmem:[%s1 + $0x50] sm:$0xff]
      %v214 = vld [vmem:[%s1 + $0x58] sm:$0xff]
      %223 = vrot.lane.b32.xlu0 %v195, 127
      %v224 = vpop.permute.xlu0 %223
      %225 = vrot.lane.b32.xlu0 %v196, 127
      %v226 = vpop.permute.xlu0 %225
      %227 = vrot.lane.b32.xlu0 %v197, 127
      %v228 = vpop.permute.xlu0 %227
      %229 = vrot.lane.b32.xlu0 %v198, 127
      %v230 = vpop.permute.xlu0 %229
      %231 = vrot.lane.b32.xlu0 %v199, 127
      %v232 = vpop.permute.xlu0 %231
      %233 = vrot.lane.b32.xlu0 %v200, 127
      %v234 = vpop.permute.xlu0 %233
      %235 = vrot.lane.b32.xlu0 %v201, 127
      %v236 = vpop.permute.xlu0 %235
      %237 = vrot.lane.b32.xlu0 %v202, 127
      %v238 = vpop.permute.xlu0 %237
      %vm239 = vcmask 1039360
      %v240 = vsel %vm239, %v224, %v226
      %v241 = vsel %vm239, %v228, %v230
      %v242 = vsel %vm239, %v232, %v234
      %v243 = vsel %vm239, %v236, %v238
      %248 = vrot.lane.b32.xlu0 %v195, 126
      %v249 = vpop.permute.xlu0 %248
      %250 = vrot.lane.b32.xlu0 %v196, 126
      %v251 = vpop.permute.xlu0 %250
      %252 = vrot.lane.b32.xlu0 %v197, 126
      %v253 = vpop.permute.xlu0 %252
      %254 = vrot.lane.b32.xlu0 %v198, 126
      %v255 = vpop.permute.xlu0 %254
      %256 = vrot.lane.b32.xlu0 %v199, 126
      %v257 = vpop.permute.xlu0 %256
      %258 = vrot.lane.b32.xlu0 %v200, 126
      %v259 = vpop.permute.xlu0 %258
      %260 = vrot.lane.b32.xlu0 %v201, 126
      %v261 = vpop.permute.xlu0 %260
      %262 = vrot.lane.b32.xlu0 %v202, 126
      %v263 = vpop.permute.xlu0 %262
      %vm264 = vcmask 1031168
      %v265 = vsel %vm264, %v249, %v251
      %v266 = vsel %vm264, %v253, %v255
      %v267 = vsel %vm264, %v257, %v259
      %v268 = vsel %vm264, %v261, %v263
      %273 = vrot.lane.b32.xlu0 %v195, 122
      %v274 = vpop.permute.xlu0 %273
      %275 = vrot.lane.b32.xlu0 %v196, 122
      %v276 = vpop.permute.xlu0 %275
      %277 = vrot.lane.b32.xlu0 %v197, 122
      %v278 = vpop.permute.xlu0 %277
      %279 = vrot.lane.b32.xlu0 %v198, 122
      %v280 = vpop.permute.xlu0 %279
      %281 = vrot.lane.b32.xlu0 %v199, 122
      %v282 = vpop.permute.xlu0 %281
      %283 = vrot.lane.b32.xlu0 %v200, 122
      %v284 = vpop.permute.xlu0 %283
      %285 = vrot.lane.b32.xlu0 %v201, 122
      %v286 = vpop.permute.xlu0 %285
      %287 = vrot.lane.b32.xlu0 %v202, 122
      %v288 = vpop.permute.xlu0 %287
      %vm289 = vcmask 998400
      %v290 = vsel %vm289, %v274, %v276
      %v291 = vsel %vm289, %v278, %v280
      %v292 = vsel %vm289, %v282, %v284
      %v293 = vsel %vm289, %v286, %v288
      %298 = vrot.lane.b32.xlu0 %v195, 121
      %v299 = vpop.permute.xlu0 %298
      %300 = vrot.lane.b32.xlu0 %v196, 121
      %v301 = vpop.permute.xlu0 %300
      %302 = vrot.lane.b32.xlu0 %v197, 121
      %v303 = vpop.permute.xlu0 %302
      %304 = vrot.lane.b32.xlu0 %v198, 121
      %v305 = vpop.permute.xlu0 %304
      %306 = vrot.lane.b32.xlu0 %v199, 121
      %v307 = vpop.permute.xlu0 %306
      %308 = vrot.lane.b32.xlu0 %v200, 121
      %v309 = vpop.permute.xlu0 %308
      %310 = vrot.lane.b32.xlu0 %v201, 121
      %v311 = vpop.permute.xlu0 %310
      %312 = vrot.lane.b32.xlu0 %v202, 121
      %v313 = vpop.permute.xlu0 %312
      %vm314 = vcmask 990208
      %v315 = vsel %vm314, %v299, %v301
      %v316 = vsel %vm314, %v303, %v305
      %v317 = vsel %vm314, %v307, %v309
      %v318 = vsel %vm314, %v311, %v313
      %323 = vrot.lane.b32.xlu0 %v195, 120
      %v324 = vpop.permute.xlu0 %323
      %325 = vrot.lane.b32.xlu0 %v196, 120
      %v326 = vpop.permute.xlu0 %325
      %327 = vrot.lane.b32.xlu0 %v197, 120
      %v328 = vpop.permute.xlu0 %327
      %329 = vrot.lane.b32.xlu0 %v198, 120
      %v330 = vpop.permute.xlu0 %329
      %331 = vrot.lane.b32.xlu0 %v199, 120
      %v332 = vpop.permute.xlu0 %331
      %333 = vrot.lane.b32.xlu0 %v200, 120
      %v334 = vpop.permute.xlu0 %333
      %335 = vrot.lane.b32.xlu0 %v201, 120
      %v336 = vpop.permute.xlu0 %335
      %337 = vrot.lane.b32.xlu0 %v202, 120
      %v338 = vpop.permute.xlu0 %337
      %vm339 = vcmask 982016
      %v340 = vsel %vm339, %v324, %v326
      %v341 = vsel %vm339, %v328, %v330
      %v342 = vsel %vm339, %v332, %v334
      %v343 = vsel %vm339, %v336, %v338
      %348 = vrot.lane.b32.xlu0 %v195, 116
      %v349 = vpop.permute.xlu0 %348
      %350 = vrot.lane.b32.xlu0 %v196, 116
      %v351 = vpop.permute.xlu0 %350
      %352 = vrot.lane.b32.xlu0 %v197, 116
      %v353 = vpop.permute.xlu0 %352
      %354 = vrot.lane.b32.xlu0 %v198, 116
      %v355 = vpop.permute.xlu0 %354
      %356 = vrot.lane.b32.xlu0 %v199, 116
      %v357 = vpop.permute.xlu0 %356
      %358 = vrot.lane.b32.xlu0 %v200, 116
      %v359 = vpop.permute.xlu0 %358
      %360 = vrot.lane.b32.xlu0 %v201, 116
      %v361 = vpop.permute.xlu0 %360
      %362 = vrot.lane.b32.xlu0 %v202, 116
      %v363 = vpop.permute.xlu0 %362
      %vm364 = vcmask 949248
      %v365 = vsel %vm364, %v349, %v351
      %v366 = vsel %vm364, %v353, %v355
      %v367 = vsel %vm364, %v357, %v359
      %v368 = vsel %vm364, %v361, %v363
      %373 = vrot.lane.b32.xlu0 %v195, 115
      %v374 = vpop.permute.xlu0 %373
      %375 = vrot.lane.b32.xlu0 %v196, 115
      %v376 = vpop.permute.xlu0 %375
      %377 = vrot.lane.b32.xlu0 %v197, 115
      %v378 = vpop.permute.xlu0 %377
      %379 = vrot.lane.b32.xlu0 %v198, 115
      %v380 = vpop.permute.xlu0 %379
      %381 = vrot.lane.b32.xlu0 %v199, 115
      %v382 = vpop.permute.xlu0 %381
      %383 = vrot.lane.b32.xlu0 %v200, 115
      %v384 = vpop.permute.xlu0 %383
      %385 = vrot.lane.b32.xlu0 %v201, 115
      %v386 = vpop.permute.xlu0 %385
      %387 = vrot.lane.b32.xlu0 %v202, 115
      %v388 = vpop.permute.xlu0 %387
      %vm389 = vcmask 941056
      %v390 = vsel %vm389, %v374, %v376
      %v391 = vsel %vm389, %v378, %v380
      %v392 = vsel %vm389, %v382, %v384
      %v393 = vsel %vm389, %v386, %v388
      %398 = vrot.lane.b32.xlu0 %v195, 114
      %v399 = vpop.permute.xlu0 %398
      %400 = vrot.lane.b32.xlu0 %v196, 114
      %v401 = vpop.permute.xlu0 %400
      %402 = vrot.lane.b32.xlu0 %v197, 114
      %v403 = vpop.permute.xlu0 %402
      %404 = vrot.lane.b32.xlu0 %v198, 114
      %v405 = vpop.permute.xlu0 %404
      %406 = vrot.lane.b32.xlu0 %v199, 114
      %v407 = vpop.permute.xlu0 %406
      %408 = vrot.lane.b32.xlu0 %v200, 114
      %v409 = vpop.permute.xlu0 %408
      %410 = vrot.lane.b32.xlu0 %v201, 114
      %v411 = vpop.permute.xlu0 %410
      %412 = vrot.lane.b32.xlu0 %v202, 114
      %v413 = vpop.permute.xlu0 %412
      %vm414 = vcmask 932864
      %v415 = vsel %vm414, %v399, %v401
      %v416 = vsel %vm414, %v403, %v405
      %v417 = vsel %vm414, %v407, %v409
      %v418 = vsel %vm414, %v411, %v413
      %vm423 = vcmask 261120
      %v425 = vsel %vm423, %v205, 0
      %v428 = vsel %vm423, %v208, 0
      %v431 = vsel %vm423, %v211, 0
      %v434 = vsel %vm423, %v214, 0
      %436 = vmatprep.subr.mxu0 0.0
      %437 = vmatpush1.msra.mxu0 %v293
      %438 = vmatprep.subr.mxu0 0.0
      %439 = vmatpush1.msra.mxu0 %v292
      %440 = vmatprep.subr.mxu0 0.0
      %441 = vmatpush1.msra.mxu0 %v291
      %442 = vmatprep.subr.mxu0 0.0
      %443 = vmatpush1.msra.mxu0 %v290
      %444 = vmatprep.subr.mxu0 0.0
      %445 = vmatpush1.msra.mxu0 %v268
      %446 = vmatprep.subr.mxu0 0.0
      %447 = vmatpush1.msra.mxu0 %v267
      %448 = vmatprep.subr.mxu0 0.0
      %449 = vmatpush1.msra.mxu0 %v266
      %450 = vmatprep.subr.mxu0 0.0
      %451 = vmatpush1.msra.mxu0 %v265
      %452 = vmatprep.subr.mxu0 0.0
      %453 = vmatpush1.msra.mxu0 %v243
      %454 = vmatprep.subr.mxu0 0.0
      %455 = vmatpush1.msra.mxu0 %v242
      %456 = vmatprep.subr.mxu0 0.0
      %457 = vmatpush1.msra.mxu0 %v241
      %458 = vmatprep.subr.mxu0 0.0
      %459 = vmatpush1.msra.mxu0 %v240
      %460 = vmatprep.subr.mxu0 0.0
      %461 = vmatpush1.msra.mxu0 %v201
      %462 = vmatprep.subr.mxu0 0.0
      %463 = vmatpush1.msra.mxu0 %v199
      %464 = vmatprep.subr.mxu0 0.0
      %465 = vmatpush1.msra.mxu0 %v197
      %466 = vmatprep.subr.mxu0 0.0
      %467 = vmatpush1.msra.mxu0 %v195
      %468 = vmatprep.subr.mxu0 0.0
      %469 = vmatpush2.msra.mxu0 %v393
      %470 = vmatprep.subr.mxu0 0.0
      %471 = vmatpush2.msra.mxu0 %v392
      %472 = vmatprep.subr.mxu0 0.0
      %473 = vmatpush2.msra.mxu0 %v391
      %474 = vmatprep.subr.mxu0 0.0
      %475 = vmatpush2.msra.mxu0 %v390
      %476 = vmatprep.subr.mxu0 0.0
      %477 = vmatpush2.msra.mxu0 %v368
      %478 = vmatprep.subr.mxu0 0.0
      %479 = vmatpush2.msra.mxu0 %v367
      %480 = vmatprep.subr.mxu0 0.0
      %481 = vmatpush2.msra.mxu0 %v366
      %482 = vmatprep.subr.mxu0 0.0
      %483 = vmatpush2.msra.mxu0 %v365
      %484 = vmatprep.subr.mxu0 0.0
      %485 = vmatpush2.msra.mxu0 %v343
      %486 = vmatprep.subr.mxu0 0.0
      %487 = vmatpush2.msra.mxu0 %v342
      %488 = vmatprep.subr.mxu0 0.0
      %489 = vmatpush2.msra.mxu0 %v341
      %490 = vmatprep.subr.mxu0 0.0
      %491 = vmatpush2.msra.mxu0 %v340
      %492 = vmatprep.subr.mxu0 0.0
      %493 = vmatpush2.msra.mxu0 %v318
      %494 = vmatprep.subr.mxu0 0.0
      %495 = vmatpush2.msra.mxu0 %v317
      %496 = vmatprep.subr.mxu0 0.0
      %497 = vmatpush2.msra.mxu0 %v316
      %498 = vmatprep.subr.mxu0 0.0
      %499 = vmatpush2.msra.mxu0 %v315
      %500 = vmatprep.mubr.f32.mxu0 %v204
      %501 = vmatmul.mubr.f32.gmra.mxu0 %v203
      %v502 = vpop.f32.mrf.mxu0
      %v503 = vadd.f32 0.0, %v502
      %v504 = vpop.f32.mrf.mxu0
      %505 = vmatprep.mubr.f32.mxu0 %v207
      %506 = vmatmul.mubr.f32.gmra.mxu0 %v206
      %v507 = vpop.f32.mrf.mxu0
      %v508 = vadd.f32 0.0, %v507
      %v509 = vpop.f32.mrf.mxu0
      %510 = vmatprep.mubr.f32.mxu0 %v210
      %511 = vmatmul.mubr.f32.gmra.mxu0 %v209
      %v512 = vpop.f32.mrf.mxu0
      %v513 = vadd.f32 0.0, %v512
      %v514 = vpop.f32.mrf.mxu0
      %515 = vmatprep.mubr.f32.mxu0 %v213
      %516 = vmatmul.mubr.f32.gmra.mxu0 %v212
      %v517 = vpop.f32.mrf.mxu0
      %v518 = vadd.f32 0.0, %v517
      %v519 = vpop.f32.mrf.mxu0
      %520 = vdwg.mxu0
      %521 = vmatprep.subr.mxu0 0.0
      %522 = vmatpush1.msra.mxu0 0.0
      %523 = vmatprep.subr.mxu0 0.0
      %524 = vmatpush1.msra.mxu0 0.0
      %525 = vmatprep.subr.mxu0 0.0
      %526 = vmatpush1.msra.mxu0 0.0
      %527 = vmatprep.subr.mxu0 0.0
      %528 = vmatpush1.msra.mxu0 0.0
      %529 = vmatprep.subr.mxu0 0.0
      %530 = vmatpush1.msra.mxu0 0.0
      %531 = vmatprep.subr.mxu0 0.0
      %532 = vmatpush1.msra.mxu0 0.0
      %533 = vmatprep.subr.mxu0 0.0
      %534 = vmatpush1.msra.mxu0 0.0
      %535 = vmatprep.subr.mxu0 0.0
      %536 = vmatpush1.msra.mxu0 0.0
      %537 = vmatprep.subr.mxu0 0.0
      %538 = vmatpush1.msra.mxu0 0.0
      %539 = vmatprep.subr.mxu0 0.0
      %540 = vmatpush1.msra.mxu0 0.0
      %541 = vmatprep.subr.mxu0 0.0
      %542 = vmatpush1.msra.mxu0 0.0
      %543 = vmatprep.subr.mxu0 0.0
      %544 = vmatpush1.msra.mxu0 0.0
      %545 = vmatprep.subr.mxu0 0.0
      %546 = vmatpush1.msra.mxu0 %v418
      %547 = vmatprep.subr.mxu0 0.0
      %548 = vmatpush1.msra.mxu0 %v417
      %549 = vmatprep.subr.mxu0 0.0
      %550 = vmatpush1.msra.mxu0 %v416
      %551 = vmatprep.subr.mxu0 0.0
      %552 = vmatpush1.msra.mxu0 %v415
      %553 = vmatprep.subr.mxu0 0.0
      %554 = vmatpush2.msra.mxu0 0.0
      %555 = vmatprep.subr.mxu0 0.0
      %556 = vmatpush2.msra.mxu0 0.0
      %557 = vmatprep.subr.mxu0 0.0
      %558 = vmatpush2.msra.mxu0 0.0
      %559 = vmatprep.subr.mxu0 0.0
      %560 = vmatpush2.msra.mxu0 0.0
      %561 = vmatprep.subr.mxu0 0.0
      %562 = vmatpush2.msra.mxu0 0.0
      %563 = vmatprep.subr.mxu0 0.0
      %564 = vmatpush2.msra.mxu0 0.0
      %565 = vmatprep.subr.mxu0 0.0
      %566 = vmatpush2.msra.mxu0 0.0
      %567 = vmatprep.subr.mxu0 0.0
      %568 = vmatpush2.msra.mxu0 0.0
      %569 = vmatprep.subr.mxu0 0.0
      %570 = vmatpush2.msra.mxu0 0.0
      %571 = vmatprep.subr.mxu0 0.0
      %572 = vmatpush2.msra.mxu0 0.0
      %573 = vmatprep.subr.mxu0 0.0
      %574 = vmatpush2.msra.mxu0 0.0
      %575 = vmatprep.subr.mxu0 0.0
      %576 = vmatpush2.msra.mxu0 0.0
      %577 = vmatprep.subr.mxu0 0.0
      %578 = vmatpush2.msra.mxu0 0.0
      %579 = vmatprep.subr.mxu0 0.0
      %580 = vmatpush2.msra.mxu0 0.0
      %581 = vmatprep.subr.mxu0 0.0
      %582 = vmatpush2.msra.mxu0 0.0
      %583 = vmatprep.subr.mxu0 0.0
      %584 = vmatpush2.msra.mxu0 0.0
      %585 = vmatprep.mubr.f32.mxu0 0.0
      %586 = vmatmul.mubr.f32.gmra.mxu0 %v425
      %v587 = vpop.f32.mrf.mxu0
      %v588 = vadd.f32 %v503, %v587
      %v589 = vpop.f32.mrf.mxu0
      %590 = vmatprep.mubr.f32.mxu0 0.0
      %591 = vmatmul.mubr.f32.gmra.mxu0 %v428
      %v592 = vpop.f32.mrf.mxu0
      %v593 = vadd.f32 %v508, %v592
      %v594 = vpop.f32.mrf.mxu0
      %595 = vmatprep.mubr.f32.mxu0 0.0
      %596 = vmatmul.mubr.f32.gmra.mxu0 %v431
      %v597 = vpop.f32.mrf.mxu0
      %v598 = vadd.f32 %v513, %v597
      %v599 = vpop.f32.mrf.mxu0
      %600 = vmatprep.mubr.f32.mxu0 0.0
      %601 = vmatmul.mubr.f32.gmra.mxu0 %v434
      %v602 = vpop.f32.mrf.mxu0
      %v603 = vadd.f32 %v518, %v602
      %v604 = vpop.f32.mrf.mxu0
      %605 = vdwg.mxu0
      %v606 = vlaneseq
      %v607 = vand.u32 %v606, 127
      %vm608 = vcmp.lt.s32.totalorder %v607, 0
      %v609 = vsub.s32 0, %v607
      %v610 = vsel %vm608, %v609, %v607
      %v611 = vmul.u32.u64.compose %v610, 2863311531
      %v612 = vextract.low.u32 %v611
      %v613 = vextract.high.u32 %v611
      %v614 = vshrl.u32 %v613, 2
      %v615 = vmul.u32 %v614, 6
      %v616 = vsub.s32 %v610, %v615
      %v617 = vsub.s32 0, %v616
      %v618 = vsel %vm608, %v617, %v616
      %vm619 = vcmp.ne.s32.totalorder %v618, 0
      %vm620 = vcmp.lt.s32.totalorder %v618, 0
      %vm621 = vmand %vm620, %vm619
      %v622 = vadd.s32 %v618, 6
      %v623 = vsel %vm621, %v622, %v618
      %vm624 = vcmp.lt.s32.totalorder %v623, 4
      %vm625 = vcmp.lt.s32.totalorder %v607, 24
      %vm626 = vmand %vm624, %vm625
      %v627 = vsel %vm626, 1, 0
      %v628 = vcvt.s32.f32 %v627
      %v629 = vmul.f32 %v588, %v628
      %v630 = vmul.f32 %v593, %v628
      %v631 = vmul.f32 %v598, %v628
      %v632 = vmul.f32 %v603, %v628
      %633 = vadd.xlane.f32.xlu0 %v629
      %v634 = vpop.xlane.xlu0 %633
      %635 = vadd.xlane.f32.xlu0 %v630
      %v636 = vpop.xlane.xlu0 %635
      %637 = vadd.xlane.f32.xlu0 %v631
      %v638 = vpop.xlane.xlu0 %637
      %639 = vadd.xlane.f32.xlu0 %v632
      %v640 = vpop.xlane.xlu0 %639
      %v641 = vadd.f32 %v634, 0.0
      %v642 = vadd.f32 %v636, 0.0
      %v643 = vadd.f32 %v638, 0.0
      %v644 = vadd.f32 %v640, 0.0
      %v645 = vmul.f32 %v629, %v588
      %v646 = vmul.f32 %v630, %v593
      %v647 = vmul.f32 %v631, %v598
      %v648 = vmul.f32 %v632, %v603
      %649 = vadd.xlane.f32.xlu0 %v645
      %v650 = vpop.xlane.xlu0 %649
      %651 = vadd.xlane.f32.xlu0 %v646
      %v652 = vpop.xlane.xlu0 %651
      %653 = vadd.xlane.f32.xlu0 %v647
      %v654 = vpop.xlane.xlu0 %653
      %655 = vadd.xlane.f32.xlu0 %v648
      %v656 = vpop.xlane.xlu0 %655
      %v657 = vadd.f32 %v650, 0.0
      %v658 = vadd.f32 %v652, 0.0
      %v659 = vadd.f32 %v654, 0.0
      %v660 = vadd.f32 %v656, 0.0
      %v661 = vmul.f32 %v641, 0.0625
      %v662 = vmul.f32 %v642, 0.0625
      %v663 = vmul.f32 %v643, 0.0625
      %v664 = vmul.f32 %v644, 0.0625
      %v665 = vmul.f32 %v657, 0.0625
      %v666 = vmul.f32 %v658, 0.0625
      %v667 = vmul.f32 %v659, 0.0625
      %v668 = vmul.f32 %v660, 0.0625
      %v669 = vmul.f32 %v661, %v661
      %v670 = vmul.f32 %v662, %v662
      %v671 = vmul.f32 %v663, %v663
      %v672 = vmul.f32 %v664, %v664
      %v673 = vsub.f32 %v665, %v669
      %v674 = vsub.f32 %v666, %v670
      %v675 = vsub.f32 %v667, %v671
      %v676 = vsub.f32 %v668, %v672
      %v677 = vmax.f32 %v673, 0.0
      %v678 = vmax.f32 %v674, 0.0
      %v679 = vmax.f32 %v675, 0.0
      %v680 = vmax.f32 %v676, 0.0
      %v681 = vadd.f32 %v677, 1e-05
      %v682 = vadd.f32 %v678, 1e-05
      %v683 = vadd.f32 %v679, 1e-05
      %v684 = vadd.f32 %v680, 1e-05
      %v685 = vrsqrt.pop %v681
      %v686 = vrsqrt.pop %v682
      %v687 = vrsqrt.pop %v683
      %v688 = vrsqrt.pop %v684
      %v689 = vsub.f32 %v588, %v661
      %v690 = vsub.f32 %v593, %v662
      %v691 = vsub.f32 %v598, %v663
      %v692 = vsub.f32 %v603, %v664
      %v693 = vmul.f32 %v689, %v685
      %v694 = vmul.f32 %v690, %v686
      %v695 = vmul.f32 %v691, %v687
      %v696 = vmul.f32 %v692, %v688
      %v697 = vld [vmem:[%s185] sm:$0xf]
      %v698 = vld [vmem:[%s185 + $0x4] sm:$0xf]
      %v699 = vld [vmem:[%s185 + $0x8] sm:$0xf]
      %v700 = vld [vmem:[%s185 + $0xc] sm:$0xf]
      %v701 = vunpack.c.l.bf16 %v697
      %v702 = vunpack.c.l.bf16 %v698
      %v703 = vunpack.c.l.bf16 %v699
      %v704 = vunpack.c.l.bf16 %v700
      %v705 = vadd.f32 %v701, %v693
      %v706 = vadd.f32 %v702, %v694
      %v707 = vadd.f32 %v703, %v695
      %v708 = vadd.f32 %v704, %v696
      %v709 = vpack.c.bf16 %v706, %v705
      %v710 = vpack.c.bf16 %v708, %v707
      %v713 = vunpack.c.l.b16 %v709
      %v714 = vunpack.c.h.b16 %v709
      %v715 = vunpack.c.l.b16 %v710
      %v716 = vunpack.c.h.b16 %v710
      %v717 = vpack.c.b16 %v713, %v713
      %v718 = vpack.c.b16 %v714, %v714
      %v719 = vpack.c.b16 %v715, %v715
      %v720 = vpack.c.b16 %v716, %v716
      %725 = vst [vmem:[%s190] sm:$0xf] %v717
      %726 = vst [vmem:[%s190 + $0x4] sm:$0xf] %v718
      %727 = vst [vmem:[%s190 + $0x8] sm:$0xf] %v719
      %728 = vst [vmem:[%s190 + $0xc] sm:$0xf] %v720
      %p729 = scmp.lt.s32.totalorder %s14, 1
      %s730 = scalar_select %p729, %s14, 1
      %s731 = smul.addr %s730, 4
      %s732 = smul.addr %s731, 4
      %s733 = scalar_lea.vmem %s3, %s732
      // Predicated region
      $region33: #{_lambda_.14} parent=31 // pred_check
        %p734 = pneg %p105
      $region34: #{_lambda_.14} parent=31 // pred_check_branch
        %736 = sbr.rel (%p734) target = $region36
      $region35: #{_lambda_.14} parent=31 // pred_region
        _
      $region36: #{_lambda_.14} parent=31 // pred_fallthru
        _
    $region32: #{_lambda_.14} parent=5 // pred_fallthru
      _
    %p737 = scmp.le.s32.totalorder 2, %s9
    // Predicated region
    $region37: #{_lambda_.14} parent=5 // pred_check
      %p738 = pneg %p737
    $region38: #{_lambda_.14} parent=5 // pred_check_branch
      %740 = sbr.rel (%p738) target = $region40
    $region39: #{_lambda_.14} parent=5 // pred_region
      %s741 = ssub.s32 %s9, 2
      // Predicated region
      $region41: #{_lambda_.14} parent=39 // pred_check
        %p742 = pneg %p111
      $region42: #{_lambda_.14} parent=39 // pred_check_branch
        %744 = sbr.rel (%p742) target = $region44
      $region43: #{_lambda_.14} parent=39 // pred_region
        %p745 = scmp.lt.s32.totalorder %s15, 1
        %s746 = scalar_select %p745, %s15, 1
        %s747 = smul.addr %s746, 4
        %s748 = smul.addr %s747, 4
        %s749 = scalar_lea.vmem %s3, %s748
      $region44: #{_lambda_.14} parent=39 // pred_fallthru
        _
    $region40: #{_lambda_.14} parent=5 // pred_fallthru
      _
  $region6: #{_lambda_.14} parent=0 // loop_footer
    %s13 = sadd.s32 1, %s9
  $region7: #{_lambda_.14} parent=0 // loop_footer_branch
    %8 = sbr.rel target = $region3
  $region8: #{_lambda_.14} parent=0 // loop_exit
    _

// kernel: _lambda_.18
$region0: #{_lambda_.18}
  #allocation0 [shape = 'u32[]', space=smem, size = 0x4, offset = 0x4, fixed_abs, tag = 'smem constant byte address 0x4 - core index']
  #allocation1 [shape = 'u32[144,128]{1,0:T(1,128)}', space=vmem, size = 0x12000, scoped, tag = 'internal scratch']
  %s0 = inlined_call_operand.vmem [shape: bf16[2,16,138], index: 0, kind: input, shape index: {}]
  %s1 = inlined_call_operand.vmem [shape: f32[8,144], index: 1, kind: input, shape index: {}]
  %s2 = inlined_call_operand.vmem [shape: bf16[2,32,128], index: 2, kind: output, shape index: {}]
  %s3 = sld [smem:[#allocation0]]
  $region41: #{_lambda_.18} parent=0
    _
  %s5 = ssub.s32 1, %s3
  %s6 = scalar_select 0, %s5, %s3
  loop: start=0, step=1, limit=4
  $region2: #{_lambda_.18} parent=0 // loop_pre_header
    _
  $region3: #{_lambda_.18} parent=0 // loop_header
    %s8 = sphi 0, %s12
    %p9 = scmp.ge.s32.totalorder %s8, 4
    %s18 = sphi 0, %s20
    %s21 = sphi 0, %s18
    %s22 = sphi 0, %s21
    %s38 = sphi 0, %s22
    %s42 = sphi 0, %s42
    %s44 = sphi 0, %s42
    %s45 = sphi 0, %s44
    %s59 = sphi 0, %s45
    %s65 = sphi 0, %s67
    %s68 = sphi 0, %s65
    %s69 = sphi 0, %s68
    %s85 = sphi 0, %s69
  $region4: #{_lambda_.18} parent=0 // loop_header_branch
    %11 = sbr.rel (%p9) target = $region8
  $region5: #{_lambda_.18} parent=0 // loop_body
    %s13 = ssub.s32 %s8, 1
    %s14 = ssub.s32 %s8, 2
    %s15 = sadd.s32 %s8, 1
    %s16 = ssub.s32 %s8, %s15
    %p17 = scmp.eq.s32.totalorder %s16, 0
    %s19 = sadd.s32 %s18, 1
    %s20 = scalar_select %p17, %s18, %s19
    %p23 = pneg %p17
    %p24 = scmp.eq.s32.totalorder %s8, 1
    %p25 = por %p23, %p24
    %p26 = scmp.ne.s32.totalorder %s18, %s21
    %p27 = scmp.eq.s32.totalorder %s8, 0
    %p28 = por %p26, %p27
    %p29 = scmp.ne.s32.totalorder %s18, %s21
    %p30 = scmp.eq.s32.totalorder %s13, 1
    %p31 = por %p29, %p30
    %p32 = scmp.ne.s32.totalorder %s21, %s22
    %p33 = scmp.eq.s32.totalorder %s13, 0
    %p34 = por %p32, %p33
    %p35 = scmp.ne.s32.totalorder %s21, %s22
    %p36 = scmp.eq.s32.totalorder %s14, 1
    %p37 = por %p35, %p36
    %p39 = scmp.ne.s32.totalorder %s22, %s38
    %p40 = scmp.eq.s32.totalorder %s14, 0
    %p41 = por %p39, %p40
    %s43 = sadd.s32 %s42, 1
    %p46 = scmp.eq.s32.totalorder %s8, 1
    %p47 = scmp.ne.s32.totalorder %s42, %s44
    %p48 = scmp.eq.s32.totalorder %s8, 0
    %p49 = por %p47, %p48
    %p50 = scmp.ne.s32.totalorder %s42, %s44
    %p51 = scmp.eq.s32.totalorder %s13, 1
    %p52 = por %p50, %p51
    %p53 = scmp.ne.s32.totalorder %s44, %s45
    %p54 = scmp.eq.s32.totalorder %s13, 0
    %p55 = por %p53, %p54
    %p56 = scmp.ne.s32.totalorder %s44, %s45
    %p57 = scmp.eq.s32.totalorder %s14, 1
    %p58 = por %p56, %p57
    %p60 = scmp.ne.s32.totalorder %s45, %s59
    %p61 = scmp.eq.s32.totalorder %s14, 0
    %p62 = por %p60, %p61
    %s63 = ssub.s32 %s8, %s15
    %p64 = scmp.eq.s32.totalorder %s63, 0
    %s66 = sadd.s32 %s65, 1
    %s67 = scalar_select %p64, %s65, %s66
    %p70 = pneg %p64
    %p71 = scmp.eq.s32.totalorder %s8, 1
    %p72 = por %p70, %p71
    %p73 = scmp.ne.s32.totalorder %s65, %s68
    %p74 = scmp.eq.s32.totalorder %s8, 0
    %p75 = por %p73, %p74
    %p76 = scmp.ne.s32.totalorder %s65, %s68
    %p77 = scmp.eq.s32.totalorder %s13, 1
    %p78 = por %p76, %p77
    %p79 = scmp.ne.s32.totalorder %s68, %s69
    %p80 = scmp.eq.s32.totalorder %s13, 0
    %p81 = por %p79, %p80
    %p82 = scmp.ne.s32.totalorder %s68, %s69
    %p83 = scmp.eq.s32.totalorder %s14, 1
    %p84 = por %p82, %p83
    %p86 = scmp.ne.s32.totalorder %s69, %s85
    %p87 = scmp.eq.s32.totalorder %s14, 0
    %p88 = por %p86, %p87
    %p89 = scmp.le.s32.totalorder 1, %s8
    %p90 = scmp.lt.s32.totalorder %s8, 3
    %p91 = pnand %p89, %p90
    %p92 = pneg %p91
    // Predicated region
    $region9: #{_lambda_.18} parent=5 // pred_check
      _
    $region10: #{_lambda_.18} parent=5 // pred_check_branch
      %94 = sbr.rel (%p91) target = $region12
    $region11: #{_lambda_.18} parent=5 // pred_region
      %s95 = ssub.s32 %s8, 1
      // Predicated region
      $region13: #{_lambda_.18} parent=11 // pred_check
        %p96 = pneg %p55
      $region14: #{_lambda_.18} parent=11 // pred_check_branch
        %98 = sbr.rel (%p96) target = $region16
      $region15: #{_lambda_.18} parent=11 // pred_region
        _
      $region16: #{_lambda_.18} parent=11 // pred_fallthru
        _
    $region12: #{_lambda_.18} parent=5 // pred_fallthru
      _
    %p99 = scmp.lt.s32.totalorder %s8, 2
    // Predicated region
    $region17: #{_lambda_.18} parent=5 // pred_check
      %p100 = pneg %p99
    $region18: #{_lambda_.18} parent=5 // pred_check_branch
      %102 = sbr.rel (%p100) target = $region20
    $region19: #{_lambda_.18} parent=5 // pred_region
      // Predicated region
      $region21: #{_lambda_.18} parent=19 // pred_check
        %p103 = pneg %p28
      $region22: #{_lambda_.18} parent=19 // pred_check_branch
        %105 = sbr.rel (%p103) target = $region24
      $region23: #{_lambda_.18} parent=19 // pred_region
        %p106 = scmp.lt.s32.totalorder %s8, 1
        %s107 = scalar_select %p106, %s8, 1
        %s108 = smul.addr %s107, 4
        %s109 = smul.addr %s108, 4
        %s110 = scalar_lea.vmem %s0, %s109
      $region24: #{_lambda_.18} parent=19 // pred_fallthru
        _
    $region20: #{_lambda_.18} parent=5 // pred_fallthru
      _
    %p111 = scmp.le.s32.totalorder 1, %s8
    %p112 = scmp.lt.s32.totalorder %s8, 3
    %p113 = pnand %p111, %p112
    %p114 = pneg %p113
    // Predicated region
    $region25: #{_lambda_.18} parent=5 // pred_check
      _
    $region26: #{_lambda_.18} parent=5 // pred_check_branch
      %116 = sbr.rel (%p113) target = $region28
    $region27: #{_lambda_.18} parent=5 // pred_region
      %s117 = ssub.s32 %s8, 1
      %p118 = scmp.lt.s32.totalorder %s13, 1
      %s119 = scalar_select %p118, %s13, 1
      %s120 = smul.addr %s119, 4
      %s121 = smul.addr %s120, 4
      %s122 = scalar_lea.vmem %s0, %s121
      %p123 = pneg %p34
      %p124 = pneg %p31
      %p125 = pneg %p55
      %p126 = pneg %p52
      %p127 = pneg %p81
      %p128 = pneg %p78
      %p129 = scmp.lt.s32.totalorder %s13, 1
      %s130 = scalar_select %p129, %s13, 1
      %s131 = smul.addr %s130, 4
      %s132 = smul.addr %s131, 4
      %s133 = scalar_lea.vmem %s2, %s132
      %p134 = scmp.lt.s32.totalorder %s13, 1
      %s135 = scalar_select %p134, %s13, 1
      %s136 = smul.addr %s135, 4
      %s137 = smul.addr %s136, 4
      %s138 = scalar_lea.vmem %s0, %s137
      %p139 = scmp.lt.s32.totalorder %s13, 1
      %s140 = scalar_select %p139, %s13, 1
      %s141 = smul.addr %s140, 4
      %s142 = smul.addr %s141, 4
      %s143 = scalar_lea.vmem %s2, %s142
      %v144 = vld [vmem:[%s138] sm:$0xff]
      %v145 = vld [vmem:[%s138 + $0x8] sm:$0xff]
      %v146 = vunpack.c.l.bf16 %v144
      %v147 = vunpack.c.h.bf16 %v144
      %v148 = vunpack.c.l.bf16 %v145
      %v149 = vunpack.c.h.bf16 %v145
      %v150 = vld [vmem:[%s1] sm:$0xff]
      %v151 = vld [vmem:[%s1 + $0x8] sm:$0xff]
      %vm152 = vcmask 130048
      %v154 = vsel %vm152, %v150, 0
      %156 = vmatprep.subr.mxu0 0.0
      %157 = vmatpush1.msra.mxu0 0.0
      %158 = vmatprep.subr.mxu0 0.0
      %159 = vmatpush1.msra.mxu0 0.0
      %160 = vmatprep.subr.mxu0 0.0
      %161 = vmatpush1.msra.mxu0 0.0
      %162 = vmatprep.subr.mxu0 0.0
      %163 = vmatpush1.msra.mxu0 0.0
      %164 = vmatprep.subr.mxu0 0.0
      %165 = vmatpush1.msra.mxu0 0.0
      %166 = vmatprep.subr.mxu0 0.0
      %167 = vmatpush1.msra.mxu0 0.0
      %168 = vmatprep.subr.mxu0 0.0
      %169 = vmatpush1.msra.mxu0 0.0
      %170 = vmatprep.subr.mxu0 0.0
      %171 = vmatpush1.msra.mxu0 0.0
      %172 = vmatprep.subr.mxu0 0.0
      %173 = vmatpush1.msra.mxu0 0.0
      %174 = vmatprep.subr.mxu0 0.0
      %175 = vmatpush1.msra.mxu0 0.0
      %176 = vmatprep.subr.mxu0 0.0
      %177 = vmatpush1.msra.mxu0 0.0
      %178 = vmatprep.subr.mxu0 0.0
      %179 = vmatpush1.msra.mxu0 0.0
      %180 = vmatprep.subr.mxu0 0.0
      %181 = vmatpush1.msra.mxu0 0.0
      %182 = vmatprep.subr.mxu0 0.0
      %183 = vmatpush1.msra.mxu0 0.0
      %184 = vmatprep.subr.mxu0 0.0
      %185 = vmatpush1.msra.mxu0 %v148
      %186 = vmatprep.subr.mxu0 0.0
      %187 = vmatpush1.msra.mxu0 %v146
      %188 = vmatprep.subr.mxu0 0.0
      %189 = vmatpush2.msra.mxu0 0.0
      %190 = vmatprep.subr.mxu0 0.0
      %191 = vmatpush2.msra.mxu0 0.0
      %192 = vmatprep.subr.mxu0 0.0
      %193 = vmatpush2.msra.mxu0 0.0
      %194 = vmatprep.subr.mxu0 0.0
      %195 = vmatpush2.msra.mxu0 0.0
      %196 = vmatprep.subr.mxu0 0.0
      %197 = vmatpush2.msra.mxu0 0.0
      %198 = vmatprep.subr.mxu0 0.0
      %199 = vmatpush2.msra.mxu0 0.0
      %200 = vmatprep.subr.mxu0 0.0
      %201 = vmatpush2.msra.mxu0 0.0
      %202 = vmatprep.subr.mxu0 0.0
      %203 = vmatpush2.msra.mxu0 0.0
      %204 = vmatprep.subr.mxu0 0.0
      %205 = vmatpush2.msra.mxu0 0.0
      %206 = vmatprep.subr.mxu0 0.0
      %207 = vmatpush2.msra.mxu0 0.0
      %208 = vmatprep.subr.mxu0 0.0
      %209 = vmatpush2.msra.mxu0 0.0
      %210 = vmatprep.subr.mxu0 0.0
      %211 = vmatpush2.msra.mxu0 0.0
      %212 = vmatprep.subr.mxu0 0.0
      %213 = vmatpush2.msra.mxu0 0.0
      %214 = vmatprep.subr.mxu0 0.0
      %215 = vmatpush2.msra.mxu0 0.0
      %216 = vmatprep.subr.mxu0 0.0
      %217 = vmatpush2.msra.mxu0 0.0
      %218 = vmatprep.subr.mxu0 0.0
      %219 = vmatpush2.msra.mxu0 0.0
      %220 = vmatprep.mubr.f32.mxu0 0.0
      %221 = vmatmul.mubr.f32.gmra.mxu0 %v154
      %v222 = vpop.f32.mrf.mxu0
      %v223 = vadd.f32 0.0, %v222
      %v224 = vpop.f32.mrf.mxu0
      %225 = vdwg.mxu0
      %230 = vrot.lane.b32.xlu0 %v146, 127
      %v231 = vpop.permute.xlu0 %230
      %232 = vrot.lane.b32.xlu0 %v147, 127
      %v233 = vpop.permute.xlu0 %232
      %234 = vrot.lane.b32.xlu0 %v148, 127
      %v235 = vpop.permute.xlu0 %234
      %236 = vrot.lane.b32.xlu0 %v149, 127
      %v237 = vpop.permute.xlu0 %236
      %vm238 = vcmask 1039360
      %v239 = vsel %vm238, %v231, %v233
      %v240 = vsel %vm238, %v235, %v237
      %243 = vrot.lane.b32.xlu0 %v150, 112
      %v244 = vpop.permute.xlu0 %243
      %vm245 = vcmask 261120
      %v246 = vsel %vm245, %v244, 0
      %248 = vmatprep.subr.mxu0 0.0
      %249 = vmatpush1.msra.mxu0 0.0
      %250 = vmatprep.subr.mxu0 0.0
      %251 = vmatpush1.msra.mxu0 0.0
      %252 = vmatprep.subr.mxu0 0.0
      %253 = vmatpush1.msra.mxu0 0.0
      %254 = vmatprep.subr.mxu0 0.0
      %255 = vmatpush1.msra.mxu0 0.0
      %256 = vmatprep.subr.mxu0 0.0
      %257 = vmatpush1.msra.mxu0 0.0
      %258 = vmatprep.subr.mxu0 0.0
      %259 = vmatpush1.msra.mxu0 0.0
      %260 = vmatprep.subr.mxu0 0.0
      %261 = vmatpush1.msra.mxu0 0.0
      %262 = vmatprep.subr.mxu0 0.0
      %263 = vmatpush1.msra.mxu0 0.0
      %264 = vmatprep.subr.mxu0 0.0
      %265 = vmatpush1.msra.mxu0 0.0
      %266 = vmatprep.subr.mxu0 0.0
      %267 = vmatpush1.msra.mxu0 0.0
      %268 = vmatprep.subr.mxu0 0.0
      %269 = vmatpush1.msra.mxu0 0.0
      %270 = vmatprep.subr.mxu0 0.0
      %271 = vmatpush1.msra.mxu0 0.0
      %272 = vmatprep.subr.mxu0 0.0
      %273 = vmatpush1.msra.mxu0 %v240
      %274 = vmatprep.subr.mxu0 0.0
      %275 = vmatpush1.msra.mxu0 %v239
      %276 = vmatprep.subr.mxu0 0.0
      %277 = vmatpush1.msra.mxu0 %v148
      %278 = vmatprep.subr.mxu0 0.0
      %279 = vmatpush1.msra.mxu0 %v146
      %280 = vmatprep.subr.mxu0 0.0
      %281 = vmatpush2.msra.mxu0 0.0
      %282 = vmatprep.subr.mxu0 0.0
      %283 = vmatpush2.msra.mxu0 0.0
      %284 = vmatprep.subr.mxu0 0.0
      %285 = vmatpush2.msra.mxu0 0.0
      %286 = vmatprep.subr.mxu0 0.0
      %287 = vmatpush2.msra.mxu0 0.0
      %288 = vmatprep.subr.mxu0 0.0
      %289 = vmatpush2.msra.mxu0 0.0
      %290 = vmatprep.subr.mxu0 0.0
      %291 = vmatpush2.msra.mxu0 0.0
      %292 = vmatprep.subr.mxu0 0.0
      %293 = vmatpush2.msra.mxu0 0.0
      %294 = vmatprep.subr.mxu0 0.0
      %295 = vmatpush2.msra.mxu0 0.0
      %296 = vmatprep.subr.mxu0 0.0
      %297 = vmatpush2.msra.mxu0 0.0
      %298 = vmatprep.subr.mxu0 0.0
      %299 = vmatpush2.msra.mxu0 0.0
      %300 = vmatprep.subr.mxu0 0.0
      %301 = vmatpush2.msra.mxu0 0.0
      %302 = vmatprep.subr.mxu0 0.0
      %303 = vmatpush2.msra.mxu0 0.0
      %304 = vmatprep.subr.mxu0 0.0
      %305 = vmatpush2.msra.mxu0 0.0
      %306 = vmatprep.subr.mxu0 0.0
      %307 = vmatpush2.msra.mxu0 0.0
      %308 = vmatprep.subr.mxu0 0.0
      %309 = vmatpush2.msra.mxu0 0.0
      %310 = vmatprep.subr.mxu0 0.0
      %311 = vmatpush2.msra.mxu0 0.0
      %312 = vmatprep.mubr.f32.mxu0 0.0
      %313 = vmatmul.mubr.f32.gmra.mxu0 %v246
      %v314 = vpop.f32.mrf.mxu0
      %v315 = vadd.f32 0.0, %v314
      %v316 = vpop.f32.mrf.mxu0
      %317 = vdwg.mxu0
      %318 = vrot.lane.b32.xlu0 %v146, 119
      %v319 = vpop.permute.xlu0 %318
      %320 = vrot.lane.b32.xlu0 %v147, 119
      %v321 = vpop.permute.xlu0 %320
      %322 = vrot.lane.b32.xlu0 %v148, 119
      %v323 = vpop.permute.xlu0 %322
      %324 = vrot.lane.b32.xlu0 %v149, 119
      %v325 = vpop.permute.xlu0 %324
      %vm326 = vcmask 973824
      %v327 = vsel %vm326, %v319, %v321
      %v328 = vsel %vm326, %v323, %v325
      %331 = vrot.lane.b32.xlu0 %v150, 80
      %v332 = vpop.permute.xlu0 %331
      %v333 = vsel %vm245, %v332, 0
      %335 = vmatprep.subr.mxu0 0.0
      %336 = vmatpush1.msra.mxu0 0.0
      %337 = vmatprep.subr.mxu0 0.0
      %338 = vmatpush1.msra.mxu0 0.0
      %339 = vmatprep.subr.mxu0 0.0
      %340 = vmatpush1.msra.mxu0 0.0
      %341 = vmatprep.subr.mxu0 0.0
      %342 = vmatpush1.msra.mxu0 0.0
      %343 = vmatprep.subr.mxu0 0.0
      %344 = vmatpush1.msra.mxu0 0.0
      %345 = vmatprep.subr.mxu0 0.0
      %346 = vmatpush1.msra.mxu0 0.0
      %347 = vmatprep.subr.mxu0 0.0
      %348 = vmatpush1.msra.mxu0 0.0
      %349 = vmatprep.subr.mxu0 0.0
      %350 = vmatpush1.msra.mxu0 0.0
      %351 = vmatprep.subr.mxu0 0.0
      %352 = vmatpush1.msra.mxu0 0.0
      %353 = vmatprep.subr.mxu0 0.0
      %354 = vmatpush1.msra.mxu0 0.0
      %355 = vmatprep.subr.mxu0 0.0
      %356 = vmatpush1.msra.mxu0 0.0
      %357 = vmatprep.subr.mxu0 0.0
      %358 = vmatpush1.msra.mxu0 0.0
      %359 = vmatprep.subr.mxu0 0.0
      %360 = vmatpush1.msra.mxu0 %v328
      %361 = vmatprep.subr.mxu0 0.0
      %362 = vmatpush1.msra.mxu0 %v327
      %363 = vmatprep.subr.mxu0 0.0
      %364 = vmatpush1.msra.mxu0 %v148
      %365 = vmatprep.subr.mxu0 0.0
      %366 = vmatpush1.msra.mxu0 %v146
      %367 = vmatprep.subr.mxu0 0.0
      %368 = vmatpush2.msra.mxu0 0.0
      %369 = vmatprep.subr.mxu0 0.0
      %370 = vmatpush2.msra.mxu0 0.0
      %371 = vmatprep.subr.mxu0 0.0
      %372 = vmatpush2.msra.mxu0 0.0
      %373 = vmatprep.subr.mxu0 0.0
      %374 = vmatpush2.msra.mxu0 0.0
      %375 = vmatprep.subr.mxu0 0.0
      %376 = vmatpush2.msra.mxu0 0.0
      %377 = vmatprep.subr.mxu0 0.0
      %378 = vmatpush2.msra.mxu0 0.0
      %379 = vmatprep.subr.mxu0 0.0
      %380 = vmatpush2.msra.mxu0 0.0
      %381 = vmatprep.subr.mxu0 0.0
      %382 = vmatpush2.msra.mxu0 0.0
      %383 = vmatprep.subr.mxu0 0.0
      %384 = vmatpush2.msra.mxu0 0.0
      %385 = vmatprep.subr.mxu0 0.0
      %386 = vmatpush2.msra.mxu0 0.0
      %387 = vmatprep.subr.mxu0 0.0
      %388 = vmatpush2.msra.mxu0 0.0
      %389 = vmatprep.subr.mxu0 0.0
      %390 = vmatpush2.msra.mxu0 0.0
      %391 = vmatprep.subr.mxu0 0.0
      %392 = vmatpush2.msra.mxu0 0.0
      %393 = vmatprep.subr.mxu0 0.0
      %394 = vmatpush2.msra.mxu0 0.0
      %395 = vmatprep.subr.mxu0 0.0
      %396 = vmatpush2.msra.mxu0 0.0
      %397 = vmatprep.subr.mxu0 0.0
      %398 = vmatpush2.msra.mxu0 0.0
      %399 = vmatprep.mubr.f32.mxu0 0.0
      %400 = vmatmul.mubr.f32.gmra.mxu0 %v333
      %v401 = vpop.f32.mrf.mxu0
      %v402 = vadd.f32 0.0, %v401
      %v403 = vpop.f32.mrf.mxu0
      %404 = vdwg.mxu0
      %405 = vrot.lane.b32.xlu0 %v146, 118
      %v406 = vpop.permute.xlu0 %405
      %407 = vrot.lane.b32.xlu0 %v147, 118
      %v408 = vpop.permute.xlu0 %407
      %409 = vrot.lane.b32.xlu0 %v148, 118
      %v410 = vpop.permute.xlu0 %409
      %411 = vrot.lane.b32.xlu0 %v149, 118
      %v412 = vpop.permute.xlu0 %411
      %vm413 = vcmask 965632
      %v414 = vsel %vm413, %v406, %v408
      %v415 = vsel %vm413, %v410, %v412
      %419 = vrot.lane.b32.xlu0 %v150, 48
      %v420 = vpop.permute.xlu0 %419
      %421 = vrot.lane.b32.xlu0 %v151, 48
      %v422 = vpop.permute.xlu0 %421
      %vm423 = vcmask 392192
      %v424 = vsel %vm423, %v420, %v422
      %vm425 = vcmask 523264
      %v426 = vsel %vm425, %v424, 0
      %428 = vmatprep.subr.mxu0 0.0
      %429 = vmatpush1.msra.mxu0 0.0
      %430 = vmatprep.subr.mxu0 0.0
      %431 = vmatpush1.msra.mxu0 0.0
      %432 = vmatprep.subr.mxu0 0.0
      %433 = vmatpush1.msra.mxu0 0.0
      %434 = vmatprep.subr.mxu0 0.0
      %435 = vmatpush1.msra.mxu0 0.0
      %436 = vmatprep.subr.mxu0 0.0
      %437 = vmatpush1.msra.mxu0 0.0
      %438 = vmatprep.subr.mxu0 0.0
      %439 = vmatpush1.msra.mxu0 0.0
      %440 = vmatprep.subr.mxu0 0.0
      %441 = vmatpush1.msra.mxu0 0.0
      %442 = vmatprep.subr.mxu0 0.0
      %443 = vmatpush1.msra.mxu0 0.0
      %444 = vmatprep.subr.mxu0 0.0
      %445 = vmatpush1.msra.mxu0 %v415
      %446 = vmatprep.subr.mxu0 0.0
      %447 = vmatpush1.msra.mxu0 %v414
      %448 = vmatprep.subr.mxu0 0.0
      %449 = vmatpush1.msra.mxu0 %v328
      %450 = vmatprep.subr.mxu0 0.0
      %451 = vmatpush1.msra.mxu0 %v327
      %452 = vmatprep.subr.mxu0 0.0
      %453 = vmatpush1.msra.mxu0 %v240
      %454 = vmatprep.subr.mxu0 0.0
      %455 = vmatpush1.msra.mxu0 %v239
      %456 = vmatprep.subr.mxu0 0.0
      %457 = vmatpush1.msra.mxu0 %v148
      %458 = vmatprep.subr.mxu0 0.0
      %459 = vmatpush1.msra.mxu0 %v146
      %460 = vmatprep.subr.mxu0 0.0
      %461 = vmatpush2.msra.mxu0 0.0
      %462 = vmatprep.subr.mxu0 0.0
      %463 = vmatpush2.msra.mxu0 0.0
      %464 = vmatprep.subr.mxu0 0.0
      %465 = vmatpush2.msra.mxu0 0.0
      %466 = vmatprep.subr.mxu0 0.0
      %467 = vmatpush2.msra.mxu0 0.0
      %468 = vmatprep.subr.mxu0 0.0
      %469 = vmatpush2.msra.mxu0 0.0
      %470 = vmatprep.subr.mxu0 0.0
      %471 = vmatpush2.msra.mxu0 0.0
      %472 = vmatprep.subr.mxu0 0.0
      %473 = vmatpush2.msra.mxu0 0.0
      %474 = vmatprep.subr.mxu0 0.0
      %475 = vmatpush2.msra.mxu0 0.0
      %476 = vmatprep.subr.mxu0 0.0
      %477 = vmatpush2.msra.mxu0 0.0
      %478 = vmatprep.subr.mxu0 0.0
      %479 = vmatpush2.msra.mxu0 0.0
      %480 = vmatprep.subr.mxu0 0.0
      %481 = vmatpush2.msra.mxu0 0.0
      %482 = vmatprep.subr.mxu0 0.0
      %483 = vmatpush2.msra.mxu0 0.0
      %484 = vmatprep.subr.mxu0 0.0
      %485 = vmatpush2.msra.mxu0 0.0
      %486 = vmatprep.subr.mxu0 0.0
      %487 = vmatpush2.msra.mxu0 0.0
      %488 = vmatprep.subr.mxu0 0.0
      %489 = vmatpush2.msra.mxu0 0.0
      %490 = vmatprep.subr.mxu0 0.0
      %491 = vmatpush2.msra.mxu0 0.0
      %492 = vmatprep.mubr.f32.mxu0 0.0
      %493 = vmatmul.mubr.f32.gmra.mxu0 %v426
      %v494 = vpop.f32.mrf.mxu0
      %v495 = vadd.f32 0.0, %v494
      %v496 = vpop.f32.mrf.mxu0
      %497 = vdwg.mxu0
      %v498 = vlaneseq
      %v499 = vand.u32 %v498, 127
      %vm500 = vcmp.lt.s32.totalorder %v499, 0
      %v501 = vsub.s32 0, %v499
      %v502 = vsel %vm500, %v501, %v499
      %v503 = vmul.u32.u64.compose %v502, 3817748708
      %v504 = vextract.low.u32 %v503
      %v505 = vextract.high.u32 %v503
      %v506 = vshrl.u32 %v505, 3
      %v507 = vmul.u32 %v506, 9
      %v508 = vsub.s32 %v502, %v507
      %v509 = vsub.s32 0, %v508
      %v510 = vsel %vm500, %v509, %v508
      %vm511 = vcmp.ne.s32.totalorder %v510, 0
      %vm512 = vcmp.lt.s32.totalorder %v510, 0
      %vm513 = vmand %vm512, %vm511
      %v514 = vadd.s32 %v510, 9
      %v515 = vsel %vm513, %v514, %v510
      %vm516 = vcmp.lt.s32.totalorder %v515, 8
      %vm517 = vcmp.lt.s32.totalorder %v499, 72
      %vm518 = vmand %vm516, %vm517
      %v519 = vsel %vm518, 1, 0
      %v520 = vcvt.s32.f32 %v519
      %v521 = vmul.f32 %v223, %v520
      %522 = vadd.xlane.f32.xlu0 %v521
      %v523 = vpop.xlane.xlu0 %522
      %v524 = vadd.f32 %v523, 0.0
      %v525 = vmul.f32 %v521, %v223
      %526 = vadd.xlane.f32.xlu0 %v525
      %v527 = vpop.xlane.xlu0 %526
      %v528 = vadd.f32 %v527, 0.0
      %v529 = vmul.f32 %v315, %v520
      %530 = vadd.xlane.f32.xlu0 %v529
      %v531 = vpop.xlane.xlu0 %530
      %v532 = vadd.f32 %v524, %v531
      %v533 = vmul.f32 %v529, %v315
      %534 = vadd.xlane.f32.xlu0 %v533
      %v535 = vpop.xlane.xlu0 %534
      %v536 = vadd.f32 %v528, %v535
      %v537 = vmul.f32 %v402, %v520
      %538 = vadd.xlane.f32.xlu0 %v537
      %v539 = vpop.xlane.xlu0 %538
      %v540 = vadd.f32 %v532, %v539
      %v541 = vmul.f32 %v537, %v402
      %542 = vadd.xlane.f32.xlu0 %v541
      %v543 = vpop.xlane.xlu0 %542
      %v544 = vadd.f32 %v536, %v543
      %v545 = vmul.f32 %v495, %v520
      %546 = vadd.xlane.f32.xlu0 %v545
      %v547 = vpop.xlane.xlu0 %546
      %v548 = vadd.f32 %v540, %v547
      %v549 = vmul.f32 %v545, %v495
      %550 = vadd.xlane.f32.xlu0 %v549
      %v551 = vpop.xlane.xlu0 %550
      %v552 = vadd.f32 %v544, %v551
      %v553 = vmul.f32 %v548, 0.00390625
      %v554 = vmul.f32 %v552, 0.00390625
      %v555 = vmul.f32 %v553, %v553
      %v556 = vsub.f32 %v554, %v555
      %v557 = vmax.f32 %v556, 0.0
      %v558 = vadd.f32 %v557, 1e-05
      %v559 = vrsqrt.pop %v558
      %v560 = vsub.f32 %v223, %v553
      %v561 = vmul.f32 %v560, %v559
      %v562 = vsub.f32 %v315, %v553
      %v563 = vmul.f32 %v562, %v559
      %v564 = vsub.f32 %v402, %v553
      %v565 = vmul.f32 %v564, %v559
      %v566 = vsub.f32 %v495, %v553
      %v567 = vmul.f32 %v566, %v559
      %v568 = vmax.f32 %v561, 0.0
      %v569 = vmax.f32 %v563, 0.0
      %v570 = vmax.f32 %v565, 0.0
      %v571 = vmax.f32 %v567, 0.0
      %v572 = vpack.c.bf16 %v569, %v568
      %v573 = vpack.c.bf16 %v571, %v570
      %v576 = vunpack.c.l.b16 %v572
      %v577 = vunpack.c.h.b16 %v572
      %v578 = vunpack.c.l.b16 %v573
      %v579 = vunpack.c.h.b16 %v573
      %v580 = vpack.c.b16 %v576, %v576
      %v581 = vpack.c.b16 %v577, %v577
      %v582 = vpack.c.b16 %v578, %v578
      %v583 = vpack.c.b16 %v579, %v579
      %588 = vst [vmem:[%s143] sm:$0xf] %v580
      %589 = vst [vmem:[%s143 + $0x4] sm:$0xf] %v581
      %590 = vst [vmem:[%s143 + $0x8] sm:$0xf] %v582
      %591 = vst [vmem:[%s143 + $0xc] sm:$0xf] %v583
      %p592 = scmp.lt.s32.totalorder %s13, 1
      %s593 = scalar_select %p592, %s13, 1
      %s594 = smul.addr %s593, 4
      %s595 = smul.addr %s594, 4
      %s596 = scalar_lea.vmem %s2, %s595
      // Predicated region
      $region29: #{_lambda_.18} parent=27 // pred_check
        %p597 = pneg %p78
      $region30: #{_lambda_.18} parent=27 // pred_check_branch
        %599 = sbr.rel (%p597) target = $region32
      $region31: #{_lambda_.18} parent=27 // pred_region
        _
      $region32: #{_lambda_.18} parent=27 // pred_fallthru
        _
    $region28: #{_lambda_.18} parent=5 // pred_fallthru
      _
    %p600 = scmp.le.s32.totalorder 2, %s8
    // Predicated region
    $region33: #{_lambda_.18} parent=5 // pred_check
      %p601 = pneg %p600
    $region34: #{_lambda_.18} parent=5 // pred_check_branch
      %603 = sbr.rel (%p601) target = $region36
    $region35: #{_lambda_.18} parent=5 // pred_region
      %s604 = ssub.s32 %s8, 2
      // Predicated region
      $region37: #{_lambda_.18} parent=35 // pred_check
        %p605 = pneg %p84
      $region38: #{_lambda_.18} parent=35 // pred_check_branch
        %607 = sbr.rel (%p605) target = $region40
      $region39: #{_lambda_.18} parent=35 // pred_region
        %p608 = scmp.lt.s32.totalorder %s14, 1
        %s609 = scalar_select %p608, %s14, 1
        %s610 = smul.addr %s609, 4
        %s611 = smul.addr %s610, 4
        %s612 = scalar_lea.vmem %s2, %s611
      $region40: #{_lambda_.18} parent=35 // pred_fallthru
        _
    $region36: #{_lambda_.18} parent=5 // pred_fallthru
      _
  $region6: #{_lambda_.18} parent=0 // loop_footer
    %s12 = sadd.s32 1, %s8
  $region7: #{_lambda_.18} parent=0 // loop_footer_branch
    %7 = sbr.rel target = $region3
  $region8: #{_lambda_.18} parent=0 // loop_exit
    _

// kernel: _lambda_.19
$region0: #{_lambda_.19}
  #allocation0 [shape = 'u32[]', space=smem, size = 0x4, offset = 0x4, fixed_abs, tag = 'smem constant byte address 0x4 - core index']
  #allocation1 [shape = 'u32[144,128]{1,0:T(1,128)}', space=vmem, size = 0x12000, scoped, tag = 'internal scratch']
  %s0 = inlined_call_operand.vmem [shape: bf16[2,8,522], index: 0, kind: input, shape index: {}]
  %s1 = inlined_call_operand.vmem [shape: f32[3,392], index: 1, kind: input, shape index: {}]
  %s2 = inlined_call_operand.vmem [shape: f32[3,1], index: 2, kind: input, shape index: {}]
  %s3 = inlined_call_operand.vmem [shape: f32[2,3,384], index: 3, kind: output, shape index: {}]
  %s4 = sld [smem:[#allocation0]]
  $region45: #{_lambda_.19} parent=0
    _
  %s6 = ssub.s32 1, %s4
  %s7 = scalar_select 0, %s6, %s4
  loop: start=0, step=1, limit=4
  $region2: #{_lambda_.19} parent=0 // loop_pre_header
    _
  $region3: #{_lambda_.19} parent=0 // loop_header
    %s9 = sphi 0, %s13
    %p10 = scmp.ge.s32.totalorder %s9, 4
    %s19 = sphi 0, %s21
    %s22 = sphi 0, %s19
    %s23 = sphi 0, %s22
    %s39 = sphi 0, %s23
    %s43 = sphi 0, %s43
    %s45 = sphi 0, %s43
    %s46 = sphi 0, %s45
    %s60 = sphi 0, %s46
    %s64 = sphi 0, %s64
    %s66 = sphi 0, %s64
    %s67 = sphi 0, %s66
    %s81 = sphi 0, %s67
    %s87 = sphi 0, %s89
    %s90 = sphi 0, %s87
    %s91 = sphi 0, %s90
    %s107 = sphi 0, %s91
  $region4: #{_lambda_.19} parent=0 // loop_header_branch
    %12 = sbr.rel (%p10) target = $region8
  $region5: #{_lambda_.19} parent=0 // loop_body
    %s14 = ssub.s32 %s9, 1
    %s15 = ssub.s32 %s9, 2
    %s16 = sadd.s32 %s9, 1
    %s17 = ssub.s32 %s9, %s16
    %p18 = scmp.eq.s32.totalorder %s17, 0
    %s20 = sadd.s32 %s19, 1
    %s21 = scalar_select %p18, %s19, %s20
    %p24 = pneg %p18
    %p25 = scmp.eq.s32.totalorder %s9, 1
    %p26 = por %p24, %p25
    %p27 = scmp.ne.s32.totalorder %s19, %s22
    %p28 = scmp.eq.s32.totalorder %s9, 0
    %p29 = por %p27, %p28
    %p30 = scmp.ne.s32.totalorder %s19, %s22
    %p31 = scmp.eq.s32.totalorder %s14, 1
    %p32 = por %p30, %p31
    %p33 = scmp.ne.s32.totalorder %s22, %s23
    %p34 = scmp.eq.s32.totalorder %s14, 0
    %p35 = por %p33, %p34
    %p36 = scmp.ne.s32.totalorder %s22, %s23
    %p37 = scmp.eq.s32.totalorder %s15, 1
    %p38 = por %p36, %p37
    %p40 = scmp.ne.s32.totalorder %s23, %s39
    %p41 = scmp.eq.s32.totalorder %s15, 0
    %p42 = por %p40, %p41
    %s44 = sadd.s32 %s43, 1
    %p47 = scmp.eq.s32.totalorder %s9, 1
    %p48 = scmp.ne.s32.totalorder %s43, %s45
    %p49 = scmp.eq.s32.totalorder %s9, 0
    %p50 = por %p48, %p49
    %p51 = scmp.ne.s32.totalorder %s43, %s45
    %p52 = scmp.eq.s32.totalorder %s14, 1
    %p53 = por %p51, %p52
    %p54 = scmp.ne.s32.totalorder %s45, %s46
    %p55 = scmp.eq.s32.totalorder %s14, 0
    %p56 = por %p54, %p55
    %p57 = scmp.ne.s32.totalorder %s45, %s46
    %p58 = scmp.eq.s32.totalorder %s15, 1
    %p59 = por %p57, %p58
    %p61 = scmp.ne.s32.totalorder %s46, %s60
    %p62 = scmp.eq.s32.totalorder %s15, 0
    %p63 = por %p61, %p62
    %s65 = sadd.s32 %s64, 1
    %p68 = scmp.eq.s32.totalorder %s9, 1
    %p69 = scmp.ne.s32.totalorder %s64, %s66
    %p70 = scmp.eq.s32.totalorder %s9, 0
    %p71 = por %p69, %p70
    %p72 = scmp.ne.s32.totalorder %s64, %s66
    %p73 = scmp.eq.s32.totalorder %s14, 1
    %p74 = por %p72, %p73
    %p75 = scmp.ne.s32.totalorder %s66, %s67
    %p76 = scmp.eq.s32.totalorder %s14, 0
    %p77 = por %p75, %p76
    %p78 = scmp.ne.s32.totalorder %s66, %s67
    %p79 = scmp.eq.s32.totalorder %s15, 1
    %p80 = por %p78, %p79
    %p82 = scmp.ne.s32.totalorder %s67, %s81
    %p83 = scmp.eq.s32.totalorder %s15, 0
    %p84 = por %p82, %p83
    %s85 = ssub.s32 %s9, %s16
    %p86 = scmp.eq.s32.totalorder %s85, 0
    %s88 = sadd.s32 %s87, 1
    %s89 = scalar_select %p86, %s87, %s88
    %p92 = pneg %p86
    %p93 = scmp.eq.s32.totalorder %s9, 1
    %p94 = por %p92, %p93
    %p95 = scmp.ne.s32.totalorder %s87, %s90
    %p96 = scmp.eq.s32.totalorder %s9, 0
    %p97 = por %p95, %p96
    %p98 = scmp.ne.s32.totalorder %s87, %s90
    %p99 = scmp.eq.s32.totalorder %s14, 1
    %p100 = por %p98, %p99
    %p101 = scmp.ne.s32.totalorder %s90, %s91
    %p102 = scmp.eq.s32.totalorder %s14, 0
    %p103 = por %p101, %p102
    %p104 = scmp.ne.s32.totalorder %s90, %s91
    %p105 = scmp.eq.s32.totalorder %s15, 1
    %p106 = por %p104, %p105
    %p108 = scmp.ne.s32.totalorder %s91, %s107
    %p109 = scmp.eq.s32.totalorder %s15, 0
    %p110 = por %p108, %p109
    %p111 = scmp.le.s32.totalorder 1, %s9
    %p112 = scmp.lt.s32.totalorder %s9, 3
    %p113 = pnand %p111, %p112
    %p114 = pneg %p113
    // Predicated region
    $region9: #{_lambda_.19} parent=5 // pred_check
      _
    $region10: #{_lambda_.19} parent=5 // pred_check_branch
      %116 = sbr.rel (%p113) target = $region12
    $region11: #{_lambda_.19} parent=5 // pred_region
      %s117 = ssub.s32 %s9, 1
      // Predicated region
      $region13: #{_lambda_.19} parent=11 // pred_check
        %p118 = pneg %p56
      $region14: #{_lambda_.19} parent=11 // pred_check_branch
        %120 = sbr.rel (%p118) target = $region16
      $region15: #{_lambda_.19} parent=11 // pred_region
        _
      $region16: #{_lambda_.19} parent=11 // pred_fallthru
        _
      // Predicated region
      $region17: #{_lambda_.19} parent=11 // pred_check
        %p121 = pneg %p77
      $region18: #{_lambda_.19} parent=11 // pred_check_branch
        %123 = sbr.rel (%p121) target = $region20
      $region19: #{_lambda_.19} parent=11 // pred_region
        _
      $region20: #{_lambda_.19} parent=11 // pred_fallthru
        _
    $region12: #{_lambda_.19} parent=5 // pred_fallthru
      _
    %p124 = scmp.lt.s32.totalorder %s9, 2
    // Predicated region
    $region21: #{_lambda_.19} parent=5 // pred_check
      %p125 = pneg %p124
    $region22: #{_lambda_.19} parent=5 // pred_check_branch
      %127 = sbr.rel (%p125) target = $region24
    $region23: #{_lambda_.19} parent=5 // pred_region
      // Predicated region
      $region25: #{_lambda_.19} parent=23 // pred_check
        %p128 = pneg %p29
      $region26: #{_lambda_.19} parent=23 // pred_check_branch
        %130 = sbr.rel (%p128) target = $region28
      $region27: #{_lambda_.19} parent=23 // pred_region
        %p131 = scmp.lt.s32.totalorder %s9, 1
        %s132 = scalar_select %p131, %s9, 1
        %s133 = smul.addr %s132, 5
        %s134 = smul.addr %s133, 4
        %s135 = scalar_lea.vmem %s0, %s134
      $region28: #{_lambda_.19} parent=23 // pred_fallthru
        _
    $region24: #{_lambda_.19} parent=5 // pred_fallthru
      _
    %p136 = scmp.le.s32.totalorder 1, %s9
    %p137 = scmp.lt.s32.totalorder %s9, 3
    %p138 = pnand %p136, %p137
    %p139 = pneg %p138
    // Predicated region
    $region29: #{_lambda_.19} parent=5 // pred_check
      _
    $region30: #{_lambda_.19} parent=5 // pred_check_branch
      %141 = sbr.rel (%p138) target = $region32
    $region31: #{_lambda_.19} parent=5 // pred_region
      %s142 = ssub.s32 %s9, 1
      %p143 = scmp.lt.s32.totalorder %s14, 1
      %s144 = scalar_select %p143, %s14, 1
      %s145 = smul.addr %s144, 5
      %s146 = smul.addr %s145, 4
      %s147 = scalar_lea.vmem %s0, %s146
      %p148 = pneg %p35
      %p149 = pneg %p32
      %p150 = pneg %p56
      %p151 = pneg %p53
      %p152 = pneg %p77
      %p153 = pneg %p74
      %p154 = pneg %p103
      %p155 = pneg %p100
      %p156 = scmp.lt.s32.totalorder %s14, 1
      %s157 = scalar_select %p156, %s14, 1
      %s158 = smul.addr %s157, 3
      %s159 = smul.addr %s158, 4
      %s160 = scalar_lea.vmem %s3, %s159
      %p161 = scmp.lt.s32.totalorder %s14, 1
      %s162 = scalar_select %p161, %s14, 1
      %s163 = smul.addr %s162, 5
      %s164 = smul.addr %s163, 4
      %s165 = scalar_lea.vmem %s0, %s164
      %p166 = scmp.lt.s32.totalorder %s14, 1
      %s167 = scalar_select %p166, %s14, 1
      %s168 = smul.addr %s167, 3
      %s169 = smul.addr %s168, 4
      %s170 = scalar_lea.vmem %s3, %s169
      %v171 = vld [vmem:[%s165] sm:$0xff]
      %v172 = vld [vmem:[%s165 + $0x8] sm:$0xff]
      %v173 = vld [vmem:[%s165 + $0x10] sm:$0xf]
      %v174 = vunpack.c.l.bf16 %v171
      %v175 = vunpack.c.h.bf16 %v171
      %v176 = vunpack.c.l.bf16 %v172
      %v177 = vunpack.c.h.bf16 %v172
      %v178 = vunpack.c.l.bf16 %v173
      %v179 = vld [vmem:[%s1] sm:$0x77]
      %v180 = vld [vmem:[%s1 + $0x8] sm:$0x77]
      %185 = vrot.lane.b32.xlu0 %v174, 127
      %v186 = vpop.permute.xlu0 %185
      %187 = vrot.lane.b32.xlu0 %v175, 127
      %v188 = vpop.permute.xlu0 %187
      %189 = vrot.lane.b32.xlu0 %v176, 127
      %v190 = vpop.permute.xlu0 %189
      %191 = vrot.lane.b32.xlu0 %v177, 127
      %v192 = vpop.permute.xlu0 %191
      %vm193 = vcmask 1039360
      %v194 = vsel %vm193, %v186, %v188
      %v195 = vsel %vm193, %v188, %v190
      %v196 = vsel %vm193, %v190, %v192
      %200 = vrot.lane.b32.xlu0 %v174, 126
      %v201 = vpop.permute.xlu0 %200
      %202 = vrot.lane.b32.xlu0 %v175, 126
      %v203 = vpop.permute.xlu0 %202
      %204 = vrot.lane.b32.xlu0 %v176, 126
      %v205 = vpop.permute.xlu0 %204
      %206 = vrot.lane.b32.xlu0 %v177, 126
      %v207 = vpop.permute.xlu0 %206
      %vm208 = vcmask 1031168
      %v209 = vsel %vm208, %v201, %v203
      %v210 = vsel %vm208, %v203, %v205
      %v211 = vsel %vm208, %v205, %v207
      %215 = vrot.lane.b32.xlu0 %v174, 125
      %v216 = vpop.permute.xlu0 %215
      %217 = vrot.lane.b32.xlu0 %v175, 125
      %v218 = vpop.permute.xlu0 %217
      %219 = vrot.lane.b32.xlu0 %v176, 125
      %v220 = vpop.permute.xlu0 %219
      %221 = vrot.lane.b32.xlu0 %v177, 125
      %v222 = vpop.permute.xlu0 %221
      %vm223 = vcmask 1022976
      %v224 = vsel %vm223, %v216, %v218
      %v225 = vsel %vm223, %v218, %v220
      %v226 = vsel %vm223, %v220, %v222
      %230 = vrot.lane.b32.xlu0 %v174, 124
      %v231 = vpop.permute.xlu0 %230
      %232 = vrot.lane.b32.xlu0 %v175, 124
      %v233 = vpop.permute.xlu0 %232
      %234 = vrot.lane.b32.xlu0 %v176, 124
      %v235 = vpop.permute.xlu0 %234
      %236 = vrot.lane.b32.xlu0 %v177, 124
      %v237 = vpop.permute.xlu0 %236
      %vm238 = vcmask 1014784
      %v239 = vsel %vm238, %v231, %v233
      %v240 = vsel %vm238, %v233, %v235
      %v241 = vsel %vm238, %v235, %v237
      %245 = vrot.lane.b32.xlu0 %v174, 123
      %v246 = vpop.permute.xlu0 %245
      %247 = vrot.lane.b32.xlu0 %v175, 123
      %v248 = vpop.permute.xlu0 %247
      %249 = vrot.lane.b32.xlu0 %v176, 123
      %v250 = vpop.permute.xlu0 %249
      %251 = vrot.lane.b32.xlu0 %v177, 123
      %v252 = vpop.permute.xlu0 %251
      %vm253 = vcmask 1006592
      %v254 = vsel %vm253, %v246, %v248
      %v255 = vsel %vm253, %v248, %v250
      %v256 = vsel %vm253, %v250, %v252
      %260 = vrot.lane.b32.xlu0 %v174, 122
      %v261 = vpop.permute.xlu0 %260
      %262 = vrot.lane.b32.xlu0 %v175, 122
      %v263 = vpop.permute.xlu0 %262
      %264 = vrot.lane.b32.xlu0 %v176, 122
      %v265 = vpop.permute.xlu0 %264
      %266 = vrot.lane.b32.xlu0 %v177, 122
      %v267 = vpop.permute.xlu0 %266
      %vm268 = vcmask 998400
      %v269 = vsel %vm268, %v261, %v263
      %v270 = vsel %vm268, %v263, %v265
      %v271 = vsel %vm268, %v265, %v267
      %275 = vrot.lane.b32.xlu0 %v174, 106
      %v276 = vpop.permute.xlu0 %275
      %277 = vrot.lane.b32.xlu0 %v175, 106
      %v278 = vpop.permute.xlu0 %277
      %279 = vrot.lane.b32.xlu0 %v176, 106
      %v280 = vpop.permute.xlu0 %279
      %281 = vrot.lane.b32.xlu0 %v177, 106
      %v282 = vpop.permute.xlu0 %281
      %vm283 = vcmask 867328
      %v284 = vsel %vm283, %v276, %v278
      %v285 = vsel %vm283, %v278, %v280
      %v286 = vsel %vm283, %v280, %v282
      %290 = vrot.lane.b32.xlu0 %v174, 105
      %v291 = vpop.permute.xlu0 %290
      %292 = vrot.lane.b32.xlu0 %v175, 105
      %v293 = vpop.permute.xlu0 %292
      %294 = vrot.lane.b32.xlu0 %v176, 105
      %v295 = vpop.permute.xlu0 %294
      %296 = vrot.lane.b32.xlu0 %v177, 105
      %v297 = vpop.permute.xlu0 %296
      %vm298 = vcmask 859136
      %v299 = vsel %vm298, %v291, %v293
      %v300 = vsel %vm298, %v293, %v295
      %v301 = vsel %vm298, %v295, %v297
      %305 = vrot.lane.b32.xlu0 %v174, 104
      %v306 = vpop.permute.xlu0 %305
      %307 = vrot.lane.b32.xlu0 %v175, 104
      %v308 = vpop.permute.xlu0 %307
      %309 = vrot.lane.b32.xlu0 %v176, 104
      %v310 = vpop.permute.xlu0 %309
      %311 = vrot.lane.b32.xlu0 %v177, 104
      %v312 = vpop.permute.xlu0 %311
      %vm313 = vcmask 850944
      %v314 = vsel %vm313, %v306, %v308
      %v315 = vsel %vm313, %v308, %v310
      %v316 = vsel %vm313, %v310, %v312
      %320 = vrot.lane.b32.xlu0 %v174, 103
      %v321 = vpop.permute.xlu0 %320
      %322 = vrot.lane.b32.xlu0 %v175, 103
      %v323 = vpop.permute.xlu0 %322
      %324 = vrot.lane.b32.xlu0 %v176, 103
      %v325 = vpop.permute.xlu0 %324
      %326 = vrot.lane.b32.xlu0 %v177, 103
      %v327 = vpop.permute.xlu0 %326
      %vm328 = vcmask 842752
      %v329 = vsel %vm328, %v321, %v323
      %v330 = vsel %vm328, %v323, %v325
      %v331 = vsel %vm328, %v325, %v327
      %335 = vrot.lane.b32.xlu0 %v174, 102
      %v336 = vpop.permute.xlu0 %335
      %337 = vrot.lane.b32.xlu0 %v175, 102
      %v338 = vpop.permute.xlu0 %337
      %339 = vrot.lane.b32.xlu0 %v176, 102
      %v340 = vpop.permute.xlu0 %339
      %341 = vrot.lane.b32.xlu0 %v177, 102
      %v342 = vpop.permute.xlu0 %341
      %vm343 = vcmask 834560
      %v344 = vsel %vm343, %v336, %v338
      %v345 = vsel %vm343, %v338, %v340
      %v346 = vsel %vm343, %v340, %v342
      %350 = vrot.lane.b32.xlu0 %v174, 101
      %v351 = vpop.permute.xlu0 %350
      %352 = vrot.lane.b32.xlu0 %v175, 101
      %v353 = vpop.permute.xlu0 %352
      %354 = vrot.lane.b32.xlu0 %v176, 101
      %v355 = vpop.permute.xlu0 %354
      %356 = vrot.lane.b32.xlu0 %v177, 101
      %v357 = vpop.permute.xlu0 %356
      %vm358 = vcmask 826368
      %v359 = vsel %vm358, %v351, %v353
      %v360 = vsel %vm358, %v353, %v355
      %v361 = vsel %vm358, %v355, %v357
      %365 = vrot.lane.b32.xlu0 %v174, 100
      %v366 = vpop.permute.xlu0 %365
      %367 = vrot.lane.b32.xlu0 %v175, 100
      %v368 = vpop.permute.xlu0 %367
      %369 = vrot.lane.b32.xlu0 %v176, 100
      %v370 = vpop.permute.xlu0 %369
      %371 = vrot.lane.b32.xlu0 %v177, 100
      %v372 = vpop.permute.xlu0 %371
      %vm373 = vcmask 818176
      %v374 = vsel %vm373, %v366, %v368
      %v375 = vsel %vm373, %v368, %v370
      %v376 = vsel %vm373, %v370, %v372
      %380 = vrot.lane.b32.xlu0 %v174, 84
      %v381 = vpop.permute.xlu0 %380
      %382 = vrot.lane.b32.xlu0 %v175, 84
      %v383 = vpop.permute.xlu0 %382
      %384 = vrot.lane.b32.xlu0 %v176, 84
      %v385 = vpop.permute.xlu0 %384
      %386 = vrot.lane.b32.xlu0 %v177, 84
      %v387 = vpop.permute.xlu0 %386
      %vm388 = vcmask 687104
      %v389 = vsel %vm388, %v381, %v383
      %v390 = vsel %vm388, %v383, %v385
      %v391 = vsel %vm388, %v385, %v387
      %395 = vrot.lane.b32.xlu0 %v174, 83
      %v396 = vpop.permute.xlu0 %395
      %397 = vrot.lane.b32.xlu0 %v175, 83
      %v398 = vpop.permute.xlu0 %397
      %399 = vrot.lane.b32.xlu0 %v176, 83
      %v400 = vpop.permute.xlu0 %399
      %401 = vrot.lane.b32.xlu0 %v177, 83
      %v402 = vpop.permute.xlu0 %401
      %vm403 = vcmask 678912
      %v404 = vsel %vm403, %v396, %v398
      %v405 = vsel %vm403, %v398, %v400
      %v406 = vsel %vm403, %v400, %v402
      %410 = vrot.lane.b32.xlu0 %v174, 108
      %v411 = vpop.permute.xlu0 %410
      %412 = vrot.lane.b32.xlu0 %v175, 108
      %v413 = vpop.permute.xlu0 %412
      %414 = vrot.lane.b32.xlu0 %v176, 108
      %v415 = vpop.permute.xlu0 %414
      %416 = vrot.lane.b32.xlu0 %v177, 108
      %v417 = vpop.permute.xlu0 %416
      %vm418 = vcmask 883712
      %v419 = vsel %vm418, %v411, %v413
      %v420 = vsel %vm418, %v413, %v415
      %v421 = vsel %vm418, %v415, %v417
      %422 = vrot.lane.b32.xlu0 %v174, 107
      %v423 = vpop.permute.xlu0 %422
      %424 = vrot.lane.b32.xlu0 %v175, 107
      %v425 = vpop.permute.xlu0 %424
      %426 = vrot.lane.b32.xlu0 %v176, 107
      %v427 = vpop.permute.xlu0 %426
      %428 = vrot.lane.b32.xlu0 %v177, 107
      %v429 = vpop.permute.xlu0 %428
      %vm430 = vcmask 875520
      %v431 = vsel %vm430, %v423, %v425
      %v432 = vsel %vm430, %v425, %v427
      %v433 = vsel %vm430, %v427, %v429
      %434 = vrot.lane.b32.xlu0 %v174, 86
      %v435 = vpop.permute.xlu0 %434
      %436 = vrot.lane.b32.xlu0 %v175, 86
      %v437 = vpop.permute.xlu0 %436
      %438 = vrot.lane.b32.xlu0 %v176, 86
      %v439 = vpop.permute.xlu0 %438
      %440 = vrot.lane.b32.xlu0 %v177, 86
      %v441 = vpop.permute.xlu0 %440
      %vm442 = vcmask 703488
      %v443 = vsel %vm442, %v435, %v437
      %v444 = vsel %vm442, %v437, %v439
      %v445 = vsel %vm442, %v439, %v441
      %446 = vrot.lane.b32.xlu0 %v174, 85
      %v447 = vpop.permute.xlu0 %446
      %448 = vrot.lane.b32.xlu0 %v175, 85
      %v449 = vpop.permute.xlu0 %448
      %450 = vrot.lane.b32.xlu0 %v176, 85
      %v451 = vpop.permute.xlu0 %450
      %452 = vrot.lane.b32.xlu0 %v177, 85
      %v453 = vpop.permute.xlu0 %452
      %vm454 = vcmask 695296
      %v455 = vsel %vm454, %v447, %v449
      %v456 = vsel %vm454, %v449, %v451
      %v457 = vsel %vm454, %v451, %v453
      %458 = vrot.lane.b32.xlu0 %v174, 110
      %v459 = vpop.permute.xlu0 %458
      %460 = vrot.lane.b32.xlu0 %v175, 110
      %v461 = vpop.permute.xlu0 %460
      %462 = vrot.lane.b32.xlu0 %v176, 110
      %v463 = vpop.permute.xlu0 %462
      %464 = vrot.lane.b32.xlu0 %v177, 110
      %v465 = vpop.permute.xlu0 %464
      %vm466 = vcmask 900096
      %v467 = vsel %vm466, %v459, %v461
      %v468 = vsel %vm466, %v461, %v463
      %v469 = vsel %vm466, %v463, %v465
      %470 = vrot.lane.b32.xlu0 %v174, 109
      %v471 = vpop.permute.xlu0 %470
      %472 = vrot.lane.b32.xlu0 %v175, 109
      %v473 = vpop.permute.xlu0 %472
      %474 = vrot.lane.b32.xlu0 %v176, 109
      %v475 = vpop.permute.xlu0 %474
      %476 = vrot.lane.b32.xlu0 %v177, 109
      %v477 = vpop.permute.xlu0 %476
      %vm478 = vcmask 891904
      %v479 = vsel %vm478, %v471, %v473
      %v480 = vsel %vm478, %v473, %v475
      %v481 = vsel %vm478, %v475, %v477
      %483 = vrot.lane.b32.xlu0 %v175, 88
      %v484 = vpop.permute.xlu0 %483
      %485 = vrot.lane.b32.xlu0 %v176, 88
      %v486 = vpop.permute.xlu0 %485
      %487 = vrot.lane.b32.xlu0 %v177, 88
      %v488 = vpop.permute.xlu0 %487
      %489 = vrot.lane.b32.xlu0 %v178, 88
      %v490 = vpop.permute.xlu0 %489
      %vm491 = vcmask 719872
      %v492 = vsel %vm491, %v484, %v486
      %v493 = vsel %vm491, %v486, %v488
      %v494 = vsel %vm491, %v488, %v490
      %495 = vrot.lane.b32.xlu0 %v175, 87
      %v496 = vpop.permute.xlu0 %495
      %497 = vrot.lane.b32.xlu0 %v176, 87
      %v498 = vpop.permute.xlu0 %497
      %499 = vrot.lane.b32.xlu0 %v177, 87
      %v500 = vpop.permute.xlu0 %499
      %501 = vrot.lane.b32.xlu0 %v178, 87
      %v502 = vpop.permute.xlu0 %501
      %vm503 = vcmask 711680
      %v504 = vsel %vm503, %v496, %v498
      %v505 = vsel %vm503, %v498, %v500
      %v506 = vsel %vm503, %v500, %v502
      %507 = vrot.lane.b32.xlu0 %v178, 86
      %v508 = vpop.permute.xlu0 %507
      %v509 = vsel %vm442, %v441, %v508
      %510 = vrot.lane.b32.xlu0 %v178, 85
      %v511 = vpop.permute.xlu0 %510
      %v512 = vsel %vm454, %v453, %v511
      %513 = vrot.lane.b32.xlu0 %v178, 84
      %v514 = vpop.permute.xlu0 %513
      %v515 = vsel %vm388, %v387, %v514
      %516 = vrot.lane.b32.xlu0 %v178, 83
      %v517 = vpop.permute.xlu0 %516
      %v518 = vsel %vm403, %v402, %v517
      %519 = vrot.lane.b32.xlu0 %v174, 82
      %v520 = vpop.permute.xlu0 %519
      %521 = vrot.lane.b32.xlu0 %v175, 82
      %v522 = vpop.permute.xlu0 %521
      %523 = vrot.lane.b32.xlu0 %v176, 82
      %v524 = vpop.permute.xlu0 %523
      %525 = vrot.lane.b32.xlu0 %v177, 82
      %v526 = vpop.permute.xlu0 %525
      %527 = vrot.lane.b32.xlu0 %v194, 82
      %v528 = vpop.permute.xlu0 %527
      %529 = vrot.lane.b32.xlu0 %v195, 82
      %v530 = vpop.permute.xlu0 %529
      %531 = vrot.lane.b32.xlu0 %v196, 82
      %v532 = vpop.permute.xlu0 %531
      %533 = vrot.lane.b32.xlu0 %v192, 82
      %v534 = vpop.permute.xlu0 %533
      %535 = vrot.lane.b32.xlu0 %v209, 82
      %v536 = vpop.permute.xlu0 %535
      %537 = vrot.lane.b32.xlu0 %v210, 82
      %v538 = vpop.permute.xlu0 %537
      %539 = vrot.lane.b32.xlu0 %v211, 82
      %v540 = vpop.permute.xlu0 %539
      %541 = vrot.lane.b32.xlu0 %v207, 82
      %v542 = vpop.permute.xlu0 %541
      %543 = vrot.lane.b32.xlu0 %v224, 82
      %v544 = vpop.permute.xlu0 %543
      %545 = vrot.lane.b32.xlu0 %v225, 82
      %v546 = vpop.permute.xlu0 %545
      %547 = vrot.lane.b32.xlu0 %v226, 82
      %v548 = vpop.permute.xlu0 %547
      %549 = vrot.lane.b32.xlu0 %v222, 82
      %v550 = vpop.permute.xlu0 %549
      %551 = vrot.lane.b32.xlu0 %v239, 82
      %v552 = vpop.permute.xlu0 %551
      %553 = vrot.lane.b32.xlu0 %v240, 82
      %v554 = vpop.permute.xlu0 %553
      %555 = vrot.lane.b32.xlu0 %v241, 82
      %v556 = vpop.permute.xlu0 %555
      %557 = vrot.lane.b32.xlu0 %v237, 82
      %v558 = vpop.permute.xlu0 %557
      %559 = vrot.lane.b32.xlu0 %v419, 82
      %v560 = vpop.permute.xlu0 %559
      %561 = vrot.lane.b32.xlu0 %v420, 82
      %v562 = vpop.permute.xlu0 %561
      %563 = vrot.lane.b32.xlu0 %v421, 82
      %v564 = vpop.permute.xlu0 %563
      %565 = vrot.lane.b32.xlu0 %v417, 82
      %v566 = vpop.permute.xlu0 %565
      %567 = vrot.lane.b32.xlu0 %v431, 82
      %v568 = vpop.permute.xlu0 %567
      %569 = vrot.lane.b32.xlu0 %v432, 82
      %v570 = vpop.permute.xlu0 %569
      %571 = vrot.lane.b32.xlu0 %v433, 82
      %v572 = vpop.permute.xlu0 %571
      %573 = vrot.lane.b32.xlu0 %v429, 82
      %v574 = vpop.permute.xlu0 %573
      %575 = vrot.lane.b32.xlu0 %v284, 82
      %v576 = vpop.permute.xlu0 %575
      %577 = vrot.lane.b32.xlu0 %v285, 82
      %v578 = vpop.permute.xlu0 %577
      %579 = vrot.lane.b32.xlu0 %v286, 82
      %v580 = vpop.permute.xlu0 %579
      %581 = vrot.lane.b32.xlu0 %v282, 82
      %v582 = vpop.permute.xlu0 %581
      %583 = vrot.lane.b32.xlu0 %v299, 82
      %v584 = vpop.permute.xlu0 %583
      %585 = vrot.lane.b32.xlu0 %v300, 82
      %v586 = vpop.permute.xlu0 %585
      %587 = vrot.lane.b32.xlu0 %v301, 82
      %v588 = vpop.permute.xlu0 %587
      %589 = vrot.lane.b32.xlu0 %v297, 82
      %v590 = vpop.permute.xlu0 %589
      %591 = vrot.lane.b32.xlu0 %v314, 82
      %v592 = vpop.permute.xlu0 %591
      %593 = vrot.lane.b32.xlu0 %v315, 82
      %v594 = vpop.permute.xlu0 %593
      %595 = vrot.lane.b32.xlu0 %v316, 82
      %v596 = vpop.permute.xlu0 %595
      %597 = vrot.lane.b32.xlu0 %v312, 82
      %v598 = vpop.permute.xlu0 %597
      %599 = vrot.lane.b32.xlu0 %v329, 82
      %v600 = vpop.permute.xlu0 %599
      %601 = vrot.lane.b32.xlu0 %v330, 82
      %v602 = vpop.permute.xlu0 %601
      %603 = vrot.lane.b32.xlu0 %v331, 82
      %v604 = vpop.permute.xlu0 %603
      %605 = vrot.lane.b32.xlu0 %v327, 82
      %v606 = vpop.permute.xlu0 %605
      %607 = vrot.lane.b32.xlu0 %v344, 82
      %v608 = vpop.permute.xlu0 %607
      %609 = vrot.lane.b32.xlu0 %v345, 82
      %v610 = vpop.permute.xlu0 %609
      %611 = vrot.lane.b32.xlu0 %v346, 82
      %v612 = vpop.permute.xlu0 %611
      %613 = vrot.lane.b32.xlu0 %v342, 82
      %v614 = vpop.permute.xlu0 %613
      %615 = vrot.lane.b32.xlu0 %v443, 82
      %v616 = vpop.permute.xlu0 %615
      %617 = vrot.lane.b32.xlu0 %v444, 82
      %v618 = vpop.permute.xlu0 %617
      %619 = vrot.lane.b32.xlu0 %v445, 82
      %v620 = vpop.permute.xlu0 %619
      %621 = vrot.lane.b32.xlu0 %v441, 82
      %v622 = vpop.permute.xlu0 %621
      %623 = vrot.lane.b32.xlu0 %v455, 82
      %v624 = vpop.permute.xlu0 %623
      %625 = vrot.lane.b32.xlu0 %v456, 82
      %v626 = vpop.permute.xlu0 %625
      %627 = vrot.lane.b32.xlu0 %v457, 82
      %v628 = vpop.permute.xlu0 %627
      %629 = vrot.lane.b32.xlu0 %v453, 82
      %v630 = vpop.permute.xlu0 %629
      %631 = vrot.lane.b32.xlu0 %v389, 82
      %v632 = vpop.permute.xlu0 %631
      %633 = vrot.lane.b32.xlu0 %v390, 82
      %v634 = vpop.permute.xlu0 %633
      %635 = vrot.lane.b32.xlu0 %v391, 82
      %v636 = vpop.permute.xlu0 %635
      %637 = vrot.lane.b32.xlu0 %v387, 82
      %v638 = vpop.permute.xlu0 %637
      %639 = vrot.lane.b32.xlu0 %v404, 82
      %v640 = vpop.permute.xlu0 %639
      %641 = vrot.lane.b32.xlu0 %v405, 82
      %v642 = vpop.permute.xlu0 %641
      %643 = vrot.lane.b32.xlu0 %v406, 82
      %v644 = vpop.permute.xlu0 %643
      %645 = vrot.lane.b32.xlu0 %v402, 82
      %v646 = vpop.permute.xlu0 %645
      %vm647 = vcmask 670720
      %v648 = vsel %vm647, %v520, %v522
      %v649 = vsel %vm647, %v522, %v524
      %v650 = vsel %vm647, %v524, %v526
      %v651 = vsel %vm647, %v528, %v530
      %v652 = vsel %vm647, %v530, %v532
      %v653 = vsel %vm647, %v532, %v534
      %v654 = vsel %vm647, %v536, %v538
      %v655 = vsel %vm647, %v538, %v540
      %v656 = vsel %vm647, %v540, %v542
      %v657 = vsel %vm647, %v544, %v546
      %v658 = vsel %vm647, %v546, %v548
      %v659 = vsel %vm647, %v548, %v550
      %v660 = vsel %vm647, %v552, %v554
      %v661 = vsel %vm647, %v554, %v556
      %v662 = vsel %vm647, %v556, %v558
      %v663 = vsel %vm647, %v560, %v562
      %v664 = vsel %vm647, %v562, %v564
      %v665 = vsel %vm647, %v564, %v566
      %v666 = vsel %vm647, %v568, %v570
      %v667 = vsel %vm647, %v570, %v572
      %v668 = vsel %vm647, %v572, %v574
      %v669 = vsel %vm647, %v576, %v578
      %v670 = vsel %vm647, %v578, %v580
      %v671 = vsel %vm647, %v580, %v582
      %v672 = vsel %vm647, %v584, %v586
      %v673 = vsel %vm647, %v586, %v588
      %v674 = vsel %vm647, %v588, %v590
      %v675 = vsel %vm647, %v592, %v594
      %v676 = vsel %vm647, %v594, %v596
      %v677 = vsel %vm647, %v596, %v598
      %v678 = vsel %vm647, %v600, %v602
      %v679 = vsel %vm647, %v602, %v604
      %v680 = vsel %vm647, %v604, %v606
      %v681 = vsel %vm647, %v608, %v610
      %v682 = vsel %vm647, %v610, %v612
      %v683 = vsel %vm647, %v612, %v614
      %v684 = vsel %vm647, %v616, %v618
      %v685 = vsel %vm647, %v618, %v620
      %v686 = vsel %vm647, %v620, %v622
      %v687 = vsel %vm647, %v624, %v626
      %v688 = vsel %vm647, %v626, %v628
      %v689 = vsel %vm647, %v628, %v630
      %v690 = vsel %vm647, %v632, %v634
      %v691 = vsel %vm647, %v634, %v636
      %v692 = vsel %vm647, %v636, %v638
      %v693 = vsel %vm647, %v640, %v642
      %v694 = vsel %vm647, %v642, %v644
      %v695 = vsel %vm647, %v644, %v646
      %744 = vrot.lane.b32.xlu0 %v174, 36
      %v745 = vpop.permute.xlu0 %744
      %746 = vrot.lane.b32.xlu0 %v175, 36
      %v747 = vpop.permute.xlu0 %746
      %748 = vrot.lane.b32.xlu0 %v176, 36
      %v749 = vpop.permute.xlu0 %748
      %750 = vrot.lane.b32.xlu0 %v177, 36
      %v751 = vpop.permute.xlu0 %750
      %752 = vrot.lane.b32.xlu0 %v194, 36
      %v753 = vpop.permute.xlu0 %752
      %754 = vrot.lane.b32.xlu0 %v195, 36
      %v755 = vpop.permute.xlu0 %754
      %756 = vrot.lane.b32.xlu0 %v196, 36
      %v757 = vpop.permute.xlu0 %756
      %758 = vrot.lane.b32.xlu0 %v192, 36
      %v759 = vpop.permute.xlu0 %758
      %760 = vrot.lane.b32.xlu0 %v209, 36
      %v761 = vpop.permute.xlu0 %760
      %762 = vrot.lane.b32.xlu0 %v210, 36
      %v763 = vpop.permute.xlu0 %762
      %764 = vrot.lane.b32.xlu0 %v211, 36
      %v765 = vpop.permute.xlu0 %764
      %766 = vrot.lane.b32.xlu0 %v207, 36
      %v767 = vpop.permute.xlu0 %766
      %768 = vrot.lane.b32.xlu0 %v467, 36
      %v769 = vpop.permute.xlu0 %768
      %770 = vrot.lane.b32.xlu0 %v468, 36
      %v771 = vpop.permute.xlu0 %770
      %772 = vrot.lane.b32.xlu0 %v469, 36
      %v773 = vpop.permute.xlu0 %772
      %774 = vrot.lane.b32.xlu0 %v465, 36
      %v775 = vpop.permute.xlu0 %774
      %776 = vrot.lane.b32.xlu0 %v479, 36
      %v777 = vpop.permute.xlu0 %776
      %778 = vrot.lane.b32.xlu0 %v480, 36
      %v779 = vpop.permute.xlu0 %778
      %780 = vrot.lane.b32.xlu0 %v481, 36
      %v781 = vpop.permute.xlu0 %780
      %782 = vrot.lane.b32.xlu0 %v477, 36
      %v783 = vpop.permute.xlu0 %782
      %784 = vrot.lane.b32.xlu0 %v419, 36
      %v785 = vpop.permute.xlu0 %784
      %786 = vrot.lane.b32.xlu0 %v420, 36
      %v787 = vpop.permute.xlu0 %786
      %788 = vrot.lane.b32.xlu0 %v421, 36
      %v789 = vpop.permute.xlu0 %788
      %790 = vrot.lane.b32.xlu0 %v417, 36
      %v791 = vpop.permute.xlu0 %790
      %792 = vrot.lane.b32.xlu0 %v431, 36
      %v793 = vpop.permute.xlu0 %792
      %794 = vrot.lane.b32.xlu0 %v432, 36
      %v795 = vpop.permute.xlu0 %794
      %796 = vrot.lane.b32.xlu0 %v433, 36
      %v797 = vpop.permute.xlu0 %796
      %798 = vrot.lane.b32.xlu0 %v429, 36
      %v799 = vpop.permute.xlu0 %798
      %800 = vrot.lane.b32.xlu0 %v284, 36
      %v801 = vpop.permute.xlu0 %800
      %802 = vrot.lane.b32.xlu0 %v285, 36
      %v803 = vpop.permute.xlu0 %802
      %804 = vrot.lane.b32.xlu0 %v286, 36
      %v805 = vpop.permute.xlu0 %804
      %806 = vrot.lane.b32.xlu0 %v282, 36
      %v807 = vpop.permute.xlu0 %806
      %808 = vrot.lane.b32.xlu0 %v299, 36
      %v809 = vpop.permute.xlu0 %808
      %810 = vrot.lane.b32.xlu0 %v300, 36
      %v811 = vpop.permute.xlu0 %810
      %812 = vrot.lane.b32.xlu0 %v301, 36
      %v813 = vpop.permute.xlu0 %812
      %814 = vrot.lane.b32.xlu0 %v297, 36
      %v815 = vpop.permute.xlu0 %814
      %816 = vrot.lane.b32.xlu0 %v314, 36
      %v817 = vpop.permute.xlu0 %816
      %818 = vrot.lane.b32.xlu0 %v315, 36
      %v819 = vpop.permute.xlu0 %818
      %820 = vrot.lane.b32.xlu0 %v316, 36
      %v821 = vpop.permute.xlu0 %820
      %822 = vrot.lane.b32.xlu0 %v312, 36
      %v823 = vpop.permute.xlu0 %822
      %824 = vrot.lane.b32.xlu0 %v484, 36
      %v825 = vpop.permute.xlu0 %824
      %826 = vrot.lane.b32.xlu0 %v492, 36
      %v827 = vpop.permute.xlu0 %826
      %828 = vrot.lane.b32.xlu0 %v493, 36
      %v829 = vpop.permute.xlu0 %828
      %830 = vrot.lane.b32.xlu0 %v494, 36
      %v831 = vpop.permute.xlu0 %830
      %832 = vrot.lane.b32.xlu0 %v496, 36
      %v833 = vpop.permute.xlu0 %832
      %834 = vrot.lane.b32.xlu0 %v504, 36
      %v835 = vpop.permute.xlu0 %834
      %836 = vrot.lane.b32.xlu0 %v505, 36
      %v837 = vpop.permute.xlu0 %836
      %838 = vrot.lane.b32.xlu0 %v506, 36
      %v839 = vpop.permute.xlu0 %838
      %840 = vrot.lane.b32.xlu0 %v437, 36
      %v841 = vpop.permute.xlu0 %840
      %842 = vrot.lane.b32.xlu0 %v444, 36
      %v843 = vpop.permute.xlu0 %842
      %844 = vrot.lane.b32.xlu0 %v445, 36
      %v845 = vpop.permute.xlu0 %844
      %846 = vrot.lane.b32.xlu0 %v509, 36
      %v847 = vpop.permute.xlu0 %846
      %848 = vrot.lane.b32.xlu0 %v449, 36
      %v849 = vpop.permute.xlu0 %848
      %850 = vrot.lane.b32.xlu0 %v456, 36
      %v851 = vpop.permute.xlu0 %850
      %852 = vrot.lane.b32.xlu0 %v457, 36
      %v853 = vpop.permute.xlu0 %852
      %854 = vrot.lane.b32.xlu0 %v512, 36
      %v855 = vpop.permute.xlu0 %854
      %856 = vrot.lane.b32.xlu0 %v383, 36
      %v857 = vpop.permute.xlu0 %856
      %858 = vrot.lane.b32.xlu0 %v390, 36
      %v859 = vpop.permute.xlu0 %858
      %860 = vrot.lane.b32.xlu0 %v391, 36
      %v861 = vpop.permute.xlu0 %860
      %862 = vrot.lane.b32.xlu0 %v515, 36
      %v863 = vpop.permute.xlu0 %862
      %864 = vrot.lane.b32.xlu0 %v398, 36
      %v865 = vpop.permute.xlu0 %864
      %866 = vrot.lane.b32.xlu0 %v405, 36
      %v867 = vpop.permute.xlu0 %866
      %868 = vrot.lane.b32.xlu0 %v406, 36
      %v869 = vpop.permute.xlu0 %868
      %870 = vrot.lane.b32.xlu0 %v518, 36
      %v871 = vpop.permute.xlu0 %870
      %vm872 = vcmask 293888
      %v873 = vsel %vm872, %v745, %v747
      %v874 = vsel %vm872, %v747, %v749
      %v875 = vsel %vm872, %v749, %v751
      %v876 = vsel %vm872, %v753, %v755
      %v877 = vsel %vm872, %v755, %v757
      %v878 = vsel %vm872, %v757, %v759
      %v879 = vsel %vm872, %v761, %v763
      %v880 = vsel %vm872, %v763, %v765
      %v881 = vsel %vm872, %v765, %v767
      %v882 = vsel %vm872, %v769, %v771
      %v883 = vsel %vm872, %v771, %v773
      %v884 = vsel %vm872, %v773, %v775
      %v885 = vsel %vm872, %v777, %v779
      %v886 = vsel %vm872, %v779, %v781
      %v887 = vsel %vm872, %v781, %v783
      %v888 = vsel %vm872, %v785, %v787
      %v889 = vsel %vm872, %v787, %v789
      %v890 = vsel %vm872, %v789, %v791
      %v891 = vsel %vm872, %v793, %v795
      %v892 = vsel %vm872, %v795, %v797
      %v893 = vsel %vm872, %v797, %v799
      %v894 = vsel %vm872, %v801, %v803
      %v895 = vsel %vm872, %v803, %v805
      %v896 = vsel %vm872, %v805, %v807
      %v897 = vsel %vm872, %v809, %v811
      %v898 = vsel %vm872, %v811, %v813
      %v899 = vsel %vm872, %v813, %v815
      %v900 = vsel %vm872, %v817, %v819
      %v901 = vsel %vm872, %v819, %v821
      %v902 = vsel %vm872, %v821, %v823
      %v903 = vsel %vm872, %v825, %v827
      %v904 = vsel %vm872, %v827, %v829
      %v905 = vsel %vm872, %v829, %v831
      %v906 = vsel %vm872, %v833, %v835
      %v907 = vsel %vm872, %v835, %v837
      %v908 = vsel %vm872, %v837, %v839
      %v909 = vsel %vm872, %v841, %v843
      %v910 = vsel %vm872, %v843, %v845
      %v911 = vsel %vm872, %v845, %v847
      %v912 = vsel %vm872, %v849, %v851
      %v913 = vsel %vm872, %v851, %v853
      %v914 = vsel %vm872, %v853, %v855
      %v915 = vsel %vm872, %v857, %v859
      %v916 = vsel %vm872, %v859, %v861
      %v917 = vsel %vm872, %v861, %v863
      %v918 = vsel %vm872, %v865, %v867
      %v919 = vsel %vm872, %v867, %v869
      %v920 = vsel %vm872, %v869, %v871
      %969 = vrot.lane.b32.xlu0 %v175, 118
      %v970 = vpop.permute.xlu0 %969
      %971 = vrot.lane.b32.xlu0 %v176, 118
      %v972 = vpop.permute.xlu0 %971
      %973 = vrot.lane.b32.xlu0 %v177, 118
      %v974 = vpop.permute.xlu0 %973
      %975 = vrot.lane.b32.xlu0 %v178, 118
      %v976 = vpop.permute.xlu0 %975
      %vm977 = vcmask 965632
      %v978 = vsel %vm977, %v970, %v972
      %v979 = vsel %vm977, %v972, %v974
      %v980 = vsel %vm977, %v974, %v976
      %v984 = vld [vmem:[%s2] sm:$0x7]
      %986 = vset.pattern.permute.xlu0 0
      %987 = vperm.xlu0 %986, %v984
      %v988 = vpop.permute.xlu0 %987
      %v992 = vcombine.high %v179, %v179
      %v993 = vcombine.high %v180, %v180
      %vm995 = vcmask 64512
      %v996 = vsel %vm995, %v993, 0
      %998 = vmatprep.subr.mxu0 %v405
      %999 = vmatpush1.msra.mxu0 %v404
      %1000 = vmatprep.subr.mxu0 %v390
      %1001 = vmatpush1.msra.mxu0 %v389
      %1002 = vmatprep.subr.mxu0 %v375
      %1003 = vmatpush1.msra.mxu0 %v374
      %1004 = vmatprep.subr.mxu0 %v360
      %1005 = vmatpush1.msra.mxu0 %v359
      %1006 = vmatprep.subr.mxu0 %v345
      %1007 = vmatpush1.msra.mxu0 %v344
      %1008 = vmatprep.subr.mxu0 %v330
      %1009 = vmatpush1.msra.mxu0 %v329
      %1010 = vmatprep.subr.mxu0 %v315
      %1011 = vmatpush1.msra.mxu0 %v314
      %1012 = vmatprep.subr.mxu0 %v300
      %1013 = vmatpush1.msra.mxu0 %v299
      %1014 = vmatprep.subr.mxu0 %v285
      %1015 = vmatpush1.msra.mxu0 %v284
      %1016 = vmatprep.subr.mxu0 %v270
      %1017 = vmatpush1.msra.mxu0 %v269
      %1018 = vmatprep.subr.mxu0 %v255
      %1019 = vmatpush1.msra.mxu0 %v254
      %1020 = vmatprep.subr.mxu0 %v240
      %1021 = vmatpush1.msra.mxu0 %v239
      %1022 = vmatprep.subr.mxu0 %v225
      %1023 = vmatpush1.msra.mxu0 %v224
      %1024 = vmatprep.subr.mxu0 %v210
      %1025 = vmatpush1.msra.mxu0 %v209
      %1026 = vmatprep.subr.mxu0 %v195
      %1027 = vmatpush1.msra.mxu0 %v194
      %1028 = vmatprep.subr.mxu0 %v175
      %1029 = vmatpush1.msra.mxu0 %v174
      %1030 = vmatprep.subr.mxu0 %v694
      %1031 = vmatpush2.msra.mxu0 %v693
      %1032 = vmatprep.subr.mxu0 %v691
      %1033 = vmatpush2.msra.mxu0 %v690
      %1034 = vmatprep.subr.mxu0 %v688
      %1035 = vmatpush2.msra.mxu0 %v687
      %1036 = vmatprep.subr.mxu0 %v685
      %1037 = vmatpush2.msra.mxu0 %v684
      %1038 = vmatprep.subr.mxu0 %v682
      %1039 = vmatpush2.msra.mxu0 %v681
      %1040 = vmatprep.subr.mxu0 %v679
      %1041 = vmatpush2.msra.mxu0 %v678
      %1042 = vmatprep.subr.mxu0 %v676
      %1043 = vmatpush2.msra.mxu0 %v675
      %1044 = vmatprep.subr.mxu0 %v673
      %1045 = vmatpush2.msra.mxu0 %v672
      %1046 = vmatprep.subr.mxu0 %v670
      %1047 = vmatpush2.msra.mxu0 %v669
      %1048 = vmatprep.subr.mxu0 %v667
      %1049 = vmatpush2.msra.mxu0 %v666
      %1050 = vmatprep.subr.mxu0 %v664
      %1051 = vmatpush2.msra.mxu0 %v663
      %1052 = vmatprep.subr.mxu0 %v661
      %1053 = vmatpush2.msra.mxu0 %v660
      %1054 = vmatprep.subr.mxu0 %v658
      %1055 = vmatpush2.msra.mxu0 %v657
      %1056 = vmatprep.subr.mxu0 %v655
      %1057 = vmatpush2.msra.mxu0 %v654
      %1058 = vmatprep.subr.mxu0 %v652
      %1059 = vmatpush2.msra.mxu0 %v651
      %1060 = vmatprep.subr.mxu0 %v649
      %1061 = vmatpush2.msra.mxu0 %v648
      %1062 = vmatprep.mubr.f32.mxu0 %v992
      %1063 = vmatmul.mubr.f32.gmra.mxu0 %v179
      %v1064 = vpop.f32.mrf.mxu0
      %v1065 = vadd.f32 %v988, %v1064
      %v1066 = vpop.f32.mrf.mxu0
      %v1067 = vadd.f32 %v988, %v1066
      %1068 = vdwg.mxu0
      %1069 = vmatprep.subr.mxu0 %v919
      %1070 = vmatpush1.msra.mxu0 %v918
      %1071 = vmatprep.subr.mxu0 %v916
      %1072 = vmatpush1.msra.mxu0 %v915
      %1073 = vmatprep.subr.mxu0 %v913
      %1074 = vmatpush1.msra.mxu0 %v912
      %1075 = vmatprep.subr.mxu0 %v910
      %1076 = vmatpush1.msra.mxu0 %v909
      %1077 = vmatprep.subr.mxu0 %v907
      %1078 = vmatpush1.msra.mxu0 %v906
      %1079 = vmatprep.subr.mxu0 %v904
      %1080 = vmatpush1.msra.mxu0 %v903
      %1081 = vmatprep.subr.mxu0 %v901
      %1082 = vmatpush1.msra.mxu0 %v900
      %1083 = vmatprep.subr.mxu0 %v898
      %1084 = vmatpush1.msra.mxu0 %v897
      %1085 = vmatprep.subr.mxu0 %v895
      %1086 = vmatpush1.msra.mxu0 %v894
      %1087 = vmatprep.subr.mxu0 %v892
      %1088 = vmatpush1.msra.mxu0 %v891
      %1089 = vmatprep.subr.mxu0 %v889
      %1090 = vmatpush1.msra.mxu0 %v888
      %1091 = vmatprep.subr.mxu0 %v886
      %1092 = vmatpush1.msra.mxu0 %v885
      %1093 = vmatprep.subr.mxu0 %v883
      %1094 = vmatpush1.msra.mxu0 %v882
      %1095 = vmatprep.subr.mxu0 %v880
      %1096 = vmatpush1.msra.mxu0 %v879
      %1097 = vmatprep.subr.mxu0 %v877
      %1098 = vmatpush1.msra.mxu0 %v876
      %1099 = vmatprep.subr.mxu0 %v874
      %1100 = vmatpush1.msra.mxu0 %v873
      %1101 = vmatprep.subr.mxu0 0.0
      %1102 = vmatpush2.msra.mxu0 0.0
      %1103 = vmatprep.subr.mxu0 0.0
      %1104 = vmatpush2.msra.mxu0 0.0
      %1105 = vmatprep.subr.mxu0 0.0
      %1106 = vmatpush2.msra.mxu0 0.0
      %1107 = vmatprep.subr.mxu0 0.0
      %1108 = vmatpush2.msra.mxu0 0.0
      %1109 = vmatprep.subr.mxu0 0.0
      %1110 = vmatpush2.msra.mxu0 0.0
      %1111 = vmatprep.subr.mxu0 0.0
      %1112 = vmatpush2.msra.mxu0 0.0
      %1113 = vmatprep.subr.mxu0 0.0
      %1114 = vmatpush2.msra.mxu0 0.0
      %1115 = vmatprep.subr.mxu0 0.0
      %1116 = vmatpush2.msra.mxu0 0.0
      %1117 = vmatprep.subr.mxu0 0.0
      %1118 = vmatpush2.msra.mxu0 0.0
      %1119 = vmatprep.subr.mxu0 0.0
      %1120 = vmatpush2.msra.mxu0 0.0
      %1121 = vmatprep.subr.mxu0 0.0
      %1122 = vmatpush2.msra.mxu0 0.0
      %1123 = vmatprep.subr.mxu0 0.0
      %1124 = vmatpush2.msra.mxu0 0.0
      %1125 = vmatprep.subr.mxu0 0.0
      %1126 = vmatpush2.msra.mxu0 0.0
      %1127 = vmatprep.subr.mxu0 0.0
      %1128 = vmatpush2.msra.mxu0 0.0
      %1129 = vmatprep.subr.mxu0 0.0
      %1130 = vmatpush2.msra.mxu0 0.0
      %1131 = vmatprep.subr.mxu0 %v979
      %1132 = vmatpush2.msra.mxu0 %v978
      %1133 = vmatprep.mubr.f32.mxu0 %v996
      %1134 = vmatmul.mubr.f32.gmra.mxu0 %v180
      %v1135 = vpop.f32.mrf.mxu0
      %v1136 = vadd.f32 %v1065, %v1135
      %v1137 = vpop.f32.mrf.mxu0
      %v1138 = vadd.f32 %v1067, %v1137
      %1139 = vdwg.mxu0
      %1140 = vmatprep.subr.mxu0 0.0
      %1141 = vmatpush1.msra.mxu0 %v406
      %1142 = vmatprep.subr.mxu0 0.0
      %1143 = vmatpush1.msra.mxu0 %v391
      %1144 = vmatprep.subr.mxu0 0.0
      %1145 = vmatpush1.msra.mxu0 %v376
      %1146 = vmatprep.subr.mxu0 0.0
      %1147 = vmatpush1.msra.mxu0 %v361
      %1148 = vmatprep.subr.mxu0 0.0
      %1149 = vmatpush1.msra.mxu0 %v346
      %1150 = vmatprep.subr.mxu0 0.0
      %1151 = vmatpush1.msra.mxu0 %v331
      %1152 = vmatprep.subr.mxu0 0.0
      %1153 = vmatpush1.msra.mxu0 %v316
      %1154 = vmatprep.subr.mxu0 0.0
      %1155 = vmatpush1.msra.mxu0 %v301
      %1156 = vmatprep.subr.mxu0 0.0
      %1157 = vmatpush1.msra.mxu0 %v286
      %1158 = vmatprep.subr.mxu0 0.0
      %1159 = vmatpush1.msra.mxu0 %v271
      %1160 = vmatprep.subr.mxu0 0.0
      %1161 = vmatpush1.msra.mxu0 %v256
      %1162 = vmatprep.subr.mxu0 0.0
      %1163 = vmatpush1.msra.mxu0 %v241
      %1164 = vmatprep.subr.mxu0 0.0
      %1165 = vmatpush1.msra.mxu0 %v226
      %1166 = vmatprep.subr.mxu0 0.0
      %1167 = vmatpush1.msra.mxu0 %v211
      %1168 = vmatprep.subr.mxu0 0.0
      %1169 = vmatpush1.msra.mxu0 %v196
      %1170 = vmatprep.subr.mxu0 0.0
      %1171 = vmatpush1.msra.mxu0 %v176
      %1172 = vmatprep.subr.mxu0 0.0
      %1173 = vmatpush2.msra.mxu0 %v695
      %1174 = vmatprep.subr.mxu0 0.0
      %1175 = vmatpush2.msra.mxu0 %v692
      %1176 = vmatprep.subr.mxu0 0.0
      %1177 = vmatpush2.msra.mxu0 %v689
      %1178 = vmatprep.subr.mxu0 0.0
      %1179 = vmatpush2.msra.mxu0 %v686
      %1180 = vmatprep.subr.mxu0 0.0
      %1181 = vmatpush2.msra.mxu0 %v683
      %1182 = vmatprep.subr.mxu0 0.0
      %1183 = vmatpush2.msra.mxu0 %v680
      %1184 = vmatprep.subr.mxu0 0.0
      %1185 = vmatpush2.msra.mxu0 %v677
      %1186 = vmatprep.subr.mxu0 0.0
      %1187 = vmatpush2.msra.mxu0 %v674
      %1188 = vmatprep.subr.mxu0 0.0
      %1189 = vmatpush2.msra.mxu0 %v671
      %1190 = vmatprep.subr.mxu0 0.0
      %1191 = vmatpush2.msra.mxu0 %v668
      %1192 = vmatprep.subr.mxu0 0.0
      %1193 = vmatpush2.msra.mxu0 %v665
      %1194 = vmatprep.subr.mxu0 0.0
      %1195 = vmatpush2.msra.mxu0 %v662
      %1196 = vmatprep.subr.mxu0 0.0
      %1197 = vmatpush2.msra.mxu0 %v659
      %1198 = vmatprep.subr.mxu0 0.0
      %1199 = vmatpush2.msra.mxu0 %v656
      %1200 = vmatprep.subr.mxu0 0.0
      %1201 = vmatpush2.msra.mxu0 %v653
      %1202 = vmatprep.subr.mxu0 0.0
      %1203 = vmatpush2.msra.mxu0 %v650
      %1204 = vmatprep.mubr.f32.mxu0 %v992
      %1205 = vmatmul.mubr.f32.gmra.mxu0 %v179
      %v1206 = vpop.f32.mrf.mxu0
      %v1207 = vadd.f32 %v988, %v1206
      %v1208 = vpop.f32.mrf.mxu0
      %1209 = vdwg.mxu0
      %1210 = vmatprep.subr.mxu0 0.0
      %1211 = vmatpush1.msra.mxu0 %v920
      %1212 = vmatprep.subr.mxu0 0.0
      %1213 = vmatpush1.msra.mxu0 %v917
      %1214 = vmatprep.subr.mxu0 0.0
      %1215 = vmatpush1.msra.mxu0 %v914
      %1216 = vmatprep.subr.mxu0 0.0
      %1217 = vmatpush1.msra.mxu0 %v911
      %1218 = vmatprep.subr.mxu0 0.0
      %1219 = vmatpush1.msra.mxu0 %v908
      %1220 = vmatprep.subr.mxu0 0.0
      %1221 = vmatpush1.msra.mxu0 %v905
      %1222 = vmatprep.subr.mxu0 0.0
      %1223 = vmatpush1.msra.mxu0 %v902
      %1224 = vmatprep.subr.mxu0 0.0
      %1225 = vmatpush1.msra.mxu0 %v899
      %1226 = vmatprep.subr.mxu0 0.0
      %1227 = vmatpush1.msra.mxu0 %v896
      %1228 = vmatprep.subr.mxu0 0.0
      %1229 = vmatpush1.msra.mxu0 %v893
      %1230 = vmatprep.subr.mxu0 0.0
      %1231 = vmatpush1.msra.mxu0 %v890
      %1232 = vmatprep.subr.mxu0 0.0
      %1233 = vmatpush1.msra.mxu0 %v887
      %1234 = vmatprep.subr.mxu0 0.0
      %1235 = vmatpush1.msra.mxu0 %v884
      %1236 = vmatprep.subr.mxu0 0.0
      %1237 = vmatpush1.msra.mxu0 %v881
      %1238 = vmatprep.subr.mxu0 0.0
      %1239 = vmatpush1.msra.mxu0 %v878
      %1240 = vmatprep.subr.mxu0 0.0
      %1241 = vmatpush1.msra.mxu0 %v875
      %1242 = vmatprep.subr.mxu0 0.0
      %1243 = vmatpush2.msra.mxu0 0.0
      %1244 = vmatprep.subr.mxu0 0.0
      %1245 = vmatpush2.msra.mxu0 0.0
      %1246 = vmatprep.subr.mxu0 0.0
      %1247 = vmatpush2.msra.mxu0 0.0
      %1248 = vmatprep.subr.mxu0 0.0
      %1249 = vmatpush2.msra.mxu0 0.0
      %1250 = vmatprep.subr.mxu0 0.0
      %1251 = vmatpush2.msra.mxu0 0.0
      %1252 = vmatprep.subr.mxu0 0.0
      %1253 = vmatpush2.msra.mxu0 0.0
      %1254 = vmatprep.subr.mxu0 0.0
      %1255 = vmatpush2.msra.mxu0 0.0
      %1256 = vmatprep.subr.mxu0 0.0
      %1257 = vmatpush2.msra.mxu0 0.0
      %1258 = vmatprep.subr.mxu0 0.0
      %1259 = vmatpush2.msra.mxu0 0.0
      %1260 = vmatprep.subr.mxu0 0.0
      %1261 = vmatpush2.msra.mxu0 0.0
      %1262 = vmatprep.subr.mxu0 0.0
      %1263 = vmatpush2.msra.mxu0 0.0
      %1264 = vmatprep.subr.mxu0 0.0
      %1265 = vmatpush2.msra.mxu0 0.0
      %1266 = vmatprep.subr.mxu0 0.0
      %1267 = vmatpush2.msra.mxu0 0.0
      %1268 = vmatprep.subr.mxu0 0.0
      %1269 = vmatpush2.msra.mxu0 0.0
      %1270 = vmatprep.subr.mxu0 0.0
      %1271 = vmatpush2.msra.mxu0 0.0
      %1272 = vmatprep.subr.mxu0 0.0
      %1273 = vmatpush2.msra.mxu0 %v980
      %1274 = vmatprep.mubr.f32.mxu0 %v996
      %1275 = vmatmul.mubr.f32.gmra.mxu0 %v180
      %v1276 = vpop.f32.mrf.mxu0
      %v1277 = vadd.f32 %v1207, %v1276
      %v1278 = vpop.f32.mrf.mxu0
      %1279 = vdwg.mxu0
      %v1280 = vtanh.pop %v1136
      %v1281 = vtanh.pop %v1138
      %v1282 = vtanh.pop %v1277
      %v1285 = vcombine.low %v1280, %v1281
      %1287 = vst [vmem:[%s170] sm:$0x77] %v1285
      %1288 = vst [vmem:[%s170 + $0x8] sm:$0x7] %v1282
      %p1289 = scmp.lt.s32.totalorder %s14, 1
      %s1290 = scalar_select %p1289, %s14, 1
      %s1291 = smul.addr %s1290, 3
      %s1292 = smul.addr %s1291, 4
      %s1293 = scalar_lea.vmem %s3, %s1292
      // Predicated region
      $region33: #{_lambda_.19} parent=31 // pred_check
        %p1294 = pneg %p100
      $region34: #{_lambda_.19} parent=31 // pred_check_branch
        %1296 = sbr.rel (%p1294) target = $region36
      $region35: #{_lambda_.19} parent=31 // pred_region
        _
      $region36: #{_lambda_.19} parent=31 // pred_fallthru
        _
    $region32: #{_lambda_.19} parent=5 // pred_fallthru
      _
    %p1297 = scmp.le.s32.totalorder 2, %s9
    // Predicated region
    $region37: #{_lambda_.19} parent=5 // pred_check
      %p1298 = pneg %p1297
    $region38: #{_lambda_.19} parent=5 // pred_check_branch
      %1300 = sbr.rel (%p1298) target = $region40
    $region39: #{_lambda_.19} parent=5 // pred_region
      %s1301 = ssub.s32 %s9, 2
      // Predicated region
      $region41: #{_lambda_.19} parent=39 // pred_check
        %p1302 = pneg %p106
      $region42: #{_lambda_.19} parent=39 // pred_check_branch
        %1304 = sbr.rel (%p1302) target = $region44
      $region43: #{_lambda_.19} parent=39 // pred_region
        %p1305 = scmp.lt.s32.totalorder %s15, 1
        %s1306 = scalar_select %p1305, %s15, 1
        %s1307 = smul.addr %s1306, 3
        %s1308 = smul.addr %s1307, 4
        %s1309 = scalar_lea.vmem %s3, %s1308
      $region44: #{_lambda_.19} parent=39 // pred_fallthru
        _
    $region40: #{_lambda_.19} parent=5 // pred_fallthru
      _
  $region6: #{_lambda_.19} parent=0 // loop_footer
    %s13 = sadd.s32 1, %s9
  $region7: #{_lambda_.19} parent=0 // loop_footer_branch
    %8 = sbr.rel target = $region3
  $region8: #{_lambda_.19} parent=0 // loop_exit
    _

</llo_original>
